<compile_context>
chip_gen: v5e
topology: v5e:2x2
jax: 0.10.0
libtpu: 0.0.40
codegen_flags: <defaults>
</compile_context>

<pallas_src>
import functools

import numpy as np
import jax
import jax.numpy as jnp
from jax.experimental import pallas as pl
from jax.experimental.pallas import tpu as pltpu


# ---------------------------------------------------------------------------
# Parameter init (PyTorch ConvTranspose2d layout: weight (Cin, Cout, kH, kW))
# ---------------------------------------------------------------------------
def init_params(key, latent_dim, img_chans, f_base):
    def ct_init(k, cin, cout):
        kw_, kb_ = jax.random.split(k)
        bound = 1.0 / float(cout * 16) ** 0.5
        w = jax.random.uniform(kw_, (cin, cout, 4, 4), jnp.float32, -bound, bound)
        b = jax.random.uniform(kb_, (cout,), jnp.float32, -bound, bound)
        return w, b

    ks = jax.random.split(key, 4)
    return {
        "ct1": ct_init(ks[0], latent_dim, f_base * 4),
        "ct2": ct_init(ks[1], f_base * 4, f_base * 2),
        "ct3": ct_init(ks[2], f_base * 2, f_base),
        "ct4": ct_init(ks[3], f_base, img_chans),
    }


# ---------------------------------------------------------------------------
# Host-side weight packing into "banded" row-matmul matrices.
#
# ConvTranspose2d(k=4, s=2, p=1):  out[o, 2r+a, 2s+b] =
#   bias[o] + sum_{c,dr,ds} inp_pad[c, r+a+dr, s+b+ds] * W[c, o, 3-a-2dr, 3-b-2ds]
# With activations stored as rows A[ip, batch, jp*Cin + c] (zero pad baked in),
# each output row y=2r+a is  A[r+a] @ M[2a+0] + A[r+a+1] @ M[2a+1] + bias_row.
# ---------------------------------------------------------------------------
def _band_weights(W, bias, w_in, col_pad):
    W = np.asarray(W, np.float32)
    bias = np.asarray(bias, np.float32)
    cin, cout = W.shape[0], W.shape[1]
    w_out = 2 * w_in
    k_in = (w_in + 2) * cin
    n_out = (w_out + 2 * col_pad) * cout
    M = np.zeros((4, k_in, n_out), np.float32)          # index = 2*a + dr
    for a in range(2):
        for dr in range(2):
            ky = 3 - a - 2 * dr
            for x in range(w_out):
                s, b = x // 2, x % 2
                n0 = (x + col_pad) * cout
                for ds in range(2):
                    kx = 3 - b - 2 * ds
                    jp = s + b + ds
                    M[2 * a + dr, jp * cin:(jp + 1) * cin, n0:n0 + cout] += W[:, :, ky, kx]
    brow = np.zeros((1, n_out), np.float32)
    for x in range(w_out):
        brow[0, (x + col_pad) * cout:(x + col_pad + 1) * cout] = bias
    return M, brow


def pack_params(params):
    W1, b1 = params["ct1"]
    W2, b2 = params["ct2"]
    W3, b3 = params["ct3"]
    W4, b4 = params["ct4"]
    W1 = np.asarray(W1, np.float32)
    b1 = np.asarray(b1, np.float32)
    W4 = np.asarray(W4, np.float32)
    b4 = np.asarray(b4, np.float32)
    L, C1 = W1.shape[0], W1.shape[1]

    # ---- Layer 1 (1x1 -> 4x4, stride 1, pad 0): all 4 output rows fused into a
    # single (L, 4*K1) matmul weight, with the next layer's column zero-padding
    # baked into the lanes (K1 = 6*C1). ----
    K1 = 6 * C1
    R1 = np.zeros((L, 4 * K1), np.float32)
    b1r = np.zeros((1, 4 * K1), np.float32)
    for y in range(4):
        for x in range(4):
            lo = y * K1 + (x + 1) * C1
            R1[:, lo:lo + C1] = W1[:, :, y, x]
            b1r[0, lo:lo + C1] = b1

    M2, b2r = _band_weights(W2, b2, w_in=4, col_pad=1)
    M3, b3r = _band_weights(W3, b3, w_in=8, col_pad=1)

    # ---- Layer 4: zero-pad output channels to a multiple of 4 so the output row
    # width 32*c_pad is a multiple of 128 lanes (dense stores / dense MXU N). ----
    C3, c_img = W4.shape[0], W4.shape[1]
    c_pad = ((c_img + 3) // 4) * 4
    W4p = np.zeros((C3, c_pad, 4, 4), np.float32)
    W4p[:, :c_img] = W4
    b4p = np.zeros((c_pad,), np.float32)
    b4p[:c_img] = b4
    M4, b4r = _band_weights(W4p, b4p, w_in=16, col_pad=0)

    bf = lambda a: jnp.asarray(a, jnp.bfloat16)
    f32 = lambda a: jnp.asarray(a, jnp.float32)
    return {
        "r1": bf(R1), "b1": f32(b1r),
        "m2": bf(M2), "b2": f32(b2r),
        "m3": bf(M3), "b3": f32(b3r),
        "m4": bf(M4), "b4": f32(b4r),
    }


# ---------------------------------------------------------------------------
# Fused decoder kernel
# ---------------------------------------------------------------------------
def _dec_kernel(z_ref, r1_ref, b1_ref, m2_ref, b2_ref, m3_ref, b3_ref, m4_ref, b4_ref,
                out_ref, a1_ref, a2_ref, a3_ref, *, tile_b):
    f32 = jnp.float32
    bf16 = jnp.bfloat16

    # Zero the baked-in spatial pad rows (top/bottom) of each activation scratch.
    # Re-done every grid step: cheap, and safe if the "parallel" grid axis is
    # split across TensorCores (scratch is per-core, program_id==0 may not run).
    for ref in (a1_ref, a2_ref, a3_ref):
        zrow = jnp.zeros((tile_b, ref.shape[1]), ref.dtype)
        ref[pl.ds(0, tile_b)] = zrow
        ref[pl.ds(ref.shape[0] - tile_b, tile_b)] = zrow

    # -------- Layer 1: ConvT(latent -> 4*f_base, 4, s=1, p=0) + ReLU ----------
    # One fused (tile_b, L) @ (L, 4*K1) matmul; split into the 4 output rows.
    k1 = a1_ref.shape[1]
    pre1 = jnp.dot(z_ref[...].astype(bf16), r1_ref[...],
                   preferred_element_type=f32) + b1_ref[...]          # (tile_b, 4*k1) f32
    for y in range(4):
        a1_ref[pl.ds((y + 1) * tile_b, tile_b)] = (
            jnp.maximum(pre1[:, y * k1:(y + 1) * k1], 0.0).astype(bf16))

    # -------- Layers 2..4: ConvT(4, s=2, p=1) as parity-batched banded matmuls --
    def up_layer(a_in_ref, m_ref, b_ref, act, store_row):
        h_in = a_in_ref.shape[0] // tile_b - 2
        bias = b_ref[...]                                              # (1, N) f32
        for a in range(2):                                             # output-row parity
            # rows r+a and r+a+1 for r = 0..h_in-1, flattened to (h_in*tile_b, K)
            x0 = a_in_ref[pl.ds(a * tile_b, h_in * tile_b)]
            x1 = a_in_ref[pl.ds((a + 1) * tile_b, h_in * tile_b)]
            pre = jnp.dot(x0, m_ref[2 * a], preferred_element_type=f32)
            pre = pre + jnp.dot(x1, m_ref[2 * a + 1], preferred_element_type=f32)
            y_act = act(pre + bias)                                    # f32 elementwise
            for r in range(h_in):
                store_row(2 * r + a, y_act[r * tile_b:(r + 1) * tile_b])

    relu_bf16 = lambda v: jnp.maximum(v, 0.0).astype(bf16)

    def store_pad_row(a_out_ref):
        def f(y, v):
            a_out_ref[pl.ds((y + 1) * tile_b, tile_b)] = v
        return f

    n4 = m4_ref.shape[2]

    def sigmoid_f32(v):
        return pl.reciprocal(1.0 + jnp.exp(-v), approx=True)

    def store_out(y, v):
        out_ref[:, pl.ds(y * n4, n4)] = v                              # lane-dense (mult of 128)

    up_layer(a1_ref, m2_ref, b2_ref, relu_bf16, store_pad_row(a2_ref))   # 4x4   -> 8x8,   ReLU
    up_layer(a2_ref, m3_ref, b3_ref, relu_bf16, store_pad_row(a3_ref))   # 8x8   -> 16x16, ReLU
    up_layer(a3_ref, m4_ref, b4_ref, sigmoid_f32, store_out)             # 16x16 -> 32x32, Sigmoid


# ---------------------------------------------------------------------------
# Forward wrapper (mirrors DecCNN_OSCN.forward)
# ---------------------------------------------------------------------------
def dec_cnn_oscn_forward(packed, z, *, img_chans, max_tile_b=256, vmem_limit_mb=48):
    lead = z.shape[:-1]
    L = z.shape[-1]
    zf = z.reshape((-1, L)).astype(jnp.float32)
    B = zf.shape[0]

    # Batch tile: multiple of 16 (bf16 sublane packing), capped so tiny batches
    # don't compute padded garbage rows; large batches get >=2 grid steps
    # (so v7x's two TensorCores are both used via "parallel").
    tile_b = min(max_tile_b, ((B + 15) // 16) * 16)
    bp = ((B + tile_b - 1) // tile_b) * tile_b
    if bp != B:
        zf = jnp.pad(zf, ((0, bp - B), (0, 0)))

    r1, b1 = packed["r1"], packed["b1"]
    m2, b2 = packed["m2"], packed["b2"]
    m3, b3 = packed["m3"], packed["b3"]
    m4, b4 = packed["m4"], packed["b4"]
    k1 = m2.shape[1]
    n2, n3, n4 = m2.shape[2], m3.shape[2], m4.shape[2]
    c_pad = n4 // 32
    out_w = 32 * n4                                      # 32 image rows, each n4 lanes

    def full_spec(arr):
        # Constant index_map -> DMA'd to VMEM once, never re-fetched.
        # (Could additionally single-buffer via pipeline_mode=pl.Buffered(1);
        #  left double-buffered — footprint is small and it keeps lowering simple.)
        if arr.ndim == 2:
            return pl.BlockSpec(arr.shape, lambda i: (0, 0))
        return pl.BlockSpec(arr.shape, lambda i: (0, 0, 0))

    flops = 2 * bp * L * (4 * k1) + 8 * bp * (4 * k1 * n2 + 8 * n2 * n3 + 16 * n3 * n4)
    bytes_acc = sum(int(a.size) * a.dtype.itemsize
                    for a in (zf, r1, b1, m2, b2, m3, b3, m4, b4))
    bytes_acc += bp * out_w * 4
    cost = pl.CostEstimate(flops=int(flops),
                           transcendentals=int(2 * 32 * bp * n4),   # exp + reciprocal
                           bytes_accessed=int(bytes_acc))

    kernel = functools.partial(_dec_kernel, tile_b=tile_b)

    out = pl.pallas_call(
        kernel,
        out_shape=jax.ShapeDtypeStruct((bp, out_w), jnp.float32),
        grid=(bp // tile_b,),
        in_specs=[
            pl.BlockSpec((tile_b, L), lambda i: (i, 0)),
            full_spec(r1), full_spec(b1),
            full_spec(m2), full_spec(b2),
            full_spec(m3), full_spec(b3),
            full_spec(m4), full_spec(b4),
        ],
        out_specs=pl.BlockSpec((tile_b, out_w), lambda i: (i, 0)),
        scratch_shapes=[
            pltpu.VMEM((6 * tile_b, k1), jnp.bfloat16),    # 4x4   activation (+pad), bf16
            pltpu.VMEM((10 * tile_b, n2), jnp.bfloat16),   # 8x8   activation (+pad), bf16
            pltpu.VMEM((18 * tile_b, n3), jnp.bfloat16),   # 16x16 activation (+pad), bf16
        ],
        compiler_params=pltpu.CompilerParams(
            dimension_semantics=("parallel",),
            vmem_limit_bytes=vmem_limit_mb * 1024 * 1024,
        ),
        cost_estimate=cost,
    )(zf, r1, b1, m2, b2, m3, b3, m4, b4)

    # (bp, 32*32*c_pad) -> NCHW, dropping batch padding and zero-padded channels.
    img = out[:B].reshape(B, 32, 32, c_pad)[..., :img_chans]     # (B, y, x, c)
    img = img.transpose(0, 3, 1, 2).reshape(lead + (img_chans, 32, 32))
    return img, jnp.asarray(0.75, dtype=jnp.float32)


# ---------------------------------------------------------------------------
# Pure-JAX f32 reference (PyTorch ConvTranspose2d semantics)
# ---------------------------------------------------------------------------
def reference_forward(params, z):
    def convT(x, W, b, stride, pad):
        Wc = jnp.flip(W, axis=(2, 3)).transpose(1, 0, 2, 3)        # (Cout, Cin, kh, kw)
        y = jax.lax.conv_general_dilated(
            x, Wc, window_strides=(1, 1),
            padding=[(3 - pad, 3 - pad), (3 - pad, 3 - pad)],
            lhs_dilation=(stride, stride),
            dimension_numbers=("NCHW", "OIHW", "NCHW"))
        return y + b.reshape(1, -1, 1, 1)

    B = z.shape[0]
    x = z.reshape(B, -1, 1, 1)
    x = jax.nn.relu(convT(x, *params["ct1"], 1, 0))
    x = jax.nn.relu(convT(x, *params["ct2"], 2, 1))
    x = jax.nn.relu(convT(x, *params["ct3"], 2, 1))
    x = jax.nn.sigmoid(convT(x, *params["ct4"], 2, 1))
    return x, jnp.float32(0.75)


if __name__ == "__main__":
    key = jax.random.PRNGKey(0)
    kz, kp = jax.random.split(key)

    # Small shapes consistent with the module geometry (latent -> 1x1 -> 32x32).
    B, latent_dim, img_chans, f_base = 2, 16, 3, 16

    z = jax.random.normal(kz, (B, latent_dim), jnp.float32)
    params = init_params(kp, latent_dim, img_chans, f_base)
    packed = pack_params(params)                           # host-side, done once

    fwd = jax.jit(functools.partial(dec_cnn_oscn_forward, img_chans=img_chans))
    img, scale = fwd(packed, z)
    jax.block_until_ready((img, scale))

    img_ref, scale_ref = reference_forward(params, z)
    assert img.shape == (B, img_chans, 32, 32)
    max_err = float(jnp.max(jnp.abs(img - img_ref)))
    assert max_err < 2e-2, f"max abs error {max_err}"      # bf16 weights/activations vs f32 ref
    assert abs(float(scale) - 0.75) < 1e-6

    print("KERNEL_OK")
</pallas_src>

<mosaic_0001>
module attributes {stable_mosaic.version = 11 : i64} {
  func.func @_dec_kernel(%arg0: i32, %arg1: memref<16x16xf32, #tpu.memory_space<vmem>>, %arg2: memref<16x1536xbf16, #tpu.memory_space<vmem>>, %arg3: memref<1x1536xf32, #tpu.memory_space<vmem>>, %arg4: memref<4x384x320xbf16, #tpu.memory_space<vmem>>, %arg5: memref<1x320xf32, #tpu.memory_space<vmem>>, %arg6: memref<4x320x288xbf16, #tpu.memory_space<vmem>>, %arg7: memref<1x288xf32, #tpu.memory_space<vmem>>, %arg8: memref<4x288x128xbf16, #tpu.memory_space<vmem>>, %arg9: memref<1x128xf32, #tpu.memory_space<vmem>>, %arg10: memref<16x4096xf32, #tpu.memory_space<vmem>>, %arg11: memref<96x384xbf16, #tpu.memory_space<vmem>>, %arg12: memref<160x320xbf16, #tpu.memory_space<vmem>>, %arg13: memref<288x288xbf16, #tpu.memory_space<vmem>>) attributes {dimension_semantics = [#tpu.dimension_semantics<parallel>], iteration_bounds = array<i64: 1>, scalar_prefetch = 0 : i64, scratch_operands = 3 : i64, tpu.core_type = #tpu.core_type<tc>, window_params = [{transform_indices = @transform_0, window_bounds = array<i64: 16, 16>}, {pipeline_mode = #tpu.pipeline_mode<synchronous>, transform_indices = @transform_1, window_bounds = array<i64: 16, 1536>}, {pipeline_mode = #tpu.pipeline_mode<synchronous>, transform_indices = @transform_2, window_bounds = array<i64: 1, 1536>}, {pipeline_mode = #tpu.pipeline_mode<synchronous>, transform_indices = @transform_3, window_bounds = array<i64: 4, 384, 320>}, {pipeline_mode = #tpu.pipeline_mode<synchronous>, transform_indices = @transform_4, window_bounds = array<i64: 1, 320>}, {pipeline_mode = #tpu.pipeline_mode<synchronous>, transform_indices = @transform_5, window_bounds = array<i64: 4, 320, 288>}, {pipeline_mode = #tpu.pipeline_mode<synchronous>, transform_indices = @transform_6, window_bounds = array<i64: 1, 288>}, {pipeline_mode = #tpu.pipeline_mode<synchronous>, transform_indices = @transform_7, window_bounds = array<i64: 4, 288, 128>}, {pipeline_mode = #tpu.pipeline_mode<synchronous>, transform_indices = @transform_8, window_bounds = array<i64: 1, 128>}, {transform_indices = @transform_9, window_bounds = array<i64: 16, 4096>}]} {
    %cst = arith.constant 0.000000e+00 : bf16
    %0 = vector.broadcast %cst : bf16 to vector<16x384xbf16>
    %c0 = arith.constant 0 : index
    %c0_0 = arith.constant 0 : index
    %1 = vector.load %arg11[%c0, %c0_0] : memref<96x384xbf16, #tpu.memory_space<vmem>>, vector<16x384xbf16>
    tpu.vector_store %arg11[%c0, %c0_0], %0 {strides = array<i32>} : memref<96x384xbf16, #tpu.memory_space<vmem>>, vector<16x384xbf16>,
    %c80 = arith.constant 80 : index
    %c0_1 = arith.constant 0 : index
    %2 = vector.load %arg11[%c80, %c0_1] : memref<96x384xbf16, #tpu.memory_space<vmem>>, vector<16x384xbf16>
    tpu.vector_store %arg11[%c80, %c0_1], %0 {strides = array<i32>} : memref<96x384xbf16, #tpu.memory_space<vmem>>, vector<16x384xbf16>,
    %cst_2 = arith.constant 0.000000e+00 : bf16
    %3 = vector.broadcast %cst_2 : bf16 to vector<16x320xbf16>
    %c0_3 = arith.constant 0 : index
    %c0_4 = arith.constant 0 : index
    %4 = vector.load %arg12[%c0_3, %c0_4] : memref<160x320xbf16, #tpu.memory_space<vmem>>, vector<16x320xbf16>
    tpu.vector_store %arg12[%c0_3, %c0_4], %3 {strides = array<i32>} : memref<160x320xbf16, #tpu.memory_space<vmem>>, vector<16x320xbf16>,
    %c144 = arith.constant 144 : index
    %c0_5 = arith.constant 0 : index
    %5 = vector.load %arg12[%c144, %c0_5] : memref<160x320xbf16, #tpu.memory_space<vmem>>, vector<16x320xbf16>
    tpu.vector_store %arg12[%c144, %c0_5], %3 {strides = array<i32>} : memref<160x320xbf16, #tpu.memory_space<vmem>>, vector<16x320xbf16>,
    %cst_6 = arith.constant 0.000000e+00 : bf16
    %6 = vector.broadcast %cst_6 : bf16 to vector<16x288xbf16>
    %c0_7 = arith.constant 0 : index
    %c0_8 = arith.constant 0 : index
    %7 = vector.load %arg13[%c0_7, %c0_8] : memref<288x288xbf16, #tpu.memory_space<vmem>>, vector<16x288xbf16>
    tpu.vector_store %arg13[%c0_7, %c0_8], %6 {strides = array<i32>} : memref<288x288xbf16, #tpu.memory_space<vmem>>, vector<16x288xbf16>,
    %c272 = arith.constant 272 : index
    %c0_9 = arith.constant 0 : index
    %8 = vector.load %arg13[%c272, %c0_9] : memref<288x288xbf16, #tpu.memory_space<vmem>>, vector<16x288xbf16>
    tpu.vector_store %arg13[%c272, %c0_9], %6 {strides = array<i32>} : memref<288x288xbf16, #tpu.memory_space<vmem>>, vector<16x288xbf16>,
    %c0_10 = arith.constant 0 : index
    %c0_11 = arith.constant 0 : index
    %9 = vector.load %arg1[%c0_10, %c0_11] : memref<16x16xf32, #tpu.memory_space<vmem>>, vector<16x16xf32>
    %10 = arith.truncf %9 : vector<16x16xf32> to vector<16x16xbf16>
    %c0_12 = arith.constant 0 : index
    %c0_13 = arith.constant 0 : index
    %11 = vector.load %arg2[%c0_12, %c0_13] : memref<16x1536xbf16, #tpu.memory_space<vmem>>, vector<16x1536xbf16>
    %cst_14 = arith.constant dense<0.000000e+00> : vector<16x1536xf32>
    %12 = tpu.matmul %10, %11, %cst_14 {dimension_numbers = #tpu.dot_dimension_numbers<[1], [0], [0], [1], [0, 0, 1, 1], [], []>} : vector<16x16xbf16>, vector<16x1536xbf16>, vector<16x1536xf32> -> vector<16x1536xf32>
    %c0_15 = arith.constant 0 : index
    %c0_16 = arith.constant 0 : index
    %13 = vector.load %arg3[%c0_15, %c0_16] : memref<1x1536xf32, #tpu.memory_space<vmem>>, vector<1x1536xf32>
    %14 = vector.broadcast %13 : vector<1x1536xf32> to vector<16x1536xf32>
    %15 = arith.addf %12, %14 : vector<16x1536xf32>
    %16 = vector.extract_strided_slice %15 {offsets = [0, 0], sizes = [16, 384], strides = [1, 1]} : vector<16x1536xf32> to vector<16x384xf32>
    %cst_17 = arith.constant 0.000000e+00 : f32
    %17 = vector.broadcast %cst_17 : f32 to vector<16x384xf32>
    %18 = arith.maximumf %16, %17 : vector<16x384xf32>
    %19 = arith.truncf %18 : vector<16x384xf32> to vector<16x384xbf16>
    %c16 = arith.constant 16 : index
    %c0_18 = arith.constant 0 : index
    %20 = vector.load %arg11[%c16, %c0_18] : memref<96x384xbf16, #tpu.memory_space<vmem>>, vector<16x384xbf16>
    tpu.vector_store %arg11[%c16, %c0_18], %19 {strides = array<i32>} : memref<96x384xbf16, #tpu.memory_space<vmem>>, vector<16x384xbf16>,
    %21 = vector.extract_strided_slice %15 {offsets = [0, 384], sizes = [16, 384], strides = [1, 1]} : vector<16x1536xf32> to vector<16x384xf32>
    %cst_19 = arith.constant 0.000000e+00 : f32
    %22 = vector.broadcast %cst_19 : f32 to vector<16x384xf32>
    %23 = arith.maximumf %21, %22 : vector<16x384xf32>
    %24 = arith.truncf %23 : vector<16x384xf32> to vector<16x384xbf16>
    %c32 = arith.constant 32 : index
    %c0_20 = arith.constant 0 : index
    %25 = vector.load %arg11[%c32, %c0_20] : memref<96x384xbf16, #tpu.memory_space<vmem>>, vector<16x384xbf16>
    tpu.vector_store %arg11[%c32, %c0_20], %24 {strides = array<i32>} : memref<96x384xbf16, #tpu.memory_space<vmem>>, vector<16x384xbf16>,
    %26 = vector.extract_strided_slice %15 {offsets = [0, 768], sizes = [16, 384], strides = [1, 1]} : vector<16x1536xf32> to vector<16x384xf32>
    %cst_21 = arith.constant 0.000000e+00 : f32
    %27 = vector.broadcast %cst_21 : f32 to vector<16x384xf32>
    %28 = arith.maximumf %26, %27 : vector<16x384xf32>
    %29 = arith.truncf %28 : vector<16x384xf32> to vector<16x384xbf16>
    %c48 = arith.constant 48 : index
    %c0_22 = arith.constant 0 : index
    %30 = vector.load %arg11[%c48, %c0_22] : memref<96x384xbf16, #tpu.memory_space<vmem>>, vector<16x384xbf16>
    tpu.vector_store %arg11[%c48, %c0_22], %29 {strides = array<i32>} : memref<96x384xbf16, #tpu.memory_space<vmem>>, vector<16x384xbf16>,
    %31 = vector.extract_strided_slice %15 {offsets = [0, 1152], sizes = [16, 384], strides = [1, 1]} : vector<16x1536xf32> to vector<16x384xf32>
    %cst_23 = arith.constant 0.000000e+00 : f32
    %32 = vector.broadcast %cst_23 : f32 to vector<16x384xf32>
    %33 = arith.maximumf %31, %32 : vector<16x384xf32>
    %34 = arith.truncf %33 : vector<16x384xf32> to vector<16x384xbf16>
    %c64 = arith.constant 64 : index
    %c0_24 = arith.constant 0 : index
    %35 = vector.load %arg11[%c64, %c0_24] : memref<96x384xbf16, #tpu.memory_space<vmem>>, vector<16x384xbf16>
    tpu.vector_store %arg11[%c64, %c0_24], %34 {strides = array<i32>} : memref<96x384xbf16, #tpu.memory_space<vmem>>, vector<16x384xbf16>,
    %c0_25 = arith.constant 0 : index
    %c0_26 = arith.constant 0 : index
    %36 = vector.load %arg5[%c0_25, %c0_26] : memref<1x320xf32, #tpu.memory_space<vmem>>, vector<1x320xf32>
    %c0_27 = arith.constant 0 : index
    %c0_28 = arith.constant 0 : index
    %37 = vector.load %arg11[%c0_27, %c0_28] : memref<96x384xbf16, #tpu.memory_space<vmem>>, vector<64x384xbf16>
    %c16_29 = arith.constant 16 : index
    %c0_30 = arith.constant 0 : index
    %38 = vector.load %arg11[%c16_29, %c0_30] : memref<96x384xbf16, #tpu.memory_space<vmem>>, vector<64x384xbf16>
    %c0_31 = arith.constant 0 : index
    %c0_32 = arith.constant 0 : index
    %c0_33 = arith.constant 0 : index
    %39 = vector.load %arg4[%c0_31, %c0_32, %c0_33] : memref<4x384x320xbf16, #tpu.memory_space<vmem>>, vector<1x384x320xbf16>
    %40 = vector.shape_cast %39 : vector<1x384x320xbf16> to vector<384x320xbf16>
    %cst_34 = arith.constant dense<0.000000e+00> : vector<64x320xf32>
    %41 = tpu.matmul %37, %40, %cst_34 {dimension_numbers = #tpu.dot_dimension_numbers<[1], [0], [0], [1], [0, 0, 1, 1], [], []>} : vector<64x384xbf16>, vector<384x320xbf16>, vector<64x320xf32> -> vector<64x320xf32>
    %c1 = arith.constant 1 : index
    %c0_35 = arith.constant 0 : index
    %c0_36 = arith.constant 0 : index
    %42 = vector.load %arg4[%c1, %c0_35, %c0_36] : memref<4x384x320xbf16, #tpu.memory_space<vmem>>, vector<1x384x320xbf16>
    %43 = vector.shape_cast %42 : vector<1x384x320xbf16> to vector<384x320xbf16>
    %cst_37 = arith.constant dense<0.000000e+00> : vector<64x320xf32>
    %44 = tpu.matmul %38, %43, %cst_37 {dimension_numbers = #tpu.dot_dimension_numbers<[1], [0], [0], [1], [0, 0, 1, 1], [], []>} : vector<64x384xbf16>, vector<384x320xbf16>, vector<64x320xf32> -> vector<64x320xf32>
    %45 = arith.addf %41, %44 : vector<64x320xf32>
    %46 = vector.broadcast %36 : vector<1x320xf32> to vector<64x320xf32>
    %47 = arith.addf %45, %46 : vector<64x320xf32>
    %cst_38 = arith.constant 0.000000e+00 : f32
    %48 = vector.broadcast %cst_38 : f32 to vector<64x320xf32>
    %49 = arith.maximumf %47, %48 : vector<64x320xf32>
    %50 = arith.truncf %49 : vector<64x320xf32> to vector<64x320xbf16>
    %51 = vector.extract_strided_slice %50 {offsets = [0, 0], sizes = [16, 320], strides = [1, 1]} : vector<64x320xbf16> to vector<16x320xbf16>
    %c16_39 = arith.constant 16 : index
    %c0_40 = arith.constant 0 : index
    %52 = vector.load %arg12[%c16_39, %c0_40] : memref<160x320xbf16, #tpu.memory_space<vmem>>, vector<16x320xbf16>
    tpu.vector_store %arg12[%c16_39, %c0_40], %51 {strides = array<i32>} : memref<160x320xbf16, #tpu.memory_space<vmem>>, vector<16x320xbf16>,
    %53 = vector.extract_strided_slice %50 {offsets = [16, 0], sizes = [16, 320], strides = [1, 1]} : vector<64x320xbf16> to vector<16x320xbf16>
    %c48_41 = arith.constant 48 : index
    %c0_42 = arith.constant 0 : index
    %54 = vector.load %arg12[%c48_41, %c0_42] : memref<160x320xbf16, #tpu.memory_space<vmem>>, vector<16x320xbf16>
    tpu.vector_store %arg12[%c48_41, %c0_42], %53 {strides = array<i32>} : memref<160x320xbf16, #tpu.memory_space<vmem>>, vector<16x320xbf16>,
    %55 = vector.extract_strided_slice %50 {offsets = [32, 0], sizes = [16, 320], strides = [1, 1]} : vector<64x320xbf16> to vector<16x320xbf16>
    %c80_43 = arith.constant 80 : index
    %c0_44 = arith.constant 0 : index
    %56 = vector.load %arg12[%c80_43, %c0_44] : memref<160x320xbf16, #tpu.memory_space<vmem>>, vector<16x320xbf16>
    tpu.vector_store %arg12[%c80_43, %c0_44], %55 {strides = array<i32>} : memref<160x320xbf16, #tpu.memory_space<vmem>>, vector<16x320xbf16>,
    %57 = vector.extract_strided_slice %50 {offsets = [48, 0], sizes = [16, 320], strides = [1, 1]} : vector<64x320xbf16> to vector<16x320xbf16>
    %c112 = arith.constant 112 : index
    %c0_45 = arith.constant 0 : index
    %58 = vector.load %arg12[%c112, %c0_45] : memref<160x320xbf16, #tpu.memory_space<vmem>>, vector<16x320xbf16>
    tpu.vector_store %arg12[%c112, %c0_45], %57 {strides = array<i32>} : memref<160x320xbf16, #tpu.memory_space<vmem>>, vector<16x320xbf16>,
    %c16_46 = arith.constant 16 : index
    %c0_47 = arith.constant 0 : index
    %59 = vector.load %arg11[%c16_46, %c0_47] : memref<96x384xbf16, #tpu.memory_space<vmem>>, vector<64x384xbf16>
    %c32_48 = arith.constant 32 : index
    %c0_49 = arith.constant 0 : index
    %60 = vector.load %arg11[%c32_48, %c0_49] : memref<96x384xbf16, #tpu.memory_space<vmem>>, vector<64x384xbf16>
    %c2 = arith.constant 2 : index
    %c0_50 = arith.constant 0 : index
    %c0_51 = arith.constant 0 : index
    %61 = vector.load %arg4[%c2, %c0_50, %c0_51] : memref<4x384x320xbf16, #tpu.memory_space<vmem>>, vector<1x384x320xbf16>
    %62 = vector.shape_cast %61 : vector<1x384x320xbf16> to vector<384x320xbf16>
    %cst_52 = arith.constant dense<0.000000e+00> : vector<64x320xf32>
    %63 = tpu.matmul %59, %62, %cst_52 {dimension_numbers = #tpu.dot_dimension_numbers<[1], [0], [0], [1], [0, 0, 1, 1], [], []>} : vector<64x384xbf16>, vector<384x320xbf16>, vector<64x320xf32> -> vector<64x320xf32>
    %c3 = arith.constant 3 : index
    %c0_53 = arith.constant 0 : index
    %c0_54 = arith.constant 0 : index
    %64 = vector.load %arg4[%c3, %c0_53, %c0_54] : memref<4x384x320xbf16, #tpu.memory_space<vmem>>, vector<1x384x320xbf16>
    %65 = vector.shape_cast %64 : vector<1x384x320xbf16> to vector<384x320xbf16>
    %cst_55 = arith.constant dense<0.000000e+00> : vector<64x320xf32>
    %66 = tpu.matmul %60, %65, %cst_55 {dimension_numbers = #tpu.dot_dimension_numbers<[1], [0], [0], [1], [0, 0, 1, 1], [], []>} : vector<64x384xbf16>, vector<384x320xbf16>, vector<64x320xf32> -> vector<64x320xf32>
    %67 = arith.addf %63, %66 : vector<64x320xf32>
    %68 = vector.broadcast %36 : vector<1x320xf32> to vector<64x320xf32>
    %69 = arith.addf %67, %68 : vector<64x320xf32>
    %cst_56 = arith.constant 0.000000e+00 : f32
    %70 = vector.broadcast %cst_56 : f32 to vector<64x320xf32>
    %71 = arith.maximumf %69, %70 : vector<64x320xf32>
    %72 = arith.truncf %71 : vector<64x320xf32> to vector<64x320xbf16>
    %73 = vector.extract_strided_slice %72 {offsets = [0, 0], sizes = [16, 320], strides = [1, 1]} : vector<64x320xbf16> to vector<16x320xbf16>
    %c32_57 = arith.constant 32 : index
    %c0_58 = arith.constant 0 : index
    %74 = vector.load %arg12[%c32_57, %c0_58] : memref<160x320xbf16, #tpu.memory_space<vmem>>, vector<16x320xbf16>
    tpu.vector_store %arg12[%c32_57, %c0_58], %73 {strides = array<i32>} : memref<160x320xbf16, #tpu.memory_space<vmem>>, vector<16x320xbf16>,
    %75 = vector.extract_strided_slice %72 {offsets = [16, 0], sizes = [16, 320], strides = [1, 1]} : vector<64x320xbf16> to vector<16x320xbf16>
    %c64_59 = arith.constant 64 : index
    %c0_60 = arith.constant 0 : index
    %76 = vector.load %arg12[%c64_59, %c0_60] : memref<160x320xbf16, #tpu.memory_space<vmem>>, vector<16x320xbf16>
    tpu.vector_store %arg12[%c64_59, %c0_60], %75 {strides = array<i32>} : memref<160x320xbf16, #tpu.memory_space<vmem>>, vector<16x320xbf16>,
    %77 = vector.extract_strided_slice %72 {offsets = [32, 0], sizes = [16, 320], strides = [1, 1]} : vector<64x320xbf16> to vector<16x320xbf16>
    %c96 = arith.constant 96 : index
    %c0_61 = arith.constant 0 : index
    %78 = vector.load %arg12[%c96, %c0_61] : memref<160x320xbf16, #tpu.memory_space<vmem>>, vector<16x320xbf16>
    tpu.vector_store %arg12[%c96, %c0_61], %77 {strides = array<i32>} : memref<160x320xbf16, #tpu.memory_space<vmem>>, vector<16x320xbf16>,
    %79 = vector.extract_strided_slice %72 {offsets = [48, 0], sizes = [16, 320], strides = [1, 1]} : vector<64x320xbf16> to vector<16x320xbf16>
    %c128 = arith.constant 128 : index
    %c0_62 = arith.constant 0 : index
    %80 = vector.load %arg12[%c128, %c0_62] : memref<160x320xbf16, #tpu.memory_space<vmem>>, vector<16x320xbf16>
    tpu.vector_store %arg12[%c128, %c0_62], %79 {strides = array<i32>} : memref<160x320xbf16, #tpu.memory_space<vmem>>, vector<16x320xbf16>,
    %c0_63 = arith.constant 0 : index
    %c0_64 = arith.constant 0 : index
    %81 = vector.load %arg7[%c0_63, %c0_64] : memref<1x288xf32, #tpu.memory_space<vmem>>, vector<1x288xf32>
    %c0_65 = arith.constant 0 : index
    %c0_66 = arith.constant 0 : index
    %82 = vector.load %arg12[%c0_65, %c0_66] : memref<160x320xbf16, #tpu.memory_space<vmem>>, vector<128x320xbf16>
    %c16_67 = arith.constant 16 : index
    %c0_68 = arith.constant 0 : index
    %83 = vector.load %arg12[%c16_67, %c0_68] : memref<160x320xbf16, #tpu.memory_space<vmem>>, vector<128x320xbf16>
    %c0_69 = arith.constant 0 : index
    %c0_70 = arith.constant 0 : index
    %c0_71 = arith.constant 0 : index
    %84 = vector.load %arg6[%c0_69, %c0_70, %c0_71] : memref<4x320x288xbf16, #tpu.memory_space<vmem>>, vector<1x320x288xbf16>
    %85 = vector.shape_cast %84 : vector<1x320x288xbf16> to vector<320x288xbf16>
    %cst_72 = arith.constant dense<0.000000e+00> : vector<128x288xf32>
    %86 = tpu.matmul %82, %85, %cst_72 {dimension_numbers = #tpu.dot_dimension_numbers<[1], [0], [0], [1], [0, 0, 1, 1], [], []>} : vector<128x320xbf16>, vector<320x288xbf16>, vector<128x288xf32> -> vector<128x288xf32>
    %c1_73 = arith.constant 1 : index
    %c0_74 = arith.constant 0 : index
    %c0_75 = arith.constant 0 : index
    %87 = vector.load %arg6[%c1_73, %c0_74, %c0_75] : memref<4x320x288xbf16, #tpu.memory_space<vmem>>, vector<1x320x288xbf16>
    %88 = vector.shape_cast %87 : vector<1x320x288xbf16> to vector<320x288xbf16>
    %cst_76 = arith.constant dense<0.000000e+00> : vector<128x288xf32>
    %89 = tpu.matmul %83, %88, %cst_76 {dimension_numbers = #tpu.dot_dimension_numbers<[1], [0], [0], [1], [0, 0, 1, 1], [], []>} : vector<128x320xbf16>, vector<320x288xbf16>, vector<128x288xf32> -> vector<128x288xf32>
    %90 = arith.addf %86, %89 : vector<128x288xf32>
    %91 = vector.broadcast %81 : vector<1x288xf32> to vector<128x288xf32>
    %92 = arith.addf %90, %91 : vector<128x288xf32>
    %cst_77 = arith.constant 0.000000e+00 : f32
    %93 = vector.broadcast %cst_77 : f32 to vector<128x288xf32>
    %94 = arith.maximumf %92, %93 : vector<128x288xf32>
    %95 = arith.truncf %94 : vector<128x288xf32> to vector<128x288xbf16>
    %96 = vector.extract_strided_slice %95 {offsets = [0, 0], sizes = [16, 288], strides = [1, 1]} : vector<128x288xbf16> to vector<16x288xbf16>
    %c16_78 = arith.constant 16 : index
    %c0_79 = arith.constant 0 : index
    %97 = vector.load %arg13[%c16_78, %c0_79] : memref<288x288xbf16, #tpu.memory_space<vmem>>, vector<16x288xbf16>
    tpu.vector_store %arg13[%c16_78, %c0_79], %96 {strides = array<i32>} : memref<288x288xbf16, #tpu.memory_space<vmem>>, vector<16x288xbf16>,
    %98 = vector.extract_strided_slice %95 {offsets = [16, 0], sizes = [16, 288], strides = [1, 1]} : vector<128x288xbf16> to vector<16x288xbf16>
    %c48_80 = arith.constant 48 : index
    %c0_81 = arith.constant 0 : index
    %99 = vector.load %arg13[%c48_80, %c0_81] : memref<288x288xbf16, #tpu.memory_space<vmem>>, vector<16x288xbf16>
    tpu.vector_store %arg13[%c48_80, %c0_81], %98 {strides = array<i32>} : memref<288x288xbf16, #tpu.memory_space<vmem>>, vector<16x288xbf16>,
    %100 = vector.extract_strided_slice %95 {offsets = [32, 0], sizes = [16, 288], strides = [1, 1]} : vector<128x288xbf16> to vector<16x288xbf16>
    %c80_82 = arith.constant 80 : index
    %c0_83 = arith.constant 0 : index
    %101 = vector.load %arg13[%c80_82, %c0_83] : memref<288x288xbf16, #tpu.memory_space<vmem>>, vector<16x288xbf16>
    tpu.vector_store %arg13[%c80_82, %c0_83], %100 {strides = array<i32>} : memref<288x288xbf16, #tpu.memory_space<vmem>>, vector<16x288xbf16>,
    %102 = vector.extract_strided_slice %95 {offsets = [48, 0], sizes = [16, 288], strides = [1, 1]} : vector<128x288xbf16> to vector<16x288xbf16>
    %c112_84 = arith.constant 112 : index
    %c0_85 = arith.constant 0 : index
    %103 = vector.load %arg13[%c112_84, %c0_85] : memref<288x288xbf16, #tpu.memory_space<vmem>>, vector<16x288xbf16>
    tpu.vector_store %arg13[%c112_84, %c0_85], %102 {strides = array<i32>} : memref<288x288xbf16, #tpu.memory_space<vmem>>, vector<16x288xbf16>,
    %104 = vector.extract_strided_slice %95 {offsets = [64, 0], sizes = [16, 288], strides = [1, 1]} : vector<128x288xbf16> to vector<16x288xbf16>
    %c144_86 = arith.constant 144 : index
    %c0_87 = arith.constant 0 : index
    %105 = vector.load %arg13[%c144_86, %c0_87] : memref<288x288xbf16, #tpu.memory_space<vmem>>, vector<16x288xbf16>
    tpu.vector_store %arg13[%c144_86, %c0_87], %104 {strides = array<i32>} : memref<288x288xbf16, #tpu.memory_space<vmem>>, vector<16x288xbf16>,
    %106 = vector.extract_strided_slice %95 {offsets = [80, 0], sizes = [16, 288], strides = [1, 1]} : vector<128x288xbf16> to vector<16x288xbf16>
    %c176 = arith.constant 176 : index
    %c0_88 = arith.constant 0 : index
    %107 = vector.load %arg13[%c176, %c0_88] : memref<288x288xbf16, #tpu.memory_space<vmem>>, vector<16x288xbf16>
    tpu.vector_store %arg13[%c176, %c0_88], %106 {strides = array<i32>} : memref<288x288xbf16, #tpu.memory_space<vmem>>, vector<16x288xbf16>,
    %108 = vector.extract_strided_slice %95 {offsets = [96, 0], sizes = [16, 288], strides = [1, 1]} : vector<128x288xbf16> to vector<16x288xbf16>
    %c208 = arith.constant 208 : index
    %c0_89 = arith.constant 0 : index
    %109 = vector.load %arg13[%c208, %c0_89] : memref<288x288xbf16, #tpu.memory_space<vmem>>, vector<16x288xbf16>
    tpu.vector_store %arg13[%c208, %c0_89], %108 {strides = array<i32>} : memref<288x288xbf16, #tpu.memory_space<vmem>>, vector<16x288xbf16>,
    %110 = vector.extract_strided_slice %95 {offsets = [112, 0], sizes = [16, 288], strides = [1, 1]} : vector<128x288xbf16> to vector<16x288xbf16>
    %c240 = arith.constant 240 : index
    %c0_90 = arith.constant 0 : index
    %111 = vector.load %arg13[%c240, %c0_90] : memref<288x288xbf16, #tpu.memory_space<vmem>>, vector<16x288xbf16>
    tpu.vector_store %arg13[%c240, %c0_90], %110 {strides = array<i32>} : memref<288x288xbf16, #tpu.memory_space<vmem>>, vector<16x288xbf16>,
    %c16_91 = arith.constant 16 : index
    %c0_92 = arith.constant 0 : index
    %112 = vector.load %arg12[%c16_91, %c0_92] : memref<160x320xbf16, #tpu.memory_space<vmem>>, vector<128x320xbf16>
    %c32_93 = arith.constant 32 : index
    %c0_94 = arith.constant 0 : index
    %113 = vector.load %arg12[%c32_93, %c0_94] : memref<160x320xbf16, #tpu.memory_space<vmem>>, vector<128x320xbf16>
    %c2_95 = arith.constant 2 : index
    %c0_96 = arith.constant 0 : index
    %c0_97 = arith.constant 0 : index
    %114 = vector.load %arg6[%c2_95, %c0_96, %c0_97] : memref<4x320x288xbf16, #tpu.memory_space<vmem>>, vector<1x320x288xbf16>
    %115 = vector.shape_cast %114 : vector<1x320x288xbf16> to vector<320x288xbf16>
    %cst_98 = arith.constant dense<0.000000e+00> : vector<128x288xf32>
    %116 = tpu.matmul %112, %115, %cst_98 {dimension_numbers = #tpu.dot_dimension_numbers<[1], [0], [0], [1], [0, 0, 1, 1], [], []>} : vector<128x320xbf16>, vector<320x288xbf16>, vector<128x288xf32> -> vector<128x288xf32>
    %c3_99 = arith.constant 3 : index
    %c0_100 = arith.constant 0 : index
    %c0_101 = arith.constant 0 : index
    %117 = vector.load %arg6[%c3_99, %c0_100, %c0_101] : memref<4x320x288xbf16, #tpu.memory_space<vmem>>, vector<1x320x288xbf16>
    %118 = vector.shape_cast %117 : vector<1x320x288xbf16> to vector<320x288xbf16>
    %cst_102 = arith.constant dense<0.000000e+00> : vector<128x288xf32>
    %119 = tpu.matmul %113, %118, %cst_102 {dimension_numbers = #tpu.dot_dimension_numbers<[1], [0], [0], [1], [0, 0, 1, 1], [], []>} : vector<128x320xbf16>, vector<320x288xbf16>, vector<128x288xf32> -> vector<128x288xf32>
    %120 = arith.addf %116, %119 : vector<128x288xf32>
    %121 = vector.broadcast %81 : vector<1x288xf32> to vector<128x288xf32>
    %122 = arith.addf %120, %121 : vector<128x288xf32>
    %cst_103 = arith.constant 0.000000e+00 : f32
    %123 = vector.broadcast %cst_103 : f32 to vector<128x288xf32>
    %124 = arith.maximumf %122, %123 : vector<128x288xf32>
    %125 = arith.truncf %124 : vector<128x288xf32> to vector<128x288xbf16>
    %126 = vector.extract_strided_slice %125 {offsets = [0, 0], sizes = [16, 288], strides = [1, 1]} : vector<128x288xbf16> to vector<16x288xbf16>
    %c32_104 = arith.constant 32 : index
    %c0_105 = arith.constant 0 : index
    %127 = vector.load %arg13[%c32_104, %c0_105] : memref<288x288xbf16, #tpu.memory_space<vmem>>, vector<16x288xbf16>
    tpu.vector_store %arg13[%c32_104, %c0_105], %126 {strides = array<i32>} : memref<288x288xbf16, #tpu.memory_space<vmem>>, vector<16x288xbf16>,
    %128 = vector.extract_strided_slice %125 {offsets = [16, 0], sizes = [16, 288], strides = [1, 1]} : vector<128x288xbf16> to vector<16x288xbf16>
    %c64_106 = arith.constant 64 : index
    %c0_107 = arith.constant 0 : index
    %129 = vector.load %arg13[%c64_106, %c0_107] : memref<288x288xbf16, #tpu.memory_space<vmem>>, vector<16x288xbf16>
    tpu.vector_store %arg13[%c64_106, %c0_107], %128 {strides = array<i32>} : memref<288x288xbf16, #tpu.memory_space<vmem>>, vector<16x288xbf16>,
    %130 = vector.extract_strided_slice %125 {offsets = [32, 0], sizes = [16, 288], strides = [1, 1]} : vector<128x288xbf16> to vector<16x288xbf16>
    %c96_108 = arith.constant 96 : index
    %c0_109 = arith.constant 0 : index
    %131 = vector.load %arg13[%c96_108, %c0_109] : memref<288x288xbf16, #tpu.memory_space<vmem>>, vector<16x288xbf16>
    tpu.vector_store %arg13[%c96_108, %c0_109], %130 {strides = array<i32>} : memref<288x288xbf16, #tpu.memory_space<vmem>>, vector<16x288xbf16>,
    %132 = vector.extract_strided_slice %125 {offsets = [48, 0], sizes = [16, 288], strides = [1, 1]} : vector<128x288xbf16> to vector<16x288xbf16>
    %c128_110 = arith.constant 128 : index
    %c0_111 = arith.constant 0 : index
    %133 = vector.load %arg13[%c128_110, %c0_111] : memref<288x288xbf16, #tpu.memory_space<vmem>>, vector<16x288xbf16>
    tpu.vector_store %arg13[%c128_110, %c0_111], %132 {strides = array<i32>} : memref<288x288xbf16, #tpu.memory_space<vmem>>, vector<16x288xbf16>,
    %134 = vector.extract_strided_slice %125 {offsets = [64, 0], sizes = [16, 288], strides = [1, 1]} : vector<128x288xbf16> to vector<16x288xbf16>
    %c160 = arith.constant 160 : index
    %c0_112 = arith.constant 0 : index
    %135 = vector.load %arg13[%c160, %c0_112] : memref<288x288xbf16, #tpu.memory_space<vmem>>, vector<16x288xbf16>
    tpu.vector_store %arg13[%c160, %c0_112], %134 {strides = array<i32>} : memref<288x288xbf16, #tpu.memory_space<vmem>>, vector<16x288xbf16>,
    %136 = vector.extract_strided_slice %125 {offsets = [80, 0], sizes = [16, 288], strides = [1, 1]} : vector<128x288xbf16> to vector<16x288xbf16>
    %c192 = arith.constant 192 : index
    %c0_113 = arith.constant 0 : index
    %137 = vector.load %arg13[%c192, %c0_113] : memref<288x288xbf16, #tpu.memory_space<vmem>>, vector<16x288xbf16>
    tpu.vector_store %arg13[%c192, %c0_113], %136 {strides = array<i32>} : memref<288x288xbf16, #tpu.memory_space<vmem>>, vector<16x288xbf16>,
    %138 = vector.extract_strided_slice %125 {offsets = [96, 0], sizes = [16, 288], strides = [1, 1]} : vector<128x288xbf16> to vector<16x288xbf16>
    %c224 = arith.constant 224 : index
    %c0_114 = arith.constant 0 : index
    %139 = vector.load %arg13[%c224, %c0_114] : memref<288x288xbf16, #tpu.memory_space<vmem>>, vector<16x288xbf16>
    tpu.vector_store %arg13[%c224, %c0_114], %138 {strides = array<i32>} : memref<288x288xbf16, #tpu.memory_space<vmem>>, vector<16x288xbf16>,
    %140 = vector.extract_strided_slice %125 {offsets = [112, 0], sizes = [16, 288], strides = [1, 1]} : vector<128x288xbf16> to vector<16x288xbf16>
    %c256 = arith.constant 256 : index
    %c0_115 = arith.constant 0 : index
    %141 = vector.load %arg13[%c256, %c0_115] : memref<288x288xbf16, #tpu.memory_space<vmem>>, vector<16x288xbf16>
    tpu.vector_store %arg13[%c256, %c0_115], %140 {strides = array<i32>} : memref<288x288xbf16, #tpu.memory_space<vmem>>, vector<16x288xbf16>,
    %c0_116 = arith.constant 0 : index
    %c0_117 = arith.constant 0 : index
    %142 = vector.load %arg9[%c0_116, %c0_117] : memref<1x128xf32, #tpu.memory_space<vmem>>, vector<1x128xf32>
    %c0_118 = arith.constant 0 : index
    %c0_119 = arith.constant 0 : index
    %143 = vector.load %arg13[%c0_118, %c0_119] : memref<288x288xbf16, #tpu.memory_space<vmem>>, vector<256x288xbf16>
    %c16_120 = arith.constant 16 : index
    %c0_121 = arith.constant 0 : index
    %144 = vector.load %arg13[%c16_120, %c0_121] : memref<288x288xbf16, #tpu.memory_space<vmem>>, vector<256x288xbf16>
    %c0_122 = arith.constant 0 : index
    %c0_123 = arith.constant 0 : index
    %c0_124 = arith.constant 0 : index
    %145 = vector.load %arg8[%c0_122, %c0_123, %c0_124] : memref<4x288x128xbf16, #tpu.memory_space<vmem>>, vector<1x288x128xbf16>
    %146 = vector.shape_cast %145 : vector<1x288x128xbf16> to vector<288x128xbf16>
    %cst_125 = arith.constant dense<0.000000e+00> : vector<256x128xf32>
    %147 = tpu.matmul %143, %146, %cst_125 {dimension_numbers = #tpu.dot_dimension_numbers<[1], [0], [0], [1], [0, 0, 1, 1], [], []>} : vector<256x288xbf16>, vector<288x128xbf16>, vector<256x128xf32> -> vector<256x128xf32>
    %c1_126 = arith.constant 1 : index
    %c0_127 = arith.constant 0 : index
    %c0_128 = arith.constant 0 : index
    %148 = vector.load %arg8[%c1_126, %c0_127, %c0_128] : memref<4x288x128xbf16, #tpu.memory_space<vmem>>, vector<1x288x128xbf16>
    %149 = vector.shape_cast %148 : vector<1x288x128xbf16> to vector<288x128xbf16>
    %cst_129 = arith.constant dense<0.000000e+00> : vector<256x128xf32>
    %150 = tpu.matmul %144, %149, %cst_129 {dimension_numbers = #tpu.dot_dimension_numbers<[1], [0], [0], [1], [0, 0, 1, 1], [], []>} : vector<256x288xbf16>, vector<288x128xbf16>, vector<256x128xf32> -> vector<256x128xf32>
    %151 = arith.addf %147, %150 : vector<256x128xf32>
    %152 = vector.broadcast %142 : vector<1x128xf32> to vector<256x128xf32>
    %153 = arith.addf %151, %152 : vector<256x128xf32>
    %cst_130 = arith.constant 0.000000e+00 : f32
    %154 = vector.broadcast %cst_130 : f32 to vector<256x128xf32>
    %155 = arith.subf %154, %153 : vector<256x128xf32>
    %156 = math.exp %155 : vector<256x128xf32>
    %cst_131 = arith.constant 1.000000e+00 : f32
    %157 = vector.broadcast %cst_131 : f32 to vector<256x128xf32>
    %158 = arith.addf %157, %156 : vector<256x128xf32>
    %159 = tpu.reciprocal %158 {approx = true} : vector<256x128xf32> -> vector<256x128xf32>
    %160 = vector.extract_strided_slice %159 {offsets = [0, 0], sizes = [16, 128], strides = [1, 1]} : vector<256x128xf32> to vector<16x128xf32>
    %c0_132 = arith.constant 0 : index
    %c0_133 = arith.constant 0 : index
    %161 = vector.load %arg10[%c0_132, %c0_133] : memref<16x4096xf32, #tpu.memory_space<vmem>>, vector<16x128xf32>
    tpu.vector_store %arg10[%c0_132, %c0_133], %160 {strides = array<i32>} : memref<16x4096xf32, #tpu.memory_space<vmem>>, vector<16x128xf32>,
    %162 = vector.extract_strided_slice %159 {offsets = [16, 0], sizes = [16, 128], strides = [1, 1]} : vector<256x128xf32> to vector<16x128xf32>
    %c0_134 = arith.constant 0 : index
    %c256_135 = arith.constant 256 : index
    %163 = vector.load %arg10[%c0_134, %c256_135] : memref<16x4096xf32, #tpu.memory_space<vmem>>, vector<16x128xf32>
    tpu.vector_store %arg10[%c0_134, %c256_135], %162 {strides = array<i32>} : memref<16x4096xf32, #tpu.memory_space<vmem>>, vector<16x128xf32>,
    %164 = vector.extract_strided_slice %159 {offsets = [32, 0], sizes = [16, 128], strides = [1, 1]} : vector<256x128xf32> to vector<16x128xf32>
    %c0_136 = arith.constant 0 : index
    %c512 = arith.constant 512 : index
    %165 = vector.load %arg10[%c0_136, %c512] : memref<16x4096xf32, #tpu.memory_space<vmem>>, vector<16x128xf32>
    tpu.vector_store %arg10[%c0_136, %c512], %164 {strides = array<i32>} : memref<16x4096xf32, #tpu.memory_space<vmem>>, vector<16x128xf32>,
    %166 = vector.extract_strided_slice %159 {offsets = [48, 0], sizes = [16, 128], strides = [1, 1]} : vector<256x128xf32> to vector<16x128xf32>
    %c0_137 = arith.constant 0 : index
    %c768 = arith.constant 768 : index
    %167 = vector.load %arg10[%c0_137, %c768] : memref<16x4096xf32, #tpu.memory_space<vmem>>, vector<16x128xf32>
    tpu.vector_store %arg10[%c0_137, %c768], %166 {strides = array<i32>} : memref<16x4096xf32, #tpu.memory_space<vmem>>, vector<16x128xf32>,
    %168 = vector.extract_strided_slice %159 {offsets = [64, 0], sizes = [16, 128], strides = [1, 1]} : vector<256x128xf32> to vector<16x128xf32>
    %c0_138 = arith.constant 0 : index
    %c1024 = arith.constant 1024 : index
    %169 = vector.load %arg10[%c0_138, %c1024] : memref<16x4096xf32, #tpu.memory_space<vmem>>, vector<16x128xf32>
    tpu.vector_store %arg10[%c0_138, %c1024], %168 {strides = array<i32>} : memref<16x4096xf32, #tpu.memory_space<vmem>>, vector<16x128xf32>,
    %170 = vector.extract_strided_slice %159 {offsets = [80, 0], sizes = [16, 128], strides = [1, 1]} : vector<256x128xf32> to vector<16x128xf32>
    %c0_139 = arith.constant 0 : index
    %c1280 = arith.constant 1280 : index
    %171 = vector.load %arg10[%c0_139, %c1280] : memref<16x4096xf32, #tpu.memory_space<vmem>>, vector<16x128xf32>
    tpu.vector_store %arg10[%c0_139, %c1280], %170 {strides = array<i32>} : memref<16x4096xf32, #tpu.memory_space<vmem>>, vector<16x128xf32>,
    %172 = vector.extract_strided_slice %159 {offsets = [96, 0], sizes = [16, 128], strides = [1, 1]} : vector<256x128xf32> to vector<16x128xf32>
    %c0_140 = arith.constant 0 : index
    %c1536 = arith.constant 1536 : index
    %173 = vector.load %arg10[%c0_140, %c1536] : memref<16x4096xf32, #tpu.memory_space<vmem>>, vector<16x128xf32>
    tpu.vector_store %arg10[%c0_140, %c1536], %172 {strides = array<i32>} : memref<16x4096xf32, #tpu.memory_space<vmem>>, vector<16x128xf32>,
    %174 = vector.extract_strided_slice %159 {offsets = [112, 0], sizes = [16, 128], strides = [1, 1]} : vector<256x128xf32> to vector<16x128xf32>
    %c0_141 = arith.constant 0 : index
    %c1792 = arith.constant 1792 : index
    %175 = vector.load %arg10[%c0_141, %c1792] : memref<16x4096xf32, #tpu.memory_space<vmem>>, vector<16x128xf32>
    tpu.vector_store %arg10[%c0_141, %c1792], %174 {strides = array<i32>} : memref<16x4096xf32, #tpu.memory_space<vmem>>, vector<16x128xf32>,
    %176 = vector.extract_strided_slice %159 {offsets = [128, 0], sizes = [16, 128], strides = [1, 1]} : vector<256x128xf32> to vector<16x128xf32>
    %c0_142 = arith.constant 0 : index
    %c2048 = arith.constant 2048 : index
    %177 = vector.load %arg10[%c0_142, %c2048] : memref<16x4096xf32, #tpu.memory_space<vmem>>, vector<16x128xf32>
    tpu.vector_store %arg10[%c0_142, %c2048], %176 {strides = array<i32>} : memref<16x4096xf32, #tpu.memory_space<vmem>>, vector<16x128xf32>,
    %178 = vector.extract_strided_slice %159 {offsets = [144, 0], sizes = [16, 128], strides = [1, 1]} : vector<256x128xf32> to vector<16x128xf32>
    %c0_143 = arith.constant 0 : index
    %c2304 = arith.constant 2304 : index
    %179 = vector.load %arg10[%c0_143, %c2304] : memref<16x4096xf32, #tpu.memory_space<vmem>>, vector<16x128xf32>
    tpu.vector_store %arg10[%c0_143, %c2304], %178 {strides = array<i32>} : memref<16x4096xf32, #tpu.memory_space<vmem>>, vector<16x128xf32>,
    %180 = vector.extract_strided_slice %159 {offsets = [160, 0], sizes = [16, 128], strides = [1, 1]} : vector<256x128xf32> to vector<16x128xf32>
    %c0_144 = arith.constant 0 : index
    %c2560 = arith.constant 2560 : index
    %181 = vector.load %arg10[%c0_144, %c2560] : memref<16x4096xf32, #tpu.memory_space<vmem>>, vector<16x128xf32>
    tpu.vector_store %arg10[%c0_144, %c2560], %180 {strides = array<i32>} : memref<16x4096xf32, #tpu.memory_space<vmem>>, vector<16x128xf32>,
    %182 = vector.extract_strided_slice %159 {offsets = [176, 0], sizes = [16, 128], strides = [1, 1]} : vector<256x128xf32> to vector<16x128xf32>
    %c0_145 = arith.constant 0 : index
    %c2816 = arith.constant 2816 : index
    %183 = vector.load %arg10[%c0_145, %c2816] : memref<16x4096xf32, #tpu.memory_space<vmem>>, vector<16x128xf32>
    tpu.vector_store %arg10[%c0_145, %c2816], %182 {strides = array<i32>} : memref<16x4096xf32, #tpu.memory_space<vmem>>, vector<16x128xf32>,
    %184 = vector.extract_strided_slice %159 {offsets = [192, 0], sizes = [16, 128], strides = [1, 1]} : vector<256x128xf32> to vector<16x128xf32>
    %c0_146 = arith.constant 0 : index
    %c3072 = arith.constant 3072 : index
    %185 = vector.load %arg10[%c0_146, %c3072] : memref<16x4096xf32, #tpu.memory_space<vmem>>, vector<16x128xf32>
    tpu.vector_store %arg10[%c0_146, %c3072], %184 {strides = array<i32>} : memref<16x4096xf32, #tpu.memory_space<vmem>>, vector<16x128xf32>,
    %186 = vector.extract_strided_slice %159 {offsets = [208, 0], sizes = [16, 128], strides = [1, 1]} : vector<256x128xf32> to vector<16x128xf32>
    %c0_147 = arith.constant 0 : index
    %c3328 = arith.constant 3328 : index
    %187 = vector.load %arg10[%c0_147, %c3328] : memref<16x4096xf32, #tpu.memory_space<vmem>>, vector<16x128xf32>
    tpu.vector_store %arg10[%c0_147, %c3328], %186 {strides = array<i32>} : memref<16x4096xf32, #tpu.memory_space<vmem>>, vector<16x128xf32>,
    %188 = vector.extract_strided_slice %159 {offsets = [224, 0], sizes = [16, 128], strides = [1, 1]} : vector<256x128xf32> to vector<16x128xf32>
    %c0_148 = arith.constant 0 : index
    %c3584 = arith.constant 3584 : index
    %189 = vector.load %arg10[%c0_148, %c3584] : memref<16x4096xf32, #tpu.memory_space<vmem>>, vector<16x128xf32>
    tpu.vector_store %arg10[%c0_148, %c3584], %188 {strides = array<i32>} : memref<16x4096xf32, #tpu.memory_space<vmem>>, vector<16x128xf32>,
    %190 = vector.extract_strided_slice %159 {offsets = [240, 0], sizes = [16, 128], strides = [1, 1]} : vector<256x128xf32> to vector<16x128xf32>
    %c0_149 = arith.constant 0 : index
    %c3840 = arith.constant 3840 : index
    %191 = vector.load %arg10[%c0_149, %c3840] : memref<16x4096xf32, #tpu.memory_space<vmem>>, vector<16x128xf32>
    tpu.vector_store %arg10[%c0_149, %c3840], %190 {strides = array<i32>} : memref<16x4096xf32, #tpu.memory_space<vmem>>, vector<16x128xf32>,
    %c16_150 = arith.constant 16 : index
    %c0_151 = arith.constant 0 : index
    %192 = vector.load %arg13[%c16_150, %c0_151] : memref<288x288xbf16, #tpu.memory_space<vmem>>, vector<256x288xbf16>
    %c32_152 = arith.constant 32 : index
    %c0_153 = arith.constant 0 : index
    %193 = vector.load %arg13[%c32_152, %c0_153] : memref<288x288xbf16, #tpu.memory_space<vmem>>, vector<256x288xbf16>
    %c2_154 = arith.constant 2 : index
    %c0_155 = arith.constant 0 : index
    %c0_156 = arith.constant 0 : index
    %194 = vector.load %arg8[%c2_154, %c0_155, %c0_156] : memref<4x288x128xbf16, #tpu.memory_space<vmem>>, vector<1x288x128xbf16>
    %195 = vector.shape_cast %194 : vector<1x288x128xbf16> to vector<288x128xbf16>
    %cst_157 = arith.constant dense<0.000000e+00> : vector<256x128xf32>
    %196 = tpu.matmul %192, %195, %cst_157 {dimension_numbers = #tpu.dot_dimension_numbers<[1], [0], [0], [1], [0, 0, 1, 1], [], []>} : vector<256x288xbf16>, vector<288x128xbf16>, vector<256x128xf32> -> vector<256x128xf32>
    %c3_158 = arith.constant 3 : index
    %c0_159 = arith.constant 0 : index
    %c0_160 = arith.constant 0 : index
    %197 = vector.load %arg8[%c3_158, %c0_159, %c0_160] : memref<4x288x128xbf16, #tpu.memory_space<vmem>>, vector<1x288x128xbf16>
    %198 = vector.shape_cast %197 : vector<1x288x128xbf16> to vector<288x128xbf16>
    %cst_161 = arith.constant dense<0.000000e+00> : vector<256x128xf32>
    %199 = tpu.matmul %193, %198, %cst_161 {dimension_numbers = #tpu.dot_dimension_numbers<[1], [0], [0], [1], [0, 0, 1, 1], [], []>} : vector<256x288xbf16>, vector<288x128xbf16>, vector<256x128xf32> -> vector<256x128xf32>
    %200 = arith.addf %196, %199 : vector<256x128xf32>
    %201 = vector.broadcast %142 : vector<1x128xf32> to vector<256x128xf32>
    %202 = arith.addf %200, %201 : vector<256x128xf32>
    %cst_162 = arith.constant 0.000000e+00 : f32
    %203 = vector.broadcast %cst_162 : f32 to vector<256x128xf32>
    %204 = arith.subf %203, %202 : vector<256x128xf32>
    %205 = math.exp %204 : vector<256x128xf32>
    %cst_163 = arith.constant 1.000000e+00 : f32
    %206 = vector.broadcast %cst_163 : f32 to vector<256x128xf32>
    %207 = arith.addf %206, %205 : vector<256x128xf32>
    %208 = tpu.reciprocal %207 {approx = true} : vector<256x128xf32> -> vector<256x128xf32>
    %209 = vector.extract_strided_slice %208 {offsets = [0, 0], sizes = [16, 128], strides = [1, 1]} : vector<256x128xf32> to vector<16x128xf32>
    %c0_164 = arith.constant 0 : index
    %c128_165 = arith.constant 128 : index
    %210 = vector.load %arg10[%c0_164, %c128_165] : memref<16x4096xf32, #tpu.memory_space<vmem>>, vector<16x128xf32>
    tpu.vector_store %arg10[%c0_164, %c128_165], %209 {strides = array<i32>} : memref<16x4096xf32, #tpu.memory_space<vmem>>, vector<16x128xf32>,
    %211 = vector.extract_strided_slice %208 {offsets = [16, 0], sizes = [16, 128], strides = [1, 1]} : vector<256x128xf32> to vector<16x128xf32>
    %c0_166 = arith.constant 0 : index
    %c384 = arith.constant 384 : index
    %212 = vector.load %arg10[%c0_166, %c384] : memref<16x4096xf32, #tpu.memory_space<vmem>>, vector<16x128xf32>
    tpu.vector_store %arg10[%c0_166, %c384], %211 {strides = array<i32>} : memref<16x4096xf32, #tpu.memory_space<vmem>>, vector<16x128xf32>,
    %213 = vector.extract_strided_slice %208 {offsets = [32, 0], sizes = [16, 128], strides = [1, 1]} : vector<256x128xf32> to vector<16x128xf32>
    %c0_167 = arith.constant 0 : index
    %c640 = arith.constant 640 : index
    %214 = vector.load %arg10[%c0_167, %c640] : memref<16x4096xf32, #tpu.memory_space<vmem>>, vector<16x128xf32>
    tpu.vector_store %arg10[%c0_167, %c640], %213 {strides = array<i32>} : memref<16x4096xf32, #tpu.memory_space<vmem>>, vector<16x128xf32>,
    %215 = vector.extract_strided_slice %208 {offsets = [48, 0], sizes = [16, 128], strides = [1, 1]} : vector<256x128xf32> to vector<16x128xf32>
    %c0_168 = arith.constant 0 : index
    %c896 = arith.constant 896 : index
    %216 = vector.load %arg10[%c0_168, %c896] : memref<16x4096xf32, #tpu.memory_space<vmem>>, vector<16x128xf32>
    tpu.vector_store %arg10[%c0_168, %c896], %215 {strides = array<i32>} : memref<16x4096xf32, #tpu.memory_space<vmem>>, vector<16x128xf32>,
    %217 = vector.extract_strided_slice %208 {offsets = [64, 0], sizes = [16, 128], strides = [1, 1]} : vector<256x128xf32> to vector<16x128xf32>
    %c0_169 = arith.constant 0 : index
    %c1152 = arith.constant 1152 : index
    %218 = vector.load %arg10[%c0_169, %c1152] : memref<16x4096xf32, #tpu.memory_space<vmem>>, vector<16x128xf32>
    tpu.vector_store %arg10[%c0_169, %c1152], %217 {strides = array<i32>} : memref<16x4096xf32, #tpu.memory_space<vmem>>, vector<16x128xf32>,
    %219 = vector.extract_strided_slice %208 {offsets = [80, 0], sizes = [16, 128], strides = [1, 1]} : vector<256x128xf32> to vector<16x128xf32>
    %c0_170 = arith.constant 0 : index
    %c1408 = arith.constant 1408 : index
    %220 = vector.load %arg10[%c0_170, %c1408] : memref<16x4096xf32, #tpu.memory_space<vmem>>, vector<16x128xf32>
    tpu.vector_store %arg10[%c0_170, %c1408], %219 {strides = array<i32>} : memref<16x4096xf32, #tpu.memory_space<vmem>>, vector<16x128xf32>,
    %221 = vector.extract_strided_slice %208 {offsets = [96, 0], sizes = [16, 128], strides = [1, 1]} : vector<256x128xf32> to vector<16x128xf32>
    %c0_171 = arith.constant 0 : index
    %c1664 = arith.constant 1664 : index
    %222 = vector.load %arg10[%c0_171, %c1664] : memref<16x4096xf32, #tpu.memory_space<vmem>>, vector<16x128xf32>
    tpu.vector_store %arg10[%c0_171, %c1664], %221 {strides = array<i32>} : memref<16x4096xf32, #tpu.memory_space<vmem>>, vector<16x128xf32>,
    %223 = vector.extract_strided_slice %208 {offsets = [112, 0], sizes = [16, 128], strides = [1, 1]} : vector<256x128xf32> to vector<16x128xf32>
    %c0_172 = arith.constant 0 : index
    %c1920 = arith.constant 1920 : index
    %224 = vector.load %arg10[%c0_172, %c1920] : memref<16x4096xf32, #tpu.memory_space<vmem>>, vector<16x128xf32>
    tpu.vector_store %arg10[%c0_172, %c1920], %223 {strides = array<i32>} : memref<16x4096xf32, #tpu.memory_space<vmem>>, vector<16x128xf32>,
    %225 = vector.extract_strided_slice %208 {offsets = [128, 0], sizes = [16, 128], strides = [1, 1]} : vector<256x128xf32> to vector<16x128xf32>
    %c0_173 = arith.constant 0 : index
    %c2176 = arith.constant 2176 : index
    %226 = vector.load %arg10[%c0_173, %c2176] : memref<16x4096xf32, #tpu.memory_space<vmem>>, vector<16x128xf32>
    tpu.vector_store %arg10[%c0_173, %c2176], %225 {strides = array<i32>} : memref<16x4096xf32, #tpu.memory_space<vmem>>, vector<16x128xf32>,
    %227 = vector.extract_strided_slice %208 {offsets = [144, 0], sizes = [16, 128], strides = [1, 1]} : vector<256x128xf32> to vector<16x128xf32>
    %c0_174 = arith.constant 0 : index
    %c2432 = arith.constant 2432 : index
    %228 = vector.load %arg10[%c0_174, %c2432] : memref<16x4096xf32, #tpu.memory_space<vmem>>, vector<16x128xf32>
    tpu.vector_store %arg10[%c0_174, %c2432], %227 {strides = array<i32>} : memref<16x4096xf32, #tpu.memory_space<vmem>>, vector<16x128xf32>,
    %229 = vector.extract_strided_slice %208 {offsets = [160, 0], sizes = [16, 128], strides = [1, 1]} : vector<256x128xf32> to vector<16x128xf32>
    %c0_175 = arith.constant 0 : index
    %c2688 = arith.constant 2688 : index
    %230 = vector.load %arg10[%c0_175, %c2688] : memref<16x4096xf32, #tpu.memory_space<vmem>>, vector<16x128xf32>
    tpu.vector_store %arg10[%c0_175, %c2688], %229 {strides = array<i32>} : memref<16x4096xf32, #tpu.memory_space<vmem>>, vector<16x128xf32>,
    %231 = vector.extract_strided_slice %208 {offsets = [176, 0], sizes = [16, 128], strides = [1, 1]} : vector<256x128xf32> to vector<16x128xf32>
    %c0_176 = arith.constant 0 : index
    %c2944 = arith.constant 2944 : index
    %232 = vector.load %arg10[%c0_176, %c2944] : memref<16x4096xf32, #tpu.memory_space<vmem>>, vector<16x128xf32>
    tpu.vector_store %arg10[%c0_176, %c2944], %231 {strides = array<i32>} : memref<16x4096xf32, #tpu.memory_space<vmem>>, vector<16x128xf32>,
    %233 = vector.extract_strided_slice %208 {offsets = [192, 0], sizes = [16, 128], strides = [1, 1]} : vector<256x128xf32> to vector<16x128xf32>
    %c0_177 = arith.constant 0 : index
    %c3200 = arith.constant 3200 : index
    %234 = vector.load %arg10[%c0_177, %c3200] : memref<16x4096xf32, #tpu.memory_space<vmem>>, vector<16x128xf32>
    tpu.vector_store %arg10[%c0_177, %c3200], %233 {strides = array<i32>} : memref<16x4096xf32, #tpu.memory_space<vmem>>, vector<16x128xf32>,
    %235 = vector.extract_strided_slice %208 {offsets = [208, 0], sizes = [16, 128], strides = [1, 1]} : vector<256x128xf32> to vector<16x128xf32>
    %c0_178 = arith.constant 0 : index
    %c3456 = arith.constant 3456 : index
    %236 = vector.load %arg10[%c0_178, %c3456] : memref<16x4096xf32, #tpu.memory_space<vmem>>, vector<16x128xf32>
    tpu.vector_store %arg10[%c0_178, %c3456], %235 {strides = array<i32>} : memref<16x4096xf32, #tpu.memory_space<vmem>>, vector<16x128xf32>,
    %237 = vector.extract_strided_slice %208 {offsets = [224, 0], sizes = [16, 128], strides = [1, 1]} : vector<256x128xf32> to vector<16x128xf32>
    %c0_179 = arith.constant 0 : index
    %c3712 = arith.constant 3712 : index
    %238 = vector.load %arg10[%c0_179, %c3712] : memref<16x4096xf32, #tpu.memory_space<vmem>>, vector<16x128xf32>
    tpu.vector_store %arg10[%c0_179, %c3712], %237 {strides = array<i32>} : memref<16x4096xf32, #tpu.memory_space<vmem>>, vector<16x128xf32>,
    %239 = vector.extract_strided_slice %208 {offsets = [240, 0], sizes = [16, 128], strides = [1, 1]} : vector<256x128xf32> to vector<16x128xf32>
    %c0_180 = arith.constant 0 : index
    %c3968 = arith.constant 3968 : index
    %240 = vector.load %arg10[%c0_180, %c3968] : memref<16x4096xf32, #tpu.memory_space<vmem>>, vector<16x128xf32>
    tpu.vector_store %arg10[%c0_180, %c3968], %239 {strides = array<i32>} : memref<16x4096xf32, #tpu.memory_space<vmem>>, vector<16x128xf32>,
    return
  }
  func.func @transform_0(%arg0: i32) -> (i32, i32) {
    %c0_i32 = arith.constant 0 : i32
    %c0_i32_0 = arith.constant 0 : i32
    return %arg0, %c0_i32 : i32, i32
  }
  func.func @transform_1(%arg0: i32) -> (i32, i32) {
    %c0_i32 = arith.constant 0 : i32
    %c0_i32_0 = arith.constant 0 : i32
    %c0_i32_1 = arith.constant 0 : i32
    return %c0_i32, %c0_i32_0 : i32, i32
  }
  func.func @transform_2(%arg0: i32) -> (i32, i32) {
    %c0_i32 = arith.constant 0 : i32
    %c0_i32_0 = arith.constant 0 : i32
    %c0_i32_1 = arith.constant 0 : i32
    return %c0_i32, %c0_i32_0 : i32, i32
  }
  func.func @transform_3(%arg0: i32) -> (i32, i32, i32) {
    %c0_i32 = arith.constant 0 : i32
    %c0_i32_0 = arith.constant 0 : i32
    %c0_i32_1 = arith.constant 0 : i32
    %c0_i32_2 = arith.constant 0 : i32
    return %c0_i32, %c0_i32_0, %c0_i32_1 : i32, i32, i32
  }
  func.func @transform_4(%arg0: i32) -> (i32, i32) {
    %c0_i32 = arith.constant 0 : i32
    %c0_i32_0 = arith.constant 0 : i32
    %c0_i32_1 = arith.constant 0 : i32
    return %c0_i32, %c0_i32_0 : i32, i32
  }
  func.func @transform_5(%arg0: i32) -> (i32, i32, i32) {
    %c0_i32 = arith.constant 0 : i32
    %c0_i32_0 = arith.constant 0 : i32
    %c0_i32_1 = arith.constant 0 : i32
    %c0_i32_2 = arith.constant 0 : i32
    return %c0_i32, %c0_i32_0, %c0_i32_1 : i32, i32, i32
  }
  func.func @transform_6(%arg0: i32) -> (i32, i32) {
    %c0_i32 = arith.constant 0 : i32
    %c0_i32_0 = arith.constant 0 : i32
    %c0_i32_1 = arith.constant 0 : i32
    return %c0_i32, %c0_i32_0 : i32, i32
  }
  func.func @transform_7(%arg0: i32) -> (i32, i32, i32) {
    %c0_i32 = arith.constant 0 : i32
    %c0_i32_0 = arith.constant 0 : i32
    %c0_i32_1 = arith.constant 0 : i32
    %c0_i32_2 = arith.constant 0 : i32
    return %c0_i32, %c0_i32_0, %c0_i32_1 : i32, i32, i32
  }
  func.func @transform_8(%arg0: i32) -> (i32, i32) {
    %c0_i32 = arith.constant 0 : i32
    %c0_i32_0 = arith.constant 0 : i32
    %c0_i32_1 = arith.constant 0 : i32
    return %c0_i32, %c0_i32_0 : i32, i32
  }
  func.func @transform_9(%arg0: i32) -> (i32, i32) {
    %c0_i32 = arith.constant 0 : i32
    %c0_i32_0 = arith.constant 0 : i32
    return %arg0, %c0_i32 : i32, i32
  }
}

</mosaic_0001>

<llo_original>
// kernel: dec_cnn_oscn_forward.1
$region0: #{dec_cnn_oscn_forward.1}
  #allocation0 [shape = 'u32[]', space=smem, size = 0x4, offset = 0x4, fixed_abs, tag = 'smem constant byte address 0x4 - core index']
  #allocation1 [shape = 'u32[72,128]{1,0:T(1,128)}', space=vmem, size = 0x9000, scoped, tag = 'internal scratch']
  #allocation2 [shape = 'bf16[96,384]{1,0:T(8,128)(2,1)}', space=vmem, size = 0x12000, scoped, tag = 'scratch operand']
  #allocation3 [shape = 'bf16[160,320]{1,0:T(8,128)(2,1)}', space=vmem, size = 0x1e000, scoped, tag = 'scratch operand']
  #allocation4 [shape = 'bf16[288,288]{1,0:T(8,128)(2,1)}', space=vmem, size = 0x36000, scoped, tag = 'scratch operand']
  %s0 = inlined_call_operand.vmem [shape: f32[16,16], index: 0, kind: input, shape index: {}]
  %s1 = inlined_call_operand.vmem [shape: bf16[16,1536], index: 1, kind: input, shape index: {}]
  %s2 = inlined_call_operand.vmem [shape: f32[1,1536], index: 2, kind: input, shape index: {}]
  %s3 = inlined_call_operand.vmem [shape: bf16[4,384,320], index: 3, kind: input, shape index: {}]
  %s4 = inlined_call_operand.vmem [shape: f32[1,320], index: 4, kind: input, shape index: {}]
  %s5 = inlined_call_operand.vmem [shape: bf16[4,320,288], index: 5, kind: input, shape index: {}]
  %s6 = inlined_call_operand.vmem [shape: f32[1,288], index: 6, kind: input, shape index: {}]
  %s7 = inlined_call_operand.vmem [shape: bf16[4,288,128], index: 7, kind: input, shape index: {}]
  %s8 = inlined_call_operand.vmem [shape: f32[1,128], index: 8, kind: input, shape index: {}]
  %s9 = inlined_call_operand.vmem [shape: f32[16,4096], index: 9, kind: output, shape index: {}]
  %s10 = sld [smem:[#allocation0]]
  $region46: #{dec_cnn_oscn_forward.1} parent=0
    _
  %s12 = ssub.s32 1, %s10
  %s13 = scalar_select 0, %s12, %s10
  // Predicated region
  $region2: #{dec_cnn_oscn_forward.1} parent=0 // pred_check
    _
  $region3: #{dec_cnn_oscn_forward.1} parent=0 // pred_check_branch
    %15 = sbr.rel (0) target = $region5
  $region4: #{dec_cnn_oscn_forward.1} parent=0 // pred_region
    _
  $region5: #{dec_cnn_oscn_forward.1} parent=0 // pred_fallthru
    _
  // Predicated region
  $region6: #{dec_cnn_oscn_forward.1} parent=0 // pred_check
    _
  $region7: #{dec_cnn_oscn_forward.1} parent=0 // pred_check_branch
    %17 = sbr.rel (0) target = $region9
  $region8: #{dec_cnn_oscn_forward.1} parent=0 // pred_region
    _
  $region9: #{dec_cnn_oscn_forward.1} parent=0 // pred_fallthru
    _
  // Predicated region
  $region10: #{dec_cnn_oscn_forward.1} parent=0 // pred_check
    _
  $region11: #{dec_cnn_oscn_forward.1} parent=0 // pred_check_branch
    %19 = sbr.rel (0) target = $region13
  $region12: #{dec_cnn_oscn_forward.1} parent=0 // pred_region
    _
  $region13: #{dec_cnn_oscn_forward.1} parent=0 // pred_fallthru
    _
  // Predicated region
  $region14: #{dec_cnn_oscn_forward.1} parent=0 // pred_check
    _
  $region15: #{dec_cnn_oscn_forward.1} parent=0 // pred_check_branch
    %21 = sbr.rel (0) target = $region17
  $region16: #{dec_cnn_oscn_forward.1} parent=0 // pred_region
    _
  $region17: #{dec_cnn_oscn_forward.1} parent=0 // pred_fallthru
    _
  // Predicated region
  $region18: #{dec_cnn_oscn_forward.1} parent=0 // pred_check
    _
  $region19: #{dec_cnn_oscn_forward.1} parent=0 // pred_check_branch
    %23 = sbr.rel (0) target = $region21
  $region20: #{dec_cnn_oscn_forward.1} parent=0 // pred_region
    _
  $region21: #{dec_cnn_oscn_forward.1} parent=0 // pred_fallthru
    _
  // Predicated region
  $region22: #{dec_cnn_oscn_forward.1} parent=0 // pred_check
    _
  $region23: #{dec_cnn_oscn_forward.1} parent=0 // pred_check_branch
    %25 = sbr.rel (0) target = $region25
  $region24: #{dec_cnn_oscn_forward.1} parent=0 // pred_region
    _
  $region25: #{dec_cnn_oscn_forward.1} parent=0 // pred_fallthru
    _
  // Predicated region
  $region26: #{dec_cnn_oscn_forward.1} parent=0 // pred_check
    _
  $region27: #{dec_cnn_oscn_forward.1} parent=0 // pred_check_branch
    %27 = sbr.rel (0) target = $region29
  $region28: #{dec_cnn_oscn_forward.1} parent=0 // pred_region
    _
  $region29: #{dec_cnn_oscn_forward.1} parent=0 // pred_fallthru
    _
  // Predicated region
  $region30: #{dec_cnn_oscn_forward.1} parent=0 // pred_check
    _
  $region31: #{dec_cnn_oscn_forward.1} parent=0 // pred_check_branch
    %29 = sbr.rel (0) target = $region33
  $region32: #{dec_cnn_oscn_forward.1} parent=0 // pred_region
    _
  $region33: #{dec_cnn_oscn_forward.1} parent=0 // pred_fallthru
    _
  // Predicated region
  $region34: #{dec_cnn_oscn_forward.1} parent=0 // pred_check
    _
  $region35: #{dec_cnn_oscn_forward.1} parent=0 // pred_check_branch
    %31 = sbr.rel (0) target = $region37
  $region36: #{dec_cnn_oscn_forward.1} parent=0 // pred_region
    _
  $region37: #{dec_cnn_oscn_forward.1} parent=0 // pred_fallthru
    _
  %33 = vst [vmem:[#allocation2] sm:$0xff] 0
  %34 = vst [vmem:[#allocation2 + $0x8] sm:$0xf] 0
  %35 = vst [vmem:[#allocation2 + $0xc] sm:$0xff] 0
  %36 = vst [vmem:[#allocation2 + $0x14] sm:$0xf] 0
  %37 = vst [vmem:[#allocation2 + $0x78] sm:$0xff] 0
  %38 = vst [vmem:[#allocation2 + $0x80] sm:$0xf] 0
  %39 = vst [vmem:[#allocation2 + $0x84] sm:$0xff] 0
  %40 = vst [vmem:[#allocation2 + $0x8c] sm:$0xf] 0
  %41 = vst [vmem:[#allocation3] sm:$0xff] 0
  %vm42 = vcmask 519168
  %43 = vst.msk [vmem:[#allocation3 + $0x8] sm:$0xf] %vm42, 0
  %44 = vst [vmem:[#allocation3 + $0xc] sm:$0xff] 0
  %45 = vst.msk [vmem:[#allocation3 + $0x14] sm:$0xf] %vm42, 0
  %46 = vst [vmem:[#allocation3 + $0xd8] sm:$0xff] 0
  %47 = vst.msk [vmem:[#allocation3 + $0xe0] sm:$0xf] %vm42, 0
  %48 = vst [vmem:[#allocation3 + $0xe4] sm:$0xff] 0
  %49 = vst.msk [vmem:[#allocation3 + $0xec] sm:$0xf] %vm42, 0
  %50 = vst [vmem:[#allocation4] sm:$0xff] 0
  %vm51 = vcmask 257024
  %52 = vst.msk [vmem:[#allocation4 + $0x8] sm:$0xf] %vm51, 0
  %53 = vst [vmem:[#allocation4 + $0xc] sm:$0xff] 0
  %54 = vst.msk [vmem:[#allocation4 + $0x14] sm:$0xf] %vm51, 0
  %55 = vst [vmem:[#allocation4 + $0x198] sm:$0xff] 0
  %56 = vst.msk [vmem:[#allocation4 + $0x1a0] sm:$0xf] %vm51, 0
  %57 = vst [vmem:[#allocation4 + $0x1a4] sm:$0xff] 0
  %58 = vst.msk [vmem:[#allocation4 + $0x1ac] sm:$0xf] %vm51, 0
  %v59 = vld [vmem:[%s0] sm:$0xff]
  %v60 = vld [vmem:[%s0 + $0x8] sm:$0xff]
  %v61 = vpack.c.bf16 %v60, %v59
  %v62 = vld [vmem:[%s1] sm:$0xff]
  %v63 = vld [vmem:[%s1 + $0x8] sm:$0xff]
  %v64 = vld [vmem:[%s1 + $0x10] sm:$0xff]
  %v65 = vld [vmem:[%s1 + $0x18] sm:$0xff]
  %v66 = vld [vmem:[%s1 + $0x20] sm:$0xff]
  %v67 = vld [vmem:[%s1 + $0x28] sm:$0xff]
  %v68 = vld [vmem:[%s1 + $0x30] sm:$0xff]
  %v69 = vld [vmem:[%s1 + $0x38] sm:$0xff]
  %v70 = vld [vmem:[%s1 + $0x40] sm:$0xff]
  %v71 = vld [vmem:[%s1 + $0x48] sm:$0xff]
  %v72 = vld [vmem:[%s1 + $0x50] sm:$0xff]
  %v73 = vld [vmem:[%s1 + $0x58] sm:$0xff]
  %v74 = vld [vmem:[%s2] sm:$0xff]
  %v75 = vld [vmem:[%s2 + $0x8] sm:$0xf]
  %v78 = vperm.slane %v74, 0
  %v79 = vperm.slane %v74, 1
  %v80 = vperm.slane %v74, 2
  %v81 = vperm.slane %v74, 3
  %v82 = vperm.slane %v74, 4
  %v83 = vperm.slane %v74, 5
  %v84 = vperm.slane %v74, 6
  %v85 = vperm.slane %v74, 7
  %v86 = vperm.slane %v75, 0
  %v87 = vperm.slane %v75, 1
  %v88 = vperm.slane %v75, 2
  %v89 = vperm.slane %v75, 3
  %v114 = vunpack.c.l.b16 %v62
  %v115 = vunpack.c.h.b16 %v62
  %v116 = vunpack.c.l.b16 %v63
  %v117 = vunpack.c.h.b16 %v63
  %v118 = vunpack.c.l.b16 %v64
  %v119 = vunpack.c.h.b16 %v64
  %v120 = vunpack.c.l.b16 %v65
  %v121 = vunpack.c.h.b16 %v65
  %v122 = vunpack.c.l.b16 %v66
  %v123 = vunpack.c.h.b16 %v66
  %v124 = vunpack.c.l.b16 %v67
  %v125 = vunpack.c.h.b16 %v67
  %v126 = vunpack.c.l.b16 %v68
  %v127 = vunpack.c.h.b16 %v68
  %v128 = vunpack.c.l.b16 %v69
  %v129 = vunpack.c.h.b16 %v69
  %v130 = vunpack.c.l.b16 %v70
  %v131 = vunpack.c.h.b16 %v70
  %v132 = vunpack.c.l.b16 %v71
  %v133 = vunpack.c.h.b16 %v71
  %v134 = vunpack.c.l.b16 %v72
  %v135 = vunpack.c.h.b16 %v72
  %v136 = vunpack.c.l.b16 %v73
  %v137 = vunpack.c.h.b16 %v73
  %v138 = vpack.c.b16 %v126, %v114
  %v139 = vpack.c.b16 %v127, %v115
  %v140 = vpack.c.b16 %v128, %v116
  %v141 = vpack.c.b16 %v129, %v117
  %v142 = vpack.c.b16 %v130, %v118
  %v143 = vpack.c.b16 %v131, %v119
  %v144 = vpack.c.b16 %v132, %v120
  %v145 = vpack.c.b16 %v133, %v121
  %v146 = vpack.c.b16 %v134, %v122
  %v147 = vpack.c.b16 %v135, %v123
  %v148 = vpack.c.b16 %v136, %v124
  %v149 = vpack.c.b16 %v137, %v125
  %vm162 = vcmask 130048
  %v164 = vsel %vm162, %v61, 0
  %166 = vmatpush.bf16.msra.mxu0 0
  %167 = vmatpush.bf16.msra.mxu0 0
  %168 = vmatpush.bf16.msra.mxu0 0
  %169 = vmatpush.bf16.msra.mxu0 0
  %170 = vmatpush.bf16.msra.mxu0 0
  %171 = vmatpush.bf16.msra.mxu0 0
  %172 = vmatpush.bf16.msra.mxu0 0
  %173 = vmatpush.bf16.msra.mxu0 %v138
  %174 = vmatmul.bf16.gmra.mxu0 %v164
  %v175 = vpop.f32.mrf.mxu0
  %v176 = vadd.f32 %v78, %v175
  %v177 = vpop.f32.mrf.mxu0
  %v178 = vadd.f32 %v78, %v177
  %179 = vdwg.mxu0
  %180 = vmatpush.bf16.msra.mxu0 0
  %181 = vmatpush.bf16.msra.mxu0 0
  %182 = vmatpush.bf16.msra.mxu0 0
  %183 = vmatpush.bf16.msra.mxu0 0
  %184 = vmatpush.bf16.msra.mxu0 0
  %185 = vmatpush.bf16.msra.mxu0 0
  %186 = vmatpush.bf16.msra.mxu0 0
  %187 = vmatpush.bf16.msra.mxu0 %v139
  %188 = vmatmul.bf16.gmra.mxu0 %v164
  %v189 = vpop.f32.mrf.mxu0
  %v190 = vadd.f32 %v79, %v189
  %v191 = vpop.f32.mrf.mxu0
  %v192 = vadd.f32 %v79, %v191
  %193 = vdwg.mxu0
  %194 = vmatpush.bf16.msra.mxu0 0
  %195 = vmatpush.bf16.msra.mxu0 0
  %196 = vmatpush.bf16.msra.mxu0 0
  %197 = vmatpush.bf16.msra.mxu0 0
  %198 = vmatpush.bf16.msra.mxu0 0
  %199 = vmatpush.bf16.msra.mxu0 0
  %200 = vmatpush.bf16.msra.mxu0 0
  %201 = vmatpush.bf16.msra.mxu0 %v140
  %202 = vmatmul.bf16.gmra.mxu0 %v164
  %v203 = vpop.f32.mrf.mxu0
  %v204 = vadd.f32 %v80, %v203
  %v205 = vpop.f32.mrf.mxu0
  %v206 = vadd.f32 %v80, %v205
  %207 = vdwg.mxu0
  %208 = vmatpush.bf16.msra.mxu0 0
  %209 = vmatpush.bf16.msra.mxu0 0
  %210 = vmatpush.bf16.msra.mxu0 0
  %211 = vmatpush.bf16.msra.mxu0 0
  %212 = vmatpush.bf16.msra.mxu0 0
  %213 = vmatpush.bf16.msra.mxu0 0
  %214 = vmatpush.bf16.msra.mxu0 0
  %215 = vmatpush.bf16.msra.mxu0 %v141
  %216 = vmatmul.bf16.gmra.mxu0 %v164
  %v217 = vpop.f32.mrf.mxu0
  %v218 = vadd.f32 %v81, %v217
  %v219 = vpop.f32.mrf.mxu0
  %v220 = vadd.f32 %v81, %v219
  %221 = vdwg.mxu0
  %222 = vmatpush.bf16.msra.mxu0 0
  %223 = vmatpush.bf16.msra.mxu0 0
  %224 = vmatpush.bf16.msra.mxu0 0
  %225 = vmatpush.bf16.msra.mxu0 0
  %226 = vmatpush.bf16.msra.mxu0 0
  %227 = vmatpush.bf16.msra.mxu0 0
  %228 = vmatpush.bf16.msra.mxu0 0
  %229 = vmatpush.bf16.msra.mxu0 %v142
  %230 = vmatmul.bf16.gmra.mxu0 %v164
  %v231 = vpop.f32.mrf.mxu0
  %v232 = vadd.f32 %v82, %v231
  %v233 = vpop.f32.mrf.mxu0
  %v234 = vadd.f32 %v82, %v233
  %235 = vdwg.mxu0
  %236 = vmatpush.bf16.msra.mxu0 0
  %237 = vmatpush.bf16.msra.mxu0 0
  %238 = vmatpush.bf16.msra.mxu0 0
  %239 = vmatpush.bf16.msra.mxu0 0
  %240 = vmatpush.bf16.msra.mxu0 0
  %241 = vmatpush.bf16.msra.mxu0 0
  %242 = vmatpush.bf16.msra.mxu0 0
  %243 = vmatpush.bf16.msra.mxu0 %v143
  %244 = vmatmul.bf16.gmra.mxu0 %v164
  %v245 = vpop.f32.mrf.mxu0
  %v246 = vadd.f32 %v83, %v245
  %v247 = vpop.f32.mrf.mxu0
  %v248 = vadd.f32 %v83, %v247
  %249 = vdwg.mxu0
  %250 = vmatpush.bf16.msra.mxu0 0
  %251 = vmatpush.bf16.msra.mxu0 0
  %252 = vmatpush.bf16.msra.mxu0 0
  %253 = vmatpush.bf16.msra.mxu0 0
  %254 = vmatpush.bf16.msra.mxu0 0
  %255 = vmatpush.bf16.msra.mxu0 0
  %256 = vmatpush.bf16.msra.mxu0 0
  %257 = vmatpush.bf16.msra.mxu0 %v144
  %258 = vmatmul.bf16.gmra.mxu0 %v164
  %v259 = vpop.f32.mrf.mxu0
  %v260 = vadd.f32 %v84, %v259
  %v261 = vpop.f32.mrf.mxu0
  %v262 = vadd.f32 %v84, %v261
  %263 = vdwg.mxu0
  %264 = vmatpush.bf16.msra.mxu0 0
  %265 = vmatpush.bf16.msra.mxu0 0
  %266 = vmatpush.bf16.msra.mxu0 0
  %267 = vmatpush.bf16.msra.mxu0 0
  %268 = vmatpush.bf16.msra.mxu0 0
  %269 = vmatpush.bf16.msra.mxu0 0
  %270 = vmatpush.bf16.msra.mxu0 0
  %271 = vmatpush.bf16.msra.mxu0 %v145
  %272 = vmatmul.bf16.gmra.mxu0 %v164
  %v273 = vpop.f32.mrf.mxu0
  %v274 = vadd.f32 %v85, %v273
  %v275 = vpop.f32.mrf.mxu0
  %v276 = vadd.f32 %v85, %v275
  %277 = vdwg.mxu0
  %278 = vmatpush.bf16.msra.mxu0 0
  %279 = vmatpush.bf16.msra.mxu0 0
  %280 = vmatpush.bf16.msra.mxu0 0
  %281 = vmatpush.bf16.msra.mxu0 0
  %282 = vmatpush.bf16.msra.mxu0 0
  %283 = vmatpush.bf16.msra.mxu0 0
  %284 = vmatpush.bf16.msra.mxu0 0
  %285 = vmatpush.bf16.msra.mxu0 %v146
  %286 = vmatmul.bf16.gmra.mxu0 %v164
  %v287 = vpop.f32.mrf.mxu0
  %v288 = vadd.f32 %v86, %v287
  %v289 = vpop.f32.mrf.mxu0
  %v290 = vadd.f32 %v86, %v289
  %291 = vdwg.mxu0
  %292 = vmatpush.bf16.msra.mxu0 0
  %293 = vmatpush.bf16.msra.mxu0 0
  %294 = vmatpush.bf16.msra.mxu0 0
  %295 = vmatpush.bf16.msra.mxu0 0
  %296 = vmatpush.bf16.msra.mxu0 0
  %297 = vmatpush.bf16.msra.mxu0 0
  %298 = vmatpush.bf16.msra.mxu0 0
  %299 = vmatpush.bf16.msra.mxu0 %v147
  %300 = vmatmul.bf16.gmra.mxu0 %v164
  %v301 = vpop.f32.mrf.mxu0
  %v302 = vadd.f32 %v87, %v301
  %v303 = vpop.f32.mrf.mxu0
  %v304 = vadd.f32 %v87, %v303
  %305 = vdwg.mxu0
  %306 = vmatpush.bf16.msra.mxu0 0
  %307 = vmatpush.bf16.msra.mxu0 0
  %308 = vmatpush.bf16.msra.mxu0 0
  %309 = vmatpush.bf16.msra.mxu0 0
  %310 = vmatpush.bf16.msra.mxu0 0
  %311 = vmatpush.bf16.msra.mxu0 0
  %312 = vmatpush.bf16.msra.mxu0 0
  %313 = vmatpush.bf16.msra.mxu0 %v148
  %314 = vmatmul.bf16.gmra.mxu0 %v164
  %v315 = vpop.f32.mrf.mxu0
  %v316 = vadd.f32 %v88, %v315
  %v317 = vpop.f32.mrf.mxu0
  %v318 = vadd.f32 %v88, %v317
  %319 = vdwg.mxu0
  %320 = vmatpush.bf16.msra.mxu0 0
  %321 = vmatpush.bf16.msra.mxu0 0
  %322 = vmatpush.bf16.msra.mxu0 0
  %323 = vmatpush.bf16.msra.mxu0 0
  %324 = vmatpush.bf16.msra.mxu0 0
  %325 = vmatpush.bf16.msra.mxu0 0
  %326 = vmatpush.bf16.msra.mxu0 0
  %327 = vmatpush.bf16.msra.mxu0 %v149
  %328 = vmatmul.bf16.gmra.mxu0 %v164
  %v329 = vpop.f32.mrf.mxu0
  %v330 = vadd.f32 %v89, %v329
  %v331 = vpop.f32.mrf.mxu0
  %v332 = vadd.f32 %v89, %v331
  %333 = vdwg.mxu0
  %v334 = vmax.f32 %v176, 0.0
  %v335 = vmax.f32 %v190, 0.0
  %v336 = vmax.f32 %v204, 0.0
  %v337 = vmax.f32 %v178, 0.0
  %v338 = vmax.f32 %v192, 0.0
  %v339 = vmax.f32 %v206, 0.0
  %v340 = vpack.c.bf16 %v335, %v334
  %v341 = vpack.c.bf16 %v336, %v336
  %v342 = vpack.c.bf16 %v338, %v337
  %v343 = vpack.c.bf16 %v339, %v339
  %344 = vst [vmem:[#allocation2 + $0x18] sm:$0xff] %v340
  %345 = vst [vmem:[#allocation2 + $0x20] sm:$0xf] %v341
  %346 = vst [vmem:[#allocation2 + $0x24] sm:$0xff] %v342
  %347 = vst [vmem:[#allocation2 + $0x2c] sm:$0xf] %v343
  %v348 = vmax.f32 %v218, 0.0
  %v349 = vmax.f32 %v232, 0.0
  %v350 = vmax.f32 %v246, 0.0
  %v351 = vmax.f32 %v220, 0.0
  %v352 = vmax.f32 %v234, 0.0
  %v353 = vmax.f32 %v248, 0.0
  %v354 = vpack.c.bf16 %v349, %v348
  %v355 = vpack.c.bf16 %v350, %v350
  %v356 = vpack.c.bf16 %v352, %v351
  %v357 = vpack.c.bf16 %v353, %v353
  %358 = vst [vmem:[#allocation2 + $0x30] sm:$0xff] %v354
  %359 = vst [vmem:[#allocation2 + $0x38] sm:$0xf] %v355
  %360 = vst [vmem:[#allocation2 + $0x3c] sm:$0xff] %v356
  %361 = vst [vmem:[#allocation2 + $0x44] sm:$0xf] %v357
  %v362 = vmax.f32 %v260, 0.0
  %v363 = vmax.f32 %v274, 0.0
  %v364 = vmax.f32 %v288, 0.0
  %v365 = vmax.f32 %v262, 0.0
  %v366 = vmax.f32 %v276, 0.0
  %v367 = vmax.f32 %v290, 0.0
  %v368 = vpack.c.bf16 %v363, %v362
  %v369 = vpack.c.bf16 %v364, %v364
  %v370 = vpack.c.bf16 %v366, %v365
  %v371 = vpack.c.bf16 %v367, %v367
  %372 = vst [vmem:[#allocation2 + $0x48] sm:$0xff] %v368
  %373 = vst [vmem:[#allocation2 + $0x50] sm:$0xf] %v369
  %374 = vst [vmem:[#allocation2 + $0x54] sm:$0xff] %v370
  %375 = vst [vmem:[#allocation2 + $0x5c] sm:$0xf] %v371
  %v376 = vmax.f32 %v302, 0.0
  %v377 = vmax.f32 %v316, 0.0
  %v378 = vmax.f32 %v330, 0.0
  %v379 = vmax.f32 %v304, 0.0
  %v380 = vmax.f32 %v318, 0.0
  %v381 = vmax.f32 %v332, 0.0
  %v382 = vpack.c.bf16 %v377, %v376
  %v383 = vpack.c.bf16 %v378, %v378
  %v384 = vpack.c.bf16 %v380, %v379
  %v385 = vpack.c.bf16 %v381, %v381
  %386 = vst [vmem:[#allocation2 + $0x60] sm:$0xff] %v382
  %387 = vst [vmem:[#allocation2 + $0x68] sm:$0xf] %v383
  %388 = vst [vmem:[#allocation2 + $0x6c] sm:$0xff] %v384
  %389 = vst [vmem:[#allocation2 + $0x74] sm:$0xf] %v385
  %v390 = vld [vmem:[%s4] sm:$0x7]
  %v391 = vld [vmem:[#allocation2] sm:$0xff]
  %v392 = vld [vmem:[#allocation2 + $0x8] sm:$0xf]
  %v393 = vld [vmem:[#allocation2 + $0xc] sm:$0xff]
  %v394 = vld [vmem:[#allocation2 + $0x14] sm:$0xf]
  %v395 = vld [vmem:[#allocation2 + $0x18] sm:$0xff]
  %v396 = vld [vmem:[#allocation2 + $0x20] sm:$0xf]
  %v397 = vld [vmem:[#allocation2 + $0x24] sm:$0xff]
  %v398 = vld [vmem:[#allocation2 + $0x2c] sm:$0xf]
  %v399 = vld [vmem:[#allocation2 + $0x30] sm:$0xff]
  %v400 = vld [vmem:[#allocation2 + $0x38] sm:$0xf]
  %v401 = vld [vmem:[#allocation2 + $0x3c] sm:$0xff]
  %v402 = vld [vmem:[#allocation2 + $0x44] sm:$0xf]
  %v403 = vld [vmem:[#allocation2 + $0x48] sm:$0xff]
  %v404 = vld [vmem:[#allocation2 + $0x50] sm:$0xf]
  %v405 = vld [vmem:[#allocation2 + $0x54] sm:$0xff]
  %v406 = vld [vmem:[#allocation2 + $0x5c] sm:$0xf]
  %v407 = vld [vmem:[#allocation2 + $0x60] sm:$0xff]
  %v408 = vld [vmem:[#allocation2 + $0x68] sm:$0xf]
  %v409 = vld [vmem:[#allocation2 + $0x6c] sm:$0xff]
  %v410 = vld [vmem:[#allocation2 + $0x74] sm:$0xf]
  %v411 = vld [vmem:[%s3] sm:$0xff]
  %v412 = vld [vmem:[%s3 + $0x8] sm:$0xf]
  %v413 = vld [vmem:[%s3 + $0xc] sm:$0xff]
  %v414 = vld [vmem:[%s3 + $0x14] sm:$0xf]
  %v415 = vld [vmem:[%s3 + $0x18] sm:$0xff]
  %v416 = vld [vmem:[%s3 + $0x20] sm:$0xf]
  %v417 = vld [vmem:[%s3 + $0x24] sm:$0xff]
  %v418 = vld [vmem:[%s3 + $0x2c] sm:$0xf]
  %v419 = vld [vmem:[%s3 + $0x30] sm:$0xff]
  %v420 = vld [vmem:[%s3 + $0x38] sm:$0xf]
  %v421 = vld [vmem:[%s3 + $0x3c] sm:$0xff]
  %v422 = vld [vmem:[%s3 + $0x44] sm:$0xf]
  %v423 = vld [vmem:[%s3 + $0x48] sm:$0xff]
  %v424 = vld [vmem:[%s3 + $0x50] sm:$0xf]
  %v425 = vld [vmem:[%s3 + $0x54] sm:$0xff]
  %v426 = vld [vmem:[%s3 + $0x5c] sm:$0xf]
  %v427 = vld [vmem:[%s3 + $0x60] sm:$0xff]
  %v428 = vld [vmem:[%s3 + $0x68] sm:$0xf]
  %v429 = vld [vmem:[%s3 + $0x6c] sm:$0xff]
  %v430 = vld [vmem:[%s3 + $0x74] sm:$0xf]
  %v431 = vld [vmem:[%s3 + $0x78] sm:$0xff]
  %v432 = vld [vmem:[%s3 + $0x80] sm:$0xf]
  %v433 = vld [vmem:[%s3 + $0x84] sm:$0xff]
  %v434 = vld [vmem:[%s3 + $0x8c] sm:$0xf]
  %v435 = vld [vmem:[%s3 + $0x90] sm:$0xff]
  %v436 = vld [vmem:[%s3 + $0x98] sm:$0xf]
  %v437 = vld [vmem:[%s3 + $0x9c] sm:$0xff]
  %v438 = vld [vmem:[%s3 + $0xa4] sm:$0xf]
  %v439 = vld [vmem:[%s3 + $0xa8] sm:$0xff]
  %v440 = vld [vmem:[%s3 + $0xb0] sm:$0xf]
  %v441 = vld [vmem:[%s3 + $0xb4] sm:$0xff]
  %v442 = vld [vmem:[%s3 + $0xbc] sm:$0xf]
  %v443 = vld [vmem:[%s3 + $0xc0] sm:$0xff]
  %v444 = vld [vmem:[%s3 + $0xc8] sm:$0xf]
  %v445 = vld [vmem:[%s3 + $0xcc] sm:$0xff]
  %v446 = vld [vmem:[%s3 + $0xd4] sm:$0xf]
  %v447 = vld [vmem:[%s3 + $0xd8] sm:$0xff]
  %v448 = vld [vmem:[%s3 + $0xe0] sm:$0xf]
  %v449 = vld [vmem:[%s3 + $0xe4] sm:$0xff]
  %v450 = vld [vmem:[%s3 + $0xec] sm:$0xf]
  %v451 = vld [vmem:[%s3 + $0xf0] sm:$0xff]
  %v452 = vld [vmem:[%s3 + $0xf8] sm:$0xf]
  %v453 = vld [vmem:[%s3 + $0xfc] sm:$0xff]
  %v454 = vld [vmem:[%s3 + $0x104] sm:$0xf]
  %v455 = vld [vmem:[%s3 + $0x108] sm:$0xff]
  %v456 = vld [vmem:[%s3 + $0x110] sm:$0xf]
  %v457 = vld [vmem:[%s3 + $0x114] sm:$0xff]
  %v458 = vld [vmem:[%s3 + $0x11c] sm:$0xf]
  %v459 = vld [vmem:[%s3 + $0x120] sm:$0xff]
  %v460 = vld [vmem:[%s3 + $0x128] sm:$0xf]
  %v461 = vld [vmem:[%s3 + $0x12c] sm:$0xff]
  %v462 = vld [vmem:[%s3 + $0x134] sm:$0xf]
  %v463 = vld [vmem:[%s3 + $0x138] sm:$0xff]
  %v464 = vld [vmem:[%s3 + $0x140] sm:$0xf]
  %v465 = vld [vmem:[%s3 + $0x144] sm:$0xff]
  %v466 = vld [vmem:[%s3 + $0x14c] sm:$0xf]
  %v467 = vld [vmem:[%s3 + $0x150] sm:$0xff]
  %v468 = vld [vmem:[%s3 + $0x158] sm:$0xf]
  %v469 = vld [vmem:[%s3 + $0x15c] sm:$0xff]
  %v470 = vld [vmem:[%s3 + $0x164] sm:$0xf]
  %v471 = vld [vmem:[%s3 + $0x168] sm:$0xff]
  %v472 = vld [vmem:[%s3 + $0x170] sm:$0xf]
  %v473 = vld [vmem:[%s3 + $0x174] sm:$0xff]
  %v474 = vld [vmem:[%s3 + $0x17c] sm:$0xf]
  %v475 = vld [vmem:[%s3 + $0x180] sm:$0xff]
  %v476 = vld [vmem:[%s3 + $0x188] sm:$0xf]
  %v477 = vld [vmem:[%s3 + $0x18c] sm:$0xff]
  %v478 = vld [vmem:[%s3 + $0x194] sm:$0xf]
  %v479 = vld [vmem:[%s3 + $0x198] sm:$0xff]
  %v480 = vld [vmem:[%s3 + $0x1a0] sm:$0xf]
  %v481 = vld [vmem:[%s3 + $0x1a4] sm:$0xff]
  %v482 = vld [vmem:[%s3 + $0x1ac] sm:$0xf]
  %v483 = vld [vmem:[%s3 + $0x1b0] sm:$0xff]
  %v484 = vld [vmem:[%s3 + $0x1b8] sm:$0xf]
  %v485 = vld [vmem:[%s3 + $0x1bc] sm:$0xff]
  %v486 = vld [vmem:[%s3 + $0x1c4] sm:$0xf]
  %v487 = vld [vmem:[%s3 + $0x1c8] sm:$0xff]
  %v488 = vld [vmem:[%s3 + $0x1d0] sm:$0xf]
  %v489 = vld [vmem:[%s3 + $0x1d4] sm:$0xff]
  %v490 = vld [vmem:[%s3 + $0x1dc] sm:$0xf]
  %v491 = vld [vmem:[%s3 + $0x1e0] sm:$0xff]
  %v492 = vld [vmem:[%s3 + $0x1e8] sm:$0xf]
  %v493 = vld [vmem:[%s3 + $0x1ec] sm:$0xff]
  %v494 = vld [vmem:[%s3 + $0x1f4] sm:$0xf]
  %v495 = vld [vmem:[%s3 + $0x1f8] sm:$0xff]
  %v496 = vld [vmem:[%s3 + $0x200] sm:$0xf]
  %v497 = vld [vmem:[%s3 + $0x204] sm:$0xff]
  %v498 = vld [vmem:[%s3 + $0x20c] sm:$0xf]
  %v499 = vld [vmem:[%s3 + $0x210] sm:$0xff]
  %v500 = vld [vmem:[%s3 + $0x218] sm:$0xf]
  %v501 = vld [vmem:[%s3 + $0x21c] sm:$0xff]
  %v502 = vld [vmem:[%s3 + $0x224] sm:$0xf]
  %v503 = vld [vmem:[%s3 + $0x228] sm:$0xff]
  %v504 = vld [vmem:[%s3 + $0x230] sm:$0xf]
  %v505 = vld [vmem:[%s3 + $0x234] sm:$0xff]
  %v506 = vld [vmem:[%s3 + $0x23c] sm:$0xf]
  %s507 = scalar_lea.vmem %s3, 576
  %v508 = vld [vmem:[%s507] sm:$0xff]
  %v509 = vld [vmem:[%s507 + $0x8] sm:$0xf]
  %v510 = vld [vmem:[%s507 + $0xc] sm:$0xff]
  %v511 = vld [vmem:[%s507 + $0x14] sm:$0xf]
  %v512 = vld [vmem:[%s507 + $0x18] sm:$0xff]
  %v513 = vld [vmem:[%s507 + $0x20] sm:$0xf]
  %v514 = vld [vmem:[%s507 + $0x24] sm:$0xff]
  %v515 = vld [vmem:[%s507 + $0x2c] sm:$0xf]
  %v516 = vld [vmem:[%s507 + $0x30] sm:$0xff]
  %v517 = vld [vmem:[%s507 + $0x38] sm:$0xf]
  %v518 = vld [vmem:[%s507 + $0x3c] sm:$0xff]
  %v519 = vld [vmem:[%s507 + $0x44] sm:$0xf]
  %v520 = vld [vmem:[%s507 + $0x48] sm:$0xff]
  %v521 = vld [vmem:[%s507 + $0x50] sm:$0xf]
  %v522 = vld [vmem:[%s507 + $0x54] sm:$0xff]
  %v523 = vld [vmem:[%s507 + $0x5c] sm:$0xf]
  %v524 = vld [vmem:[%s507 + $0x60] sm:$0xff]
  %v525 = vld [vmem:[%s507 + $0x68] sm:$0xf]
  %v526 = vld [vmem:[%s507 + $0x6c] sm:$0xff]
  %v527 = vld [vmem:[%s507 + $0x74] sm:$0xf]
  %v528 = vld [vmem:[%s507 + $0x78] sm:$0xff]
  %v529 = vld [vmem:[%s507 + $0x80] sm:$0xf]
  %v530 = vld [vmem:[%s507 + $0x84] sm:$0xff]
  %v531 = vld [vmem:[%s507 + $0x8c] sm:$0xf]
  %v532 = vld [vmem:[%s507 + $0x90] sm:$0xff]
  %v533 = vld [vmem:[%s507 + $0x98] sm:$0xf]
  %v534 = vld [vmem:[%s507 + $0x9c] sm:$0xff]
  %v535 = vld [vmem:[%s507 + $0xa4] sm:$0xf]
  %v536 = vld [vmem:[%s507 + $0xa8] sm:$0xff]
  %v537 = vld [vmem:[%s507 + $0xb0] sm:$0xf]
  %v538 = vld [vmem:[%s507 + $0xb4] sm:$0xff]
  %v539 = vld [vmem:[%s507 + $0xbc] sm:$0xf]
  %v540 = vld [vmem:[%s507 + $0xc0] sm:$0xff]
  %v541 = vld [vmem:[%s507 + $0xc8] sm:$0xf]
  %v542 = vld [vmem:[%s507 + $0xcc] sm:$0xff]
  %v543 = vld [vmem:[%s507 + $0xd4] sm:$0xf]
  %v544 = vld [vmem:[%s507 + $0xd8] sm:$0xff]
  %v545 = vld [vmem:[%s507 + $0xe0] sm:$0xf]
  %v546 = vld [vmem:[%s507 + $0xe4] sm:$0xff]
  %v547 = vld [vmem:[%s507 + $0xec] sm:$0xf]
  %v548 = vld [vmem:[%s507 + $0xf0] sm:$0xff]
  %v549 = vld [vmem:[%s507 + $0xf8] sm:$0xf]
  %v550 = vld [vmem:[%s507 + $0xfc] sm:$0xff]
  %v551 = vld [vmem:[%s507 + $0x104] sm:$0xf]
  %v552 = vld [vmem:[%s507 + $0x108] sm:$0xff]
  %v553 = vld [vmem:[%s507 + $0x110] sm:$0xf]
  %v554 = vld [vmem:[%s507 + $0x114] sm:$0xff]
  %v555 = vld [vmem:[%s507 + $0x11c] sm:$0xf]
  %v556 = vld [vmem:[%s507 + $0x120] sm:$0xff]
  %v557 = vld [vmem:[%s507 + $0x128] sm:$0xf]
  %v558 = vld [vmem:[%s507 + $0x12c] sm:$0xff]
  %v559 = vld [vmem:[%s507 + $0x134] sm:$0xf]
  %v560 = vld [vmem:[%s507 + $0x138] sm:$0xff]
  %v561 = vld [vmem:[%s507 + $0x140] sm:$0xf]
  %v562 = vld [vmem:[%s507 + $0x144] sm:$0xff]
  %v563 = vld [vmem:[%s507 + $0x14c] sm:$0xf]
  %v564 = vld [vmem:[%s507 + $0x150] sm:$0xff]
  %v565 = vld [vmem:[%s507 + $0x158] sm:$0xf]
  %v566 = vld [vmem:[%s507 + $0x15c] sm:$0xff]
  %v567 = vld [vmem:[%s507 + $0x164] sm:$0xf]
  %v568 = vld [vmem:[%s507 + $0x168] sm:$0xff]
  %v569 = vld [vmem:[%s507 + $0x170] sm:$0xf]
  %v570 = vld [vmem:[%s507 + $0x174] sm:$0xff]
  %v571 = vld [vmem:[%s507 + $0x17c] sm:$0xf]
  %v572 = vld [vmem:[%s507 + $0x180] sm:$0xff]
  %v573 = vld [vmem:[%s507 + $0x188] sm:$0xf]
  %v574 = vld [vmem:[%s507 + $0x18c] sm:$0xff]
  %v575 = vld [vmem:[%s507 + $0x194] sm:$0xf]
  %v576 = vld [vmem:[%s507 + $0x198] sm:$0xff]
  %v577 = vld [vmem:[%s507 + $0x1a0] sm:$0xf]
  %v578 = vld [vmem:[%s507 + $0x1a4] sm:$0xff]
  %v579 = vld [vmem:[%s507 + $0x1ac] sm:$0xf]
  %v580 = vld [vmem:[%s507 + $0x1b0] sm:$0xff]
  %v581 = vld [vmem:[%s507 + $0x1b8] sm:$0xf]
  %v582 = vld [vmem:[%s507 + $0x1bc] sm:$0xff]
  %v583 = vld [vmem:[%s507 + $0x1c4] sm:$0xf]
  %v584 = vld [vmem:[%s507 + $0x1c8] sm:$0xff]
  %v585 = vld [vmem:[%s507 + $0x1d0] sm:$0xf]
  %v586 = vld [vmem:[%s507 + $0x1d4] sm:$0xff]
  %v587 = vld [vmem:[%s507 + $0x1dc] sm:$0xf]
  %v588 = vld [vmem:[%s507 + $0x1e0] sm:$0xff]
  %v589 = vld [vmem:[%s507 + $0x1e8] sm:$0xf]
  %v590 = vld [vmem:[%s507 + $0x1ec] sm:$0xff]
  %v591 = vld [vmem:[%s507 + $0x1f4] sm:$0xf]
  %v592 = vld [vmem:[%s507 + $0x1f8] sm:$0xff]
  %v593 = vld [vmem:[%s507 + $0x200] sm:$0xf]
  %v594 = vld [vmem:[%s507 + $0x204] sm:$0xff]
  %v595 = vld [vmem:[%s507 + $0x20c] sm:$0xf]
  %v596 = vld [vmem:[%s507 + $0x210] sm:$0xff]
  %v597 = vld [vmem:[%s507 + $0x218] sm:$0xf]
  %v598 = vld [vmem:[%s507 + $0x21c] sm:$0xff]
  %v599 = vld [vmem:[%s507 + $0x224] sm:$0xf]
  %v600 = vld [vmem:[%s507 + $0x228] sm:$0xff]
  %v601 = vld [vmem:[%s507 + $0x230] sm:$0xf]
  %v602 = vld [vmem:[%s507 + $0x234] sm:$0xff]
  %v603 = vld [vmem:[%s507 + $0x23c] sm:$0xf]
  %v620 = vunpack.c.l.b16 %v395
  %v621 = vunpack.c.h.b16 %v395
  %v622 = vunpack.c.l.b16 %v396
  %v623 = vunpack.c.l.b16 %v397
  %v624 = vunpack.c.h.b16 %v397
  %v625 = vunpack.c.l.b16 %v398
  %v626 = vunpack.c.l.b16 %v399
  %v627 = vunpack.c.h.b16 %v399
  %v628 = vunpack.c.l.b16 %v400
  %v629 = vunpack.c.l.b16 %v401
  %v630 = vunpack.c.h.b16 %v401
  %v631 = vunpack.c.l.b16 %v402
  %v632 = vunpack.c.l.b16 %v403
  %v633 = vunpack.c.h.b16 %v403
  %v634 = vunpack.c.l.b16 %v404
  %v635 = vunpack.c.l.b16 %v405
  %v636 = vunpack.c.h.b16 %v405
  %v637 = vunpack.c.l.b16 %v406
  %v638 = vunpack.c.l.b16 %v407
  %v639 = vunpack.c.h.b16 %v407
  %v640 = vunpack.c.l.b16 %v408
  %v641 = vunpack.c.l.b16 %v409
  %v642 = vunpack.c.h.b16 %v409
  %v643 = vunpack.c.l.b16 %v410
  %v644 = vpack.c.b16 %v623, %v620
  %v645 = vpack.c.b16 %v624, %v621
  %v646 = vpack.c.b16 %v625, %v622
  %v647 = vpack.c.b16 %v629, %v626
  %v648 = vpack.c.b16 %v630, %v627
  %v649 = vpack.c.b16 %v631, %v628
  %v650 = vpack.c.b16 %v635, %v632
  %v651 = vpack.c.b16 %v636, %v633
  %v652 = vpack.c.b16 %v637, %v634
  %v653 = vpack.c.b16 %v641, %v638
  %v654 = vpack.c.b16 %v642, %v639
  %v655 = vpack.c.b16 %v643, %v640
  %v764 = vunpack.c.l.b16 %v508
  %v765 = vunpack.c.h.b16 %v508
  %v766 = vunpack.c.l.b16 %v509
  %v767 = vunpack.c.l.b16 %v510
  %v768 = vunpack.c.h.b16 %v510
  %v769 = vunpack.c.l.b16 %v511
  %v770 = vunpack.c.l.b16 %v512
  %v771 = vunpack.c.h.b16 %v512
  %v772 = vunpack.c.l.b16 %v513
  %v773 = vunpack.c.l.b16 %v514
  %v774 = vunpack.c.h.b16 %v514
  %v775 = vunpack.c.l.b16 %v515
  %v776 = vunpack.c.l.b16 %v516
  %v777 = vunpack.c.h.b16 %v516
  %v778 = vunpack.c.l.b16 %v517
  %v779 = vunpack.c.l.b16 %v518
  %v780 = vunpack.c.h.b16 %v518
  %v781 = vunpack.c.l.b16 %v519
  %v782 = vunpack.c.l.b16 %v520
  %v783 = vunpack.c.h.b16 %v520
  %v784 = vunpack.c.l.b16 %v521
  %v785 = vunpack.c.l.b16 %v522
  %v786 = vunpack.c.h.b16 %v522
  %v787 = vunpack.c.l.b16 %v523
  %v788 = vunpack.c.l.b16 %v524
  %v789 = vunpack.c.h.b16 %v524
  %v790 = vunpack.c.l.b16 %v525
  %v791 = vunpack.c.l.b16 %v526
  %v792 = vunpack.c.h.b16 %v526
  %v793 = vunpack.c.l.b16 %v527
  %v794 = vunpack.c.l.b16 %v528
  %v795 = vunpack.c.h.b16 %v528
  %v796 = vunpack.c.l.b16 %v529
  %v797 = vunpack.c.l.b16 %v530
  %v798 = vunpack.c.h.b16 %v530
  %v799 = vunpack.c.l.b16 %v531
  %v800 = vunpack.c.l.b16 %v532
  %v801 = vunpack.c.h.b16 %v532
  %v802 = vunpack.c.l.b16 %v533
  %v803 = vunpack.c.l.b16 %v534
  %v804 = vunpack.c.h.b16 %v534
  %v805 = vunpack.c.l.b16 %v535
  %v806 = vunpack.c.l.b16 %v536
  %v807 = vunpack.c.h.b16 %v536
  %v808 = vunpack.c.l.b16 %v537
  %v809 = vunpack.c.l.b16 %v538
  %v810 = vunpack.c.h.b16 %v538
  %v811 = vunpack.c.l.b16 %v539
  %v812 = vunpack.c.l.b16 %v540
  %v813 = vunpack.c.h.b16 %v540
  %v814 = vunpack.c.l.b16 %v541
  %v815 = vunpack.c.l.b16 %v542
  %v816 = vunpack.c.h.b16 %v542
  %v817 = vunpack.c.l.b16 %v543
  %v818 = vunpack.c.l.b16 %v544
  %v819 = vunpack.c.h.b16 %v544
  %v820 = vunpack.c.l.b16 %v545
  %v821 = vunpack.c.l.b16 %v546
  %v822 = vunpack.c.h.b16 %v546
  %v823 = vunpack.c.l.b16 %v547
  %v824 = vunpack.c.l.b16 %v548
  %v825 = vunpack.c.h.b16 %v548
  %v826 = vunpack.c.l.b16 %v549
  %v827 = vunpack.c.l.b16 %v550
  %v828 = vunpack.c.h.b16 %v550
  %v829 = vunpack.c.l.b16 %v551
  %v830 = vunpack.c.l.b16 %v552
  %v831 = vunpack.c.h.b16 %v552
  %v832 = vunpack.c.l.b16 %v553
  %v833 = vunpack.c.l.b16 %v554
  %v834 = vunpack.c.h.b16 %v554
  %v835 = vunpack.c.l.b16 %v555
  %v836 = vunpack.c.l.b16 %v556
  %v837 = vunpack.c.h.b16 %v556
  %v838 = vunpack.c.l.b16 %v557
  %v839 = vunpack.c.l.b16 %v558
  %v840 = vunpack.c.h.b16 %v558
  %v841 = vunpack.c.l.b16 %v559
  %v842 = vunpack.c.l.b16 %v560
  %v843 = vunpack.c.h.b16 %v560
  %v844 = vunpack.c.l.b16 %v561
  %v845 = vunpack.c.l.b16 %v562
  %v846 = vunpack.c.h.b16 %v562
  %v847 = vunpack.c.l.b16 %v563
  %v848 = vunpack.c.l.b16 %v564
  %v849 = vunpack.c.h.b16 %v564
  %v850 = vunpack.c.l.b16 %v565
  %v851 = vunpack.c.l.b16 %v566
  %v852 = vunpack.c.h.b16 %v566
  %v853 = vunpack.c.l.b16 %v567
  %v854 = vunpack.c.l.b16 %v568
  %v855 = vunpack.c.h.b16 %v568
  %v856 = vunpack.c.l.b16 %v569
  %v857 = vunpack.c.l.b16 %v570
  %v858 = vunpack.c.h.b16 %v570
  %v859 = vunpack.c.l.b16 %v571
  %v860 = vunpack.c.l.b16 %v572
  %v861 = vunpack.c.h.b16 %v572
  %v862 = vunpack.c.l.b16 %v573
  %v863 = vunpack.c.l.b16 %v574
  %v864 = vunpack.c.h.b16 %v574
  %v865 = vunpack.c.l.b16 %v575
  %v866 = vunpack.c.l.b16 %v576
  %v867 = vunpack.c.h.b16 %v576
  %v868 = vunpack.c.l.b16 %v577
  %v869 = vunpack.c.l.b16 %v578
  %v870 = vunpack.c.h.b16 %v578
  %v871 = vunpack.c.l.b16 %v579
  %v872 = vunpack.c.l.b16 %v580
  %v873 = vunpack.c.h.b16 %v580
  %v874 = vunpack.c.l.b16 %v581
  %v875 = vunpack.c.l.b16 %v582
  %v876 = vunpack.c.h.b16 %v582
  %v877 = vunpack.c.l.b16 %v583
  %v878 = vunpack.c.l.b16 %v584
  %v879 = vunpack.c.h.b16 %v584
  %v880 = vunpack.c.l.b16 %v585
  %v881 = vunpack.c.l.b16 %v586
  %v882 = vunpack.c.h.b16 %v586
  %v883 = vunpack.c.l.b16 %v587
  %v884 = vunpack.c.l.b16 %v588
  %v885 = vunpack.c.h.b16 %v588
  %v886 = vunpack.c.l.b16 %v589
  %v887 = vunpack.c.l.b16 %v590
  %v888 = vunpack.c.h.b16 %v590
  %v889 = vunpack.c.l.b16 %v591
  %v890 = vunpack.c.l.b16 %v592
  %v891 = vunpack.c.h.b16 %v592
  %v892 = vunpack.c.l.b16 %v593
  %v893 = vunpack.c.l.b16 %v594
  %v894 = vunpack.c.h.b16 %v594
  %v895 = vunpack.c.l.b16 %v595
  %v896 = vunpack.c.l.b16 %v596
  %v897 = vunpack.c.h.b16 %v596
  %v898 = vunpack.c.l.b16 %v597
  %v899 = vunpack.c.l.b16 %v598
  %v900 = vunpack.c.h.b16 %v598
  %v901 = vunpack.c.l.b16 %v599
  %v902 = vunpack.c.l.b16 %v600
  %v903 = vunpack.c.h.b16 %v600
  %v904 = vunpack.c.l.b16 %v601
  %v905 = vunpack.c.l.b16 %v602
  %v906 = vunpack.c.h.b16 %v602
  %v907 = vunpack.c.l.b16 %v603
  %v908 = vpack.c.b16 %v767, %v764
  %v909 = vpack.c.b16 %v768, %v765
  %v910 = vpack.c.b16 %v769, %v766
  %v911 = vpack.c.b16 %v773, %v770
  %v912 = vpack.c.b16 %v774, %v771
  %v913 = vpack.c.b16 %v775, %v772
  %v914 = vpack.c.b16 %v779, %v776
  %v915 = vpack.c.b16 %v780, %v777
  %v916 = vpack.c.b16 %v781, %v778
  %v917 = vpack.c.b16 %v785, %v782
  %v918 = vpack.c.b16 %v786, %v783
  %v919 = vpack.c.b16 %v787, %v784
  %v920 = vpack.c.b16 %v791, %v788
  %v921 = vpack.c.b16 %v792, %v789
  %v922 = vpack.c.b16 %v793, %v790
  %v923 = vpack.c.b16 %v797, %v794
  %v924 = vpack.c.b16 %v798, %v795
  %v925 = vpack.c.b16 %v799, %v796
  %v926 = vpack.c.b16 %v803, %v800
  %v927 = vpack.c.b16 %v804, %v801
  %v928 = vpack.c.b16 %v805, %v802
  %v929 = vpack.c.b16 %v809, %v806
  %v930 = vpack.c.b16 %v810, %v807
  %v931 = vpack.c.b16 %v811, %v808
  %v932 = vpack.c.b16 %v815, %v812
  %v933 = vpack.c.b16 %v816, %v813
  %v934 = vpack.c.b16 %v817, %v814
  %v935 = vpack.c.b16 %v821, %v818
  %v936 = vpack.c.b16 %v822, %v819
  %v937 = vpack.c.b16 %v823, %v820
  %v938 = vpack.c.b16 %v827, %v824
  %v939 = vpack.c.b16 %v828, %v825
  %v940 = vpack.c.b16 %v829, %v826
  %v941 = vpack.c.b16 %v833, %v830
  %v942 = vpack.c.b16 %v834, %v831
  %v943 = vpack.c.b16 %v835, %v832
  %v944 = vpack.c.b16 %v839, %v836
  %v945 = vpack.c.b16 %v840, %v837
  %v946 = vpack.c.b16 %v841, %v838
  %v947 = vpack.c.b16 %v845, %v842
  %v948 = vpack.c.b16 %v846, %v843
  %v949 = vpack.c.b16 %v847, %v844
  %v950 = vpack.c.b16 %v851, %v848
  %v951 = vpack.c.b16 %v852, %v849
  %v952 = vpack.c.b16 %v853, %v850
  %v953 = vpack.c.b16 %v857, %v854
  %v954 = vpack.c.b16 %v858, %v855
  %v955 = vpack.c.b16 %v859, %v856
  %v956 = vpack.c.b16 %v863, %v860
  %v957 = vpack.c.b16 %v864, %v861
  %v958 = vpack.c.b16 %v865, %v862
  %v959 = vpack.c.b16 %v869, %v866
  %v960 = vpack.c.b16 %v870, %v867
  %v961 = vpack.c.b16 %v871, %v868
  %v962 = vpack.c.b16 %v875, %v872
  %v963 = vpack.c.b16 %v876, %v873
  %v964 = vpack.c.b16 %v877, %v874
  %v965 = vpack.c.b16 %v881, %v878
  %v966 = vpack.c.b16 %v882, %v879
  %v967 = vpack.c.b16 %v883, %v880
  %v968 = vpack.c.b16 %v887, %v884
  %v969 = vpack.c.b16 %v888, %v885
  %v970 = vpack.c.b16 %v889, %v886
  %v971 = vpack.c.b16 %v893, %v890
  %v972 = vpack.c.b16 %v894, %v891
  %v973 = vpack.c.b16 %v895, %v892
  %v974 = vpack.c.b16 %v899, %v896
  %v975 = vpack.c.b16 %v900, %v897
  %v976 = vpack.c.b16 %v901, %v898
  %v977 = vpack.c.b16 %v905, %v902
  %v978 = vpack.c.b16 %v906, %v903
  %v979 = vpack.c.b16 %v907, %v904
  %1052 = vmatpush.bf16.msra.mxu0 %v929
  %1053 = vmatpush.bf16.msra.mxu0 %v926
  %1054 = vmatpush.bf16.msra.mxu0 %v923
  %1055 = vmatpush.bf16.msra.mxu0 %v920
  %1056 = vmatpush.bf16.msra.mxu0 %v917
  %1057 = vmatpush.bf16.msra.mxu0 %v914
  %1058 = vmatpush.bf16.msra.mxu0 %v911
  %1059 = vmatpush.bf16.msra.mxu0 %v908
  %1060 = vmatmul.bf16.gmra.mxu0 %v644
  %v1061 = vpop.f32.mrf.mxu0
  %v1062 = vadd.f32 0.0, %v1061
  %v1063 = vpop.f32.mrf.mxu0
  %v1064 = vadd.f32 0.0, %v1063
  %1065 = vmatmul.bf16.gmra.mxu0 %v647
  %v1066 = vpop.f32.mrf.mxu0
  %v1067 = vadd.f32 0.0, %v1066
  %v1068 = vpop.f32.mrf.mxu0
  %v1069 = vadd.f32 0.0, %v1068
  %1070 = vmatmul.bf16.gmra.mxu0 %v650
  %v1071 = vpop.f32.mrf.mxu0
  %v1072 = vadd.f32 0.0, %v1071
  %v1073 = vpop.f32.mrf.mxu0
  %v1074 = vadd.f32 0.0, %v1073
  %1075 = vmatmul.bf16.gmra.mxu0 %v653
  %v1076 = vpop.f32.mrf.mxu0
  %v1077 = vadd.f32 0.0, %v1076
  %v1078 = vpop.f32.mrf.mxu0
  %v1079 = vadd.f32 0.0, %v1078
  %1080 = vdwg.mxu0
  %1081 = vmatpush.bf16.msra.mxu0 %v953
  %1082 = vmatpush.bf16.msra.mxu0 %v950
  %1083 = vmatpush.bf16.msra.mxu0 %v947
  %1084 = vmatpush.bf16.msra.mxu0 %v944
  %1085 = vmatpush.bf16.msra.mxu0 %v941
  %1086 = vmatpush.bf16.msra.mxu0 %v938
  %1087 = vmatpush.bf16.msra.mxu0 %v935
  %1088 = vmatpush.bf16.msra.mxu0 %v932
  %1089 = vmatmul.bf16.gmra.mxu0 %v645
  %v1090 = vpop.f32.mrf.mxu0
  %v1091 = vadd.f32 %v1062, %v1090
  %v1092 = vpop.f32.mrf.mxu0
  %v1093 = vadd.f32 %v1064, %v1092
  %1094 = vmatmul.bf16.gmra.mxu0 %v648
  %v1095 = vpop.f32.mrf.mxu0
  %v1096 = vadd.f32 %v1067, %v1095
  %v1097 = vpop.f32.mrf.mxu0
  %v1098 = vadd.f32 %v1069, %v1097
  %1099 = vmatmul.bf16.gmra.mxu0 %v651
  %v1100 = vpop.f32.mrf.mxu0
  %v1101 = vadd.f32 %v1072, %v1100
  %v1102 = vpop.f32.mrf.mxu0
  %v1103 = vadd.f32 %v1074, %v1102
  %1104 = vmatmul.bf16.gmra.mxu0 %v654
  %v1105 = vpop.f32.mrf.mxu0
  %v1106 = vadd.f32 %v1077, %v1105
  %v1107 = vpop.f32.mrf.mxu0
  %v1108 = vadd.f32 %v1079, %v1107
  %1109 = vdwg.mxu0
  %1110 = vmatpush.bf16.msra.mxu0 %v977
  %1111 = vmatpush.bf16.msra.mxu0 %v974
  %1112 = vmatpush.bf16.msra.mxu0 %v971
  %1113 = vmatpush.bf16.msra.mxu0 %v968
  %1114 = vmatpush.bf16.msra.mxu0 %v965
  %1115 = vmatpush.bf16.msra.mxu0 %v962
  %1116 = vmatpush.bf16.msra.mxu0 %v959
  %1117 = vmatpush.bf16.msra.mxu0 %v956
  %1118 = vmatmul.bf16.gmra.mxu0 %v646
  %v1119 = vpop.f32.mrf.mxu0
  %v1120 = vadd.f32 %v1091, %v1119
  %v1121 = vpop.f32.mrf.mxu0
  %v1122 = vadd.f32 %v1093, %v1121
  %1123 = vmatmul.bf16.gmra.mxu0 %v649
  %v1124 = vpop.f32.mrf.mxu0
  %v1125 = vadd.f32 %v1096, %v1124
  %v1126 = vpop.f32.mrf.mxu0
  %v1127 = vadd.f32 %v1098, %v1126
  %1128 = vmatmul.bf16.gmra.mxu0 %v652
  %v1129 = vpop.f32.mrf.mxu0
  %v1130 = vadd.f32 %v1101, %v1129
  %v1131 = vpop.f32.mrf.mxu0
  %v1132 = vadd.f32 %v1103, %v1131
  %1133 = vmatmul.bf16.gmra.mxu0 %v655
  %v1134 = vpop.f32.mrf.mxu0
  %v1135 = vadd.f32 %v1106, %v1134
  %v1136 = vpop.f32.mrf.mxu0
  %v1137 = vadd.f32 %v1108, %v1136
  %1138 = vdwg.mxu0
  %1139 = vmatpush.bf16.msra.mxu0 %v930
  %1140 = vmatpush.bf16.msra.mxu0 %v927
  %1141 = vmatpush.bf16.msra.mxu0 %v924
  %1142 = vmatpush.bf16.msra.mxu0 %v921
  %1143 = vmatpush.bf16.msra.mxu0 %v918
  %1144 = vmatpush.bf16.msra.mxu0 %v915
  %1145 = vmatpush.bf16.msra.mxu0 %v912
  %1146 = vmatpush.bf16.msra.mxu0 %v909
  %1147 = vmatmul.bf16.gmra.mxu0 %v644
  %v1148 = vpop.f32.mrf.mxu0
  %v1149 = vadd.f32 0.0, %v1148
  %v1150 = vpop.f32.mrf.mxu0
  %v1151 = vadd.f32 0.0, %v1150
  %1152 = vmatmul.bf16.gmra.mxu0 %v647
  %v1153 = vpop.f32.mrf.mxu0
  %v1154 = vadd.f32 0.0, %v1153
  %v1155 = vpop.f32.mrf.mxu0
  %v1156 = vadd.f32 0.0, %v1155
  %1157 = vmatmul.bf16.gmra.mxu0 %v650
  %v1158 = vpop.f32.mrf.mxu0
  %v1159 = vadd.f32 0.0, %v1158
  %v1160 = vpop.f32.mrf.mxu0
  %v1161 = vadd.f32 0.0, %v1160
  %1162 = vmatmul.bf16.gmra.mxu0 %v653
  %v1163 = vpop.f32.mrf.mxu0
  %v1164 = vadd.f32 0.0, %v1163
  %v1165 = vpop.f32.mrf.mxu0
  %v1166 = vadd.f32 0.0, %v1165
  %1167 = vdwg.mxu0
  %1168 = vmatpush.bf16.msra.mxu0 %v954
  %1169 = vmatpush.bf16.msra.mxu0 %v951
  %1170 = vmatpush.bf16.msra.mxu0 %v948
  %1171 = vmatpush.bf16.msra.mxu0 %v945
  %1172 = vmatpush.bf16.msra.mxu0 %v942
  %1173 = vmatpush.bf16.msra.mxu0 %v939
  %1174 = vmatpush.bf16.msra.mxu0 %v936
  %1175 = vmatpush.bf16.msra.mxu0 %v933
  %1176 = vmatmul.bf16.gmra.mxu0 %v645
  %v1177 = vpop.f32.mrf.mxu0
  %v1178 = vadd.f32 %v1149, %v1177
  %v1179 = vpop.f32.mrf.mxu0
  %v1180 = vadd.f32 %v1151, %v1179
  %1181 = vmatmul.bf16.gmra.mxu0 %v648
  %v1182 = vpop.f32.mrf.mxu0
  %v1183 = vadd.f32 %v1154, %v1182
  %v1184 = vpop.f32.mrf.mxu0
  %v1185 = vadd.f32 %v1156, %v1184
  %1186 = vmatmul.bf16.gmra.mxu0 %v651
  %v1187 = vpop.f32.mrf.mxu0
  %v1188 = vadd.f32 %v1159, %v1187
  %v1189 = vpop.f32.mrf.mxu0
  %v1190 = vadd.f32 %v1161, %v1189
  %1191 = vmatmul.bf16.gmra.mxu0 %v654
  %v1192 = vpop.f32.mrf.mxu0
  %v1193 = vadd.f32 %v1164, %v1192
  %v1194 = vpop.f32.mrf.mxu0
  %v1195 = vadd.f32 %v1166, %v1194
  %1196 = vdwg.mxu0
  %1197 = vmatpush.bf16.msra.mxu0 %v978
  %1198 = vmatpush.bf16.msra.mxu0 %v975
  %1199 = vmatpush.bf16.msra.mxu0 %v972
  %1200 = vmatpush.bf16.msra.mxu0 %v969
  %1201 = vmatpush.bf16.msra.mxu0 %v966
  %1202 = vmatpush.bf16.msra.mxu0 %v963
  %1203 = vmatpush.bf16.msra.mxu0 %v960
  %1204 = vmatpush.bf16.msra.mxu0 %v957
  %1205 = vmatmul.bf16.gmra.mxu0 %v646
  %v1206 = vpop.f32.mrf.mxu0
  %v1207 = vadd.f32 %v1178, %v1206
  %v1208 = vpop.f32.mrf.mxu0
  %v1209 = vadd.f32 %v1180, %v1208
  %1210 = vmatmul.bf16.gmra.mxu0 %v649
  %v1211 = vpop.f32.mrf.mxu0
  %v1212 = vadd.f32 %v1183, %v1211
  %v1213 = vpop.f32.mrf.mxu0
  %v1214 = vadd.f32 %v1185, %v1213
  %1215 = vmatmul.bf16.gmra.mxu0 %v652
  %v1216 = vpop.f32.mrf.mxu0
  %v1217 = vadd.f32 %v1188, %v1216
  %v1218 = vpop.f32.mrf.mxu0
  %v1219 = vadd.f32 %v1190, %v1218
  %1220 = vmatmul.bf16.gmra.mxu0 %v655
  %v1221 = vpop.f32.mrf.mxu0
  %v1222 = vadd.f32 %v1193, %v1221
  %v1223 = vpop.f32.mrf.mxu0
  %v1224 = vadd.f32 %v1195, %v1223
  %1225 = vdwg.mxu0
  %1226 = vmatpush.bf16.msra.mxu0 %v931
  %1227 = vmatpush.bf16.msra.mxu0 %v928
  %1228 = vmatpush.bf16.msra.mxu0 %v925
  %1229 = vmatpush.bf16.msra.mxu0 %v922
  %1230 = vmatpush.bf16.msra.mxu0 %v919
  %1231 = vmatpush.bf16.msra.mxu0 %v916
  %1232 = vmatpush.bf16.msra.mxu0 %v913
  %1233 = vmatpush.bf16.msra.mxu0 %v910
  %1234 = vmatmul.bf16.gmra.mxu0 %v644
  %v1235 = vpop.f32.mrf.mxu0
  %v1236 = vadd.f32 0.0, %v1235
  %v1237 = vpop.f32.mrf.mxu0
  %v1238 = vadd.f32 0.0, %v1237
  %1239 = vmatmul.bf16.gmra.mxu0 %v647
  %v1240 = vpop.f32.mrf.mxu0
  %v1241 = vadd.f32 0.0, %v1240
  %v1242 = vpop.f32.mrf.mxu0
  %v1243 = vadd.f32 0.0, %v1242
  %1244 = vmatmul.bf16.gmra.mxu0 %v650
  %v1245 = vpop.f32.mrf.mxu0
  %v1246 = vadd.f32 0.0, %v1245
  %v1247 = vpop.f32.mrf.mxu0
  %v1248 = vadd.f32 0.0, %v1247
  %1249 = vmatmul.bf16.gmra.mxu0 %v653
  %v1250 = vpop.f32.mrf.mxu0
  %v1251 = vadd.f32 0.0, %v1250
  %v1252 = vpop.f32.mrf.mxu0
  %v1253 = vadd.f32 0.0, %v1252
  %1254 = vdwg.mxu0
  %1255 = vmatpush.bf16.msra.mxu0 %v955
  %1256 = vmatpush.bf16.msra.mxu0 %v952
  %1257 = vmatpush.bf16.msra.mxu0 %v949
  %1258 = vmatpush.bf16.msra.mxu0 %v946
  %1259 = vmatpush.bf16.msra.mxu0 %v943
  %1260 = vmatpush.bf16.msra.mxu0 %v940
  %1261 = vmatpush.bf16.msra.mxu0 %v937
  %1262 = vmatpush.bf16.msra.mxu0 %v934
  %1263 = vmatmul.bf16.gmra.mxu0 %v645
  %v1264 = vpop.f32.mrf.mxu0
  %v1265 = vadd.f32 %v1236, %v1264
  %v1266 = vpop.f32.mrf.mxu0
  %v1267 = vadd.f32 %v1238, %v1266
  %1268 = vmatmul.bf16.gmra.mxu0 %v648
  %v1269 = vpop.f32.mrf.mxu0
  %v1270 = vadd.f32 %v1241, %v1269
  %v1271 = vpop.f32.mrf.mxu0
  %v1272 = vadd.f32 %v1243, %v1271
  %1273 = vmatmul.bf16.gmra.mxu0 %v651
  %v1274 = vpop.f32.mrf.mxu0
  %v1275 = vadd.f32 %v1246, %v1274
  %v1276 = vpop.f32.mrf.mxu0
  %v1277 = vadd.f32 %v1248, %v1276
  %1278 = vmatmul.bf16.gmra.mxu0 %v654
  %v1279 = vpop.f32.mrf.mxu0
  %v1280 = vadd.f32 %v1251, %v1279
  %v1281 = vpop.f32.mrf.mxu0
  %v1282 = vadd.f32 %v1253, %v1281
  %1283 = vdwg.mxu0
  %1284 = vmatpush.bf16.msra.mxu0 %v979
  %1285 = vmatpush.bf16.msra.mxu0 %v976
  %1286 = vmatpush.bf16.msra.mxu0 %v973
  %1287 = vmatpush.bf16.msra.mxu0 %v970
  %1288 = vmatpush.bf16.msra.mxu0 %v967
  %1289 = vmatpush.bf16.msra.mxu0 %v964
  %1290 = vmatpush.bf16.msra.mxu0 %v961
  %1291 = vmatpush.bf16.msra.mxu0 %v958
  %1292 = vmatmul.bf16.gmra.mxu0 %v646
  %v1293 = vpop.f32.mrf.mxu0
  %v1294 = vadd.f32 %v1265, %v1293
  %v1295 = vpop.f32.mrf.mxu0
  %v1296 = vadd.f32 %v1267, %v1295
  %1297 = vmatmul.bf16.gmra.mxu0 %v649
  %v1298 = vpop.f32.mrf.mxu0
  %v1299 = vadd.f32 %v1270, %v1298
  %v1300 = vpop.f32.mrf.mxu0
  %v1301 = vadd.f32 %v1272, %v1300
  %1302 = vmatmul.bf16.gmra.mxu0 %v652
  %v1303 = vpop.f32.mrf.mxu0
  %v1304 = vadd.f32 %v1275, %v1303
  %v1305 = vpop.f32.mrf.mxu0
  %v1306 = vadd.f32 %v1277, %v1305
  %1307 = vmatmul.bf16.gmra.mxu0 %v655
  %v1308 = vpop.f32.mrf.mxu0
  %v1309 = vadd.f32 %v1280, %v1308
  %v1310 = vpop.f32.mrf.mxu0
  %v1311 = vadd.f32 %v1282, %v1310
  %1312 = vdwg.mxu0
  %v1317 = vunpack.c.l.b16 %v391
  %v1318 = vunpack.c.h.b16 %v391
  %v1319 = vunpack.c.l.b16 %v392
  %v1320 = vunpack.c.l.b16 %v393
  %v1321 = vunpack.c.h.b16 %v393
  %v1322 = vunpack.c.l.b16 %v394
  %v1323 = vpack.c.b16 %v1320, %v1317
  %v1324 = vpack.c.b16 %v1321, %v1318
  %v1325 = vpack.c.b16 %v1322, %v1319
  %v1425 = vunpack.c.l.b16 %v411
  %v1426 = vunpack.c.h.b16 %v411
  %v1427 = vunpack.c.l.b16 %v412
  %v1428 = vunpack.c.l.b16 %v413
  %v1429 = vunpack.c.h.b16 %v413
  %v1430 = vunpack.c.l.b16 %v414
  %v1431 = vunpack.c.l.b16 %v415
  %v1432 = vunpack.c.h.b16 %v415
  %v1433 = vunpack.c.l.b16 %v416
  %v1434 = vunpack.c.l.b16 %v417
  %v1435 = vunpack.c.h.b16 %v417
  %v1436 = vunpack.c.l.b16 %v418
  %v1437 = vunpack.c.l.b16 %v419
  %v1438 = vunpack.c.h.b16 %v419
  %v1439 = vunpack.c.l.b16 %v420
  %v1440 = vunpack.c.l.b16 %v421
  %v1441 = vunpack.c.h.b16 %v421
  %v1442 = vunpack.c.l.b16 %v422
  %v1443 = vunpack.c.l.b16 %v423
  %v1444 = vunpack.c.h.b16 %v423
  %v1445 = vunpack.c.l.b16 %v424
  %v1446 = vunpack.c.l.b16 %v425
  %v1447 = vunpack.c.h.b16 %v425
  %v1448 = vunpack.c.l.b16 %v426
  %v1449 = vunpack.c.l.b16 %v427
  %v1450 = vunpack.c.h.b16 %v427
  %v1451 = vunpack.c.l.b16 %v428
  %v1452 = vunpack.c.l.b16 %v429
  %v1453 = vunpack.c.h.b16 %v429
  %v1454 = vunpack.c.l.b16 %v430
  %v1455 = vunpack.c.l.b16 %v431
  %v1456 = vunpack.c.h.b16 %v431
  %v1457 = vunpack.c.l.b16 %v432
  %v1458 = vunpack.c.l.b16 %v433
  %v1459 = vunpack.c.h.b16 %v433
  %v1460 = vunpack.c.l.b16 %v434
  %v1461 = vunpack.c.l.b16 %v435
  %v1462 = vunpack.c.h.b16 %v435
  %v1463 = vunpack.c.l.b16 %v436
  %v1464 = vunpack.c.l.b16 %v437
  %v1465 = vunpack.c.h.b16 %v437
  %v1466 = vunpack.c.l.b16 %v438
  %v1467 = vunpack.c.l.b16 %v439
  %v1468 = vunpack.c.h.b16 %v439
  %v1469 = vunpack.c.l.b16 %v440
  %v1470 = vunpack.c.l.b16 %v441
  %v1471 = vunpack.c.h.b16 %v441
  %v1472 = vunpack.c.l.b16 %v442
  %v1473 = vunpack.c.l.b16 %v443
  %v1474 = vunpack.c.h.b16 %v443
  %v1475 = vunpack.c.l.b16 %v444
  %v1476 = vunpack.c.l.b16 %v445
  %v1477 = vunpack.c.h.b16 %v445
  %v1478 = vunpack.c.l.b16 %v446
  %v1479 = vunpack.c.l.b16 %v447
  %v1480 = vunpack.c.h.b16 %v447
  %v1481 = vunpack.c.l.b16 %v448
  %v1482 = vunpack.c.l.b16 %v449
  %v1483 = vunpack.c.h.b16 %v449
  %v1484 = vunpack.c.l.b16 %v450
  %v1485 = vunpack.c.l.b16 %v451
  %v1486 = vunpack.c.h.b16 %v451
  %v1487 = vunpack.c.l.b16 %v452
  %v1488 = vunpack.c.l.b16 %v453
  %v1489 = vunpack.c.h.b16 %v453
  %v1490 = vunpack.c.l.b16 %v454
  %v1491 = vunpack.c.l.b16 %v455
  %v1492 = vunpack.c.h.b16 %v455
  %v1493 = vunpack.c.l.b16 %v456
  %v1494 = vunpack.c.l.b16 %v457
  %v1495 = vunpack.c.h.b16 %v457
  %v1496 = vunpack.c.l.b16 %v458
  %v1497 = vunpack.c.l.b16 %v459
  %v1498 = vunpack.c.h.b16 %v459
  %v1499 = vunpack.c.l.b16 %v460
  %v1500 = vunpack.c.l.b16 %v461
  %v1501 = vunpack.c.h.b16 %v461
  %v1502 = vunpack.c.l.b16 %v462
  %v1503 = vunpack.c.l.b16 %v463
  %v1504 = vunpack.c.h.b16 %v463
  %v1505 = vunpack.c.l.b16 %v464
  %v1506 = vunpack.c.l.b16 %v465
  %v1507 = vunpack.c.h.b16 %v465
  %v1508 = vunpack.c.l.b16 %v466
  %v1509 = vunpack.c.l.b16 %v467
  %v1510 = vunpack.c.h.b16 %v467
  %v1511 = vunpack.c.l.b16 %v468
  %v1512 = vunpack.c.l.b16 %v469
  %v1513 = vunpack.c.h.b16 %v469
  %v1514 = vunpack.c.l.b16 %v470
  %v1515 = vunpack.c.l.b16 %v471
  %v1516 = vunpack.c.h.b16 %v471
  %v1517 = vunpack.c.l.b16 %v472
  %v1518 = vunpack.c.l.b16 %v473
  %v1519 = vunpack.c.h.b16 %v473
  %v1520 = vunpack.c.l.b16 %v474
  %v1521 = vunpack.c.l.b16 %v475
  %v1522 = vunpack.c.h.b16 %v475
  %v1523 = vunpack.c.l.b16 %v476
  %v1524 = vunpack.c.l.b16 %v477
  %v1525 = vunpack.c.h.b16 %v477
  %v1526 = vunpack.c.l.b16 %v478
  %v1527 = vunpack.c.l.b16 %v479
  %v1528 = vunpack.c.h.b16 %v479
  %v1529 = vunpack.c.l.b16 %v480
  %v1530 = vunpack.c.l.b16 %v481
  %v1531 = vunpack.c.h.b16 %v481
  %v1532 = vunpack.c.l.b16 %v482
  %v1533 = vunpack.c.l.b16 %v483
  %v1534 = vunpack.c.h.b16 %v483
  %v1535 = vunpack.c.l.b16 %v484
  %v1536 = vunpack.c.l.b16 %v485
  %v1537 = vunpack.c.h.b16 %v485
  %v1538 = vunpack.c.l.b16 %v486
  %v1539 = vunpack.c.l.b16 %v487
  %v1540 = vunpack.c.h.b16 %v487
  %v1541 = vunpack.c.l.b16 %v488
  %v1542 = vunpack.c.l.b16 %v489
  %v1543 = vunpack.c.h.b16 %v489
  %v1544 = vunpack.c.l.b16 %v490
  %v1545 = vunpack.c.l.b16 %v491
  %v1546 = vunpack.c.h.b16 %v491
  %v1547 = vunpack.c.l.b16 %v492
  %v1548 = vunpack.c.l.b16 %v493
  %v1549 = vunpack.c.h.b16 %v493
  %v1550 = vunpack.c.l.b16 %v494
  %v1551 = vunpack.c.l.b16 %v495
  %v1552 = vunpack.c.h.b16 %v495
  %v1553 = vunpack.c.l.b16 %v496
  %v1554 = vunpack.c.l.b16 %v497
  %v1555 = vunpack.c.h.b16 %v497
  %v1556 = vunpack.c.l.b16 %v498
  %v1557 = vunpack.c.l.b16 %v499
  %v1558 = vunpack.c.h.b16 %v499
  %v1559 = vunpack.c.l.b16 %v500
  %v1560 = vunpack.c.l.b16 %v501
  %v1561 = vunpack.c.h.b16 %v501
  %v1562 = vunpack.c.l.b16 %v502
  %v1563 = vunpack.c.l.b16 %v503
  %v1564 = vunpack.c.h.b16 %v503
  %v1565 = vunpack.c.l.b16 %v504
  %v1566 = vunpack.c.l.b16 %v505
  %v1567 = vunpack.c.h.b16 %v505
  %v1568 = vunpack.c.l.b16 %v506
  %v1569 = vpack.c.b16 %v1428, %v1425
  %v1570 = vpack.c.b16 %v1429, %v1426
  %v1571 = vpack.c.b16 %v1430, %v1427
  %v1572 = vpack.c.b16 %v1434, %v1431
  %v1573 = vpack.c.b16 %v1435, %v1432
  %v1574 = vpack.c.b16 %v1436, %v1433
  %v1575 = vpack.c.b16 %v1440, %v1437
  %v1576 = vpack.c.b16 %v1441, %v1438
  %v1577 = vpack.c.b16 %v1442, %v1439
  %v1578 = vpack.c.b16 %v1446, %v1443
  %v1579 = vpack.c.b16 %v1447, %v1444
  %v1580 = vpack.c.b16 %v1448, %v1445
  %v1581 = vpack.c.b16 %v1452, %v1449
  %v1582 = vpack.c.b16 %v1453, %v1450
  %v1583 = vpack.c.b16 %v1454, %v1451
  %v1584 = vpack.c.b16 %v1458, %v1455
  %v1585 = vpack.c.b16 %v1459, %v1456
  %v1586 = vpack.c.b16 %v1460, %v1457
  %v1587 = vpack.c.b16 %v1464, %v1461
  %v1588 = vpack.c.b16 %v1465, %v1462
  %v1589 = vpack.c.b16 %v1466, %v1463
  %v1590 = vpack.c.b16 %v1470, %v1467
  %v1591 = vpack.c.b16 %v1471, %v1468
  %v1592 = vpack.c.b16 %v1472, %v1469
  %v1593 = vpack.c.b16 %v1476, %v1473
  %v1594 = vpack.c.b16 %v1477, %v1474
  %v1595 = vpack.c.b16 %v1478, %v1475
  %v1596 = vpack.c.b16 %v1482, %v1479
  %v1597 = vpack.c.b16 %v1483, %v1480
  %v1598 = vpack.c.b16 %v1484, %v1481
  %v1599 = vpack.c.b16 %v1488, %v1485
  %v1600 = vpack.c.b16 %v1489, %v1486
  %v1601 = vpack.c.b16 %v1490, %v1487
  %v1602 = vpack.c.b16 %v1494, %v1491
  %v1603 = vpack.c.b16 %v1495, %v1492
  %v1604 = vpack.c.b16 %v1496, %v1493
  %v1605 = vpack.c.b16 %v1500, %v1497
  %v1606 = vpack.c.b16 %v1501, %v1498
  %v1607 = vpack.c.b16 %v1502, %v1499
  %v1608 = vpack.c.b16 %v1506, %v1503
  %v1609 = vpack.c.b16 %v1507, %v1504
  %v1610 = vpack.c.b16 %v1508, %v1505
  %v1611 = vpack.c.b16 %v1512, %v1509
  %v1612 = vpack.c.b16 %v1513, %v1510
  %v1613 = vpack.c.b16 %v1514, %v1511
  %v1614 = vpack.c.b16 %v1518, %v1515
  %v1615 = vpack.c.b16 %v1519, %v1516
  %v1616 = vpack.c.b16 %v1520, %v1517
  %v1617 = vpack.c.b16 %v1524, %v1521
  %v1618 = vpack.c.b16 %v1525, %v1522
  %v1619 = vpack.c.b16 %v1526, %v1523
  %v1620 = vpack.c.b16 %v1530, %v1527
  %v1621 = vpack.c.b16 %v1531, %v1528
  %v1622 = vpack.c.b16 %v1532, %v1529
  %v1623 = vpack.c.b16 %v1536, %v1533
  %v1624 = vpack.c.b16 %v1537, %v1534
  %v1625 = vpack.c.b16 %v1538, %v1535
  %v1626 = vpack.c.b16 %v1542, %v1539
  %v1627 = vpack.c.b16 %v1543, %v1540
  %v1628 = vpack.c.b16 %v1544, %v1541
  %v1629 = vpack.c.b16 %v1548, %v1545
  %v1630 = vpack.c.b16 %v1549, %v1546
  %v1631 = vpack.c.b16 %v1550, %v1547
  %v1632 = vpack.c.b16 %v1554, %v1551
  %v1633 = vpack.c.b16 %v1555, %v1552
  %v1634 = vpack.c.b16 %v1556, %v1553
  %v1635 = vpack.c.b16 %v1560, %v1557
  %v1636 = vpack.c.b16 %v1561, %v1558
  %v1637 = vpack.c.b16 %v1562, %v1559
  %v1638 = vpack.c.b16 %v1566, %v1563
  %v1639 = vpack.c.b16 %v1567, %v1564
  %v1640 = vpack.c.b16 %v1568, %v1565
  %1713 = vmatpush.bf16.msra.mxu0 %v1590
  %1714 = vmatpush.bf16.msra.mxu0 %v1587
  %1715 = vmatpush.bf16.msra.mxu0 %v1584
  %1716 = vmatpush.bf16.msra.mxu0 %v1581
  %1717 = vmatpush.bf16.msra.mxu0 %v1578
  %1718 = vmatpush.bf16.msra.mxu0 %v1575
  %1719 = vmatpush.bf16.msra.mxu0 %v1572
  %1720 = vmatpush.bf16.msra.mxu0 %v1569
  %1721 = vmatmul.bf16.gmra.mxu0 %v1323
  %v1722 = vpop.f32.mrf.mxu0
  %v1723 = vadd.f32 %v1120, %v1722
  %v1724 = vpop.f32.mrf.mxu0
  %v1725 = vadd.f32 %v1122, %v1724
  %1726 = vmatmul.bf16.gmra.mxu0 %v644
  %v1727 = vpop.f32.mrf.mxu0
  %v1728 = vadd.f32 %v1125, %v1727
  %v1729 = vpop.f32.mrf.mxu0
  %v1730 = vadd.f32 %v1127, %v1729
  %1731 = vmatmul.bf16.gmra.mxu0 %v647
  %v1732 = vpop.f32.mrf.mxu0
  %v1733 = vadd.f32 %v1130, %v1732
  %v1734 = vpop.f32.mrf.mxu0
  %v1735 = vadd.f32 %v1132, %v1734
  %1736 = vmatmul.bf16.gmra.mxu0 %v650
  %v1737 = vpop.f32.mrf.mxu0
  %v1738 = vadd.f32 %v1135, %v1737
  %v1739 = vpop.f32.mrf.mxu0
  %v1740 = vadd.f32 %v1137, %v1739
  %1741 = vdwg.mxu0
  %1742 = vmatpush.bf16.msra.mxu0 %v1614
  %1743 = vmatpush.bf16.msra.mxu0 %v1611
  %1744 = vmatpush.bf16.msra.mxu0 %v1608
  %1745 = vmatpush.bf16.msra.mxu0 %v1605
  %1746 = vmatpush.bf16.msra.mxu0 %v1602
  %1747 = vmatpush.bf16.msra.mxu0 %v1599
  %1748 = vmatpush.bf16.msra.mxu0 %v1596
  %1749 = vmatpush.bf16.msra.mxu0 %v1593
  %1750 = vmatmul.bf16.gmra.mxu0 %v1324
  %v1751 = vpop.f32.mrf.mxu0
  %v1752 = vadd.f32 %v1723, %v1751
  %v1753 = vpop.f32.mrf.mxu0
  %v1754 = vadd.f32 %v1725, %v1753
  %1755 = vmatmul.bf16.gmra.mxu0 %v645
  %v1756 = vpop.f32.mrf.mxu0
  %v1757 = vadd.f32 %v1728, %v1756
  %v1758 = vpop.f32.mrf.mxu0
  %v1759 = vadd.f32 %v1730, %v1758
  %1760 = vmatmul.bf16.gmra.mxu0 %v648
  %v1761 = vpop.f32.mrf.mxu0
  %v1762 = vadd.f32 %v1733, %v1761
  %v1763 = vpop.f32.mrf.mxu0
  %v1764 = vadd.f32 %v1735, %v1763
  %1765 = vmatmul.bf16.gmra.mxu0 %v651
  %v1766 = vpop.f32.mrf.mxu0
  %v1767 = vadd.f32 %v1738, %v1766
  %v1768 = vpop.f32.mrf.mxu0
  %v1769 = vadd.f32 %v1740, %v1768
  %1770 = vdwg.mxu0
  %1771 = vmatpush.bf16.msra.mxu0 %v1638
  %1772 = vmatpush.bf16.msra.mxu0 %v1635
  %1773 = vmatpush.bf16.msra.mxu0 %v1632
  %1774 = vmatpush.bf16.msra.mxu0 %v1629
  %1775 = vmatpush.bf16.msra.mxu0 %v1626
  %1776 = vmatpush.bf16.msra.mxu0 %v1623
  %1777 = vmatpush.bf16.msra.mxu0 %v1620
  %1778 = vmatpush.bf16.msra.mxu0 %v1617
  %1779 = vmatmul.bf16.gmra.mxu0 %v1325
  %v1780 = vpop.f32.mrf.mxu0
  %v1781 = vadd.f32 %v1752, %v1780
  %v1782 = vpop.f32.mrf.mxu0
  %v1783 = vadd.f32 %v1754, %v1782
  %1784 = vmatmul.bf16.gmra.mxu0 %v646
  %v1785 = vpop.f32.mrf.mxu0
  %v1786 = vadd.f32 %v1757, %v1785
  %v1787 = vpop.f32.mrf.mxu0
  %v1788 = vadd.f32 %v1759, %v1787
  %1789 = vmatmul.bf16.gmra.mxu0 %v649
  %v1790 = vpop.f32.mrf.mxu0
  %v1791 = vadd.f32 %v1762, %v1790
  %v1792 = vpop.f32.mrf.mxu0
  %v1793 = vadd.f32 %v1764, %v1792
  %1794 = vmatmul.bf16.gmra.mxu0 %v652
  %v1795 = vpop.f32.mrf.mxu0
  %v1796 = vadd.f32 %v1767, %v1795
  %v1797 = vpop.f32.mrf.mxu0
  %v1798 = vadd.f32 %v1769, %v1797
  %1799 = vdwg.mxu0
  %1800 = vmatpush.bf16.msra.mxu0 %v1591
  %1801 = vmatpush.bf16.msra.mxu0 %v1588
  %1802 = vmatpush.bf16.msra.mxu0 %v1585
  %1803 = vmatpush.bf16.msra.mxu0 %v1582
  %1804 = vmatpush.bf16.msra.mxu0 %v1579
  %1805 = vmatpush.bf16.msra.mxu0 %v1576
  %1806 = vmatpush.bf16.msra.mxu0 %v1573
  %1807 = vmatpush.bf16.msra.mxu0 %v1570
  %1808 = vmatmul.bf16.gmra.mxu0 %v1323
  %v1809 = vpop.f32.mrf.mxu0
  %v1810 = vadd.f32 %v1207, %v1809
  %v1811 = vpop.f32.mrf.mxu0
  %v1812 = vadd.f32 %v1209, %v1811
  %1813 = vmatmul.bf16.gmra.mxu0 %v644
  %v1814 = vpop.f32.mrf.mxu0
  %v1815 = vadd.f32 %v1212, %v1814
  %v1816 = vpop.f32.mrf.mxu0
  %v1817 = vadd.f32 %v1214, %v1816
  %1818 = vmatmul.bf16.gmra.mxu0 %v647
  %v1819 = vpop.f32.mrf.mxu0
  %v1820 = vadd.f32 %v1217, %v1819
  %v1821 = vpop.f32.mrf.mxu0
  %v1822 = vadd.f32 %v1219, %v1821
  %1823 = vmatmul.bf16.gmra.mxu0 %v650
  %v1824 = vpop.f32.mrf.mxu0
  %v1825 = vadd.f32 %v1222, %v1824
  %v1826 = vpop.f32.mrf.mxu0
  %v1827 = vadd.f32 %v1224, %v1826
  %1828 = vdwg.mxu0
  %1829 = vmatpush.bf16.msra.mxu0 %v1615
  %1830 = vmatpush.bf16.msra.mxu0 %v1612
  %1831 = vmatpush.bf16.msra.mxu0 %v1609
  %1832 = vmatpush.bf16.msra.mxu0 %v1606
  %1833 = vmatpush.bf16.msra.mxu0 %v1603
  %1834 = vmatpush.bf16.msra.mxu0 %v1600
  %1835 = vmatpush.bf16.msra.mxu0 %v1597
  %1836 = vmatpush.bf16.msra.mxu0 %v1594
  %1837 = vmatmul.bf16.gmra.mxu0 %v1324
  %v1838 = vpop.f32.mrf.mxu0
  %v1839 = vadd.f32 %v1810, %v1838
  %v1840 = vpop.f32.mrf.mxu0
  %v1841 = vadd.f32 %v1812, %v1840
  %1842 = vmatmul.bf16.gmra.mxu0 %v645
  %v1843 = vpop.f32.mrf.mxu0
  %v1844 = vadd.f32 %v1815, %v1843
  %v1845 = vpop.f32.mrf.mxu0
  %v1846 = vadd.f32 %v1817, %v1845
  %1847 = vmatmul.bf16.gmra.mxu0 %v648
  %v1848 = vpop.f32.mrf.mxu0
  %v1849 = vadd.f32 %v1820, %v1848
  %v1850 = vpop.f32.mrf.mxu0
  %v1851 = vadd.f32 %v1822, %v1850
  %1852 = vmatmul.bf16.gmra.mxu0 %v651
  %v1853 = vpop.f32.mrf.mxu0
  %v1854 = vadd.f32 %v1825, %v1853
  %v1855 = vpop.f32.mrf.mxu0
  %v1856 = vadd.f32 %v1827, %v1855
  %1857 = vdwg.mxu0
  %1858 = vmatpush.bf16.msra.mxu0 %v1639
  %1859 = vmatpush.bf16.msra.mxu0 %v1636
  %1860 = vmatpush.bf16.msra.mxu0 %v1633
  %1861 = vmatpush.bf16.msra.mxu0 %v1630
  %1862 = vmatpush.bf16.msra.mxu0 %v1627
  %1863 = vmatpush.bf16.msra.mxu0 %v1624
  %1864 = vmatpush.bf16.msra.mxu0 %v1621
  %1865 = vmatpush.bf16.msra.mxu0 %v1618
  %1866 = vmatmul.bf16.gmra.mxu0 %v1325
  %v1867 = vpop.f32.mrf.mxu0
  %v1868 = vadd.f32 %v1839, %v1867
  %v1869 = vpop.f32.mrf.mxu0
  %v1870 = vadd.f32 %v1841, %v1869
  %1871 = vmatmul.bf16.gmra.mxu0 %v646
  %v1872 = vpop.f32.mrf.mxu0
  %v1873 = vadd.f32 %v1844, %v1872
  %v1874 = vpop.f32.mrf.mxu0
  %v1875 = vadd.f32 %v1846, %v1874
  %1876 = vmatmul.bf16.gmra.mxu0 %v649
  %v1877 = vpop.f32.mrf.mxu0
  %v1878 = vadd.f32 %v1849, %v1877
  %v1879 = vpop.f32.mrf.mxu0
  %v1880 = vadd.f32 %v1851, %v1879
  %1881 = vmatmul.bf16.gmra.mxu0 %v652
  %v1882 = vpop.f32.mrf.mxu0
  %v1883 = vadd.f32 %v1854, %v1882
  %v1884 = vpop.f32.mrf.mxu0
  %v1885 = vadd.f32 %v1856, %v1884
  %1886 = vdwg.mxu0
  %1887 = vmatpush.bf16.msra.mxu0 %v1592
  %1888 = vmatpush.bf16.msra.mxu0 %v1589
  %1889 = vmatpush.bf16.msra.mxu0 %v1586
  %1890 = vmatpush.bf16.msra.mxu0 %v1583
  %1891 = vmatpush.bf16.msra.mxu0 %v1580
  %1892 = vmatpush.bf16.msra.mxu0 %v1577
  %1893 = vmatpush.bf16.msra.mxu0 %v1574
  %1894 = vmatpush.bf16.msra.mxu0 %v1571
  %1895 = vmatmul.bf16.gmra.mxu0 %v1323
  %v1896 = vpop.f32.mrf.mxu0
  %v1897 = vadd.f32 %v1294, %v1896
  %v1898 = vpop.f32.mrf.mxu0
  %v1899 = vadd.f32 %v1296, %v1898
  %1900 = vmatmul.bf16.gmra.mxu0 %v644
  %v1901 = vpop.f32.mrf.mxu0
  %v1902 = vadd.f32 %v1299, %v1901
  %v1903 = vpop.f32.mrf.mxu0
  %v1904 = vadd.f32 %v1301, %v1903
  %1905 = vmatmul.bf16.gmra.mxu0 %v647
  %v1906 = vpop.f32.mrf.mxu0
  %v1907 = vadd.f32 %v1304, %v1906
  %v1908 = vpop.f32.mrf.mxu0
  %v1909 = vadd.f32 %v1306, %v1908
  %1910 = vmatmul.bf16.gmra.mxu0 %v650
  %v1911 = vpop.f32.mrf.mxu0
  %v1912 = vadd.f32 %v1309, %v1911
  %v1913 = vpop.f32.mrf.mxu0
  %v1914 = vadd.f32 %v1311, %v1913
  %1915 = vdwg.mxu0
  %1916 = vmatpush.bf16.msra.mxu0 %v1616
  %1917 = vmatpush.bf16.msra.mxu0 %v1613
  %1918 = vmatpush.bf16.msra.mxu0 %v1610
  %1919 = vmatpush.bf16.msra.mxu0 %v1607
  %1920 = vmatpush.bf16.msra.mxu0 %v1604
  %1921 = vmatpush.bf16.msra.mxu0 %v1601
  %1922 = vmatpush.bf16.msra.mxu0 %v1598
  %1923 = vmatpush.bf16.msra.mxu0 %v1595
  %1924 = vmatmul.bf16.gmra.mxu0 %v1324
  %v1925 = vpop.f32.mrf.mxu0
  %v1926 = vadd.f32 %v1897, %v1925
  %v1927 = vpop.f32.mrf.mxu0
  %v1928 = vadd.f32 %v1899, %v1927
  %1929 = vmatmul.bf16.gmra.mxu0 %v645
  %v1930 = vpop.f32.mrf.mxu0
  %v1931 = vadd.f32 %v1902, %v1930
  %v1932 = vpop.f32.mrf.mxu0
  %v1933 = vadd.f32 %v1904, %v1932
  %1934 = vmatmul.bf16.gmra.mxu0 %v648
  %v1935 = vpop.f32.mrf.mxu0
  %v1936 = vadd.f32 %v1907, %v1935
  %v1937 = vpop.f32.mrf.mxu0
  %v1938 = vadd.f32 %v1909, %v1937
  %1939 = vmatmul.bf16.gmra.mxu0 %v651
  %v1940 = vpop.f32.mrf.mxu0
  %v1941 = vadd.f32 %v1912, %v1940
  %v1942 = vpop.f32.mrf.mxu0
  %v1943 = vadd.f32 %v1914, %v1942
  %1944 = vdwg.mxu0
  %1945 = vmatpush.bf16.msra.mxu0 %v1640
  %1946 = vmatpush.bf16.msra.mxu0 %v1637
  %1947 = vmatpush.bf16.msra.mxu0 %v1634
  %1948 = vmatpush.bf16.msra.mxu0 %v1631
  %1949 = vmatpush.bf16.msra.mxu0 %v1628
  %1950 = vmatpush.bf16.msra.mxu0 %v1625
  %1951 = vmatpush.bf16.msra.mxu0 %v1622
  %1952 = vmatpush.bf16.msra.mxu0 %v1619
  %1953 = vmatmul.bf16.gmra.mxu0 %v1325
  %v1954 = vpop.f32.mrf.mxu0
  %v1955 = vadd.f32 %v1926, %v1954
  %v1956 = vpop.f32.mrf.mxu0
  %v1957 = vadd.f32 %v1928, %v1956
  %1958 = vmatmul.bf16.gmra.mxu0 %v646
  %v1959 = vpop.f32.mrf.mxu0
  %v1960 = vadd.f32 %v1931, %v1959
  %v1961 = vpop.f32.mrf.mxu0
  %v1962 = vadd.f32 %v1933, %v1961
  %1963 = vmatmul.bf16.gmra.mxu0 %v649
  %v1964 = vpop.f32.mrf.mxu0
  %v1965 = vadd.f32 %v1936, %v1964
  %v1966 = vpop.f32.mrf.mxu0
  %v1967 = vadd.f32 %v1938, %v1966
  %1968 = vmatmul.bf16.gmra.mxu0 %v652
  %v1969 = vpop.f32.mrf.mxu0
  %v1970 = vadd.f32 %v1941, %v1969
  %v1971 = vpop.f32.mrf.mxu0
  %v1972 = vadd.f32 %v1943, %v1971
  %1973 = vdwg.mxu0
  %v1975 = vperm.slane %v390, 0
  %v1976 = vperm.slane %v390, 1
  %v1977 = vperm.slane %v390, 2
  %v1981 = vadd.f32 %v1781, %v1975
  %v1982 = vadd.f32 %v1868, %v1976
  %v1983 = vadd.f32 %v1955, %v1977
  %v1984 = vadd.f32 %v1783, %v1975
  %v1985 = vadd.f32 %v1870, %v1976
  %v1986 = vadd.f32 %v1957, %v1977
  %v1987 = vadd.f32 %v1786, %v1975
  %v1988 = vadd.f32 %v1873, %v1976
  %v1989 = vadd.f32 %v1960, %v1977
  %v1990 = vadd.f32 %v1788, %v1975
  %v1991 = vadd.f32 %v1875, %v1976
  %v1992 = vadd.f32 %v1962, %v1977
  %v1993 = vadd.f32 %v1791, %v1975
  %v1994 = vadd.f32 %v1878, %v1976
  %v1995 = vadd.f32 %v1965, %v1977
  %v1996 = vadd.f32 %v1793, %v1975
  %v1997 = vadd.f32 %v1880, %v1976
  %v1998 = vadd.f32 %v1967, %v1977
  %v1999 = vadd.f32 %v1796, %v1975
  %v2000 = vadd.f32 %v1883, %v1976
  %v2001 = vadd.f32 %v1970, %v1977
  %v2002 = vadd.f32 %v1798, %v1975
  %v2003 = vadd.f32 %v1885, %v1976
  %v2004 = vadd.f32 %v1972, %v1977
  %v2005 = vmax.f32 %v1981, 0.0
  %v2006 = vmax.f32 %v1982, 0.0
  %v2007 = vmax.f32 %v1983, 0.0
  %v2008 = vmax.f32 %v1984, 0.0
  %v2009 = vmax.f32 %v1985, 0.0
  %v2010 = vmax.f32 %v1986, 0.0
  %v2011 = vmax.f32 %v1987, 0.0
  %v2012 = vmax.f32 %v1988, 0.0
  %v2013 = vmax.f32 %v1989, 0.0
  %v2014 = vmax.f32 %v1990, 0.0
  %v2015 = vmax.f32 %v1991, 0.0
  %v2016 = vmax.f32 %v1992, 0.0
  %v2017 = vmax.f32 %v1993, 0.0
  %v2018 = vmax.f32 %v1994, 0.0
  %v2019 = vmax.f32 %v1995, 0.0
  %v2020 = vmax.f32 %v1996, 0.0
  %v2021 = vmax.f32 %v1997, 0.0
  %v2022 = vmax.f32 %v1998, 0.0
  %v2023 = vmax.f32 %v1999, 0.0
  %v2024 = vmax.f32 %v2000, 0.0
  %v2025 = vmax.f32 %v2001, 0.0
  %v2026 = vmax.f32 %v2002, 0.0
  %v2027 = vmax.f32 %v2003, 0.0
  %v2028 = vmax.f32 %v2004, 0.0
  %v2029 = vpack.c.bf16 %v2006, %v2005
  %v2030 = vpack.c.bf16 %v2007, %v2007
  %v2031 = vpack.c.bf16 %v2009, %v2008
  %v2032 = vpack.c.bf16 %v2010, %v2010
  %v2033 = vpack.c.bf16 %v2012, %v2011
  %v2034 = vpack.c.bf16 %v2013, %v2013
  %v2035 = vpack.c.bf16 %v2015, %v2014
  %v2036 = vpack.c.bf16 %v2016, %v2016
  %v2037 = vpack.c.bf16 %v2018, %v2017
  %v2038 = vpack.c.bf16 %v2019, %v2019
  %v2039 = vpack.c.bf16 %v2021, %v2020
  %v2040 = vpack.c.bf16 %v2022, %v2022
  %v2041 = vpack.c.bf16 %v2024, %v2023
  %v2042 = vpack.c.bf16 %v2025, %v2025
  %v2043 = vpack.c.bf16 %v2027, %v2026
  %v2044 = vpack.c.bf16 %v2028, %v2028
  %2045 = vst [vmem:[#allocation3 + $0x18] sm:$0xff] %v2029
  %2046 = vst.msk [vmem:[#allocation3 + $0x20] sm:$0xf] %vm42, %v2030
  %2047 = vst [vmem:[#allocation3 + $0x24] sm:$0xff] %v2031
  %2048 = vst.msk [vmem:[#allocation3 + $0x2c] sm:$0xf] %vm42, %v2032
  %2049 = vst [vmem:[#allocation3 + $0x48] sm:$0xff] %v2033
  %2050 = vst.msk [vmem:[#allocation3 + $0x50] sm:$0xf] %vm42, %v2034
  %2051 = vst [vmem:[#allocation3 + $0x54] sm:$0xff] %v2035
  %2052 = vst.msk [vmem:[#allocation3 + $0x5c] sm:$0xf] %vm42, %v2036
  %2053 = vst [vmem:[#allocation3 + $0x78] sm:$0xff] %v2037
  %2054 = vst.msk [vmem:[#allocation3 + $0x80] sm:$0xf] %vm42, %v2038
  %2055 = vst [vmem:[#allocation3 + $0x84] sm:$0xff] %v2039
  %2056 = vst.msk [vmem:[#allocation3 + $0x8c] sm:$0xf] %vm42, %v2040
  %2057 = vst [vmem:[#allocation3 + $0xa8] sm:$0xff] %v2041
  %2058 = vst.msk [vmem:[#allocation3 + $0xb0] sm:$0xf] %vm42, %v2042
  %2059 = vst [vmem:[#allocation3 + $0xb4] sm:$0xff] %v2043
  %2060 = vst.msk [vmem:[#allocation3 + $0xbc] sm:$0xf] %vm42, %v2044
  %v2061 = vld [vmem:[#allocation2 + $0x18] sm:$0xff]
  %v2062 = vld [vmem:[#allocation2 + $0x20] sm:$0xf]
  %v2063 = vld [vmem:[#allocation2 + $0x24] sm:$0xff]
  %v2064 = vld [vmem:[#allocation2 + $0x2c] sm:$0xf]
  %v2065 = vld [vmem:[#allocation2 + $0x30] sm:$0xff]
  %v2066 = vld [vmem:[#allocation2 + $0x38] sm:$0xf]
  %v2067 = vld [vmem:[#allocation2 + $0x3c] sm:$0xff]
  %v2068 = vld [vmem:[#allocation2 + $0x44] sm:$0xf]
  %v2069 = vld [vmem:[#allocation2 + $0x48] sm:$0xff]
  %v2070 = vld [vmem:[#allocation2 + $0x50] sm:$0xf]
  %v2071 = vld [vmem:[#allocation2 + $0x54] sm:$0xff]
  %v2072 = vld [vmem:[#allocation2 + $0x5c] sm:$0xf]
  %v2073 = vld [vmem:[#allocation2 + $0x60] sm:$0xff]
  %v2074 = vld [vmem:[#allocation2 + $0x68] sm:$0xf]
  %v2075 = vld [vmem:[#allocation2 + $0x6c] sm:$0xff]
  %v2076 = vld [vmem:[#allocation2 + $0x74] sm:$0xf]
  %v2077 = vld [vmem:[#allocation2 + $0x30] sm:$0xff]
  %v2078 = vld [vmem:[#allocation2 + $0x38] sm:$0xf]
  %v2079 = vld [vmem:[#allocation2 + $0x3c] sm:$0xff]
  %v2080 = vld [vmem:[#allocation2 + $0x44] sm:$0xf]
  %v2081 = vld [vmem:[#allocation2 + $0x48] sm:$0xff]
  %v2082 = vld [vmem:[#allocation2 + $0x50] sm:$0xf]
  %v2083 = vld [vmem:[#allocation2 + $0x54] sm:$0xff]
  %v2084 = vld [vmem:[#allocation2 + $0x5c] sm:$0xf]
  %v2085 = vld [vmem:[#allocation2 + $0x60] sm:$0xff]
  %v2086 = vld [vmem:[#allocation2 + $0x68] sm:$0xf]
  %v2087 = vld [vmem:[#allocation2 + $0x6c] sm:$0xff]
  %v2088 = vld [vmem:[#allocation2 + $0x74] sm:$0xf]
  %v2089 = vld [vmem:[#allocation2 + $0x78] sm:$0xff]
  %v2090 = vld [vmem:[#allocation2 + $0x80] sm:$0xf]
  %v2091 = vld [vmem:[#allocation2 + $0x84] sm:$0xff]
  %v2092 = vld [vmem:[#allocation2 + $0x8c] sm:$0xf]
  %s2093 = scalar_lea.vmem %s3, 1152
  %v2094 = vld [vmem:[%s2093] sm:$0xff]
  %v2095 = vld [vmem:[%s2093 + $0x8] sm:$0xf]
  %v2096 = vld [vmem:[%s2093 + $0xc] sm:$0xff]
  %v2097 = vld [vmem:[%s2093 + $0x14] sm:$0xf]
  %v2098 = vld [vmem:[%s2093 + $0x18] sm:$0xff]
  %v2099 = vld [vmem:[%s2093 + $0x20] sm:$0xf]
  %v2100 = vld [vmem:[%s2093 + $0x24] sm:$0xff]
  %v2101 = vld [vmem:[%s2093 + $0x2c] sm:$0xf]
  %v2102 = vld [vmem:[%s2093 + $0x30] sm:$0xff]
  %v2103 = vld [vmem:[%s2093 + $0x38] sm:$0xf]
  %v2104 = vld [vmem:[%s2093 + $0x3c] sm:$0xff]
  %v2105 = vld [vmem:[%s2093 + $0x44] sm:$0xf]
  %v2106 = vld [vmem:[%s2093 + $0x48] sm:$0xff]
  %v2107 = vld [vmem:[%s2093 + $0x50] sm:$0xf]
  %v2108 = vld [vmem:[%s2093 + $0x54] sm:$0xff]
  %v2109 = vld [vmem:[%s2093 + $0x5c] sm:$0xf]
  %v2110 = vld [vmem:[%s2093 + $0x60] sm:$0xff]
  %v2111 = vld [vmem:[%s2093 + $0x68] sm:$0xf]
  %v2112 = vld [vmem:[%s2093 + $0x6c] sm:$0xff]
  %v2113 = vld [vmem:[%s2093 + $0x74] sm:$0xf]
  %v2114 = vld [vmem:[%s2093 + $0x78] sm:$0xff]
  %v2115 = vld [vmem:[%s2093 + $0x80] sm:$0xf]
  %v2116 = vld [vmem:[%s2093 + $0x84] sm:$0xff]
  %v2117 = vld [vmem:[%s2093 + $0x8c] sm:$0xf]
  %v2118 = vld [vmem:[%s2093 + $0x90] sm:$0xff]
  %v2119 = vld [vmem:[%s2093 + $0x98] sm:$0xf]
  %v2120 = vld [vmem:[%s2093 + $0x9c] sm:$0xff]
  %v2121 = vld [vmem:[%s2093 + $0xa4] sm:$0xf]
  %v2122 = vld [vmem:[%s2093 + $0xa8] sm:$0xff]
  %v2123 = vld [vmem:[%s2093 + $0xb0] sm:$0xf]
  %v2124 = vld [vmem:[%s2093 + $0xb4] sm:$0xff]
  %v2125 = vld [vmem:[%s2093 + $0xbc] sm:$0xf]
  %v2126 = vld [vmem:[%s2093 + $0xc0] sm:$0xff]
  %v2127 = vld [vmem:[%s2093 + $0xc8] sm:$0xf]
  %v2128 = vld [vmem:[%s2093 + $0xcc] sm:$0xff]
  %v2129 = vld [vmem:[%s2093 + $0xd4] sm:$0xf]
  %v2130 = vld [vmem:[%s2093 + $0xd8] sm:$0xff]
  %v2131 = vld [vmem:[%s2093 + $0xe0] sm:$0xf]
  %v2132 = vld [vmem:[%s2093 + $0xe4] sm:$0xff]
  %v2133 = vld [vmem:[%s2093 + $0xec] sm:$0xf]
  %v2134 = vld [vmem:[%s2093 + $0xf0] sm:$0xff]
  %v2135 = vld [vmem:[%s2093 + $0xf8] sm:$0xf]
  %v2136 = vld [vmem:[%s2093 + $0xfc] sm:$0xff]
  %v2137 = vld [vmem:[%s2093 + $0x104] sm:$0xf]
  %v2138 = vld [vmem:[%s2093 + $0x108] sm:$0xff]
  %v2139 = vld [vmem:[%s2093 + $0x110] sm:$0xf]
  %v2140 = vld [vmem:[%s2093 + $0x114] sm:$0xff]
  %v2141 = vld [vmem:[%s2093 + $0x11c] sm:$0xf]
  %v2142 = vld [vmem:[%s2093 + $0x120] sm:$0xff]
  %v2143 = vld [vmem:[%s2093 + $0x128] sm:$0xf]
  %v2144 = vld [vmem:[%s2093 + $0x12c] sm:$0xff]
  %v2145 = vld [vmem:[%s2093 + $0x134] sm:$0xf]
  %v2146 = vld [vmem:[%s2093 + $0x138] sm:$0xff]
  %v2147 = vld [vmem:[%s2093 + $0x140] sm:$0xf]
  %v2148 = vld [vmem:[%s2093 + $0x144] sm:$0xff]
  %v2149 = vld [vmem:[%s2093 + $0x14c] sm:$0xf]
  %v2150 = vld [vmem:[%s2093 + $0x150] sm:$0xff]
  %v2151 = vld [vmem:[%s2093 + $0x158] sm:$0xf]
  %v2152 = vld [vmem:[%s2093 + $0x15c] sm:$0xff]
  %v2153 = vld [vmem:[%s2093 + $0x164] sm:$0xf]
  %v2154 = vld [vmem:[%s2093 + $0x168] sm:$0xff]
  %v2155 = vld [vmem:[%s2093 + $0x170] sm:$0xf]
  %v2156 = vld [vmem:[%s2093 + $0x174] sm:$0xff]
  %v2157 = vld [vmem:[%s2093 + $0x17c] sm:$0xf]
  %v2158 = vld [vmem:[%s2093 + $0x180] sm:$0xff]
  %v2159 = vld [vmem:[%s2093 + $0x188] sm:$0xf]
  %v2160 = vld [vmem:[%s2093 + $0x18c] sm:$0xff]
  %v2161 = vld [vmem:[%s2093 + $0x194] sm:$0xf]
  %v2162 = vld [vmem:[%s2093 + $0x198] sm:$0xff]
  %v2163 = vld [vmem:[%s2093 + $0x1a0] sm:$0xf]
  %v2164 = vld [vmem:[%s2093 + $0x1a4] sm:$0xff]
  %v2165 = vld [vmem:[%s2093 + $0x1ac] sm:$0xf]
  %v2166 = vld [vmem:[%s2093 + $0x1b0] sm:$0xff]
  %v2167 = vld [vmem:[%s2093 + $0x1b8] sm:$0xf]
  %v2168 = vld [vmem:[%s2093 + $0x1bc] sm:$0xff]
  %v2169 = vld [vmem:[%s2093 + $0x1c4] sm:$0xf]
  %v2170 = vld [vmem:[%s2093 + $0x1c8] sm:$0xff]
  %v2171 = vld [vmem:[%s2093 + $0x1d0] sm:$0xf]
  %v2172 = vld [vmem:[%s2093 + $0x1d4] sm:$0xff]
  %v2173 = vld [vmem:[%s2093 + $0x1dc] sm:$0xf]
  %v2174 = vld [vmem:[%s2093 + $0x1e0] sm:$0xff]
  %v2175 = vld [vmem:[%s2093 + $0x1e8] sm:$0xf]
  %v2176 = vld [vmem:[%s2093 + $0x1ec] sm:$0xff]
  %v2177 = vld [vmem:[%s2093 + $0x1f4] sm:$0xf]
  %v2178 = vld [vmem:[%s2093 + $0x1f8] sm:$0xff]
  %v2179 = vld [vmem:[%s2093 + $0x200] sm:$0xf]
  %v2180 = vld [vmem:[%s2093 + $0x204] sm:$0xff]
  %v2181 = vld [vmem:[%s2093 + $0x20c] sm:$0xf]
  %v2182 = vld [vmem:[%s2093 + $0x210] sm:$0xff]
  %v2183 = vld [vmem:[%s2093 + $0x218] sm:$0xf]
  %v2184 = vld [vmem:[%s2093 + $0x21c] sm:$0xff]
  %v2185 = vld [vmem:[%s2093 + $0x224] sm:$0xf]
  %v2186 = vld [vmem:[%s2093 + $0x228] sm:$0xff]
  %v2187 = vld [vmem:[%s2093 + $0x230] sm:$0xf]
  %v2188 = vld [vmem:[%s2093 + $0x234] sm:$0xff]
  %v2189 = vld [vmem:[%s2093 + $0x23c] sm:$0xf]
  %s2190 = scalar_lea.vmem %s3, 1728
  %v2191 = vld [vmem:[%s2190] sm:$0xff]
  %v2192 = vld [vmem:[%s2190 + $0x8] sm:$0xf]
  %v2193 = vld [vmem:[%s2190 + $0xc] sm:$0xff]
  %v2194 = vld [vmem:[%s2190 + $0x14] sm:$0xf]
  %v2195 = vld [vmem:[%s2190 + $0x18] sm:$0xff]
  %v2196 = vld [vmem:[%s2190 + $0x20] sm:$0xf]
  %v2197 = vld [vmem:[%s2190 + $0x24] sm:$0xff]
  %v2198 = vld [vmem:[%s2190 + $0x2c] sm:$0xf]
  %v2199 = vld [vmem:[%s2190 + $0x30] sm:$0xff]
  %v2200 = vld [vmem:[%s2190 + $0x38] sm:$0xf]
  %v2201 = vld [vmem:[%s2190 + $0x3c] sm:$0xff]
  %v2202 = vld [vmem:[%s2190 + $0x44] sm:$0xf]
  %v2203 = vld [vmem:[%s2190 + $0x48] sm:$0xff]
  %v2204 = vld [vmem:[%s2190 + $0x50] sm:$0xf]
  %v2205 = vld [vmem:[%s2190 + $0x54] sm:$0xff]
  %v2206 = vld [vmem:[%s2190 + $0x5c] sm:$0xf]
  %v2207 = vld [vmem:[%s2190 + $0x60] sm:$0xff]
  %v2208 = vld [vmem:[%s2190 + $0x68] sm:$0xf]
  %v2209 = vld [vmem:[%s2190 + $0x6c] sm:$0xff]
  %v2210 = vld [vmem:[%s2190 + $0x74] sm:$0xf]
  %v2211 = vld [vmem:[%s2190 + $0x78] sm:$0xff]
  %v2212 = vld [vmem:[%s2190 + $0x80] sm:$0xf]
  %v2213 = vld [vmem:[%s2190 + $0x84] sm:$0xff]
  %v2214 = vld [vmem:[%s2190 + $0x8c] sm:$0xf]
  %v2215 = vld [vmem:[%s2190 + $0x90] sm:$0xff]
  %v2216 = vld [vmem:[%s2190 + $0x98] sm:$0xf]
  %v2217 = vld [vmem:[%s2190 + $0x9c] sm:$0xff]
  %v2218 = vld [vmem:[%s2190 + $0xa4] sm:$0xf]
  %v2219 = vld [vmem:[%s2190 + $0xa8] sm:$0xff]
  %v2220 = vld [vmem:[%s2190 + $0xb0] sm:$0xf]
  %v2221 = vld [vmem:[%s2190 + $0xb4] sm:$0xff]
  %v2222 = vld [vmem:[%s2190 + $0xbc] sm:$0xf]
  %v2223 = vld [vmem:[%s2190 + $0xc0] sm:$0xff]
  %v2224 = vld [vmem:[%s2190 + $0xc8] sm:$0xf]
  %v2225 = vld [vmem:[%s2190 + $0xcc] sm:$0xff]
  %v2226 = vld [vmem:[%s2190 + $0xd4] sm:$0xf]
  %v2227 = vld [vmem:[%s2190 + $0xd8] sm:$0xff]
  %v2228 = vld [vmem:[%s2190 + $0xe0] sm:$0xf]
  %v2229 = vld [vmem:[%s2190 + $0xe4] sm:$0xff]
  %v2230 = vld [vmem:[%s2190 + $0xec] sm:$0xf]
  %v2231 = vld [vmem:[%s2190 + $0xf0] sm:$0xff]
  %v2232 = vld [vmem:[%s2190 + $0xf8] sm:$0xf]
  %v2233 = vld [vmem:[%s2190 + $0xfc] sm:$0xff]
  %v2234 = vld [vmem:[%s2190 + $0x104] sm:$0xf]
  %v2235 = vld [vmem:[%s2190 + $0x108] sm:$0xff]
  %v2236 = vld [vmem:[%s2190 + $0x110] sm:$0xf]
  %v2237 = vld [vmem:[%s2190 + $0x114] sm:$0xff]
  %v2238 = vld [vmem:[%s2190 + $0x11c] sm:$0xf]
  %v2239 = vld [vmem:[%s2190 + $0x120] sm:$0xff]
  %v2240 = vld [vmem:[%s2190 + $0x128] sm:$0xf]
  %v2241 = vld [vmem:[%s2190 + $0x12c] sm:$0xff]
  %v2242 = vld [vmem:[%s2190 + $0x134] sm:$0xf]
  %v2243 = vld [vmem:[%s2190 + $0x138] sm:$0xff]
  %v2244 = vld [vmem:[%s2190 + $0x140] sm:$0xf]
  %v2245 = vld [vmem:[%s2190 + $0x144] sm:$0xff]
  %v2246 = vld [vmem:[%s2190 + $0x14c] sm:$0xf]
  %v2247 = vld [vmem:[%s2190 + $0x150] sm:$0xff]
  %v2248 = vld [vmem:[%s2190 + $0x158] sm:$0xf]
  %v2249 = vld [vmem:[%s2190 + $0x15c] sm:$0xff]
  %v2250 = vld [vmem:[%s2190 + $0x164] sm:$0xf]
  %v2251 = vld [vmem:[%s2190 + $0x168] sm:$0xff]
  %v2252 = vld [vmem:[%s2190 + $0x170] sm:$0xf]
  %v2253 = vld [vmem:[%s2190 + $0x174] sm:$0xff]
  %v2254 = vld [vmem:[%s2190 + $0x17c] sm:$0xf]
  %v2255 = vld [vmem:[%s2190 + $0x180] sm:$0xff]
  %v2256 = vld [vmem:[%s2190 + $0x188] sm:$0xf]
  %v2257 = vld [vmem:[%s2190 + $0x18c] sm:$0xff]
  %v2258 = vld [vmem:[%s2190 + $0x194] sm:$0xf]
  %v2259 = vld [vmem:[%s2190 + $0x198] sm:$0xff]
  %v2260 = vld [vmem:[%s2190 + $0x1a0] sm:$0xf]
  %v2261 = vld [vmem:[%s2190 + $0x1a4] sm:$0xff]
  %v2262 = vld [vmem:[%s2190 + $0x1ac] sm:$0xf]
  %v2263 = vld [vmem:[%s2190 + $0x1b0] sm:$0xff]
  %v2264 = vld [vmem:[%s2190 + $0x1b8] sm:$0xf]
  %v2265 = vld [vmem:[%s2190 + $0x1bc] sm:$0xff]
  %v2266 = vld [vmem:[%s2190 + $0x1c4] sm:$0xf]
  %v2267 = vld [vmem:[%s2190 + $0x1c8] sm:$0xff]
  %v2268 = vld [vmem:[%s2190 + $0x1d0] sm:$0xf]
  %v2269 = vld [vmem:[%s2190 + $0x1d4] sm:$0xff]
  %v2270 = vld [vmem:[%s2190 + $0x1dc] sm:$0xf]
  %v2271 = vld [vmem:[%s2190 + $0x1e0] sm:$0xff]
  %v2272 = vld [vmem:[%s2190 + $0x1e8] sm:$0xf]
  %v2273 = vld [vmem:[%s2190 + $0x1ec] sm:$0xff]
  %v2274 = vld [vmem:[%s2190 + $0x1f4] sm:$0xf]
  %v2275 = vld [vmem:[%s2190 + $0x1f8] sm:$0xff]
  %v2276 = vld [vmem:[%s2190 + $0x200] sm:$0xf]
  %v2277 = vld [vmem:[%s2190 + $0x204] sm:$0xff]
  %v2278 = vld [vmem:[%s2190 + $0x20c] sm:$0xf]
  %v2279 = vld [vmem:[%s2190 + $0x210] sm:$0xff]
  %v2280 = vld [vmem:[%s2190 + $0x218] sm:$0xf]
  %v2281 = vld [vmem:[%s2190 + $0x21c] sm:$0xff]
  %v2282 = vld [vmem:[%s2190 + $0x224] sm:$0xf]
  %v2283 = vld [vmem:[%s2190 + $0x228] sm:$0xff]
  %v2284 = vld [vmem:[%s2190 + $0x230] sm:$0xf]
  %v2285 = vld [vmem:[%s2190 + $0x234] sm:$0xff]
  %v2286 = vld [vmem:[%s2190 + $0x23c] sm:$0xf]
  %v2303 = vunpack.c.l.b16 %v2077
  %v2304 = vunpack.c.h.b16 %v2077
  %v2305 = vunpack.c.l.b16 %v2078
  %v2306 = vunpack.c.l.b16 %v2079
  %v2307 = vunpack.c.h.b16 %v2079
  %v2308 = vunpack.c.l.b16 %v2080
  %v2309 = vunpack.c.l.b16 %v2081
  %v2310 = vunpack.c.h.b16 %v2081
  %v2311 = vunpack.c.l.b16 %v2082
  %v2312 = vunpack.c.l.b16 %v2083
  %v2313 = vunpack.c.h.b16 %v2083
  %v2314 = vunpack.c.l.b16 %v2084
  %v2315 = vunpack.c.l.b16 %v2085
  %v2316 = vunpack.c.h.b16 %v2085
  %v2317 = vunpack.c.l.b16 %v2086
  %v2318 = vunpack.c.l.b16 %v2087
  %v2319 = vunpack.c.h.b16 %v2087
  %v2320 = vunpack.c.l.b16 %v2088
  %v2321 = vunpack.c.l.b16 %v2089
  %v2322 = vunpack.c.h.b16 %v2089
  %v2323 = vunpack.c.l.b16 %v2090
  %v2324 = vunpack.c.l.b16 %v2091
  %v2325 = vunpack.c.h.b16 %v2091
  %v2326 = vunpack.c.l.b16 %v2092
  %v2327 = vpack.c.b16 %v2306, %v2303
  %v2328 = vpack.c.b16 %v2307, %v2304
  %v2329 = vpack.c.b16 %v2308, %v2305
  %v2330 = vpack.c.b16 %v2312, %v2309
  %v2331 = vpack.c.b16 %v2313, %v2310
  %v2332 = vpack.c.b16 %v2314, %v2311
  %v2333 = vpack.c.b16 %v2318, %v2315
  %v2334 = vpack.c.b16 %v2319, %v2316
  %v2335 = vpack.c.b16 %v2320, %v2317
  %v2336 = vpack.c.b16 %v2324, %v2321
  %v2337 = vpack.c.b16 %v2325, %v2322
  %v2338 = vpack.c.b16 %v2326, %v2323
  %v2447 = vunpack.c.l.b16 %v2191
  %v2448 = vunpack.c.h.b16 %v2191
  %v2449 = vunpack.c.l.b16 %v2192
  %v2450 = vunpack.c.l.b16 %v2193
  %v2451 = vunpack.c.h.b16 %v2193
  %v2452 = vunpack.c.l.b16 %v2194
  %v2453 = vunpack.c.l.b16 %v2195
  %v2454 = vunpack.c.h.b16 %v2195
  %v2455 = vunpack.c.l.b16 %v2196
  %v2456 = vunpack.c.l.b16 %v2197
  %v2457 = vunpack.c.h.b16 %v2197
  %v2458 = vunpack.c.l.b16 %v2198
  %v2459 = vunpack.c.l.b16 %v2199
  %v2460 = vunpack.c.h.b16 %v2199
  %v2461 = vunpack.c.l.b16 %v2200
  %v2462 = vunpack.c.l.b16 %v2201
  %v2463 = vunpack.c.h.b16 %v2201
  %v2464 = vunpack.c.l.b16 %v2202
  %v2465 = vunpack.c.l.b16 %v2203
  %v2466 = vunpack.c.h.b16 %v2203
  %v2467 = vunpack.c.l.b16 %v2204
  %v2468 = vunpack.c.l.b16 %v2205
  %v2469 = vunpack.c.h.b16 %v2205
  %v2470 = vunpack.c.l.b16 %v2206
  %v2471 = vunpack.c.l.b16 %v2207
  %v2472 = vunpack.c.h.b16 %v2207
  %v2473 = vunpack.c.l.b16 %v2208
  %v2474 = vunpack.c.l.b16 %v2209
  %v2475 = vunpack.c.h.b16 %v2209
  %v2476 = vunpack.c.l.b16 %v2210
  %v2477 = vunpack.c.l.b16 %v2211
  %v2478 = vunpack.c.h.b16 %v2211
  %v2479 = vunpack.c.l.b16 %v2212
  %v2480 = vunpack.c.l.b16 %v2213
  %v2481 = vunpack.c.h.b16 %v2213
  %v2482 = vunpack.c.l.b16 %v2214
  %v2483 = vunpack.c.l.b16 %v2215
  %v2484 = vunpack.c.h.b16 %v2215
  %v2485 = vunpack.c.l.b16 %v2216
  %v2486 = vunpack.c.l.b16 %v2217
  %v2487 = vunpack.c.h.b16 %v2217
  %v2488 = vunpack.c.l.b16 %v2218
  %v2489 = vunpack.c.l.b16 %v2219
  %v2490 = vunpack.c.h.b16 %v2219
  %v2491 = vunpack.c.l.b16 %v2220
  %v2492 = vunpack.c.l.b16 %v2221
  %v2493 = vunpack.c.h.b16 %v2221
  %v2494 = vunpack.c.l.b16 %v2222
  %v2495 = vunpack.c.l.b16 %v2223
  %v2496 = vunpack.c.h.b16 %v2223
  %v2497 = vunpack.c.l.b16 %v2224
  %v2498 = vunpack.c.l.b16 %v2225
  %v2499 = vunpack.c.h.b16 %v2225
  %v2500 = vunpack.c.l.b16 %v2226
  %v2501 = vunpack.c.l.b16 %v2227
  %v2502 = vunpack.c.h.b16 %v2227
  %v2503 = vunpack.c.l.b16 %v2228
  %v2504 = vunpack.c.l.b16 %v2229
  %v2505 = vunpack.c.h.b16 %v2229
  %v2506 = vunpack.c.l.b16 %v2230
  %v2507 = vunpack.c.l.b16 %v2231
  %v2508 = vunpack.c.h.b16 %v2231
  %v2509 = vunpack.c.l.b16 %v2232
  %v2510 = vunpack.c.l.b16 %v2233
  %v2511 = vunpack.c.h.b16 %v2233
  %v2512 = vunpack.c.l.b16 %v2234
  %v2513 = vunpack.c.l.b16 %v2235
  %v2514 = vunpack.c.h.b16 %v2235
  %v2515 = vunpack.c.l.b16 %v2236
  %v2516 = vunpack.c.l.b16 %v2237
  %v2517 = vunpack.c.h.b16 %v2237
  %v2518 = vunpack.c.l.b16 %v2238
  %v2519 = vunpack.c.l.b16 %v2239
  %v2520 = vunpack.c.h.b16 %v2239
  %v2521 = vunpack.c.l.b16 %v2240
  %v2522 = vunpack.c.l.b16 %v2241
  %v2523 = vunpack.c.h.b16 %v2241
  %v2524 = vunpack.c.l.b16 %v2242
  %v2525 = vunpack.c.l.b16 %v2243
  %v2526 = vunpack.c.h.b16 %v2243
  %v2527 = vunpack.c.l.b16 %v2244
  %v2528 = vunpack.c.l.b16 %v2245
  %v2529 = vunpack.c.h.b16 %v2245
  %v2530 = vunpack.c.l.b16 %v2246
  %v2531 = vunpack.c.l.b16 %v2247
  %v2532 = vunpack.c.h.b16 %v2247
  %v2533 = vunpack.c.l.b16 %v2248
  %v2534 = vunpack.c.l.b16 %v2249
  %v2535 = vunpack.c.h.b16 %v2249
  %v2536 = vunpack.c.l.b16 %v2250
  %v2537 = vunpack.c.l.b16 %v2251
  %v2538 = vunpack.c.h.b16 %v2251
  %v2539 = vunpack.c.l.b16 %v2252
  %v2540 = vunpack.c.l.b16 %v2253
  %v2541 = vunpack.c.h.b16 %v2253
  %v2542 = vunpack.c.l.b16 %v2254
  %v2543 = vunpack.c.l.b16 %v2255
  %v2544 = vunpack.c.h.b16 %v2255
  %v2545 = vunpack.c.l.b16 %v2256
  %v2546 = vunpack.c.l.b16 %v2257
  %v2547 = vunpack.c.h.b16 %v2257
  %v2548 = vunpack.c.l.b16 %v2258
  %v2549 = vunpack.c.l.b16 %v2259
  %v2550 = vunpack.c.h.b16 %v2259
  %v2551 = vunpack.c.l.b16 %v2260
  %v2552 = vunpack.c.l.b16 %v2261
  %v2553 = vunpack.c.h.b16 %v2261
  %v2554 = vunpack.c.l.b16 %v2262
  %v2555 = vunpack.c.l.b16 %v2263
  %v2556 = vunpack.c.h.b16 %v2263
  %v2557 = vunpack.c.l.b16 %v2264
  %v2558 = vunpack.c.l.b16 %v2265
  %v2559 = vunpack.c.h.b16 %v2265
  %v2560 = vunpack.c.l.b16 %v2266
  %v2561 = vunpack.c.l.b16 %v2267
  %v2562 = vunpack.c.h.b16 %v2267
  %v2563 = vunpack.c.l.b16 %v2268
  %v2564 = vunpack.c.l.b16 %v2269
  %v2565 = vunpack.c.h.b16 %v2269
  %v2566 = vunpack.c.l.b16 %v2270
  %v2567 = vunpack.c.l.b16 %v2271
  %v2568 = vunpack.c.h.b16 %v2271
  %v2569 = vunpack.c.l.b16 %v2272
  %v2570 = vunpack.c.l.b16 %v2273
  %v2571 = vunpack.c.h.b16 %v2273
  %v2572 = vunpack.c.l.b16 %v2274
  %v2573 = vunpack.c.l.b16 %v2275
  %v2574 = vunpack.c.h.b16 %v2275
  %v2575 = vunpack.c.l.b16 %v2276
  %v2576 = vunpack.c.l.b16 %v2277
  %v2577 = vunpack.c.h.b16 %v2277
  %v2578 = vunpack.c.l.b16 %v2278
  %v2579 = vunpack.c.l.b16 %v2279
  %v2580 = vunpack.c.h.b16 %v2279
  %v2581 = vunpack.c.l.b16 %v2280
  %v2582 = vunpack.c.l.b16 %v2281
  %v2583 = vunpack.c.h.b16 %v2281
  %v2584 = vunpack.c.l.b16 %v2282
  %v2585 = vunpack.c.l.b16 %v2283
  %v2586 = vunpack.c.h.b16 %v2283
  %v2587 = vunpack.c.l.b16 %v2284
  %v2588 = vunpack.c.l.b16 %v2285
  %v2589 = vunpack.c.h.b16 %v2285
  %v2590 = vunpack.c.l.b16 %v2286
  %v2591 = vpack.c.b16 %v2450, %v2447
  %v2592 = vpack.c.b16 %v2451, %v2448
  %v2593 = vpack.c.b16 %v2452, %v2449
  %v2594 = vpack.c.b16 %v2456, %v2453
  %v2595 = vpack.c.b16 %v2457, %v2454
  %v2596 = vpack.c.b16 %v2458, %v2455
  %v2597 = vpack.c.b16 %v2462, %v2459
  %v2598 = vpack.c.b16 %v2463, %v2460
  %v2599 = vpack.c.b16 %v2464, %v2461
  %v2600 = vpack.c.b16 %v2468, %v2465
  %v2601 = vpack.c.b16 %v2469, %v2466
  %v2602 = vpack.c.b16 %v2470, %v2467
  %v2603 = vpack.c.b16 %v2474, %v2471
  %v2604 = vpack.c.b16 %v2475, %v2472
  %v2605 = vpack.c.b16 %v2476, %v2473
  %v2606 = vpack.c.b16 %v2480, %v2477
  %v2607 = vpack.c.b16 %v2481, %v2478
  %v2608 = vpack.c.b16 %v2482, %v2479
  %v2609 = vpack.c.b16 %v2486, %v2483
  %v2610 = vpack.c.b16 %v2487, %v2484
  %v2611 = vpack.c.b16 %v2488, %v2485
  %v2612 = vpack.c.b16 %v2492, %v2489
  %v2613 = vpack.c.b16 %v2493, %v2490
  %v2614 = vpack.c.b16 %v2494, %v2491
  %v2615 = vpack.c.b16 %v2498, %v2495
  %v2616 = vpack.c.b16 %v2499, %v2496
  %v2617 = vpack.c.b16 %v2500, %v2497
  %v2618 = vpack.c.b16 %v2504, %v2501
  %v2619 = vpack.c.b16 %v2505, %v2502
  %v2620 = vpack.c.b16 %v2506, %v2503
  %v2621 = vpack.c.b16 %v2510, %v2507
  %v2622 = vpack.c.b16 %v2511, %v2508
  %v2623 = vpack.c.b16 %v2512, %v2509
  %v2624 = vpack.c.b16 %v2516, %v2513
  %v2625 = vpack.c.b16 %v2517, %v2514
  %v2626 = vpack.c.b16 %v2518, %v2515
  %v2627 = vpack.c.b16 %v2522, %v2519
  %v2628 = vpack.c.b16 %v2523, %v2520
  %v2629 = vpack.c.b16 %v2524, %v2521
  %v2630 = vpack.c.b16 %v2528, %v2525
  %v2631 = vpack.c.b16 %v2529, %v2526
  %v2632 = vpack.c.b16 %v2530, %v2527
  %v2633 = vpack.c.b16 %v2534, %v2531
  %v2634 = vpack.c.b16 %v2535, %v2532
  %v2635 = vpack.c.b16 %v2536, %v2533
  %v2636 = vpack.c.b16 %v2540, %v2537
  %v2637 = vpack.c.b16 %v2541, %v2538
  %v2638 = vpack.c.b16 %v2542, %v2539
  %v2639 = vpack.c.b16 %v2546, %v2543
  %v2640 = vpack.c.b16 %v2547, %v2544
  %v2641 = vpack.c.b16 %v2548, %v2545
  %v2642 = vpack.c.b16 %v2552, %v2549
  %v2643 = vpack.c.b16 %v2553, %v2550
  %v2644 = vpack.c.b16 %v2554, %v2551
  %v2645 = vpack.c.b16 %v2558, %v2555
  %v2646 = vpack.c.b16 %v2559, %v2556
  %v2647 = vpack.c.b16 %v2560, %v2557
  %v2648 = vpack.c.b16 %v2564, %v2561
  %v2649 = vpack.c.b16 %v2565, %v2562
  %v2650 = vpack.c.b16 %v2566, %v2563
  %v2651 = vpack.c.b16 %v2570, %v2567
  %v2652 = vpack.c.b16 %v2571, %v2568
  %v2653 = vpack.c.b16 %v2572, %v2569
  %v2654 = vpack.c.b16 %v2576, %v2573
  %v2655 = vpack.c.b16 %v2577, %v2574
  %v2656 = vpack.c.b16 %v2578, %v2575
  %v2657 = vpack.c.b16 %v2582, %v2579
  %v2658 = vpack.c.b16 %v2583, %v2580
  %v2659 = vpack.c.b16 %v2584, %v2581
  %v2660 = vpack.c.b16 %v2588, %v2585
  %v2661 = vpack.c.b16 %v2589, %v2586
  %v2662 = vpack.c.b16 %v2590, %v2587
  %2735 = vmatpush.bf16.msra.mxu0 %v2612
  %2736 = vmatpush.bf16.msra.mxu0 %v2609
  %2737 = vmatpush.bf16.msra.mxu0 %v2606
  %2738 = vmatpush.bf16.msra.mxu0 %v2603
  %2739 = vmatpush.bf16.msra.mxu0 %v2600
  %2740 = vmatpush.bf16.msra.mxu0 %v2597
  %2741 = vmatpush.bf16.msra.mxu0 %v2594
  %2742 = vmatpush.bf16.msra.mxu0 %v2591
  %2743 = vmatmul.bf16.gmra.mxu0 %v2327
  %v2744 = vpop.f32.mrf.mxu0
  %v2745 = vadd.f32 0.0, %v2744
  %v2746 = vpop.f32.mrf.mxu0
  %v2747 = vadd.f32 0.0, %v2746
  %2748 = vmatmul.bf16.gmra.mxu0 %v2330
  %v2749 = vpop.f32.mrf.mxu0
  %v2750 = vadd.f32 0.0, %v2749
  %v2751 = vpop.f32.mrf.mxu0
  %v2752 = vadd.f32 0.0, %v2751
  %2753 = vmatmul.bf16.gmra.mxu0 %v2333
  %v2754 = vpop.f32.mrf.mxu0
  %v2755 = vadd.f32 0.0, %v2754
  %v2756 = vpop.f32.mrf.mxu0
  %v2757 = vadd.f32 0.0, %v2756
  %2758 = vmatmul.bf16.gmra.mxu0 %v2336
  %v2759 = vpop.f32.mrf.mxu0
  %v2760 = vadd.f32 0.0, %v2759
  %v2761 = vpop.f32.mrf.mxu0
  %v2762 = vadd.f32 0.0, %v2761
  %2763 = vdwg.mxu0
  %2764 = vmatpush.bf16.msra.mxu0 %v2636
  %2765 = vmatpush.bf16.msra.mxu0 %v2633
  %2766 = vmatpush.bf16.msra.mxu0 %v2630
  %2767 = vmatpush.bf16.msra.mxu0 %v2627
  %2768 = vmatpush.bf16.msra.mxu0 %v2624
  %2769 = vmatpush.bf16.msra.mxu0 %v2621
  %2770 = vmatpush.bf16.msra.mxu0 %v2618
  %2771 = vmatpush.bf16.msra.mxu0 %v2615
  %2772 = vmatmul.bf16.gmra.mxu0 %v2328
  %v2773 = vpop.f32.mrf.mxu0
  %v2774 = vadd.f32 %v2745, %v2773
  %v2775 = vpop.f32.mrf.mxu0
  %v2776 = vadd.f32 %v2747, %v2775
  %2777 = vmatmul.bf16.gmra.mxu0 %v2331
  %v2778 = vpop.f32.mrf.mxu0
  %v2779 = vadd.f32 %v2750, %v2778
  %v2780 = vpop.f32.mrf.mxu0
  %v2781 = vadd.f32 %v2752, %v2780
  %2782 = vmatmul.bf16.gmra.mxu0 %v2334
  %v2783 = vpop.f32.mrf.mxu0
  %v2784 = vadd.f32 %v2755, %v2783
  %v2785 = vpop.f32.mrf.mxu0
  %v2786 = vadd.f32 %v2757, %v2785
  %2787 = vmatmul.bf16.gmra.mxu0 %v2337
  %v2788 = vpop.f32.mrf.mxu0
  %v2789 = vadd.f32 %v2760, %v2788
  %v2790 = vpop.f32.mrf.mxu0
  %v2791 = vadd.f32 %v2762, %v2790
  %2792 = vdwg.mxu0
  %2793 = vmatpush.bf16.msra.mxu0 %v2660
  %2794 = vmatpush.bf16.msra.mxu0 %v2657
  %2795 = vmatpush.bf16.msra.mxu0 %v2654
  %2796 = vmatpush.bf16.msra.mxu0 %v2651
  %2797 = vmatpush.bf16.msra.mxu0 %v2648
  %2798 = vmatpush.bf16.msra.mxu0 %v2645
  %2799 = vmatpush.bf16.msra.mxu0 %v2642
  %2800 = vmatpush.bf16.msra.mxu0 %v2639
  %2801 = vmatmul.bf16.gmra.mxu0 %v2329
  %v2802 = vpop.f32.mrf.mxu0
  %v2803 = vadd.f32 %v2774, %v2802
  %v2804 = vpop.f32.mrf.mxu0
  %v2805 = vadd.f32 %v2776, %v2804
  %2806 = vmatmul.bf16.gmra.mxu0 %v2332
  %v2807 = vpop.f32.mrf.mxu0
  %v2808 = vadd.f32 %v2779, %v2807
  %v2809 = vpop.f32.mrf.mxu0
  %v2810 = vadd.f32 %v2781, %v2809
  %2811 = vmatmul.bf16.gmra.mxu0 %v2335
  %v2812 = vpop.f32.mrf.mxu0
  %v2813 = vadd.f32 %v2784, %v2812
  %v2814 = vpop.f32.mrf.mxu0
  %v2815 = vadd.f32 %v2786, %v2814
  %2816 = vmatmul.bf16.gmra.mxu0 %v2338
  %v2817 = vpop.f32.mrf.mxu0
  %v2818 = vadd.f32 %v2789, %v2817
  %v2819 = vpop.f32.mrf.mxu0
  %v2820 = vadd.f32 %v2791, %v2819
  %2821 = vdwg.mxu0
  %2822 = vmatpush.bf16.msra.mxu0 %v2613
  %2823 = vmatpush.bf16.msra.mxu0 %v2610
  %2824 = vmatpush.bf16.msra.mxu0 %v2607
  %2825 = vmatpush.bf16.msra.mxu0 %v2604
  %2826 = vmatpush.bf16.msra.mxu0 %v2601
  %2827 = vmatpush.bf16.msra.mxu0 %v2598
  %2828 = vmatpush.bf16.msra.mxu0 %v2595
  %2829 = vmatpush.bf16.msra.mxu0 %v2592
  %2830 = vmatmul.bf16.gmra.mxu0 %v2327
  %v2831 = vpop.f32.mrf.mxu0
  %v2832 = vadd.f32 0.0, %v2831
  %v2833 = vpop.f32.mrf.mxu0
  %v2834 = vadd.f32 0.0, %v2833
  %2835 = vmatmul.bf16.gmra.mxu0 %v2330
  %v2836 = vpop.f32.mrf.mxu0
  %v2837 = vadd.f32 0.0, %v2836
  %v2838 = vpop.f32.mrf.mxu0
  %v2839 = vadd.f32 0.0, %v2838
  %2840 = vmatmul.bf16.gmra.mxu0 %v2333
  %v2841 = vpop.f32.mrf.mxu0
  %v2842 = vadd.f32 0.0, %v2841
  %v2843 = vpop.f32.mrf.mxu0
  %v2844 = vadd.f32 0.0, %v2843
  %2845 = vmatmul.bf16.gmra.mxu0 %v2336
  %v2846 = vpop.f32.mrf.mxu0
  %v2847 = vadd.f32 0.0, %v2846
  %v2848 = vpop.f32.mrf.mxu0
  %v2849 = vadd.f32 0.0, %v2848
  %2850 = vdwg.mxu0
  %2851 = vmatpush.bf16.msra.mxu0 %v2637
  %2852 = vmatpush.bf16.msra.mxu0 %v2634
  %2853 = vmatpush.bf16.msra.mxu0 %v2631
  %2854 = vmatpush.bf16.msra.mxu0 %v2628
  %2855 = vmatpush.bf16.msra.mxu0 %v2625
  %2856 = vmatpush.bf16.msra.mxu0 %v2622
  %2857 = vmatpush.bf16.msra.mxu0 %v2619
  %2858 = vmatpush.bf16.msra.mxu0 %v2616
  %2859 = vmatmul.bf16.gmra.mxu0 %v2328
  %v2860 = vpop.f32.mrf.mxu0
  %v2861 = vadd.f32 %v2832, %v2860
  %v2862 = vpop.f32.mrf.mxu0
  %v2863 = vadd.f32 %v2834, %v2862
  %2864 = vmatmul.bf16.gmra.mxu0 %v2331
  %v2865 = vpop.f32.mrf.mxu0
  %v2866 = vadd.f32 %v2837, %v2865
  %v2867 = vpop.f32.mrf.mxu0
  %v2868 = vadd.f32 %v2839, %v2867
  %2869 = vmatmul.bf16.gmra.mxu0 %v2334
  %v2870 = vpop.f32.mrf.mxu0
  %v2871 = vadd.f32 %v2842, %v2870
  %v2872 = vpop.f32.mrf.mxu0
  %v2873 = vadd.f32 %v2844, %v2872
  %2874 = vmatmul.bf16.gmra.mxu0 %v2337
  %v2875 = vpop.f32.mrf.mxu0
  %v2876 = vadd.f32 %v2847, %v2875
  %v2877 = vpop.f32.mrf.mxu0
  %v2878 = vadd.f32 %v2849, %v2877
  %2879 = vdwg.mxu0
  %2880 = vmatpush.bf16.msra.mxu0 %v2661
  %2881 = vmatpush.bf16.msra.mxu0 %v2658
  %2882 = vmatpush.bf16.msra.mxu0 %v2655
  %2883 = vmatpush.bf16.msra.mxu0 %v2652
  %2884 = vmatpush.bf16.msra.mxu0 %v2649
  %2885 = vmatpush.bf16.msra.mxu0 %v2646
  %2886 = vmatpush.bf16.msra.mxu0 %v2643
  %2887 = vmatpush.bf16.msra.mxu0 %v2640
  %2888 = vmatmul.bf16.gmra.mxu0 %v2329
  %v2889 = vpop.f32.mrf.mxu0
  %v2890 = vadd.f32 %v2861, %v2889
  %v2891 = vpop.f32.mrf.mxu0
  %v2892 = vadd.f32 %v2863, %v2891
  %2893 = vmatmul.bf16.gmra.mxu0 %v2332
  %v2894 = vpop.f32.mrf.mxu0
  %v2895 = vadd.f32 %v2866, %v2894
  %v2896 = vpop.f32.mrf.mxu0
  %v2897 = vadd.f32 %v2868, %v2896
  %2898 = vmatmul.bf16.gmra.mxu0 %v2335
  %v2899 = vpop.f32.mrf.mxu0
  %v2900 = vadd.f32 %v2871, %v2899
  %v2901 = vpop.f32.mrf.mxu0
  %v2902 = vadd.f32 %v2873, %v2901
  %2903 = vmatmul.bf16.gmra.mxu0 %v2338
  %v2904 = vpop.f32.mrf.mxu0
  %v2905 = vadd.f32 %v2876, %v2904
  %v2906 = vpop.f32.mrf.mxu0
  %v2907 = vadd.f32 %v2878, %v2906
  %2908 = vdwg.mxu0
  %2909 = vmatpush.bf16.msra.mxu0 %v2614
  %2910 = vmatpush.bf16.msra.mxu0 %v2611
  %2911 = vmatpush.bf16.msra.mxu0 %v2608
  %2912 = vmatpush.bf16.msra.mxu0 %v2605
  %2913 = vmatpush.bf16.msra.mxu0 %v2602
  %2914 = vmatpush.bf16.msra.mxu0 %v2599
  %2915 = vmatpush.bf16.msra.mxu0 %v2596
  %2916 = vmatpush.bf16.msra.mxu0 %v2593
  %2917 = vmatmul.bf16.gmra.mxu0 %v2327
  %v2918 = vpop.f32.mrf.mxu0
  %v2919 = vadd.f32 0.0, %v2918
  %v2920 = vpop.f32.mrf.mxu0
  %v2921 = vadd.f32 0.0, %v2920
  %2922 = vmatmul.bf16.gmra.mxu0 %v2330
  %v2923 = vpop.f32.mrf.mxu0
  %v2924 = vadd.f32 0.0, %v2923
  %v2925 = vpop.f32.mrf.mxu0
  %v2926 = vadd.f32 0.0, %v2925
  %2927 = vmatmul.bf16.gmra.mxu0 %v2333
  %v2928 = vpop.f32.mrf.mxu0
  %v2929 = vadd.f32 0.0, %v2928
  %v2930 = vpop.f32.mrf.mxu0
  %v2931 = vadd.f32 0.0, %v2930
  %2932 = vmatmul.bf16.gmra.mxu0 %v2336
  %v2933 = vpop.f32.mrf.mxu0
  %v2934 = vadd.f32 0.0, %v2933
  %v2935 = vpop.f32.mrf.mxu0
  %v2936 = vadd.f32 0.0, %v2935
  %2937 = vdwg.mxu0
  %2938 = vmatpush.bf16.msra.mxu0 %v2638
  %2939 = vmatpush.bf16.msra.mxu0 %v2635
  %2940 = vmatpush.bf16.msra.mxu0 %v2632
  %2941 = vmatpush.bf16.msra.mxu0 %v2629
  %2942 = vmatpush.bf16.msra.mxu0 %v2626
  %2943 = vmatpush.bf16.msra.mxu0 %v2623
  %2944 = vmatpush.bf16.msra.mxu0 %v2620
  %2945 = vmatpush.bf16.msra.mxu0 %v2617
  %2946 = vmatmul.bf16.gmra.mxu0 %v2328
  %v2947 = vpop.f32.mrf.mxu0
  %v2948 = vadd.f32 %v2919, %v2947
  %v2949 = vpop.f32.mrf.mxu0
  %v2950 = vadd.f32 %v2921, %v2949
  %2951 = vmatmul.bf16.gmra.mxu0 %v2331
  %v2952 = vpop.f32.mrf.mxu0
  %v2953 = vadd.f32 %v2924, %v2952
  %v2954 = vpop.f32.mrf.mxu0
  %v2955 = vadd.f32 %v2926, %v2954
  %2956 = vmatmul.bf16.gmra.mxu0 %v2334
  %v2957 = vpop.f32.mrf.mxu0
  %v2958 = vadd.f32 %v2929, %v2957
  %v2959 = vpop.f32.mrf.mxu0
  %v2960 = vadd.f32 %v2931, %v2959
  %2961 = vmatmul.bf16.gmra.mxu0 %v2337
  %v2962 = vpop.f32.mrf.mxu0
  %v2963 = vadd.f32 %v2934, %v2962
  %v2964 = vpop.f32.mrf.mxu0
  %v2965 = vadd.f32 %v2936, %v2964
  %2966 = vdwg.mxu0
  %2967 = vmatpush.bf16.msra.mxu0 %v2662
  %2968 = vmatpush.bf16.msra.mxu0 %v2659
  %2969 = vmatpush.bf16.msra.mxu0 %v2656
  %2970 = vmatpush.bf16.msra.mxu0 %v2653
  %2971 = vmatpush.bf16.msra.mxu0 %v2650
  %2972 = vmatpush.bf16.msra.mxu0 %v2647
  %2973 = vmatpush.bf16.msra.mxu0 %v2644
  %2974 = vmatpush.bf16.msra.mxu0 %v2641
  %2975 = vmatmul.bf16.gmra.mxu0 %v2329
  %v2976 = vpop.f32.mrf.mxu0
  %v2977 = vadd.f32 %v2948, %v2976
  %v2978 = vpop.f32.mrf.mxu0
  %v2979 = vadd.f32 %v2950, %v2978
  %2980 = vmatmul.bf16.gmra.mxu0 %v2332
  %v2981 = vpop.f32.mrf.mxu0
  %v2982 = vadd.f32 %v2953, %v2981
  %v2983 = vpop.f32.mrf.mxu0
  %v2984 = vadd.f32 %v2955, %v2983
  %2985 = vmatmul.bf16.gmra.mxu0 %v2335
  %v2986 = vpop.f32.mrf.mxu0
  %v2987 = vadd.f32 %v2958, %v2986
  %v2988 = vpop.f32.mrf.mxu0
  %v2989 = vadd.f32 %v2960, %v2988
  %2990 = vmatmul.bf16.gmra.mxu0 %v2338
  %v2991 = vpop.f32.mrf.mxu0
  %v2992 = vadd.f32 %v2963, %v2991
  %v2993 = vpop.f32.mrf.mxu0
  %v2994 = vadd.f32 %v2965, %v2993
  %2995 = vdwg.mxu0
  %v3012 = vunpack.c.l.b16 %v2061
  %v3013 = vunpack.c.h.b16 %v2061
  %v3014 = vunpack.c.l.b16 %v2062
  %v3015 = vunpack.c.l.b16 %v2063
  %v3016 = vunpack.c.h.b16 %v2063
  %v3017 = vunpack.c.l.b16 %v2064
  %v3018 = vunpack.c.l.b16 %v2065
  %v3019 = vunpack.c.h.b16 %v2065
  %v3020 = vunpack.c.l.b16 %v2066
  %v3021 = vunpack.c.l.b16 %v2067
  %v3022 = vunpack.c.h.b16 %v2067
  %v3023 = vunpack.c.l.b16 %v2068
  %v3024 = vunpack.c.l.b16 %v2069
  %v3025 = vunpack.c.h.b16 %v2069
  %v3026 = vunpack.c.l.b16 %v2070
  %v3027 = vunpack.c.l.b16 %v2071
  %v3028 = vunpack.c.h.b16 %v2071
  %v3029 = vunpack.c.l.b16 %v2072
  %v3030 = vunpack.c.l.b16 %v2073
  %v3031 = vunpack.c.h.b16 %v2073
  %v3032 = vunpack.c.l.b16 %v2074
  %v3033 = vunpack.c.l.b16 %v2075
  %v3034 = vunpack.c.h.b16 %v2075
  %v3035 = vunpack.c.l.b16 %v2076
  %v3036 = vpack.c.b16 %v3015, %v3012
  %v3037 = vpack.c.b16 %v3016, %v3013
  %v3038 = vpack.c.b16 %v3017, %v3014
  %v3039 = vpack.c.b16 %v3021, %v3018
  %v3040 = vpack.c.b16 %v3022, %v3019
  %v3041 = vpack.c.b16 %v3023, %v3020
  %v3042 = vpack.c.b16 %v3027, %v3024
  %v3043 = vpack.c.b16 %v3028, %v3025
  %v3044 = vpack.c.b16 %v3029, %v3026
  %v3045 = vpack.c.b16 %v3033, %v3030
  %v3046 = vpack.c.b16 %v3034, %v3031
  %v3047 = vpack.c.b16 %v3035, %v3032
  %v3156 = vunpack.c.l.b16 %v2094
  %v3157 = vunpack.c.h.b16 %v2094
  %v3158 = vunpack.c.l.b16 %v2095
  %v3159 = vunpack.c.l.b16 %v2096
  %v3160 = vunpack.c.h.b16 %v2096
  %v3161 = vunpack.c.l.b16 %v2097
  %v3162 = vunpack.c.l.b16 %v2098
  %v3163 = vunpack.c.h.b16 %v2098
  %v3164 = vunpack.c.l.b16 %v2099
  %v3165 = vunpack.c.l.b16 %v2100
  %v3166 = vunpack.c.h.b16 %v2100
  %v3167 = vunpack.c.l.b16 %v2101
  %v3168 = vunpack.c.l.b16 %v2102
  %v3169 = vunpack.c.h.b16 %v2102
  %v3170 = vunpack.c.l.b16 %v2103
  %v3171 = vunpack.c.l.b16 %v2104
  %v3172 = vunpack.c.h.b16 %v2104
  %v3173 = vunpack.c.l.b16 %v2105
  %v3174 = vunpack.c.l.b16 %v2106
  %v3175 = vunpack.c.h.b16 %v2106
  %v3176 = vunpack.c.l.b16 %v2107
  %v3177 = vunpack.c.l.b16 %v2108
  %v3178 = vunpack.c.h.b16 %v2108
  %v3179 = vunpack.c.l.b16 %v2109
  %v3180 = vunpack.c.l.b16 %v2110
  %v3181 = vunpack.c.h.b16 %v2110
  %v3182 = vunpack.c.l.b16 %v2111
  %v3183 = vunpack.c.l.b16 %v2112
  %v3184 = vunpack.c.h.b16 %v2112
  %v3185 = vunpack.c.l.b16 %v2113
  %v3186 = vunpack.c.l.b16 %v2114
  %v3187 = vunpack.c.h.b16 %v2114
  %v3188 = vunpack.c.l.b16 %v2115
  %v3189 = vunpack.c.l.b16 %v2116
  %v3190 = vunpack.c.h.b16 %v2116
  %v3191 = vunpack.c.l.b16 %v2117
  %v3192 = vunpack.c.l.b16 %v2118
  %v3193 = vunpack.c.h.b16 %v2118
  %v3194 = vunpack.c.l.b16 %v2119
  %v3195 = vunpack.c.l.b16 %v2120
  %v3196 = vunpack.c.h.b16 %v2120
  %v3197 = vunpack.c.l.b16 %v2121
  %v3198 = vunpack.c.l.b16 %v2122
  %v3199 = vunpack.c.h.b16 %v2122
  %v3200 = vunpack.c.l.b16 %v2123
  %v3201 = vunpack.c.l.b16 %v2124
  %v3202 = vunpack.c.h.b16 %v2124
  %v3203 = vunpack.c.l.b16 %v2125
  %v3204 = vunpack.c.l.b16 %v2126
  %v3205 = vunpack.c.h.b16 %v2126
  %v3206 = vunpack.c.l.b16 %v2127
  %v3207 = vunpack.c.l.b16 %v2128
  %v3208 = vunpack.c.h.b16 %v2128
  %v3209 = vunpack.c.l.b16 %v2129
  %v3210 = vunpack.c.l.b16 %v2130
  %v3211 = vunpack.c.h.b16 %v2130
  %v3212 = vunpack.c.l.b16 %v2131
  %v3213 = vunpack.c.l.b16 %v2132
  %v3214 = vunpack.c.h.b16 %v2132
  %v3215 = vunpack.c.l.b16 %v2133
  %v3216 = vunpack.c.l.b16 %v2134
  %v3217 = vunpack.c.h.b16 %v2134
  %v3218 = vunpack.c.l.b16 %v2135
  %v3219 = vunpack.c.l.b16 %v2136
  %v3220 = vunpack.c.h.b16 %v2136
  %v3221 = vunpack.c.l.b16 %v2137
  %v3222 = vunpack.c.l.b16 %v2138
  %v3223 = vunpack.c.h.b16 %v2138
  %v3224 = vunpack.c.l.b16 %v2139
  %v3225 = vunpack.c.l.b16 %v2140
  %v3226 = vunpack.c.h.b16 %v2140
  %v3227 = vunpack.c.l.b16 %v2141
  %v3228 = vunpack.c.l.b16 %v2142
  %v3229 = vunpack.c.h.b16 %v2142
  %v3230 = vunpack.c.l.b16 %v2143
  %v3231 = vunpack.c.l.b16 %v2144
  %v3232 = vunpack.c.h.b16 %v2144
  %v3233 = vunpack.c.l.b16 %v2145
  %v3234 = vunpack.c.l.b16 %v2146
  %v3235 = vunpack.c.h.b16 %v2146
  %v3236 = vunpack.c.l.b16 %v2147
  %v3237 = vunpack.c.l.b16 %v2148
  %v3238 = vunpack.c.h.b16 %v2148
  %v3239 = vunpack.c.l.b16 %v2149
  %v3240 = vunpack.c.l.b16 %v2150
  %v3241 = vunpack.c.h.b16 %v2150
  %v3242 = vunpack.c.l.b16 %v2151
  %v3243 = vunpack.c.l.b16 %v2152
  %v3244 = vunpack.c.h.b16 %v2152
  %v3245 = vunpack.c.l.b16 %v2153
  %v3246 = vunpack.c.l.b16 %v2154
  %v3247 = vunpack.c.h.b16 %v2154
  %v3248 = vunpack.c.l.b16 %v2155
  %v3249 = vunpack.c.l.b16 %v2156
  %v3250 = vunpack.c.h.b16 %v2156
  %v3251 = vunpack.c.l.b16 %v2157
  %v3252 = vunpack.c.l.b16 %v2158
  %v3253 = vunpack.c.h.b16 %v2158
  %v3254 = vunpack.c.l.b16 %v2159
  %v3255 = vunpack.c.l.b16 %v2160
  %v3256 = vunpack.c.h.b16 %v2160
  %v3257 = vunpack.c.l.b16 %v2161
  %v3258 = vunpack.c.l.b16 %v2162
  %v3259 = vunpack.c.h.b16 %v2162
  %v3260 = vunpack.c.l.b16 %v2163
  %v3261 = vunpack.c.l.b16 %v2164
  %v3262 = vunpack.c.h.b16 %v2164
  %v3263 = vunpack.c.l.b16 %v2165
  %v3264 = vunpack.c.l.b16 %v2166
  %v3265 = vunpack.c.h.b16 %v2166
  %v3266 = vunpack.c.l.b16 %v2167
  %v3267 = vunpack.c.l.b16 %v2168
  %v3268 = vunpack.c.h.b16 %v2168
  %v3269 = vunpack.c.l.b16 %v2169
  %v3270 = vunpack.c.l.b16 %v2170
  %v3271 = vunpack.c.h.b16 %v2170
  %v3272 = vunpack.c.l.b16 %v2171
  %v3273 = vunpack.c.l.b16 %v2172
  %v3274 = vunpack.c.h.b16 %v2172
  %v3275 = vunpack.c.l.b16 %v2173
  %v3276 = vunpack.c.l.b16 %v2174
  %v3277 = vunpack.c.h.b16 %v2174
  %v3278 = vunpack.c.l.b16 %v2175
  %v3279 = vunpack.c.l.b16 %v2176
  %v3280 = vunpack.c.h.b16 %v2176
  %v3281 = vunpack.c.l.b16 %v2177
  %v3282 = vunpack.c.l.b16 %v2178
  %v3283 = vunpack.c.h.b16 %v2178
  %v3284 = vunpack.c.l.b16 %v2179
  %v3285 = vunpack.c.l.b16 %v2180
  %v3286 = vunpack.c.h.b16 %v2180
  %v3287 = vunpack.c.l.b16 %v2181
  %v3288 = vunpack.c.l.b16 %v2182
  %v3289 = vunpack.c.h.b16 %v2182
  %v3290 = vunpack.c.l.b16 %v2183
  %v3291 = vunpack.c.l.b16 %v2184
  %v3292 = vunpack.c.h.b16 %v2184
  %v3293 = vunpack.c.l.b16 %v2185
  %v3294 = vunpack.c.l.b16 %v2186
  %v3295 = vunpack.c.h.b16 %v2186
  %v3296 = vunpack.c.l.b16 %v2187
  %v3297 = vunpack.c.l.b16 %v2188
  %v3298 = vunpack.c.h.b16 %v2188
  %v3299 = vunpack.c.l.b16 %v2189
  %v3300 = vpack.c.b16 %v3159, %v3156
  %v3301 = vpack.c.b16 %v3160, %v3157
  %v3302 = vpack.c.b16 %v3161, %v3158
  %v3303 = vpack.c.b16 %v3165, %v3162
  %v3304 = vpack.c.b16 %v3166, %v3163
  %v3305 = vpack.c.b16 %v3167, %v3164
  %v3306 = vpack.c.b16 %v3171, %v3168
  %v3307 = vpack.c.b16 %v3172, %v3169
  %v3308 = vpack.c.b16 %v3173, %v3170
  %v3309 = vpack.c.b16 %v3177, %v3174
  %v3310 = vpack.c.b16 %v3178, %v3175
  %v3311 = vpack.c.b16 %v3179, %v3176
  %v3312 = vpack.c.b16 %v3183, %v3180
  %v3313 = vpack.c.b16 %v3184, %v3181
  %v3314 = vpack.c.b16 %v3185, %v3182
  %v3315 = vpack.c.b16 %v3189, %v3186
  %v3316 = vpack.c.b16 %v3190, %v3187
  %v3317 = vpack.c.b16 %v3191, %v3188
  %v3318 = vpack.c.b16 %v3195, %v3192
  %v3319 = vpack.c.b16 %v3196, %v3193
  %v3320 = vpack.c.b16 %v3197, %v3194
  %v3321 = vpack.c.b16 %v3201, %v3198
  %v3322 = vpack.c.b16 %v3202, %v3199
  %v3323 = vpack.c.b16 %v3203, %v3200
  %v3324 = vpack.c.b16 %v3207, %v3204
  %v3325 = vpack.c.b16 %v3208, %v3205
  %v3326 = vpack.c.b16 %v3209, %v3206
  %v3327 = vpack.c.b16 %v3213, %v3210
  %v3328 = vpack.c.b16 %v3214, %v3211
  %v3329 = vpack.c.b16 %v3215, %v3212
  %v3330 = vpack.c.b16 %v3219, %v3216
  %v3331 = vpack.c.b16 %v3220, %v3217
  %v3332 = vpack.c.b16 %v3221, %v3218
  %v3333 = vpack.c.b16 %v3225, %v3222
  %v3334 = vpack.c.b16 %v3226, %v3223
  %v3335 = vpack.c.b16 %v3227, %v3224
  %v3336 = vpack.c.b16 %v3231, %v3228
  %v3337 = vpack.c.b16 %v3232, %v3229
  %v3338 = vpack.c.b16 %v3233, %v3230
  %v3339 = vpack.c.b16 %v3237, %v3234
  %v3340 = vpack.c.b16 %v3238, %v3235
  %v3341 = vpack.c.b16 %v3239, %v3236
  %v3342 = vpack.c.b16 %v3243, %v3240
  %v3343 = vpack.c.b16 %v3244, %v3241
  %v3344 = vpack.c.b16 %v3245, %v3242
  %v3345 = vpack.c.b16 %v3249, %v3246
  %v3346 = vpack.c.b16 %v3250, %v3247
  %v3347 = vpack.c.b16 %v3251, %v3248
  %v3348 = vpack.c.b16 %v3255, %v3252
  %v3349 = vpack.c.b16 %v3256, %v3253
  %v3350 = vpack.c.b16 %v3257, %v3254
  %v3351 = vpack.c.b16 %v3261, %v3258
  %v3352 = vpack.c.b16 %v3262, %v3259
  %v3353 = vpack.c.b16 %v3263, %v3260
  %v3354 = vpack.c.b16 %v3267, %v3264
  %v3355 = vpack.c.b16 %v3268, %v3265
  %v3356 = vpack.c.b16 %v3269, %v3266
  %v3357 = vpack.c.b16 %v3273, %v3270
  %v3358 = vpack.c.b16 %v3274, %v3271
  %v3359 = vpack.c.b16 %v3275, %v3272
  %v3360 = vpack.c.b16 %v3279, %v3276
  %v3361 = vpack.c.b16 %v3280, %v3277
  %v3362 = vpack.c.b16 %v3281, %v3278
  %v3363 = vpack.c.b16 %v3285, %v3282
  %v3364 = vpack.c.b16 %v3286, %v3283
  %v3365 = vpack.c.b16 %v3287, %v3284
  %v3366 = vpack.c.b16 %v3291, %v3288
  %v3367 = vpack.c.b16 %v3292, %v3289
  %v3368 = vpack.c.b16 %v3293, %v3290
  %v3369 = vpack.c.b16 %v3297, %v3294
  %v3370 = vpack.c.b16 %v3298, %v3295
  %v3371 = vpack.c.b16 %v3299, %v3296
  %3444 = vmatpush.bf16.msra.mxu0 %v3321
  %3445 = vmatpush.bf16.msra.mxu0 %v3318
  %3446 = vmatpush.bf16.msra.mxu0 %v3315
  %3447 = vmatpush.bf16.msra.mxu0 %v3312
  %3448 = vmatpush.bf16.msra.mxu0 %v3309
  %3449 = vmatpush.bf16.msra.mxu0 %v3306
  %3450 = vmatpush.bf16.msra.mxu0 %v3303
  %3451 = vmatpush.bf16.msra.mxu0 %v3300
  %3452 = vmatmul.bf16.gmra.mxu0 %v3036
  %v3453 = vpop.f32.mrf.mxu0
  %v3454 = vadd.f32 %v2803, %v3453
  %v3455 = vpop.f32.mrf.mxu0
  %v3456 = vadd.f32 %v2805, %v3455
  %3457 = vmatmul.bf16.gmra.mxu0 %v3039
  %v3458 = vpop.f32.mrf.mxu0
  %v3459 = vadd.f32 %v2808, %v3458
  %v3460 = vpop.f32.mrf.mxu0
  %v3461 = vadd.f32 %v2810, %v3460
  %3462 = vmatmul.bf16.gmra.mxu0 %v3042
  %v3463 = vpop.f32.mrf.mxu0
  %v3464 = vadd.f32 %v2813, %v3463
  %v3465 = vpop.f32.mrf.mxu0
  %v3466 = vadd.f32 %v2815, %v3465
  %3467 = vmatmul.bf16.gmra.mxu0 %v3045
  %v3468 = vpop.f32.mrf.mxu0
  %v3469 = vadd.f32 %v2818, %v3468
  %v3470 = vpop.f32.mrf.mxu0
  %v3471 = vadd.f32 %v2820, %v3470
  %3472 = vdwg.mxu0
  %3473 = vmatpush.bf16.msra.mxu0 %v3345
  %3474 = vmatpush.bf16.msra.mxu0 %v3342
  %3475 = vmatpush.bf16.msra.mxu0 %v3339
  %3476 = vmatpush.bf16.msra.mxu0 %v3336
  %3477 = vmatpush.bf16.msra.mxu0 %v3333
  %3478 = vmatpush.bf16.msra.mxu0 %v3330
  %3479 = vmatpush.bf16.msra.mxu0 %v3327
  %3480 = vmatpush.bf16.msra.mxu0 %v3324
  %3481 = vmatmul.bf16.gmra.mxu0 %v3037
  %v3482 = vpop.f32.mrf.mxu0
  %v3483 = vadd.f32 %v3454, %v3482
  %v3484 = vpop.f32.mrf.mxu0
  %v3485 = vadd.f32 %v3456, %v3484
  %3486 = vmatmul.bf16.gmra.mxu0 %v3040
  %v3487 = vpop.f32.mrf.mxu0
  %v3488 = vadd.f32 %v3459, %v3487
  %v3489 = vpop.f32.mrf.mxu0
  %v3490 = vadd.f32 %v3461, %v3489
  %3491 = vmatmul.bf16.gmra.mxu0 %v3043
  %v3492 = vpop.f32.mrf.mxu0
  %v3493 = vadd.f32 %v3464, %v3492
  %v3494 = vpop.f32.mrf.mxu0
  %v3495 = vadd.f32 %v3466, %v3494
  %3496 = vmatmul.bf16.gmra.mxu0 %v3046
  %v3497 = vpop.f32.mrf.mxu0
  %v3498 = vadd.f32 %v3469, %v3497
  %v3499 = vpop.f32.mrf.mxu0
  %v3500 = vadd.f32 %v3471, %v3499
  %3501 = vdwg.mxu0
  %3502 = vmatpush.bf16.msra.mxu0 %v3369
  %3503 = vmatpush.bf16.msra.mxu0 %v3366
  %3504 = vmatpush.bf16.msra.mxu0 %v3363
  %3505 = vmatpush.bf16.msra.mxu0 %v3360
  %3506 = vmatpush.bf16.msra.mxu0 %v3357
  %3507 = vmatpush.bf16.msra.mxu0 %v3354
  %3508 = vmatpush.bf16.msra.mxu0 %v3351
  %3509 = vmatpush.bf16.msra.mxu0 %v3348
  %3510 = vmatmul.bf16.gmra.mxu0 %v3038
  %v3511 = vpop.f32.mrf.mxu0
  %v3512 = vadd.f32 %v3483, %v3511
  %v3513 = vpop.f32.mrf.mxu0
  %v3514 = vadd.f32 %v3485, %v3513
  %3515 = vmatmul.bf16.gmra.mxu0 %v3041
  %v3516 = vpop.f32.mrf.mxu0
  %v3517 = vadd.f32 %v3488, %v3516
  %v3518 = vpop.f32.mrf.mxu0
  %v3519 = vadd.f32 %v3490, %v3518
  %3520 = vmatmul.bf16.gmra.mxu0 %v3044
  %v3521 = vpop.f32.mrf.mxu0
  %v3522 = vadd.f32 %v3493, %v3521
  %v3523 = vpop.f32.mrf.mxu0
  %v3524 = vadd.f32 %v3495, %v3523
  %3525 = vmatmul.bf16.gmra.mxu0 %v3047
  %v3526 = vpop.f32.mrf.mxu0
  %v3527 = vadd.f32 %v3498, %v3526
  %v3528 = vpop.f32.mrf.mxu0
  %v3529 = vadd.f32 %v3500, %v3528
  %3530 = vdwg.mxu0
  %3531 = vmatpush.bf16.msra.mxu0 %v3322
  %3532 = vmatpush.bf16.msra.mxu0 %v3319
  %3533 = vmatpush.bf16.msra.mxu0 %v3316
  %3534 = vmatpush.bf16.msra.mxu0 %v3313
  %3535 = vmatpush.bf16.msra.mxu0 %v3310
  %3536 = vmatpush.bf16.msra.mxu0 %v3307
  %3537 = vmatpush.bf16.msra.mxu0 %v3304
  %3538 = vmatpush.bf16.msra.mxu0 %v3301
  %3539 = vmatmul.bf16.gmra.mxu0 %v3036
  %v3540 = vpop.f32.mrf.mxu0
  %v3541 = vadd.f32 %v2890, %v3540
  %v3542 = vpop.f32.mrf.mxu0
  %v3543 = vadd.f32 %v2892, %v3542
  %3544 = vmatmul.bf16.gmra.mxu0 %v3039
  %v3545 = vpop.f32.mrf.mxu0
  %v3546 = vadd.f32 %v2895, %v3545
  %v3547 = vpop.f32.mrf.mxu0
  %v3548 = vadd.f32 %v2897, %v3547
  %3549 = vmatmul.bf16.gmra.mxu0 %v3042
  %v3550 = vpop.f32.mrf.mxu0
  %v3551 = vadd.f32 %v2900, %v3550
  %v3552 = vpop.f32.mrf.mxu0
  %v3553 = vadd.f32 %v2902, %v3552
  %3554 = vmatmul.bf16.gmra.mxu0 %v3045
  %v3555 = vpop.f32.mrf.mxu0
  %v3556 = vadd.f32 %v2905, %v3555
  %v3557 = vpop.f32.mrf.mxu0
  %v3558 = vadd.f32 %v2907, %v3557
  %3559 = vdwg.mxu0
  %3560 = vmatpush.bf16.msra.mxu0 %v3346
  %3561 = vmatpush.bf16.msra.mxu0 %v3343
  %3562 = vmatpush.bf16.msra.mxu0 %v3340
  %3563 = vmatpush.bf16.msra.mxu0 %v3337
  %3564 = vmatpush.bf16.msra.mxu0 %v3334
  %3565 = vmatpush.bf16.msra.mxu0 %v3331
  %3566 = vmatpush.bf16.msra.mxu0 %v3328
  %3567 = vmatpush.bf16.msra.mxu0 %v3325
  %3568 = vmatmul.bf16.gmra.mxu0 %v3037
  %v3569 = vpop.f32.mrf.mxu0
  %v3570 = vadd.f32 %v3541, %v3569
  %v3571 = vpop.f32.mrf.mxu0
  %v3572 = vadd.f32 %v3543, %v3571
  %3573 = vmatmul.bf16.gmra.mxu0 %v3040
  %v3574 = vpop.f32.mrf.mxu0
  %v3575 = vadd.f32 %v3546, %v3574
  %v3576 = vpop.f32.mrf.mxu0
  %v3577 = vadd.f32 %v3548, %v3576
  %3578 = vmatmul.bf16.gmra.mxu0 %v3043
  %v3579 = vpop.f32.mrf.mxu0
  %v3580 = vadd.f32 %v3551, %v3579
  %v3581 = vpop.f32.mrf.mxu0
  %v3582 = vadd.f32 %v3553, %v3581
  %3583 = vmatmul.bf16.gmra.mxu0 %v3046
  %v3584 = vpop.f32.mrf.mxu0
  %v3585 = vadd.f32 %v3556, %v3584
  %v3586 = vpop.f32.mrf.mxu0
  %v3587 = vadd.f32 %v3558, %v3586
  %3588 = vdwg.mxu0
  %3589 = vmatpush.bf16.msra.mxu0 %v3370
  %3590 = vmatpush.bf16.msra.mxu0 %v3367
  %3591 = vmatpush.bf16.msra.mxu0 %v3364
  %3592 = vmatpush.bf16.msra.mxu0 %v3361
  %3593 = vmatpush.bf16.msra.mxu0 %v3358
  %3594 = vmatpush.bf16.msra.mxu0 %v3355
  %3595 = vmatpush.bf16.msra.mxu0 %v3352
  %3596 = vmatpush.bf16.msra.mxu0 %v3349
  %3597 = vmatmul.bf16.gmra.mxu0 %v3038
  %v3598 = vpop.f32.mrf.mxu0
  %v3599 = vadd.f32 %v3570, %v3598
  %v3600 = vpop.f32.mrf.mxu0
  %v3601 = vadd.f32 %v3572, %v3600
  %3602 = vmatmul.bf16.gmra.mxu0 %v3041
  %v3603 = vpop.f32.mrf.mxu0
  %v3604 = vadd.f32 %v3575, %v3603
  %v3605 = vpop.f32.mrf.mxu0
  %v3606 = vadd.f32 %v3577, %v3605
  %3607 = vmatmul.bf16.gmra.mxu0 %v3044
  %v3608 = vpop.f32.mrf.mxu0
  %v3609 = vadd.f32 %v3580, %v3608
  %v3610 = vpop.f32.mrf.mxu0
  %v3611 = vadd.f32 %v3582, %v3610
  %3612 = vmatmul.bf16.gmra.mxu0 %v3047
  %v3613 = vpop.f32.mrf.mxu0
  %v3614 = vadd.f32 %v3585, %v3613
  %v3615 = vpop.f32.mrf.mxu0
  %v3616 = vadd.f32 %v3587, %v3615
  %3617 = vdwg.mxu0
  %3618 = vmatpush.bf16.msra.mxu0 %v3323
  %3619 = vmatpush.bf16.msra.mxu0 %v3320
  %3620 = vmatpush.bf16.msra.mxu0 %v3317
  %3621 = vmatpush.bf16.msra.mxu0 %v3314
  %3622 = vmatpush.bf16.msra.mxu0 %v3311
  %3623 = vmatpush.bf16.msra.mxu0 %v3308
  %3624 = vmatpush.bf16.msra.mxu0 %v3305
  %3625 = vmatpush.bf16.msra.mxu0 %v3302
  %3626 = vmatmul.bf16.gmra.mxu0 %v3036
  %v3627 = vpop.f32.mrf.mxu0
  %v3628 = vadd.f32 %v2977, %v3627
  %v3629 = vpop.f32.mrf.mxu0
  %v3630 = vadd.f32 %v2979, %v3629
  %3631 = vmatmul.bf16.gmra.mxu0 %v3039
  %v3632 = vpop.f32.mrf.mxu0
  %v3633 = vadd.f32 %v2982, %v3632
  %v3634 = vpop.f32.mrf.mxu0
  %v3635 = vadd.f32 %v2984, %v3634
  %3636 = vmatmul.bf16.gmra.mxu0 %v3042
  %v3637 = vpop.f32.mrf.mxu0
  %v3638 = vadd.f32 %v2987, %v3637
  %v3639 = vpop.f32.mrf.mxu0
  %v3640 = vadd.f32 %v2989, %v3639
  %3641 = vmatmul.bf16.gmra.mxu0 %v3045
  %v3642 = vpop.f32.mrf.mxu0
  %v3643 = vadd.f32 %v2992, %v3642
  %v3644 = vpop.f32.mrf.mxu0
  %v3645 = vadd.f32 %v2994, %v3644
  %3646 = vdwg.mxu0
  %3647 = vmatpush.bf16.msra.mxu0 %v3347
  %3648 = vmatpush.bf16.msra.mxu0 %v3344
  %3649 = vmatpush.bf16.msra.mxu0 %v3341
  %3650 = vmatpush.bf16.msra.mxu0 %v3338
  %3651 = vmatpush.bf16.msra.mxu0 %v3335
  %3652 = vmatpush.bf16.msra.mxu0 %v3332
  %3653 = vmatpush.bf16.msra.mxu0 %v3329
  %3654 = vmatpush.bf16.msra.mxu0 %v3326
  %3655 = vmatmul.bf16.gmra.mxu0 %v3037
  %v3656 = vpop.f32.mrf.mxu0
  %v3657 = vadd.f32 %v3628, %v3656
  %v3658 = vpop.f32.mrf.mxu0
  %v3659 = vadd.f32 %v3630, %v3658
  %3660 = vmatmul.bf16.gmra.mxu0 %v3040
  %v3661 = vpop.f32.mrf.mxu0
  %v3662 = vadd.f32 %v3633, %v3661
  %v3663 = vpop.f32.mrf.mxu0
  %v3664 = vadd.f32 %v3635, %v3663
  %3665 = vmatmul.bf16.gmra.mxu0 %v3043
  %v3666 = vpop.f32.mrf.mxu0
  %v3667 = vadd.f32 %v3638, %v3666
  %v3668 = vpop.f32.mrf.mxu0
  %v3669 = vadd.f32 %v3640, %v3668
  %3670 = vmatmul.bf16.gmra.mxu0 %v3046
  %v3671 = vpop.f32.mrf.mxu0
  %v3672 = vadd.f32 %v3643, %v3671
  %v3673 = vpop.f32.mrf.mxu0
  %v3674 = vadd.f32 %v3645, %v3673
  %3675 = vdwg.mxu0
  %3676 = vmatpush.bf16.msra.mxu0 %v3371
  %3677 = vmatpush.bf16.msra.mxu0 %v3368
  %3678 = vmatpush.bf16.msra.mxu0 %v3365
  %3679 = vmatpush.bf16.msra.mxu0 %v3362
  %3680 = vmatpush.bf16.msra.mxu0 %v3359
  %3681 = vmatpush.bf16.msra.mxu0 %v3356
  %3682 = vmatpush.bf16.msra.mxu0 %v3353
  %3683 = vmatpush.bf16.msra.mxu0 %v3350
  %3684 = vmatmul.bf16.gmra.mxu0 %v3038
  %v3685 = vpop.f32.mrf.mxu0
  %v3686 = vadd.f32 %v3657, %v3685
  %v3687 = vpop.f32.mrf.mxu0
  %v3688 = vadd.f32 %v3659, %v3687
  %3689 = vmatmul.bf16.gmra.mxu0 %v3041
  %v3690 = vpop.f32.mrf.mxu0
  %v3691 = vadd.f32 %v3662, %v3690
  %v3692 = vpop.f32.mrf.mxu0
  %v3693 = vadd.f32 %v3664, %v3692
  %3694 = vmatmul.bf16.gmra.mxu0 %v3044
  %v3695 = vpop.f32.mrf.mxu0
  %v3696 = vadd.f32 %v3667, %v3695
  %v3697 = vpop.f32.mrf.mxu0
  %v3698 = vadd.f32 %v3669, %v3697
  %3699 = vmatmul.bf16.gmra.mxu0 %v3047
  %v3700 = vpop.f32.mrf.mxu0
  %v3701 = vadd.f32 %v3672, %v3700
  %v3702 = vpop.f32.mrf.mxu0
  %v3703 = vadd.f32 %v3674, %v3702
  %3704 = vdwg.mxu0
  %v3705 = vadd.f32 %v3512, %v1975
  %v3706 = vadd.f32 %v3599, %v1976
  %v3707 = vadd.f32 %v3686, %v1977
  %v3708 = vadd.f32 %v3514, %v1975
  %v3709 = vadd.f32 %v3601, %v1976
  %v3710 = vadd.f32 %v3688, %v1977
  %v3711 = vadd.f32 %v3517, %v1975
  %v3712 = vadd.f32 %v3604, %v1976
  %v3713 = vadd.f32 %v3691, %v1977
  %v3714 = vadd.f32 %v3519, %v1975
  %v3715 = vadd.f32 %v3606, %v1976
  %v3716 = vadd.f32 %v3693, %v1977
  %v3717 = vadd.f32 %v3522, %v1975
  %v3718 = vadd.f32 %v3609, %v1976
  %v3719 = vadd.f32 %v3696, %v1977
  %v3720 = vadd.f32 %v3524, %v1975
  %v3721 = vadd.f32 %v3611, %v1976
  %v3722 = vadd.f32 %v3698, %v1977
  %v3723 = vadd.f32 %v3527, %v1975
  %v3724 = vadd.f32 %v3614, %v1976
  %v3725 = vadd.f32 %v3701, %v1977
  %v3726 = vadd.f32 %v3529, %v1975
  %v3727 = vadd.f32 %v3616, %v1976
  %v3728 = vadd.f32 %v3703, %v1977
  %v3729 = vmax.f32 %v3705, 0.0
  %v3730 = vmax.f32 %v3706, 0.0
  %v3731 = vmax.f32 %v3707, 0.0
  %v3732 = vmax.f32 %v3708, 0.0
  %v3733 = vmax.f32 %v3709, 0.0
  %v3734 = vmax.f32 %v3710, 0.0
  %v3735 = vmax.f32 %v3711, 0.0
  %v3736 = vmax.f32 %v3712, 0.0
  %v3737 = vmax.f32 %v3713, 0.0
  %v3738 = vmax.f32 %v3714, 0.0
  %v3739 = vmax.f32 %v3715, 0.0
  %v3740 = vmax.f32 %v3716, 0.0
  %v3741 = vmax.f32 %v3717, 0.0
  %v3742 = vmax.f32 %v3718, 0.0
  %v3743 = vmax.f32 %v3719, 0.0
  %v3744 = vmax.f32 %v3720, 0.0
  %v3745 = vmax.f32 %v3721, 0.0
  %v3746 = vmax.f32 %v3722, 0.0
  %v3747 = vmax.f32 %v3723, 0.0
  %v3748 = vmax.f32 %v3724, 0.0
  %v3749 = vmax.f32 %v3725, 0.0
  %v3750 = vmax.f32 %v3726, 0.0
  %v3751 = vmax.f32 %v3727, 0.0
  %v3752 = vmax.f32 %v3728, 0.0
  %v3753 = vpack.c.bf16 %v3730, %v3729
  %v3754 = vpack.c.bf16 %v3731, %v3731
  %v3755 = vpack.c.bf16 %v3733, %v3732
  %v3756 = vpack.c.bf16 %v3734, %v3734
  %v3757 = vpack.c.bf16 %v3736, %v3735
  %v3758 = vpack.c.bf16 %v3737, %v3737
  %v3759 = vpack.c.bf16 %v3739, %v3738
  %v3760 = vpack.c.bf16 %v3740, %v3740
  %v3761 = vpack.c.bf16 %v3742, %v3741
  %v3762 = vpack.c.bf16 %v3743, %v3743
  %v3763 = vpack.c.bf16 %v3745, %v3744
  %v3764 = vpack.c.bf16 %v3746, %v3746
  %v3765 = vpack.c.bf16 %v3748, %v3747
  %v3766 = vpack.c.bf16 %v3749, %v3749
  %v3767 = vpack.c.bf16 %v3751, %v3750
  %v3768 = vpack.c.bf16 %v3752, %v3752
  %3769 = vst [vmem:[#allocation3 + $0x30] sm:$0xff] %v3753
  %3770 = vst.msk [vmem:[#allocation3 + $0x38] sm:$0xf] %vm42, %v3754
  %3771 = vst [vmem:[#allocation3 + $0x3c] sm:$0xff] %v3755
  %3772 = vst.msk [vmem:[#allocation3 + $0x44] sm:$0xf] %vm42, %v3756
  %3773 = vst [vmem:[#allocation3 + $0x60] sm:$0xff] %v3757
  %3774 = vst.msk [vmem:[#allocation3 + $0x68] sm:$0xf] %vm42, %v3758
  %3775 = vst [vmem:[#allocation3 + $0x6c] sm:$0xff] %v3759
  %3776 = vst.msk [vmem:[#allocation3 + $0x74] sm:$0xf] %vm42, %v3760
  %3777 = vst [vmem:[#allocation3 + $0x90] sm:$0xff] %v3761
  %3778 = vst.msk [vmem:[#allocation3 + $0x98] sm:$0xf] %vm42, %v3762
  %3779 = vst [vmem:[#allocation3 + $0x9c] sm:$0xff] %v3763
  %3780 = vst.msk [vmem:[#allocation3 + $0xa4] sm:$0xf] %vm42, %v3764
  %3781 = vst [vmem:[#allocation3 + $0xc0] sm:$0xff] %v3765
  %3782 = vst.msk [vmem:[#allocation3 + $0xc8] sm:$0xf] %vm42, %v3766
  %3783 = vst [vmem:[#allocation3 + $0xcc] sm:$0xff] %v3767
  %3784 = vst.msk [vmem:[#allocation3 + $0xd4] sm:$0xf] %vm42, %v3768
  %v3785 = vld [vmem:[%s6] sm:$0x7]
  %v3786 = vld [vmem:[#allocation3] sm:$0xff]
  %v3787 = vld [vmem:[#allocation3 + $0x8] sm:$0xf]
  %v3788 = vld [vmem:[#allocation3 + $0xc] sm:$0xff]
  %v3789 = vld [vmem:[#allocation3 + $0x14] sm:$0xf]
  %v3790 = vld [vmem:[#allocation3 + $0x18] sm:$0xff]
  %v3791 = vld [vmem:[#allocation3 + $0x20] sm:$0xf]
  %v3792 = vld [vmem:[#allocation3 + $0x24] sm:$0xff]
  %v3793 = vld [vmem:[#allocation3 + $0x2c] sm:$0xf]
  %v3794 = vld [vmem:[#allocation3 + $0x30] sm:$0xff]
  %v3795 = vld [vmem:[#allocation3 + $0x38] sm:$0xf]
  %v3796 = vld [vmem:[#allocation3 + $0x3c] sm:$0xff]
  %v3797 = vld [vmem:[#allocation3 + $0x44] sm:$0xf]
  %v3798 = vld [vmem:[#allocation3 + $0x48] sm:$0xff]
  %v3799 = vld [vmem:[#allocation3 + $0x50] sm:$0xf]
  %v3800 = vld [vmem:[#allocation3 + $0x54] sm:$0xff]
  %v3801 = vld [vmem:[#allocation3 + $0x5c] sm:$0xf]
  %v3802 = vld [vmem:[#allocation3 + $0x60] sm:$0xff]
  %v3803 = vld [vmem:[#allocation3 + $0x68] sm:$0xf]
  %v3804 = vld [vmem:[#allocation3 + $0x6c] sm:$0xff]
  %v3805 = vld [vmem:[#allocation3 + $0x74] sm:$0xf]
  %v3806 = vld [vmem:[#allocation3 + $0x78] sm:$0xff]
  %v3807 = vld [vmem:[#allocation3 + $0x80] sm:$0xf]
  %v3808 = vld [vmem:[#allocation3 + $0x84] sm:$0xff]
  %v3809 = vld [vmem:[#allocation3 + $0x8c] sm:$0xf]
  %v3810 = vld [vmem:[#allocation3 + $0x90] sm:$0xff]
  %v3811 = vld [vmem:[#allocation3 + $0x98] sm:$0xf]
  %v3812 = vld [vmem:[#allocation3 + $0x9c] sm:$0xff]
  %v3813 = vld [vmem:[#allocation3 + $0xa4] sm:$0xf]
  %v3814 = vld [vmem:[#allocation3 + $0xa8] sm:$0xff]
  %v3815 = vld [vmem:[#allocation3 + $0xb0] sm:$0xf]
  %v3816 = vld [vmem:[#allocation3 + $0xb4] sm:$0xff]
  %v3817 = vld [vmem:[#allocation3 + $0xbc] sm:$0xf]
  %v3818 = vld [vmem:[#allocation3 + $0xc0] sm:$0xff]
  %v3819 = vld [vmem:[#allocation3 + $0xc8] sm:$0xf]
  %v3820 = vld [vmem:[#allocation3 + $0xcc] sm:$0xff]
  %v3821 = vld [vmem:[#allocation3 + $0xd4] sm:$0xf]
  %v3822 = vld [vmem:[%s5] sm:$0xff]
  %v3823 = vld [vmem:[%s5 + $0x8] sm:$0xf]
  %v3824 = vld [vmem:[%s5 + $0xc] sm:$0xff]
  %v3825 = vld [vmem:[%s5 + $0x14] sm:$0xf]
  %v3826 = vld [vmem:[%s5 + $0x18] sm:$0xff]
  %v3827 = vld [vmem:[%s5 + $0x20] sm:$0xf]
  %v3828 = vld [vmem:[%s5 + $0x24] sm:$0xff]
  %v3829 = vld [vmem:[%s5 + $0x2c] sm:$0xf]
  %v3830 = vld [vmem:[%s5 + $0x30] sm:$0xff]
  %v3831 = vld [vmem:[%s5 + $0x38] sm:$0xf]
  %v3832 = vld [vmem:[%s5 + $0x3c] sm:$0xff]
  %v3833 = vld [vmem:[%s5 + $0x44] sm:$0xf]
  %v3834 = vld [vmem:[%s5 + $0x48] sm:$0xff]
  %v3835 = vld [vmem:[%s5 + $0x50] sm:$0xf]
  %v3836 = vld [vmem:[%s5 + $0x54] sm:$0xff]
  %v3837 = vld [vmem:[%s5 + $0x5c] sm:$0xf]
  %v3838 = vld [vmem:[%s5 + $0x60] sm:$0xff]
  %v3839 = vld [vmem:[%s5 + $0x68] sm:$0xf]
  %v3840 = vld [vmem:[%s5 + $0x6c] sm:$0xff]
  %v3841 = vld [vmem:[%s5 + $0x74] sm:$0xf]
  %v3842 = vld [vmem:[%s5 + $0x78] sm:$0xff]
  %v3843 = vld [vmem:[%s5 + $0x80] sm:$0xf]
  %v3844 = vld [vmem:[%s5 + $0x84] sm:$0xff]
  %v3845 = vld [vmem:[%s5 + $0x8c] sm:$0xf]
  %v3846 = vld [vmem:[%s5 + $0x90] sm:$0xff]
  %v3847 = vld [vmem:[%s5 + $0x98] sm:$0xf]
  %v3848 = vld [vmem:[%s5 + $0x9c] sm:$0xff]
  %v3849 = vld [vmem:[%s5 + $0xa4] sm:$0xf]
  %v3850 = vld [vmem:[%s5 + $0xa8] sm:$0xff]
  %v3851 = vld [vmem:[%s5 + $0xb0] sm:$0xf]
  %v3852 = vld [vmem:[%s5 + $0xb4] sm:$0xff]
  %v3853 = vld [vmem:[%s5 + $0xbc] sm:$0xf]
  %v3854 = vld [vmem:[%s5 + $0xc0] sm:$0xff]
  %v3855 = vld [vmem:[%s5 + $0xc8] sm:$0xf]
  %v3856 = vld [vmem:[%s5 + $0xcc] sm:$0xff]
  %v3857 = vld [vmem:[%s5 + $0xd4] sm:$0xf]
  %v3858 = vld [vmem:[%s5 + $0xd8] sm:$0xff]
  %v3859 = vld [vmem:[%s5 + $0xe0] sm:$0xf]
  %v3860 = vld [vmem:[%s5 + $0xe4] sm:$0xff]
  %v3861 = vld [vmem:[%s5 + $0xec] sm:$0xf]
  %v3862 = vld [vmem:[%s5 + $0xf0] sm:$0xff]
  %v3863 = vld [vmem:[%s5 + $0xf8] sm:$0xf]
  %v3864 = vld [vmem:[%s5 + $0xfc] sm:$0xff]
  %v3865 = vld [vmem:[%s5 + $0x104] sm:$0xf]
  %v3866 = vld [vmem:[%s5 + $0x108] sm:$0xff]
  %v3867 = vld [vmem:[%s5 + $0x110] sm:$0xf]
  %v3868 = vld [vmem:[%s5 + $0x114] sm:$0xff]
  %v3869 = vld [vmem:[%s5 + $0x11c] sm:$0xf]
  %v3870 = vld [vmem:[%s5 + $0x120] sm:$0xff]
  %v3871 = vld [vmem:[%s5 + $0x128] sm:$0xf]
  %v3872 = vld [vmem:[%s5 + $0x12c] sm:$0xff]
  %v3873 = vld [vmem:[%s5 + $0x134] sm:$0xf]
  %v3874 = vld [vmem:[%s5 + $0x138] sm:$0xff]
  %v3875 = vld [vmem:[%s5 + $0x140] sm:$0xf]
  %v3876 = vld [vmem:[%s5 + $0x144] sm:$0xff]
  %v3877 = vld [vmem:[%s5 + $0x14c] sm:$0xf]
  %v3878 = vld [vmem:[%s5 + $0x150] sm:$0xff]
  %v3879 = vld [vmem:[%s5 + $0x158] sm:$0xf]
  %v3880 = vld [vmem:[%s5 + $0x15c] sm:$0xff]
  %v3881 = vld [vmem:[%s5 + $0x164] sm:$0xf]
  %v3882 = vld [vmem:[%s5 + $0x168] sm:$0xff]
  %v3883 = vld [vmem:[%s5 + $0x170] sm:$0xf]
  %v3884 = vld [vmem:[%s5 + $0x174] sm:$0xff]
  %v3885 = vld [vmem:[%s5 + $0x17c] sm:$0xf]
  %v3886 = vld [vmem:[%s5 + $0x180] sm:$0xff]
  %v3887 = vld [vmem:[%s5 + $0x188] sm:$0xf]
  %v3888 = vld [vmem:[%s5 + $0x18c] sm:$0xff]
  %v3889 = vld [vmem:[%s5 + $0x194] sm:$0xf]
  %v3890 = vld [vmem:[%s5 + $0x198] sm:$0xff]
  %v3891 = vld [vmem:[%s5 + $0x1a0] sm:$0xf]
  %v3892 = vld [vmem:[%s5 + $0x1a4] sm:$0xff]
  %v3893 = vld [vmem:[%s5 + $0x1ac] sm:$0xf]
  %v3894 = vld [vmem:[%s5 + $0x1b0] sm:$0xff]
  %v3895 = vld [vmem:[%s5 + $0x1b8] sm:$0xf]
  %v3896 = vld [vmem:[%s5 + $0x1bc] sm:$0xff]
  %v3897 = vld [vmem:[%s5 + $0x1c4] sm:$0xf]
  %v3898 = vld [vmem:[%s5 + $0x1c8] sm:$0xff]
  %v3899 = vld [vmem:[%s5 + $0x1d0] sm:$0xf]
  %v3900 = vld [vmem:[%s5 + $0x1d4] sm:$0xff]
  %v3901 = vld [vmem:[%s5 + $0x1dc] sm:$0xf]
  %s3902 = scalar_lea.vmem %s5, 480
  %v3903 = vld [vmem:[%s3902] sm:$0xff]
  %v3904 = vld [vmem:[%s3902 + $0x8] sm:$0xf]
  %v3905 = vld [vmem:[%s3902 + $0xc] sm:$0xff]
  %v3906 = vld [vmem:[%s3902 + $0x14] sm:$0xf]
  %v3907 = vld [vmem:[%s3902 + $0x18] sm:$0xff]
  %v3908 = vld [vmem:[%s3902 + $0x20] sm:$0xf]
  %v3909 = vld [vmem:[%s3902 + $0x24] sm:$0xff]
  %v3910 = vld [vmem:[%s3902 + $0x2c] sm:$0xf]
  %v3911 = vld [vmem:[%s3902 + $0x30] sm:$0xff]
  %v3912 = vld [vmem:[%s3902 + $0x38] sm:$0xf]
  %v3913 = vld [vmem:[%s3902 + $0x3c] sm:$0xff]
  %v3914 = vld [vmem:[%s3902 + $0x44] sm:$0xf]
  %v3915 = vld [vmem:[%s3902 + $0x48] sm:$0xff]
  %v3916 = vld [vmem:[%s3902 + $0x50] sm:$0xf]
  %v3917 = vld [vmem:[%s3902 + $0x54] sm:$0xff]
  %v3918 = vld [vmem:[%s3902 + $0x5c] sm:$0xf]
  %v3919 = vld [vmem:[%s3902 + $0x60] sm:$0xff]
  %v3920 = vld [vmem:[%s3902 + $0x68] sm:$0xf]
  %v3921 = vld [vmem:[%s3902 + $0x6c] sm:$0xff]
  %v3922 = vld [vmem:[%s3902 + $0x74] sm:$0xf]
  %v3923 = vld [vmem:[%s3902 + $0x78] sm:$0xff]
  %v3924 = vld [vmem:[%s3902 + $0x80] sm:$0xf]
  %v3925 = vld [vmem:[%s3902 + $0x84] sm:$0xff]
  %v3926 = vld [vmem:[%s3902 + $0x8c] sm:$0xf]
  %v3927 = vld [vmem:[%s3902 + $0x90] sm:$0xff]
  %v3928 = vld [vmem:[%s3902 + $0x98] sm:$0xf]
  %v3929 = vld [vmem:[%s3902 + $0x9c] sm:$0xff]
  %v3930 = vld [vmem:[%s3902 + $0xa4] sm:$0xf]
  %v3931 = vld [vmem:[%s3902 + $0xa8] sm:$0xff]
  %v3932 = vld [vmem:[%s3902 + $0xb0] sm:$0xf]
  %v3933 = vld [vmem:[%s3902 + $0xb4] sm:$0xff]
  %v3934 = vld [vmem:[%s3902 + $0xbc] sm:$0xf]
  %v3935 = vld [vmem:[%s3902 + $0xc0] sm:$0xff]
  %v3936 = vld [vmem:[%s3902 + $0xc8] sm:$0xf]
  %v3937 = vld [vmem:[%s3902 + $0xcc] sm:$0xff]
  %v3938 = vld [vmem:[%s3902 + $0xd4] sm:$0xf]
  %v3939 = vld [vmem:[%s3902 + $0xd8] sm:$0xff]
  %v3940 = vld [vmem:[%s3902 + $0xe0] sm:$0xf]
  %v3941 = vld [vmem:[%s3902 + $0xe4] sm:$0xff]
  %v3942 = vld [vmem:[%s3902 + $0xec] sm:$0xf]
  %v3943 = vld [vmem:[%s3902 + $0xf0] sm:$0xff]
  %v3944 = vld [vmem:[%s3902 + $0xf8] sm:$0xf]
  %v3945 = vld [vmem:[%s3902 + $0xfc] sm:$0xff]
  %v3946 = vld [vmem:[%s3902 + $0x104] sm:$0xf]
  %v3947 = vld [vmem:[%s3902 + $0x108] sm:$0xff]
  %v3948 = vld [vmem:[%s3902 + $0x110] sm:$0xf]
  %v3949 = vld [vmem:[%s3902 + $0x114] sm:$0xff]
  %v3950 = vld [vmem:[%s3902 + $0x11c] sm:$0xf]
  %v3951 = vld [vmem:[%s3902 + $0x120] sm:$0xff]
  %v3952 = vld [vmem:[%s3902 + $0x128] sm:$0xf]
  %v3953 = vld [vmem:[%s3902 + $0x12c] sm:$0xff]
  %v3954 = vld [vmem:[%s3902 + $0x134] sm:$0xf]
  %v3955 = vld [vmem:[%s3902 + $0x138] sm:$0xff]
  %v3956 = vld [vmem:[%s3902 + $0x140] sm:$0xf]
  %v3957 = vld [vmem:[%s3902 + $0x144] sm:$0xff]
  %v3958 = vld [vmem:[%s3902 + $0x14c] sm:$0xf]
  %v3959 = vld [vmem:[%s3902 + $0x150] sm:$0xff]
  %v3960 = vld [vmem:[%s3902 + $0x158] sm:$0xf]
  %v3961 = vld [vmem:[%s3902 + $0x15c] sm:$0xff]
  %v3962 = vld [vmem:[%s3902 + $0x164] sm:$0xf]
  %v3963 = vld [vmem:[%s3902 + $0x168] sm:$0xff]
  %v3964 = vld [vmem:[%s3902 + $0x170] sm:$0xf]
  %v3965 = vld [vmem:[%s3902 + $0x174] sm:$0xff]
  %v3966 = vld [vmem:[%s3902 + $0x17c] sm:$0xf]
  %v3967 = vld [vmem:[%s3902 + $0x180] sm:$0xff]
  %v3968 = vld [vmem:[%s3902 + $0x188] sm:$0xf]
  %v3969 = vld [vmem:[%s3902 + $0x18c] sm:$0xff]
  %v3970 = vld [vmem:[%s3902 + $0x194] sm:$0xf]
  %v3971 = vld [vmem:[%s3902 + $0x198] sm:$0xff]
  %v3972 = vld [vmem:[%s3902 + $0x1a0] sm:$0xf]
  %v3973 = vld [vmem:[%s3902 + $0x1a4] sm:$0xff]
  %v3974 = vld [vmem:[%s3902 + $0x1ac] sm:$0xf]
  %v3975 = vld [vmem:[%s3902 + $0x1b0] sm:$0xff]
  %v3976 = vld [vmem:[%s3902 + $0x1b8] sm:$0xf]
  %v3977 = vld [vmem:[%s3902 + $0x1bc] sm:$0xff]
  %v3978 = vld [vmem:[%s3902 + $0x1c4] sm:$0xf]
  %v3979 = vld [vmem:[%s3902 + $0x1c8] sm:$0xff]
  %v3980 = vld [vmem:[%s3902 + $0x1d0] sm:$0xf]
  %v3981 = vld [vmem:[%s3902 + $0x1d4] sm:$0xff]
  %v3982 = vld [vmem:[%s3902 + $0x1dc] sm:$0xf]
  %v4015 = vunpack.c.l.b16 %v3790
  %v4016 = vunpack.c.h.b16 %v3790
  %v4017 = vunpack.c.l.b16 %v3791
  %v4018 = vunpack.c.l.b16 %v3792
  %v4019 = vunpack.c.h.b16 %v3792
  %v4020 = vunpack.c.l.b16 %v3793
  %v4021 = vunpack.c.l.b16 %v3794
  %v4022 = vunpack.c.h.b16 %v3794
  %v4023 = vunpack.c.l.b16 %v3795
  %v4024 = vunpack.c.l.b16 %v3796
  %v4025 = vunpack.c.h.b16 %v3796
  %v4026 = vunpack.c.l.b16 %v3797
  %v4027 = vunpack.c.l.b16 %v3798
  %v4028 = vunpack.c.h.b16 %v3798
  %v4029 = vunpack.c.l.b16 %v3799
  %v4030 = vunpack.c.l.b16 %v3800
  %v4031 = vunpack.c.h.b16 %v3800
  %v4032 = vunpack.c.l.b16 %v3801
  %v4033 = vunpack.c.l.b16 %v3802
  %v4034 = vunpack.c.h.b16 %v3802
  %v4035 = vunpack.c.l.b16 %v3803
  %v4036 = vunpack.c.l.b16 %v3804
  %v4037 = vunpack.c.h.b16 %v3804
  %v4038 = vunpack.c.l.b16 %v3805
  %v4039 = vunpack.c.l.b16 %v3806
  %v4040 = vunpack.c.h.b16 %v3806
  %v4041 = vunpack.c.l.b16 %v3807
  %v4042 = vunpack.c.l.b16 %v3808
  %v4043 = vunpack.c.h.b16 %v3808
  %v4044 = vunpack.c.l.b16 %v3809
  %v4045 = vunpack.c.l.b16 %v3810
  %v4046 = vunpack.c.h.b16 %v3810
  %v4047 = vunpack.c.l.b16 %v3811
  %v4048 = vunpack.c.l.b16 %v3812
  %v4049 = vunpack.c.h.b16 %v3812
  %v4050 = vunpack.c.l.b16 %v3813
  %v4051 = vunpack.c.l.b16 %v3814
  %v4052 = vunpack.c.h.b16 %v3814
  %v4053 = vunpack.c.l.b16 %v3815
  %v4054 = vunpack.c.l.b16 %v3816
  %v4055 = vunpack.c.h.b16 %v3816
  %v4056 = vunpack.c.l.b16 %v3817
  %v4057 = vunpack.c.l.b16 %v3818
  %v4058 = vunpack.c.h.b16 %v3818
  %v4059 = vunpack.c.l.b16 %v3819
  %v4060 = vunpack.c.l.b16 %v3820
  %v4061 = vunpack.c.h.b16 %v3820
  %v4062 = vunpack.c.l.b16 %v3821
  %v4063 = vpack.c.b16 %v4018, %v4015
  %v4064 = vpack.c.b16 %v4019, %v4016
  %v4065 = vpack.c.b16 %v4020, %v4017
  %v4066 = vpack.c.b16 %v4024, %v4021
  %v4067 = vpack.c.b16 %v4025, %v4022
  %v4068 = vpack.c.b16 %v4026, %v4023
  %v4069 = vpack.c.b16 %v4030, %v4027
  %v4070 = vpack.c.b16 %v4031, %v4028
  %v4071 = vpack.c.b16 %v4032, %v4029
  %v4072 = vpack.c.b16 %v4036, %v4033
  %v4073 = vpack.c.b16 %v4037, %v4034
  %v4074 = vpack.c.b16 %v4038, %v4035
  %v4075 = vpack.c.b16 %v4042, %v4039
  %v4076 = vpack.c.b16 %v4043, %v4040
  %v4077 = vpack.c.b16 %v4044, %v4041
  %v4078 = vpack.c.b16 %v4048, %v4045
  %v4079 = vpack.c.b16 %v4049, %v4046
  %v4080 = vpack.c.b16 %v4050, %v4047
  %v4081 = vpack.c.b16 %v4054, %v4051
  %v4082 = vpack.c.b16 %v4055, %v4052
  %v4083 = vpack.c.b16 %v4056, %v4053
  %v4084 = vpack.c.b16 %v4060, %v4057
  %v4085 = vpack.c.b16 %v4061, %v4058
  %v4086 = vpack.c.b16 %v4062, %v4059
  %v4183 = vunpack.c.l.b16 %v3903
  %v4184 = vunpack.c.h.b16 %v3903
  %v4185 = vunpack.c.l.b16 %v3904
  %v4186 = vunpack.c.l.b16 %v3905
  %v4187 = vunpack.c.h.b16 %v3905
  %v4188 = vunpack.c.l.b16 %v3906
  %v4189 = vunpack.c.l.b16 %v3907
  %v4190 = vunpack.c.h.b16 %v3907
  %v4191 = vunpack.c.l.b16 %v3908
  %v4192 = vunpack.c.l.b16 %v3909
  %v4193 = vunpack.c.h.b16 %v3909
  %v4194 = vunpack.c.l.b16 %v3910
  %v4195 = vunpack.c.l.b16 %v3911
  %v4196 = vunpack.c.h.b16 %v3911
  %v4197 = vunpack.c.l.b16 %v3912
  %v4198 = vunpack.c.l.b16 %v3913
  %v4199 = vunpack.c.h.b16 %v3913
  %v4200 = vunpack.c.l.b16 %v3914
  %v4201 = vunpack.c.l.b16 %v3915
  %v4202 = vunpack.c.h.b16 %v3915
  %v4203 = vunpack.c.l.b16 %v3916
  %v4204 = vunpack.c.l.b16 %v3917
  %v4205 = vunpack.c.h.b16 %v3917
  %v4206 = vunpack.c.l.b16 %v3918
  %v4207 = vunpack.c.l.b16 %v3919
  %v4208 = vunpack.c.h.b16 %v3919
  %v4209 = vunpack.c.l.b16 %v3920
  %v4210 = vunpack.c.l.b16 %v3921
  %v4211 = vunpack.c.h.b16 %v3921
  %v4212 = vunpack.c.l.b16 %v3922
  %v4213 = vunpack.c.l.b16 %v3923
  %v4214 = vunpack.c.h.b16 %v3923
  %v4215 = vunpack.c.l.b16 %v3924
  %v4216 = vunpack.c.l.b16 %v3925
  %v4217 = vunpack.c.h.b16 %v3925
  %v4218 = vunpack.c.l.b16 %v3926
  %v4219 = vunpack.c.l.b16 %v3927
  %v4220 = vunpack.c.h.b16 %v3927
  %v4221 = vunpack.c.l.b16 %v3928
  %v4222 = vunpack.c.l.b16 %v3929
  %v4223 = vunpack.c.h.b16 %v3929
  %v4224 = vunpack.c.l.b16 %v3930
  %v4225 = vunpack.c.l.b16 %v3931
  %v4226 = vunpack.c.h.b16 %v3931
  %v4227 = vunpack.c.l.b16 %v3932
  %v4228 = vunpack.c.l.b16 %v3933
  %v4229 = vunpack.c.h.b16 %v3933
  %v4230 = vunpack.c.l.b16 %v3934
  %v4231 = vunpack.c.l.b16 %v3935
  %v4232 = vunpack.c.h.b16 %v3935
  %v4233 = vunpack.c.l.b16 %v3936
  %v4234 = vunpack.c.l.b16 %v3937
  %v4235 = vunpack.c.h.b16 %v3937
  %v4236 = vunpack.c.l.b16 %v3938
  %v4237 = vunpack.c.l.b16 %v3939
  %v4238 = vunpack.c.h.b16 %v3939
  %v4239 = vunpack.c.l.b16 %v3940
  %v4240 = vunpack.c.l.b16 %v3941
  %v4241 = vunpack.c.h.b16 %v3941
  %v4242 = vunpack.c.l.b16 %v3942
  %v4243 = vunpack.c.l.b16 %v3943
  %v4244 = vunpack.c.h.b16 %v3943
  %v4245 = vunpack.c.l.b16 %v3944
  %v4246 = vunpack.c.l.b16 %v3945
  %v4247 = vunpack.c.h.b16 %v3945
  %v4248 = vunpack.c.l.b16 %v3946
  %v4249 = vunpack.c.l.b16 %v3947
  %v4250 = vunpack.c.h.b16 %v3947
  %v4251 = vunpack.c.l.b16 %v3948
  %v4252 = vunpack.c.l.b16 %v3949
  %v4253 = vunpack.c.h.b16 %v3949
  %v4254 = vunpack.c.l.b16 %v3950
  %v4255 = vunpack.c.l.b16 %v3951
  %v4256 = vunpack.c.h.b16 %v3951
  %v4257 = vunpack.c.l.b16 %v3952
  %v4258 = vunpack.c.l.b16 %v3953
  %v4259 = vunpack.c.h.b16 %v3953
  %v4260 = vunpack.c.l.b16 %v3954
  %v4261 = vunpack.c.l.b16 %v3955
  %v4262 = vunpack.c.h.b16 %v3955
  %v4263 = vunpack.c.l.b16 %v3956
  %v4264 = vunpack.c.l.b16 %v3957
  %v4265 = vunpack.c.h.b16 %v3957
  %v4266 = vunpack.c.l.b16 %v3958
  %v4267 = vunpack.c.l.b16 %v3959
  %v4268 = vunpack.c.h.b16 %v3959
  %v4269 = vunpack.c.l.b16 %v3960
  %v4270 = vunpack.c.l.b16 %v3961
  %v4271 = vunpack.c.h.b16 %v3961
  %v4272 = vunpack.c.l.b16 %v3962
  %v4273 = vunpack.c.l.b16 %v3963
  %v4274 = vunpack.c.h.b16 %v3963
  %v4275 = vunpack.c.l.b16 %v3964
  %v4276 = vunpack.c.l.b16 %v3965
  %v4277 = vunpack.c.h.b16 %v3965
  %v4278 = vunpack.c.l.b16 %v3966
  %v4279 = vunpack.c.l.b16 %v3967
  %v4280 = vunpack.c.h.b16 %v3967
  %v4281 = vunpack.c.l.b16 %v3968
  %v4282 = vunpack.c.l.b16 %v3969
  %v4283 = vunpack.c.h.b16 %v3969
  %v4284 = vunpack.c.l.b16 %v3970
  %v4285 = vunpack.c.l.b16 %v3971
  %v4286 = vunpack.c.h.b16 %v3971
  %v4287 = vunpack.c.l.b16 %v3972
  %v4288 = vunpack.c.l.b16 %v3973
  %v4289 = vunpack.c.h.b16 %v3973
  %v4290 = vunpack.c.l.b16 %v3974
  %v4291 = vunpack.c.l.b16 %v3975
  %v4292 = vunpack.c.h.b16 %v3975
  %v4293 = vunpack.c.l.b16 %v3976
  %v4294 = vunpack.c.l.b16 %v3977
  %v4295 = vunpack.c.h.b16 %v3977
  %v4296 = vunpack.c.l.b16 %v3978
  %v4297 = vunpack.c.l.b16 %v3979
  %v4298 = vunpack.c.h.b16 %v3979
  %v4299 = vunpack.c.l.b16 %v3980
  %v4300 = vunpack.c.l.b16 %v3981
  %v4301 = vunpack.c.h.b16 %v3981
  %v4302 = vunpack.c.l.b16 %v3982
  %v4303 = vpack.c.b16 %v4186, %v4183
  %v4304 = vpack.c.b16 %v4187, %v4184
  %v4305 = vpack.c.b16 %v4188, %v4185
  %v4306 = vpack.c.b16 %v4192, %v4189
  %v4307 = vpack.c.b16 %v4193, %v4190
  %v4308 = vpack.c.b16 %v4194, %v4191
  %v4309 = vpack.c.b16 %v4198, %v4195
  %v4310 = vpack.c.b16 %v4199, %v4196
  %v4311 = vpack.c.b16 %v4200, %v4197
  %v4312 = vpack.c.b16 %v4204, %v4201
  %v4313 = vpack.c.b16 %v4205, %v4202
  %v4314 = vpack.c.b16 %v4206, %v4203
  %v4315 = vpack.c.b16 %v4210, %v4207
  %v4316 = vpack.c.b16 %v4211, %v4208
  %v4317 = vpack.c.b16 %v4212, %v4209
  %v4318 = vpack.c.b16 %v4216, %v4213
  %v4319 = vpack.c.b16 %v4217, %v4214
  %v4320 = vpack.c.b16 %v4218, %v4215
  %v4321 = vpack.c.b16 %v4222, %v4219
  %v4322 = vpack.c.b16 %v4223, %v4220
  %v4323 = vpack.c.b16 %v4224, %v4221
  %v4324 = vpack.c.b16 %v4228, %v4225
  %v4325 = vpack.c.b16 %v4229, %v4226
  %v4326 = vpack.c.b16 %v4230, %v4227
  %v4327 = vpack.c.b16 %v4234, %v4231
  %v4328 = vpack.c.b16 %v4235, %v4232
  %v4329 = vpack.c.b16 %v4236, %v4233
  %v4330 = vpack.c.b16 %v4240, %v4237
  %v4331 = vpack.c.b16 %v4241, %v4238
  %v4332 = vpack.c.b16 %v4242, %v4239
  %v4333 = vpack.c.b16 %v4246, %v4243
  %v4334 = vpack.c.b16 %v4247, %v4244
  %v4335 = vpack.c.b16 %v4248, %v4245
  %v4336 = vpack.c.b16 %v4252, %v4249
  %v4337 = vpack.c.b16 %v4253, %v4250
  %v4338 = vpack.c.b16 %v4254, %v4251
  %v4339 = vpack.c.b16 %v4258, %v4255
  %v4340 = vpack.c.b16 %v4259, %v4256
  %v4341 = vpack.c.b16 %v4260, %v4257
  %v4342 = vpack.c.b16 %v4264, %v4261
  %v4343 = vpack.c.b16 %v4265, %v4262
  %v4344 = vpack.c.b16 %v4266, %v4263
  %v4345 = vpack.c.b16 %v4270, %v4267
  %v4346 = vpack.c.b16 %v4271, %v4268
  %v4347 = vpack.c.b16 %v4272, %v4269
  %v4348 = vpack.c.b16 %v4276, %v4273
  %v4349 = vpack.c.b16 %v4277, %v4274
  %v4350 = vpack.c.b16 %v4278, %v4275
  %v4351 = vpack.c.b16 %v4282, %v4279
  %v4352 = vpack.c.b16 %v4283, %v4280
  %v4353 = vpack.c.b16 %v4284, %v4281
  %v4354 = vpack.c.b16 %v4288, %v4285
  %v4355 = vpack.c.b16 %v4289, %v4286
  %v4356 = vpack.c.b16 %v4290, %v4287
  %v4357 = vpack.c.b16 %v4294, %v4291
  %v4358 = vpack.c.b16 %v4295, %v4292
  %v4359 = vpack.c.b16 %v4296, %v4293
  %v4360 = vpack.c.b16 %v4300, %v4297
  %v4361 = vpack.c.b16 %v4301, %v4298
  %v4362 = vpack.c.b16 %v4302, %v4299
  %vm4423 = vcmask 523264
  %v4425 = vsel %vm4423, %v4065, 0
  %v4428 = vsel %vm4423, %v4068, 0
  %v4431 = vsel %vm4423, %v4071, 0
  %v4434 = vsel %vm4423, %v4074, 0
  %v4437 = vsel %vm4423, %v4077, 0
  %v4440 = vsel %vm4423, %v4080, 0
  %v4443 = vsel %vm4423, %v4083, 0
  %v4446 = vsel %vm4423, %v4086, 0
  %4448 = vmatpush.bf16.msra.mxu0 %v4324
  %4449 = vmatpush.bf16.msra.mxu0 %v4321
  %4450 = vmatpush.bf16.msra.mxu0 %v4318
  %4451 = vmatpush.bf16.msra.mxu0 %v4315
  %4452 = vmatpush.bf16.msra.mxu0 %v4312
  %4453 = vmatpush.bf16.msra.mxu0 %v4309
  %4454 = vmatpush.bf16.msra.mxu0 %v4306
  %4455 = vmatpush.bf16.msra.mxu0 %v4303
  %4456 = vmatmul.bf16.gmra.mxu0 %v4063
  %v4457 = vpop.f32.mrf.mxu0
  %v4458 = vadd.f32 0.0, %v4457
  %v4459 = vpop.f32.mrf.mxu0
  %v4460 = vadd.f32 0.0, %v4459
  %4461 = vmatmul.bf16.gmra.mxu0 %v4066
  %v4462 = vpop.f32.mrf.mxu0
  %v4463 = vadd.f32 0.0, %v4462
  %v4464 = vpop.f32.mrf.mxu0
  %v4465 = vadd.f32 0.0, %v4464
  %4466 = vmatmul.bf16.gmra.mxu0 %v4069
  %v4467 = vpop.f32.mrf.mxu0
  %v4468 = vadd.f32 0.0, %v4467
  %v4469 = vpop.f32.mrf.mxu0
  %v4470 = vadd.f32 0.0, %v4469
  %4471 = vmatmul.bf16.gmra.mxu0 %v4072
  %v4472 = vpop.f32.mrf.mxu0
  %v4473 = vadd.f32 0.0, %v4472
  %v4474 = vpop.f32.mrf.mxu0
  %v4475 = vadd.f32 0.0, %v4474
  %4476 = vmatmul.bf16.gmra.mxu0 %v4075
  %v4477 = vpop.f32.mrf.mxu0
  %v4478 = vadd.f32 0.0, %v4477
  %v4479 = vpop.f32.mrf.mxu0
  %v4480 = vadd.f32 0.0, %v4479
  %4481 = vmatmul.bf16.gmra.mxu0 %v4078
  %v4482 = vpop.f32.mrf.mxu0
  %v4483 = vadd.f32 0.0, %v4482
  %v4484 = vpop.f32.mrf.mxu0
  %v4485 = vadd.f32 0.0, %v4484
  %4486 = vmatmul.bf16.gmra.mxu0 %v4081
  %v4487 = vpop.f32.mrf.mxu0
  %v4488 = vadd.f32 0.0, %v4487
  %v4489 = vpop.f32.mrf.mxu0
  %v4490 = vadd.f32 0.0, %v4489
  %4491 = vmatmul.bf16.gmra.mxu0 %v4084
  %v4492 = vpop.f32.mrf.mxu0
  %v4493 = vadd.f32 0.0, %v4492
  %v4494 = vpop.f32.mrf.mxu0
  %v4495 = vadd.f32 0.0, %v4494
  %4496 = vdwg.mxu0
  %4497 = vmatpush.bf16.msra.mxu0 %v4348
  %4498 = vmatpush.bf16.msra.mxu0 %v4345
  %4499 = vmatpush.bf16.msra.mxu0 %v4342
  %4500 = vmatpush.bf16.msra.mxu0 %v4339
  %4501 = vmatpush.bf16.msra.mxu0 %v4336
  %4502 = vmatpush.bf16.msra.mxu0 %v4333
  %4503 = vmatpush.bf16.msra.mxu0 %v4330
  %4504 = vmatpush.bf16.msra.mxu0 %v4327
  %4505 = vmatmul.bf16.gmra.mxu0 %v4064
  %v4506 = vpop.f32.mrf.mxu0
  %v4507 = vadd.f32 %v4458, %v4506
  %v4508 = vpop.f32.mrf.mxu0
  %v4509 = vadd.f32 %v4460, %v4508
  %4510 = vmatmul.bf16.gmra.mxu0 %v4067
  %v4511 = vpop.f32.mrf.mxu0
  %v4512 = vadd.f32 %v4463, %v4511
  %v4513 = vpop.f32.mrf.mxu0
  %v4514 = vadd.f32 %v4465, %v4513
  %4515 = vmatmul.bf16.gmra.mxu0 %v4070
  %v4516 = vpop.f32.mrf.mxu0
  %v4517 = vadd.f32 %v4468, %v4516
  %v4518 = vpop.f32.mrf.mxu0
  %v4519 = vadd.f32 %v4470, %v4518
  %4520 = vmatmul.bf16.gmra.mxu0 %v4073
  %v4521 = vpop.f32.mrf.mxu0
  %v4522 = vadd.f32 %v4473, %v4521
  %v4523 = vpop.f32.mrf.mxu0
  %v4524 = vadd.f32 %v4475, %v4523
  %4525 = vmatmul.bf16.gmra.mxu0 %v4076
  %v4526 = vpop.f32.mrf.mxu0
  %v4527 = vadd.f32 %v4478, %v4526
  %v4528 = vpop.f32.mrf.mxu0
  %v4529 = vadd.f32 %v4480, %v4528
  %4530 = vmatmul.bf16.gmra.mxu0 %v4079
  %v4531 = vpop.f32.mrf.mxu0
  %v4532 = vadd.f32 %v4483, %v4531
  %v4533 = vpop.f32.mrf.mxu0
  %v4534 = vadd.f32 %v4485, %v4533
  %4535 = vmatmul.bf16.gmra.mxu0 %v4082
  %v4536 = vpop.f32.mrf.mxu0
  %v4537 = vadd.f32 %v4488, %v4536
  %v4538 = vpop.f32.mrf.mxu0
  %v4539 = vadd.f32 %v4490, %v4538
  %4540 = vmatmul.bf16.gmra.mxu0 %v4085
  %v4541 = vpop.f32.mrf.mxu0
  %v4542 = vadd.f32 %v4493, %v4541
  %v4543 = vpop.f32.mrf.mxu0
  %v4544 = vadd.f32 %v4495, %v4543
  %4545 = vdwg.mxu0
  %4546 = vmatpush.bf16.msra.mxu0 0
  %4547 = vmatpush.bf16.msra.mxu0 0
  %4548 = vmatpush.bf16.msra.mxu0 0
  %4549 = vmatpush.bf16.msra.mxu0 0
  %4550 = vmatpush.bf16.msra.mxu0 %v4360
  %4551 = vmatpush.bf16.msra.mxu0 %v4357
  %4552 = vmatpush.bf16.msra.mxu0 %v4354
  %4553 = vmatpush.bf16.msra.mxu0 %v4351
  %4554 = vmatmul.bf16.gmra.mxu0 %v4425
  %v4555 = vpop.f32.mrf.mxu0
  %v4556 = vadd.f32 %v4507, %v4555
  %v4557 = vpop.f32.mrf.mxu0
  %v4558 = vadd.f32 %v4509, %v4557
  %4559 = vmatmul.bf16.gmra.mxu0 %v4428
  %v4560 = vpop.f32.mrf.mxu0
  %v4561 = vadd.f32 %v4512, %v4560
  %v4562 = vpop.f32.mrf.mxu0
  %v4563 = vadd.f32 %v4514, %v4562
  %4564 = vmatmul.bf16.gmra.mxu0 %v4431
  %v4565 = vpop.f32.mrf.mxu0
  %v4566 = vadd.f32 %v4517, %v4565
  %v4567 = vpop.f32.mrf.mxu0
  %v4568 = vadd.f32 %v4519, %v4567
  %4569 = vmatmul.bf16.gmra.mxu0 %v4434
  %v4570 = vpop.f32.mrf.mxu0
  %v4571 = vadd.f32 %v4522, %v4570
  %v4572 = vpop.f32.mrf.mxu0
  %v4573 = vadd.f32 %v4524, %v4572
  %4574 = vmatmul.bf16.gmra.mxu0 %v4437
  %v4575 = vpop.f32.mrf.mxu0
  %v4576 = vadd.f32 %v4527, %v4575
  %v4577 = vpop.f32.mrf.mxu0
  %v4578 = vadd.f32 %v4529, %v4577
  %4579 = vmatmul.bf16.gmra.mxu0 %v4440
  %v4580 = vpop.f32.mrf.mxu0
  %v4581 = vadd.f32 %v4532, %v4580
  %v4582 = vpop.f32.mrf.mxu0
  %v4583 = vadd.f32 %v4534, %v4582
  %4584 = vmatmul.bf16.gmra.mxu0 %v4443
  %v4585 = vpop.f32.mrf.mxu0
  %v4586 = vadd.f32 %v4537, %v4585
  %v4587 = vpop.f32.mrf.mxu0
  %v4588 = vadd.f32 %v4539, %v4587
  %4589 = vmatmul.bf16.gmra.mxu0 %v4446
  %v4590 = vpop.f32.mrf.mxu0
  %v4591 = vadd.f32 %v4542, %v4590
  %v4592 = vpop.f32.mrf.mxu0
  %v4593 = vadd.f32 %v4544, %v4592
  %4594 = vdwg.mxu0
  %4595 = vmatpush.bf16.msra.mxu0 %v4325
  %4596 = vmatpush.bf16.msra.mxu0 %v4322
  %4597 = vmatpush.bf16.msra.mxu0 %v4319
  %4598 = vmatpush.bf16.msra.mxu0 %v4316
  %4599 = vmatpush.bf16.msra.mxu0 %v4313
  %4600 = vmatpush.bf16.msra.mxu0 %v4310
  %4601 = vmatpush.bf16.msra.mxu0 %v4307
  %4602 = vmatpush.bf16.msra.mxu0 %v4304
  %4603 = vmatmul.bf16.gmra.mxu0 %v4063
  %v4604 = vpop.f32.mrf.mxu0
  %v4605 = vadd.f32 0.0, %v4604
  %v4606 = vpop.f32.mrf.mxu0
  %v4607 = vadd.f32 0.0, %v4606
  %4608 = vmatmul.bf16.gmra.mxu0 %v4066
  %v4609 = vpop.f32.mrf.mxu0
  %v4610 = vadd.f32 0.0, %v4609
  %v4611 = vpop.f32.mrf.mxu0
  %v4612 = vadd.f32 0.0, %v4611
  %4613 = vmatmul.bf16.gmra.mxu0 %v4069
  %v4614 = vpop.f32.mrf.mxu0
  %v4615 = vadd.f32 0.0, %v4614
  %v4616 = vpop.f32.mrf.mxu0
  %v4617 = vadd.f32 0.0, %v4616
  %4618 = vmatmul.bf16.gmra.mxu0 %v4072
  %v4619 = vpop.f32.mrf.mxu0
  %v4620 = vadd.f32 0.0, %v4619
  %v4621 = vpop.f32.mrf.mxu0
  %v4622 = vadd.f32 0.0, %v4621
  %4623 = vmatmul.bf16.gmra.mxu0 %v4075
  %v4624 = vpop.f32.mrf.mxu0
  %v4625 = vadd.f32 0.0, %v4624
  %v4626 = vpop.f32.mrf.mxu0
  %v4627 = vadd.f32 0.0, %v4626
  %4628 = vmatmul.bf16.gmra.mxu0 %v4078
  %v4629 = vpop.f32.mrf.mxu0
  %v4630 = vadd.f32 0.0, %v4629
  %v4631 = vpop.f32.mrf.mxu0
  %v4632 = vadd.f32 0.0, %v4631
  %4633 = vmatmul.bf16.gmra.mxu0 %v4081
  %v4634 = vpop.f32.mrf.mxu0
  %v4635 = vadd.f32 0.0, %v4634
  %v4636 = vpop.f32.mrf.mxu0
  %v4637 = vadd.f32 0.0, %v4636
  %4638 = vmatmul.bf16.gmra.mxu0 %v4084
  %v4639 = vpop.f32.mrf.mxu0
  %v4640 = vadd.f32 0.0, %v4639
  %v4641 = vpop.f32.mrf.mxu0
  %v4642 = vadd.f32 0.0, %v4641
  %4643 = vdwg.mxu0
  %4644 = vmatpush.bf16.msra.mxu0 %v4349
  %4645 = vmatpush.bf16.msra.mxu0 %v4346
  %4646 = vmatpush.bf16.msra.mxu0 %v4343
  %4647 = vmatpush.bf16.msra.mxu0 %v4340
  %4648 = vmatpush.bf16.msra.mxu0 %v4337
  %4649 = vmatpush.bf16.msra.mxu0 %v4334
  %4650 = vmatpush.bf16.msra.mxu0 %v4331
  %4651 = vmatpush.bf16.msra.mxu0 %v4328
  %4652 = vmatmul.bf16.gmra.mxu0 %v4064
  %v4653 = vpop.f32.mrf.mxu0
  %v4654 = vadd.f32 %v4605, %v4653
  %v4655 = vpop.f32.mrf.mxu0
  %v4656 = vadd.f32 %v4607, %v4655
  %4657 = vmatmul.bf16.gmra.mxu0 %v4067
  %v4658 = vpop.f32.mrf.mxu0
  %v4659 = vadd.f32 %v4610, %v4658
  %v4660 = vpop.f32.mrf.mxu0
  %v4661 = vadd.f32 %v4612, %v4660
  %4662 = vmatmul.bf16.gmra.mxu0 %v4070
  %v4663 = vpop.f32.mrf.mxu0
  %v4664 = vadd.f32 %v4615, %v4663
  %v4665 = vpop.f32.mrf.mxu0
  %v4666 = vadd.f32 %v4617, %v4665
  %4667 = vmatmul.bf16.gmra.mxu0 %v4073
  %v4668 = vpop.f32.mrf.mxu0
  %v4669 = vadd.f32 %v4620, %v4668
  %v4670 = vpop.f32.mrf.mxu0
  %v4671 = vadd.f32 %v4622, %v4670
  %4672 = vmatmul.bf16.gmra.mxu0 %v4076
  %v4673 = vpop.f32.mrf.mxu0
  %v4674 = vadd.f32 %v4625, %v4673
  %v4675 = vpop.f32.mrf.mxu0
  %v4676 = vadd.f32 %v4627, %v4675
  %4677 = vmatmul.bf16.gmra.mxu0 %v4079
  %v4678 = vpop.f32.mrf.mxu0
  %v4679 = vadd.f32 %v4630, %v4678
  %v4680 = vpop.f32.mrf.mxu0
  %v4681 = vadd.f32 %v4632, %v4680
  %4682 = vmatmul.bf16.gmra.mxu0 %v4082
  %v4683 = vpop.f32.mrf.mxu0
  %v4684 = vadd.f32 %v4635, %v4683
  %v4685 = vpop.f32.mrf.mxu0
  %v4686 = vadd.f32 %v4637, %v4685
  %4687 = vmatmul.bf16.gmra.mxu0 %v4085
  %v4688 = vpop.f32.mrf.mxu0
  %v4689 = vadd.f32 %v4640, %v4688
  %v4690 = vpop.f32.mrf.mxu0
  %v4691 = vadd.f32 %v4642, %v4690
  %4692 = vdwg.mxu0
  %4693 = vmatpush.bf16.msra.mxu0 0
  %4694 = vmatpush.bf16.msra.mxu0 0
  %4695 = vmatpush.bf16.msra.mxu0 0
  %4696 = vmatpush.bf16.msra.mxu0 0
  %4697 = vmatpush.bf16.msra.mxu0 %v4361
  %4698 = vmatpush.bf16.msra.mxu0 %v4358
  %4699 = vmatpush.bf16.msra.mxu0 %v4355
  %4700 = vmatpush.bf16.msra.mxu0 %v4352
  %4701 = vmatmul.bf16.gmra.mxu0 %v4425
  %v4702 = vpop.f32.mrf.mxu0
  %v4703 = vadd.f32 %v4654, %v4702
  %v4704 = vpop.f32.mrf.mxu0
  %v4705 = vadd.f32 %v4656, %v4704
  %4706 = vmatmul.bf16.gmra.mxu0 %v4428
  %v4707 = vpop.f32.mrf.mxu0
  %v4708 = vadd.f32 %v4659, %v4707
  %v4709 = vpop.f32.mrf.mxu0
  %v4710 = vadd.f32 %v4661, %v4709
  %4711 = vmatmul.bf16.gmra.mxu0 %v4431
  %v4712 = vpop.f32.mrf.mxu0
  %v4713 = vadd.f32 %v4664, %v4712
  %v4714 = vpop.f32.mrf.mxu0
  %v4715 = vadd.f32 %v4666, %v4714
  %4716 = vmatmul.bf16.gmra.mxu0 %v4434
  %v4717 = vpop.f32.mrf.mxu0
  %v4718 = vadd.f32 %v4669, %v4717
  %v4719 = vpop.f32.mrf.mxu0
  %v4720 = vadd.f32 %v4671, %v4719
  %4721 = vmatmul.bf16.gmra.mxu0 %v4437
  %v4722 = vpop.f32.mrf.mxu0
  %v4723 = vadd.f32 %v4674, %v4722
  %v4724 = vpop.f32.mrf.mxu0
  %v4725 = vadd.f32 %v4676, %v4724
  %4726 = vmatmul.bf16.gmra.mxu0 %v4440
  %v4727 = vpop.f32.mrf.mxu0
  %v4728 = vadd.f32 %v4679, %v4727
  %v4729 = vpop.f32.mrf.mxu0
  %v4730 = vadd.f32 %v4681, %v4729
  %4731 = vmatmul.bf16.gmra.mxu0 %v4443
  %v4732 = vpop.f32.mrf.mxu0
  %v4733 = vadd.f32 %v4684, %v4732
  %v4734 = vpop.f32.mrf.mxu0
  %v4735 = vadd.f32 %v4686, %v4734
  %4736 = vmatmul.bf16.gmra.mxu0 %v4446
  %v4737 = vpop.f32.mrf.mxu0
  %v4738 = vadd.f32 %v4689, %v4737
  %v4739 = vpop.f32.mrf.mxu0
  %v4740 = vadd.f32 %v4691, %v4739
  %4741 = vdwg.mxu0
  %4742 = vmatpush.bf16.msra.mxu0 %v4326
  %4743 = vmatpush.bf16.msra.mxu0 %v4323
  %4744 = vmatpush.bf16.msra.mxu0 %v4320
  %4745 = vmatpush.bf16.msra.mxu0 %v4317
  %4746 = vmatpush.bf16.msra.mxu0 %v4314
  %4747 = vmatpush.bf16.msra.mxu0 %v4311
  %4748 = vmatpush.bf16.msra.mxu0 %v4308
  %4749 = vmatpush.bf16.msra.mxu0 %v4305
  %4750 = vmatmul.bf16.gmra.mxu0 %v4063
  %v4751 = vpop.f32.mrf.mxu0
  %v4752 = vadd.f32 0.0, %v4751
  %v4753 = vpop.f32.mrf.mxu0
  %v4754 = vadd.f32 0.0, %v4753
  %4755 = vmatmul.bf16.gmra.mxu0 %v4066
  %v4756 = vpop.f32.mrf.mxu0
  %v4757 = vadd.f32 0.0, %v4756
  %v4758 = vpop.f32.mrf.mxu0
  %v4759 = vadd.f32 0.0, %v4758
  %4760 = vmatmul.bf16.gmra.mxu0 %v4069
  %v4761 = vpop.f32.mrf.mxu0
  %v4762 = vadd.f32 0.0, %v4761
  %v4763 = vpop.f32.mrf.mxu0
  %v4764 = vadd.f32 0.0, %v4763
  %4765 = vmatmul.bf16.gmra.mxu0 %v4072
  %v4766 = vpop.f32.mrf.mxu0
  %v4767 = vadd.f32 0.0, %v4766
  %v4768 = vpop.f32.mrf.mxu0
  %v4769 = vadd.f32 0.0, %v4768
  %4770 = vmatmul.bf16.gmra.mxu0 %v4075
  %v4771 = vpop.f32.mrf.mxu0
  %v4772 = vadd.f32 0.0, %v4771
  %v4773 = vpop.f32.mrf.mxu0
  %v4774 = vadd.f32 0.0, %v4773
  %4775 = vmatmul.bf16.gmra.mxu0 %v4078
  %v4776 = vpop.f32.mrf.mxu0
  %v4777 = vadd.f32 0.0, %v4776
  %v4778 = vpop.f32.mrf.mxu0
  %v4779 = vadd.f32 0.0, %v4778
  %4780 = vmatmul.bf16.gmra.mxu0 %v4081
  %v4781 = vpop.f32.mrf.mxu0
  %v4782 = vadd.f32 0.0, %v4781
  %v4783 = vpop.f32.mrf.mxu0
  %v4784 = vadd.f32 0.0, %v4783
  %4785 = vmatmul.bf16.gmra.mxu0 %v4084
  %v4786 = vpop.f32.mrf.mxu0
  %v4787 = vadd.f32 0.0, %v4786
  %v4788 = vpop.f32.mrf.mxu0
  %v4789 = vadd.f32 0.0, %v4788
  %4790 = vdwg.mxu0
  %4791 = vmatpush.bf16.msra.mxu0 %v4350
  %4792 = vmatpush.bf16.msra.mxu0 %v4347
  %4793 = vmatpush.bf16.msra.mxu0 %v4344
  %4794 = vmatpush.bf16.msra.mxu0 %v4341
  %4795 = vmatpush.bf16.msra.mxu0 %v4338
  %4796 = vmatpush.bf16.msra.mxu0 %v4335
  %4797 = vmatpush.bf16.msra.mxu0 %v4332
  %4798 = vmatpush.bf16.msra.mxu0 %v4329
  %4799 = vmatmul.bf16.gmra.mxu0 %v4064
  %v4800 = vpop.f32.mrf.mxu0
  %v4801 = vadd.f32 %v4752, %v4800
  %v4802 = vpop.f32.mrf.mxu0
  %v4803 = vadd.f32 %v4754, %v4802
  %4804 = vmatmul.bf16.gmra.mxu0 %v4067
  %v4805 = vpop.f32.mrf.mxu0
  %v4806 = vadd.f32 %v4757, %v4805
  %v4807 = vpop.f32.mrf.mxu0
  %v4808 = vadd.f32 %v4759, %v4807
  %4809 = vmatmul.bf16.gmra.mxu0 %v4070
  %v4810 = vpop.f32.mrf.mxu0
  %v4811 = vadd.f32 %v4762, %v4810
  %v4812 = vpop.f32.mrf.mxu0
  %v4813 = vadd.f32 %v4764, %v4812
  %4814 = vmatmul.bf16.gmra.mxu0 %v4073
  %v4815 = vpop.f32.mrf.mxu0
  %v4816 = vadd.f32 %v4767, %v4815
  %v4817 = vpop.f32.mrf.mxu0
  %v4818 = vadd.f32 %v4769, %v4817
  %4819 = vmatmul.bf16.gmra.mxu0 %v4076
  %v4820 = vpop.f32.mrf.mxu0
  %v4821 = vadd.f32 %v4772, %v4820
  %v4822 = vpop.f32.mrf.mxu0
  %v4823 = vadd.f32 %v4774, %v4822
  %4824 = vmatmul.bf16.gmra.mxu0 %v4079
  %v4825 = vpop.f32.mrf.mxu0
  %v4826 = vadd.f32 %v4777, %v4825
  %v4827 = vpop.f32.mrf.mxu0
  %v4828 = vadd.f32 %v4779, %v4827
  %4829 = vmatmul.bf16.gmra.mxu0 %v4082
  %v4830 = vpop.f32.mrf.mxu0
  %v4831 = vadd.f32 %v4782, %v4830
  %v4832 = vpop.f32.mrf.mxu0
  %v4833 = vadd.f32 %v4784, %v4832
  %4834 = vmatmul.bf16.gmra.mxu0 %v4085
  %v4835 = vpop.f32.mrf.mxu0
  %v4836 = vadd.f32 %v4787, %v4835
  %v4837 = vpop.f32.mrf.mxu0
  %v4838 = vadd.f32 %v4789, %v4837
  %4839 = vdwg.mxu0
  %4840 = vmatpush.bf16.msra.mxu0 0
  %4841 = vmatpush.bf16.msra.mxu0 0
  %4842 = vmatpush.bf16.msra.mxu0 0
  %4843 = vmatpush.bf16.msra.mxu0 0
  %4844 = vmatpush.bf16.msra.mxu0 %v4362
  %4845 = vmatpush.bf16.msra.mxu0 %v4359
  %4846 = vmatpush.bf16.msra.mxu0 %v4356
  %4847 = vmatpush.bf16.msra.mxu0 %v4353
  %4848 = vmatmul.bf16.gmra.mxu0 %v4425
  %v4849 = vpop.f32.mrf.mxu0
  %v4850 = vadd.f32 %v4801, %v4849
  %v4851 = vpop.f32.mrf.mxu0
  %v4852 = vadd.f32 %v4803, %v4851
  %4853 = vmatmul.bf16.gmra.mxu0 %v4428
  %v4854 = vpop.f32.mrf.mxu0
  %v4855 = vadd.f32 %v4806, %v4854
  %v4856 = vpop.f32.mrf.mxu0
  %v4857 = vadd.f32 %v4808, %v4856
  %4858 = vmatmul.bf16.gmra.mxu0 %v4431
  %v4859 = vpop.f32.mrf.mxu0
  %v4860 = vadd.f32 %v4811, %v4859
  %v4861 = vpop.f32.mrf.mxu0
  %v4862 = vadd.f32 %v4813, %v4861
  %4863 = vmatmul.bf16.gmra.mxu0 %v4434
  %v4864 = vpop.f32.mrf.mxu0
  %v4865 = vadd.f32 %v4816, %v4864
  %v4866 = vpop.f32.mrf.mxu0
  %v4867 = vadd.f32 %v4818, %v4866
  %4868 = vmatmul.bf16.gmra.mxu0 %v4437
  %v4869 = vpop.f32.mrf.mxu0
  %v4870 = vadd.f32 %v4821, %v4869
  %v4871 = vpop.f32.mrf.mxu0
  %v4872 = vadd.f32 %v4823, %v4871
  %4873 = vmatmul.bf16.gmra.mxu0 %v4440
  %v4874 = vpop.f32.mrf.mxu0
  %v4875 = vadd.f32 %v4826, %v4874
  %v4876 = vpop.f32.mrf.mxu0
  %v4877 = vadd.f32 %v4828, %v4876
  %4878 = vmatmul.bf16.gmra.mxu0 %v4443
  %v4879 = vpop.f32.mrf.mxu0
  %v4880 = vadd.f32 %v4831, %v4879
  %v4881 = vpop.f32.mrf.mxu0
  %v4882 = vadd.f32 %v4833, %v4881
  %4883 = vmatmul.bf16.gmra.mxu0 %v4446
  %v4884 = vpop.f32.mrf.mxu0
  %v4885 = vadd.f32 %v4836, %v4884
  %v4886 = vpop.f32.mrf.mxu0
  %v4887 = vadd.f32 %v4838, %v4886
  %4888 = vdwg.mxu0
  %v4893 = vunpack.c.l.b16 %v3786
  %v4894 = vunpack.c.h.b16 %v3786
  %v4895 = vunpack.c.l.b16 %v3787
  %v4896 = vunpack.c.l.b16 %v3788
  %v4897 = vunpack.c.h.b16 %v3788
  %v4898 = vunpack.c.l.b16 %v3789
  %v4899 = vpack.c.b16 %v4896, %v4893
  %v4900 = vpack.c.b16 %v4897, %v4894
  %v4901 = vpack.c.b16 %v4898, %v4895
  %v4984 = vunpack.c.l.b16 %v3822
  %v4985 = vunpack.c.h.b16 %v3822
  %v4986 = vunpack.c.l.b16 %v3823
  %v4987 = vunpack.c.l.b16 %v3824
  %v4988 = vunpack.c.h.b16 %v3824
  %v4989 = vunpack.c.l.b16 %v3825
  %v4990 = vunpack.c.l.b16 %v3826
  %v4991 = vunpack.c.h.b16 %v3826
  %v4992 = vunpack.c.l.b16 %v3827
  %v4993 = vunpack.c.l.b16 %v3828
  %v4994 = vunpack.c.h.b16 %v3828
  %v4995 = vunpack.c.l.b16 %v3829
  %v4996 = vunpack.c.l.b16 %v3830
  %v4997 = vunpack.c.h.b16 %v3830
  %v4998 = vunpack.c.l.b16 %v3831
  %v4999 = vunpack.c.l.b16 %v3832
  %v5000 = vunpack.c.h.b16 %v3832
  %v5001 = vunpack.c.l.b16 %v3833
  %v5002 = vunpack.c.l.b16 %v3834
  %v5003 = vunpack.c.h.b16 %v3834
  %v5004 = vunpack.c.l.b16 %v3835
  %v5005 = vunpack.c.l.b16 %v3836
  %v5006 = vunpack.c.h.b16 %v3836
  %v5007 = vunpack.c.l.b16 %v3837
  %v5008 = vunpack.c.l.b16 %v3838
  %v5009 = vunpack.c.h.b16 %v3838
  %v5010 = vunpack.c.l.b16 %v3839
  %v5011 = vunpack.c.l.b16 %v3840
  %v5012 = vunpack.c.h.b16 %v3840
  %v5013 = vunpack.c.l.b16 %v3841
  %v5014 = vunpack.c.l.b16 %v3842
  %v5015 = vunpack.c.h.b16 %v3842
  %v5016 = vunpack.c.l.b16 %v3843
  %v5017 = vunpack.c.l.b16 %v3844
  %v5018 = vunpack.c.h.b16 %v3844
  %v5019 = vunpack.c.l.b16 %v3845
  %v5020 = vunpack.c.l.b16 %v3846
  %v5021 = vunpack.c.h.b16 %v3846
  %v5022 = vunpack.c.l.b16 %v3847
  %v5023 = vunpack.c.l.b16 %v3848
  %v5024 = vunpack.c.h.b16 %v3848
  %v5025 = vunpack.c.l.b16 %v3849
  %v5026 = vunpack.c.l.b16 %v3850
  %v5027 = vunpack.c.h.b16 %v3850
  %v5028 = vunpack.c.l.b16 %v3851
  %v5029 = vunpack.c.l.b16 %v3852
  %v5030 = vunpack.c.h.b16 %v3852
  %v5031 = vunpack.c.l.b16 %v3853
  %v5032 = vunpack.c.l.b16 %v3854
  %v5033 = vunpack.c.h.b16 %v3854
  %v5034 = vunpack.c.l.b16 %v3855
  %v5035 = vunpack.c.l.b16 %v3856
  %v5036 = vunpack.c.h.b16 %v3856
  %v5037 = vunpack.c.l.b16 %v3857
  %v5038 = vunpack.c.l.b16 %v3858
  %v5039 = vunpack.c.h.b16 %v3858
  %v5040 = vunpack.c.l.b16 %v3859
  %v5041 = vunpack.c.l.b16 %v3860
  %v5042 = vunpack.c.h.b16 %v3860
  %v5043 = vunpack.c.l.b16 %v3861
  %v5044 = vunpack.c.l.b16 %v3862
  %v5045 = vunpack.c.h.b16 %v3862
  %v5046 = vunpack.c.l.b16 %v3863
  %v5047 = vunpack.c.l.b16 %v3864
  %v5048 = vunpack.c.h.b16 %v3864
  %v5049 = vunpack.c.l.b16 %v3865
  %v5050 = vunpack.c.l.b16 %v3866
  %v5051 = vunpack.c.h.b16 %v3866
  %v5052 = vunpack.c.l.b16 %v3867
  %v5053 = vunpack.c.l.b16 %v3868
  %v5054 = vunpack.c.h.b16 %v3868
  %v5055 = vunpack.c.l.b16 %v3869
  %v5056 = vunpack.c.l.b16 %v3870
  %v5057 = vunpack.c.h.b16 %v3870
  %v5058 = vunpack.c.l.b16 %v3871
  %v5059 = vunpack.c.l.b16 %v3872
  %v5060 = vunpack.c.h.b16 %v3872
  %v5061 = vunpack.c.l.b16 %v3873
  %v5062 = vunpack.c.l.b16 %v3874
  %v5063 = vunpack.c.h.b16 %v3874
  %v5064 = vunpack.c.l.b16 %v3875
  %v5065 = vunpack.c.l.b16 %v3876
  %v5066 = vunpack.c.h.b16 %v3876
  %v5067 = vunpack.c.l.b16 %v3877
  %v5068 = vunpack.c.l.b16 %v3878
  %v5069 = vunpack.c.h.b16 %v3878
  %v5070 = vunpack.c.l.b16 %v3879
  %v5071 = vunpack.c.l.b16 %v3880
  %v5072 = vunpack.c.h.b16 %v3880
  %v5073 = vunpack.c.l.b16 %v3881
  %v5074 = vunpack.c.l.b16 %v3882
  %v5075 = vunpack.c.h.b16 %v3882
  %v5076 = vunpack.c.l.b16 %v3883
  %v5077 = vunpack.c.l.b16 %v3884
  %v5078 = vunpack.c.h.b16 %v3884
  %v5079 = vunpack.c.l.b16 %v3885
  %v5080 = vunpack.c.l.b16 %v3886
  %v5081 = vunpack.c.h.b16 %v3886
  %v5082 = vunpack.c.l.b16 %v3887
  %v5083 = vunpack.c.l.b16 %v3888
  %v5084 = vunpack.c.h.b16 %v3888
  %v5085 = vunpack.c.l.b16 %v3889
  %v5086 = vunpack.c.l.b16 %v3890
  %v5087 = vunpack.c.h.b16 %v3890
  %v5088 = vunpack.c.l.b16 %v3891
  %v5089 = vunpack.c.l.b16 %v3892
  %v5090 = vunpack.c.h.b16 %v3892
  %v5091 = vunpack.c.l.b16 %v3893
  %v5092 = vunpack.c.l.b16 %v3894
  %v5093 = vunpack.c.h.b16 %v3894
  %v5094 = vunpack.c.l.b16 %v3895
  %v5095 = vunpack.c.l.b16 %v3896
  %v5096 = vunpack.c.h.b16 %v3896
  %v5097 = vunpack.c.l.b16 %v3897
  %v5098 = vunpack.c.l.b16 %v3898
  %v5099 = vunpack.c.h.b16 %v3898
  %v5100 = vunpack.c.l.b16 %v3899
  %v5101 = vunpack.c.l.b16 %v3900
  %v5102 = vunpack.c.h.b16 %v3900
  %v5103 = vunpack.c.l.b16 %v3901
  %v5104 = vpack.c.b16 %v4987, %v4984
  %v5105 = vpack.c.b16 %v4988, %v4985
  %v5106 = vpack.c.b16 %v4989, %v4986
  %v5107 = vpack.c.b16 %v4993, %v4990
  %v5108 = vpack.c.b16 %v4994, %v4991
  %v5109 = vpack.c.b16 %v4995, %v4992
  %v5110 = vpack.c.b16 %v4999, %v4996
  %v5111 = vpack.c.b16 %v5000, %v4997
  %v5112 = vpack.c.b16 %v5001, %v4998
  %v5113 = vpack.c.b16 %v5005, %v5002
  %v5114 = vpack.c.b16 %v5006, %v5003
  %v5115 = vpack.c.b16 %v5007, %v5004
  %v5116 = vpack.c.b16 %v5011, %v5008
  %v5117 = vpack.c.b16 %v5012, %v5009
  %v5118 = vpack.c.b16 %v5013, %v5010
  %v5119 = vpack.c.b16 %v5017, %v5014
  %v5120 = vpack.c.b16 %v5018, %v5015
  %v5121 = vpack.c.b16 %v5019, %v5016
  %v5122 = vpack.c.b16 %v5023, %v5020
  %v5123 = vpack.c.b16 %v5024, %v5021
  %v5124 = vpack.c.b16 %v5025, %v5022
  %v5125 = vpack.c.b16 %v5029, %v5026
  %v5126 = vpack.c.b16 %v5030, %v5027
  %v5127 = vpack.c.b16 %v5031, %v5028
  %v5128 = vpack.c.b16 %v5035, %v5032
  %v5129 = vpack.c.b16 %v5036, %v5033
  %v5130 = vpack.c.b16 %v5037, %v5034
  %v5131 = vpack.c.b16 %v5041, %v5038
  %v5132 = vpack.c.b16 %v5042, %v5039
  %v5133 = vpack.c.b16 %v5043, %v5040
  %v5134 = vpack.c.b16 %v5047, %v5044
  %v5135 = vpack.c.b16 %v5048, %v5045
  %v5136 = vpack.c.b16 %v5049, %v5046
  %v5137 = vpack.c.b16 %v5053, %v5050
  %v5138 = vpack.c.b16 %v5054, %v5051
  %v5139 = vpack.c.b16 %v5055, %v5052
  %v5140 = vpack.c.b16 %v5059, %v5056
  %v5141 = vpack.c.b16 %v5060, %v5057
  %v5142 = vpack.c.b16 %v5061, %v5058
  %v5143 = vpack.c.b16 %v5065, %v5062
  %v5144 = vpack.c.b16 %v5066, %v5063
  %v5145 = vpack.c.b16 %v5067, %v5064
  %v5146 = vpack.c.b16 %v5071, %v5068
  %v5147 = vpack.c.b16 %v5072, %v5069
  %v5148 = vpack.c.b16 %v5073, %v5070
  %v5149 = vpack.c.b16 %v5077, %v5074
  %v5150 = vpack.c.b16 %v5078, %v5075
  %v5151 = vpack.c.b16 %v5079, %v5076
  %v5152 = vpack.c.b16 %v5083, %v5080
  %v5153 = vpack.c.b16 %v5084, %v5081
  %v5154 = vpack.c.b16 %v5085, %v5082
  %v5155 = vpack.c.b16 %v5089, %v5086
  %v5156 = vpack.c.b16 %v5090, %v5087
  %v5157 = vpack.c.b16 %v5091, %v5088
  %v5158 = vpack.c.b16 %v5095, %v5092
  %v5159 = vpack.c.b16 %v5096, %v5093
  %v5160 = vpack.c.b16 %v5097, %v5094
  %v5161 = vpack.c.b16 %v5101, %v5098
  %v5162 = vpack.c.b16 %v5102, %v5099
  %v5163 = vpack.c.b16 %v5103, %v5100
  %v5225 = vsel %vm4423, %v4901, 0
  %5227 = vmatpush.bf16.msra.mxu0 %v5125
  %5228 = vmatpush.bf16.msra.mxu0 %v5122
  %5229 = vmatpush.bf16.msra.mxu0 %v5119
  %5230 = vmatpush.bf16.msra.mxu0 %v5116
  %5231 = vmatpush.bf16.msra.mxu0 %v5113
  %5232 = vmatpush.bf16.msra.mxu0 %v5110
  %5233 = vmatpush.bf16.msra.mxu0 %v5107
  %5234 = vmatpush.bf16.msra.mxu0 %v5104
  %5235 = vmatmul.bf16.gmra.mxu0 %v4899
  %v5236 = vpop.f32.mrf.mxu0
  %v5237 = vadd.f32 %v4556, %v5236
  %v5238 = vpop.f32.mrf.mxu0
  %v5239 = vadd.f32 %v4558, %v5238
  %5240 = vmatmul.bf16.gmra.mxu0 %v4063
  %v5241 = vpop.f32.mrf.mxu0
  %v5242 = vadd.f32 %v4561, %v5241
  %v5243 = vpop.f32.mrf.mxu0
  %v5244 = vadd.f32 %v4563, %v5243
  %5245 = vmatmul.bf16.gmra.mxu0 %v4066
  %v5246 = vpop.f32.mrf.mxu0
  %v5247 = vadd.f32 %v4566, %v5246
  %v5248 = vpop.f32.mrf.mxu0
  %v5249 = vadd.f32 %v4568, %v5248
  %5250 = vmatmul.bf16.gmra.mxu0 %v4069
  %v5251 = vpop.f32.mrf.mxu0
  %v5252 = vadd.f32 %v4571, %v5251
  %v5253 = vpop.f32.mrf.mxu0
  %v5254 = vadd.f32 %v4573, %v5253
  %5255 = vmatmul.bf16.gmra.mxu0 %v4072
  %v5256 = vpop.f32.mrf.mxu0
  %v5257 = vadd.f32 %v4576, %v5256
  %v5258 = vpop.f32.mrf.mxu0
  %v5259 = vadd.f32 %v4578, %v5258
  %5260 = vmatmul.bf16.gmra.mxu0 %v4075
  %v5261 = vpop.f32.mrf.mxu0
  %v5262 = vadd.f32 %v4581, %v5261
  %v5263 = vpop.f32.mrf.mxu0
  %v5264 = vadd.f32 %v4583, %v5263
  %5265 = vmatmul.bf16.gmra.mxu0 %v4078
  %v5266 = vpop.f32.mrf.mxu0
  %v5267 = vadd.f32 %v4586, %v5266
  %v5268 = vpop.f32.mrf.mxu0
  %v5269 = vadd.f32 %v4588, %v5268
  %5270 = vmatmul.bf16.gmra.mxu0 %v4081
  %v5271 = vpop.f32.mrf.mxu0
  %v5272 = vadd.f32 %v4591, %v5271
  %v5273 = vpop.f32.mrf.mxu0
  %v5274 = vadd.f32 %v4593, %v5273
  %5275 = vdwg.mxu0
  %5276 = vmatpush.bf16.msra.mxu0 %v5149
  %5277 = vmatpush.bf16.msra.mxu0 %v5146
  %5278 = vmatpush.bf16.msra.mxu0 %v5143
  %5279 = vmatpush.bf16.msra.mxu0 %v5140
  %5280 = vmatpush.bf16.msra.mxu0 %v5137
  %5281 = vmatpush.bf16.msra.mxu0 %v5134
  %5282 = vmatpush.bf16.msra.mxu0 %v5131
  %5283 = vmatpush.bf16.msra.mxu0 %v5128
  %5284 = vmatmul.bf16.gmra.mxu0 %v4900
  %v5285 = vpop.f32.mrf.mxu0
  %v5286 = vadd.f32 %v5237, %v5285
  %v5287 = vpop.f32.mrf.mxu0
  %v5288 = vadd.f32 %v5239, %v5287
  %5289 = vmatmul.bf16.gmra.mxu0 %v4064
  %v5290 = vpop.f32.mrf.mxu0
  %v5291 = vadd.f32 %v5242, %v5290
  %v5292 = vpop.f32.mrf.mxu0
  %v5293 = vadd.f32 %v5244, %v5292
  %5294 = vmatmul.bf16.gmra.mxu0 %v4067
  %v5295 = vpop.f32.mrf.mxu0
  %v5296 = vadd.f32 %v5247, %v5295
  %v5297 = vpop.f32.mrf.mxu0
  %v5298 = vadd.f32 %v5249, %v5297
  %5299 = vmatmul.bf16.gmra.mxu0 %v4070
  %v5300 = vpop.f32.mrf.mxu0
  %v5301 = vadd.f32 %v5252, %v5300
  %v5302 = vpop.f32.mrf.mxu0
  %v5303 = vadd.f32 %v5254, %v5302
  %5304 = vmatmul.bf16.gmra.mxu0 %v4073
  %v5305 = vpop.f32.mrf.mxu0
  %v5306 = vadd.f32 %v5257, %v5305
  %v5307 = vpop.f32.mrf.mxu0
  %v5308 = vadd.f32 %v5259, %v5307
  %5309 = vmatmul.bf16.gmra.mxu0 %v4076
  %v5310 = vpop.f32.mrf.mxu0
  %v5311 = vadd.f32 %v5262, %v5310
  %v5312 = vpop.f32.mrf.mxu0
  %v5313 = vadd.f32 %v5264, %v5312
  %5314 = vmatmul.bf16.gmra.mxu0 %v4079
  %v5315 = vpop.f32.mrf.mxu0
  %v5316 = vadd.f32 %v5267, %v5315
  %v5317 = vpop.f32.mrf.mxu0
  %v5318 = vadd.f32 %v5269, %v5317
  %5319 = vmatmul.bf16.gmra.mxu0 %v4082
  %v5320 = vpop.f32.mrf.mxu0
  %v5321 = vadd.f32 %v5272, %v5320
  %v5322 = vpop.f32.mrf.mxu0
  %v5323 = vadd.f32 %v5274, %v5322
  %5324 = vdwg.mxu0
  %5325 = vmatpush.bf16.msra.mxu0 0
  %5326 = vmatpush.bf16.msra.mxu0 0
  %5327 = vmatpush.bf16.msra.mxu0 0
  %5328 = vmatpush.bf16.msra.mxu0 0
  %5329 = vmatpush.bf16.msra.mxu0 %v5161
  %5330 = vmatpush.bf16.msra.mxu0 %v5158
  %5331 = vmatpush.bf16.msra.mxu0 %v5155
  %5332 = vmatpush.bf16.msra.mxu0 %v5152
  %5333 = vmatmul.bf16.gmra.mxu0 %v5225
  %v5334 = vpop.f32.mrf.mxu0
  %v5335 = vadd.f32 %v5286, %v5334
  %v5336 = vpop.f32.mrf.mxu0
  %v5337 = vadd.f32 %v5288, %v5336
  %5338 = vmatmul.bf16.gmra.mxu0 %v4425
  %v5339 = vpop.f32.mrf.mxu0
  %v5340 = vadd.f32 %v5291, %v5339
  %v5341 = vpop.f32.mrf.mxu0
  %v5342 = vadd.f32 %v5293, %v5341
  %5343 = vmatmul.bf16.gmra.mxu0 %v4428
  %v5344 = vpop.f32.mrf.mxu0
  %v5345 = vadd.f32 %v5296, %v5344
  %v5346 = vpop.f32.mrf.mxu0
  %v5347 = vadd.f32 %v5298, %v5346
  %5348 = vmatmul.bf16.gmra.mxu0 %v4431
  %v5349 = vpop.f32.mrf.mxu0
  %v5350 = vadd.f32 %v5301, %v5349
  %v5351 = vpop.f32.mrf.mxu0
  %v5352 = vadd.f32 %v5303, %v5351
  %5353 = vmatmul.bf16.gmra.mxu0 %v4434
  %v5354 = vpop.f32.mrf.mxu0
  %v5355 = vadd.f32 %v5306, %v5354
  %v5356 = vpop.f32.mrf.mxu0
  %v5357 = vadd.f32 %v5308, %v5356
  %5358 = vmatmul.bf16.gmra.mxu0 %v4437
  %v5359 = vpop.f32.mrf.mxu0
  %v5360 = vadd.f32 %v5311, %v5359
  %v5361 = vpop.f32.mrf.mxu0
  %v5362 = vadd.f32 %v5313, %v5361
  %5363 = vmatmul.bf16.gmra.mxu0 %v4440
  %v5364 = vpop.f32.mrf.mxu0
  %v5365 = vadd.f32 %v5316, %v5364
  %v5366 = vpop.f32.mrf.mxu0
  %v5367 = vadd.f32 %v5318, %v5366
  %5368 = vmatmul.bf16.gmra.mxu0 %v4443
  %v5369 = vpop.f32.mrf.mxu0
  %v5370 = vadd.f32 %v5321, %v5369
  %v5371 = vpop.f32.mrf.mxu0
  %v5372 = vadd.f32 %v5323, %v5371
  %5373 = vdwg.mxu0
  %5374 = vmatpush.bf16.msra.mxu0 %v5126
  %5375 = vmatpush.bf16.msra.mxu0 %v5123
  %5376 = vmatpush.bf16.msra.mxu0 %v5120
  %5377 = vmatpush.bf16.msra.mxu0 %v5117
  %5378 = vmatpush.bf16.msra.mxu0 %v5114
  %5379 = vmatpush.bf16.msra.mxu0 %v5111
  %5380 = vmatpush.bf16.msra.mxu0 %v5108
  %5381 = vmatpush.bf16.msra.mxu0 %v5105
  %5382 = vmatmul.bf16.gmra.mxu0 %v4899
  %v5383 = vpop.f32.mrf.mxu0
  %v5384 = vadd.f32 %v4703, %v5383
  %v5385 = vpop.f32.mrf.mxu0
  %v5386 = vadd.f32 %v4705, %v5385
  %5387 = vmatmul.bf16.gmra.mxu0 %v4063
  %v5388 = vpop.f32.mrf.mxu0
  %v5389 = vadd.f32 %v4708, %v5388
  %v5390 = vpop.f32.mrf.mxu0
  %v5391 = vadd.f32 %v4710, %v5390
  %5392 = vmatmul.bf16.gmra.mxu0 %v4066
  %v5393 = vpop.f32.mrf.mxu0
  %v5394 = vadd.f32 %v4713, %v5393
  %v5395 = vpop.f32.mrf.mxu0
  %v5396 = vadd.f32 %v4715, %v5395
  %5397 = vmatmul.bf16.gmra.mxu0 %v4069
  %v5398 = vpop.f32.mrf.mxu0
  %v5399 = vadd.f32 %v4718, %v5398
  %v5400 = vpop.f32.mrf.mxu0
  %v5401 = vadd.f32 %v4720, %v5400
  %5402 = vmatmul.bf16.gmra.mxu0 %v4072
  %v5403 = vpop.f32.mrf.mxu0
  %v5404 = vadd.f32 %v4723, %v5403
  %v5405 = vpop.f32.mrf.mxu0
  %v5406 = vadd.f32 %v4725, %v5405
  %5407 = vmatmul.bf16.gmra.mxu0 %v4075
  %v5408 = vpop.f32.mrf.mxu0
  %v5409 = vadd.f32 %v4728, %v5408
  %v5410 = vpop.f32.mrf.mxu0
  %v5411 = vadd.f32 %v4730, %v5410
  %5412 = vmatmul.bf16.gmra.mxu0 %v4078
  %v5413 = vpop.f32.mrf.mxu0
  %v5414 = vadd.f32 %v4733, %v5413
  %v5415 = vpop.f32.mrf.mxu0
  %v5416 = vadd.f32 %v4735, %v5415
  %5417 = vmatmul.bf16.gmra.mxu0 %v4081
  %v5418 = vpop.f32.mrf.mxu0
  %v5419 = vadd.f32 %v4738, %v5418
  %v5420 = vpop.f32.mrf.mxu0
  %v5421 = vadd.f32 %v4740, %v5420
  %5422 = vdwg.mxu0
  %5423 = vmatpush.bf16.msra.mxu0 %v5150
  %5424 = vmatpush.bf16.msra.mxu0 %v5147
  %5425 = vmatpush.bf16.msra.mxu0 %v5144
  %5426 = vmatpush.bf16.msra.mxu0 %v5141
  %5427 = vmatpush.bf16.msra.mxu0 %v5138
  %5428 = vmatpush.bf16.msra.mxu0 %v5135
  %5429 = vmatpush.bf16.msra.mxu0 %v5132
  %5430 = vmatpush.bf16.msra.mxu0 %v5129
  %5431 = vmatmul.bf16.gmra.mxu0 %v4900
  %v5432 = vpop.f32.mrf.mxu0
  %v5433 = vadd.f32 %v5384, %v5432
  %v5434 = vpop.f32.mrf.mxu0
  %v5435 = vadd.f32 %v5386, %v5434
  %5436 = vmatmul.bf16.gmra.mxu0 %v4064
  %v5437 = vpop.f32.mrf.mxu0
  %v5438 = vadd.f32 %v5389, %v5437
  %v5439 = vpop.f32.mrf.mxu0
  %v5440 = vadd.f32 %v5391, %v5439
  %5441 = vmatmul.bf16.gmra.mxu0 %v4067
  %v5442 = vpop.f32.mrf.mxu0
  %v5443 = vadd.f32 %v5394, %v5442
  %v5444 = vpop.f32.mrf.mxu0
  %v5445 = vadd.f32 %v5396, %v5444
  %5446 = vmatmul.bf16.gmra.mxu0 %v4070
  %v5447 = vpop.f32.mrf.mxu0
  %v5448 = vadd.f32 %v5399, %v5447
  %v5449 = vpop.f32.mrf.mxu0
  %v5450 = vadd.f32 %v5401, %v5449
  %5451 = vmatmul.bf16.gmra.mxu0 %v4073
  %v5452 = vpop.f32.mrf.mxu0
  %v5453 = vadd.f32 %v5404, %v5452
  %v5454 = vpop.f32.mrf.mxu0
  %v5455 = vadd.f32 %v5406, %v5454
  %5456 = vmatmul.bf16.gmra.mxu0 %v4076
  %v5457 = vpop.f32.mrf.mxu0
  %v5458 = vadd.f32 %v5409, %v5457
  %v5459 = vpop.f32.mrf.mxu0
  %v5460 = vadd.f32 %v5411, %v5459
  %5461 = vmatmul.bf16.gmra.mxu0 %v4079
  %v5462 = vpop.f32.mrf.mxu0
  %v5463 = vadd.f32 %v5414, %v5462
  %v5464 = vpop.f32.mrf.mxu0
  %v5465 = vadd.f32 %v5416, %v5464
  %5466 = vmatmul.bf16.gmra.mxu0 %v4082
  %v5467 = vpop.f32.mrf.mxu0
  %v5468 = vadd.f32 %v5419, %v5467
  %v5469 = vpop.f32.mrf.mxu0
  %v5470 = vadd.f32 %v5421, %v5469
  %5471 = vdwg.mxu0
  %5472 = vmatpush.bf16.msra.mxu0 0
  %5473 = vmatpush.bf16.msra.mxu0 0
  %5474 = vmatpush.bf16.msra.mxu0 0
  %5475 = vmatpush.bf16.msra.mxu0 0
  %5476 = vmatpush.bf16.msra.mxu0 %v5162
  %5477 = vmatpush.bf16.msra.mxu0 %v5159
  %5478 = vmatpush.bf16.msra.mxu0 %v5156
  %5479 = vmatpush.bf16.msra.mxu0 %v5153
  %5480 = vmatmul.bf16.gmra.mxu0 %v5225
  %v5481 = vpop.f32.mrf.mxu0
  %v5482 = vadd.f32 %v5433, %v5481
  %v5483 = vpop.f32.mrf.mxu0
  %v5484 = vadd.f32 %v5435, %v5483
  %5485 = vmatmul.bf16.gmra.mxu0 %v4425
  %v5486 = vpop.f32.mrf.mxu0
  %v5487 = vadd.f32 %v5438, %v5486
  %v5488 = vpop.f32.mrf.mxu0
  %v5489 = vadd.f32 %v5440, %v5488
  %5490 = vmatmul.bf16.gmra.mxu0 %v4428
  %v5491 = vpop.f32.mrf.mxu0
  %v5492 = vadd.f32 %v5443, %v5491
  %v5493 = vpop.f32.mrf.mxu0
  %v5494 = vadd.f32 %v5445, %v5493
  %5495 = vmatmul.bf16.gmra.mxu0 %v4431
  %v5496 = vpop.f32.mrf.mxu0
  %v5497 = vadd.f32 %v5448, %v5496
  %v5498 = vpop.f32.mrf.mxu0
  %v5499 = vadd.f32 %v5450, %v5498
  %5500 = vmatmul.bf16.gmra.mxu0 %v4434
  %v5501 = vpop.f32.mrf.mxu0
  %v5502 = vadd.f32 %v5453, %v5501
  %v5503 = vpop.f32.mrf.mxu0
  %v5504 = vadd.f32 %v5455, %v5503
  %5505 = vmatmul.bf16.gmra.mxu0 %v4437
  %v5506 = vpop.f32.mrf.mxu0
  %v5507 = vadd.f32 %v5458, %v5506
  %v5508 = vpop.f32.mrf.mxu0
  %v5509 = vadd.f32 %v5460, %v5508
  %5510 = vmatmul.bf16.gmra.mxu0 %v4440
  %v5511 = vpop.f32.mrf.mxu0
  %v5512 = vadd.f32 %v5463, %v5511
  %v5513 = vpop.f32.mrf.mxu0
  %v5514 = vadd.f32 %v5465, %v5513
  %5515 = vmatmul.bf16.gmra.mxu0 %v4443
  %v5516 = vpop.f32.mrf.mxu0
  %v5517 = vadd.f32 %v5468, %v5516
  %v5518 = vpop.f32.mrf.mxu0
  %v5519 = vadd.f32 %v5470, %v5518
  %5520 = vdwg.mxu0
  %5521 = vmatpush.bf16.msra.mxu0 %v5127
  %5522 = vmatpush.bf16.msra.mxu0 %v5124
  %5523 = vmatpush.bf16.msra.mxu0 %v5121
  %5524 = vmatpush.bf16.msra.mxu0 %v5118
  %5525 = vmatpush.bf16.msra.mxu0 %v5115
  %5526 = vmatpush.bf16.msra.mxu0 %v5112
  %5527 = vmatpush.bf16.msra.mxu0 %v5109
  %5528 = vmatpush.bf16.msra.mxu0 %v5106
  %5529 = vmatmul.bf16.gmra.mxu0 %v4899
  %v5530 = vpop.f32.mrf.mxu0
  %v5531 = vadd.f32 %v4850, %v5530
  %v5532 = vpop.f32.mrf.mxu0
  %v5533 = vadd.f32 %v4852, %v5532
  %5534 = vmatmul.bf16.gmra.mxu0 %v4063
  %v5535 = vpop.f32.mrf.mxu0
  %v5536 = vadd.f32 %v4855, %v5535
  %v5537 = vpop.f32.mrf.mxu0
  %v5538 = vadd.f32 %v4857, %v5537
  %5539 = vmatmul.bf16.gmra.mxu0 %v4066
  %v5540 = vpop.f32.mrf.mxu0
  %v5541 = vadd.f32 %v4860, %v5540
  %v5542 = vpop.f32.mrf.mxu0
  %v5543 = vadd.f32 %v4862, %v5542
  %5544 = vmatmul.bf16.gmra.mxu0 %v4069
  %v5545 = vpop.f32.mrf.mxu0
  %v5546 = vadd.f32 %v4865, %v5545
  %v5547 = vpop.f32.mrf.mxu0
  %v5548 = vadd.f32 %v4867, %v5547
  %5549 = vmatmul.bf16.gmra.mxu0 %v4072
  %v5550 = vpop.f32.mrf.mxu0
  %v5551 = vadd.f32 %v4870, %v5550
  %v5552 = vpop.f32.mrf.mxu0
  %v5553 = vadd.f32 %v4872, %v5552
  %5554 = vmatmul.bf16.gmra.mxu0 %v4075
  %v5555 = vpop.f32.mrf.mxu0
  %v5556 = vadd.f32 %v4875, %v5555
  %v5557 = vpop.f32.mrf.mxu0
  %v5558 = vadd.f32 %v4877, %v5557
  %5559 = vmatmul.bf16.gmra.mxu0 %v4078
  %v5560 = vpop.f32.mrf.mxu0
  %v5561 = vadd.f32 %v4880, %v5560
  %v5562 = vpop.f32.mrf.mxu0
  %v5563 = vadd.f32 %v4882, %v5562
  %5564 = vmatmul.bf16.gmra.mxu0 %v4081
  %v5565 = vpop.f32.mrf.mxu0
  %v5566 = vadd.f32 %v4885, %v5565
  %v5567 = vpop.f32.mrf.mxu0
  %v5568 = vadd.f32 %v4887, %v5567
  %5569 = vdwg.mxu0
  %5570 = vmatpush.bf16.msra.mxu0 %v5151
  %5571 = vmatpush.bf16.msra.mxu0 %v5148
  %5572 = vmatpush.bf16.msra.mxu0 %v5145
  %5573 = vmatpush.bf16.msra.mxu0 %v5142
  %5574 = vmatpush.bf16.msra.mxu0 %v5139
  %5575 = vmatpush.bf16.msra.mxu0 %v5136
  %5576 = vmatpush.bf16.msra.mxu0 %v5133
  %5577 = vmatpush.bf16.msra.mxu0 %v5130
  %5578 = vmatmul.bf16.gmra.mxu0 %v4900
  %v5579 = vpop.f32.mrf.mxu0
  %v5580 = vadd.f32 %v5531, %v5579
  %v5581 = vpop.f32.mrf.mxu0
  %v5582 = vadd.f32 %v5533, %v5581
  %5583 = vmatmul.bf16.gmra.mxu0 %v4064
  %v5584 = vpop.f32.mrf.mxu0
  %v5585 = vadd.f32 %v5536, %v5584
  %v5586 = vpop.f32.mrf.mxu0
  %v5587 = vadd.f32 %v5538, %v5586
  %5588 = vmatmul.bf16.gmra.mxu0 %v4067
  %v5589 = vpop.f32.mrf.mxu0
  %v5590 = vadd.f32 %v5541, %v5589
  %v5591 = vpop.f32.mrf.mxu0
  %v5592 = vadd.f32 %v5543, %v5591
  %5593 = vmatmul.bf16.gmra.mxu0 %v4070
  %v5594 = vpop.f32.mrf.mxu0
  %v5595 = vadd.f32 %v5546, %v5594
  %v5596 = vpop.f32.mrf.mxu0
  %v5597 = vadd.f32 %v5548, %v5596
  %5598 = vmatmul.bf16.gmra.mxu0 %v4073
  %v5599 = vpop.f32.mrf.mxu0
  %v5600 = vadd.f32 %v5551, %v5599
  %v5601 = vpop.f32.mrf.mxu0
  %v5602 = vadd.f32 %v5553, %v5601
  %5603 = vmatmul.bf16.gmra.mxu0 %v4076
  %v5604 = vpop.f32.mrf.mxu0
  %v5605 = vadd.f32 %v5556, %v5604
  %v5606 = vpop.f32.mrf.mxu0
  %v5607 = vadd.f32 %v5558, %v5606
  %5608 = vmatmul.bf16.gmra.mxu0 %v4079
  %v5609 = vpop.f32.mrf.mxu0
  %v5610 = vadd.f32 %v5561, %v5609
  %v5611 = vpop.f32.mrf.mxu0
  %v5612 = vadd.f32 %v5563, %v5611
  %5613 = vmatmul.bf16.gmra.mxu0 %v4082
  %v5614 = vpop.f32.mrf.mxu0
  %v5615 = vadd.f32 %v5566, %v5614
  %v5616 = vpop.f32.mrf.mxu0
  %v5617 = vadd.f32 %v5568, %v5616
  %5618 = vdwg.mxu0
  %5619 = vmatpush.bf16.msra.mxu0 0
  %5620 = vmatpush.bf16.msra.mxu0 0
  %5621 = vmatpush.bf16.msra.mxu0 0
  %5622 = vmatpush.bf16.msra.mxu0 0
  %5623 = vmatpush.bf16.msra.mxu0 %v5163
  %5624 = vmatpush.bf16.msra.mxu0 %v5160
  %5625 = vmatpush.bf16.msra.mxu0 %v5157
  %5626 = vmatpush.bf16.msra.mxu0 %v5154
  %5627 = vmatmul.bf16.gmra.mxu0 %v5225
  %v5628 = vpop.f32.mrf.mxu0
  %v5629 = vadd.f32 %v5580, %v5628
  %v5630 = vpop.f32.mrf.mxu0
  %v5631 = vadd.f32 %v5582, %v5630
  %5632 = vmatmul.bf16.gmra.mxu0 %v4425
  %v5633 = vpop.f32.mrf.mxu0
  %v5634 = vadd.f32 %v5585, %v5633
  %v5635 = vpop.f32.mrf.mxu0
  %v5636 = vadd.f32 %v5587, %v5635
  %5637 = vmatmul.bf16.gmra.mxu0 %v4428
  %v5638 = vpop.f32.mrf.mxu0
  %v5639 = vadd.f32 %v5590, %v5638
  %v5640 = vpop.f32.mrf.mxu0
  %v5641 = vadd.f32 %v5592, %v5640
  %5642 = vmatmul.bf16.gmra.mxu0 %v4431
  %v5643 = vpop.f32.mrf.mxu0
  %v5644 = vadd.f32 %v5595, %v5643
  %v5645 = vpop.f32.mrf.mxu0
  %v5646 = vadd.f32 %v5597, %v5645
  %5647 = vmatmul.bf16.gmra.mxu0 %v4434
  %v5648 = vpop.f32.mrf.mxu0
  %v5649 = vadd.f32 %v5600, %v5648
  %v5650 = vpop.f32.mrf.mxu0
  %v5651 = vadd.f32 %v5602, %v5650
  %5652 = vmatmul.bf16.gmra.mxu0 %v4437
  %v5653 = vpop.f32.mrf.mxu0
  %v5654 = vadd.f32 %v5605, %v5653
  %v5655 = vpop.f32.mrf.mxu0
  %v5656 = vadd.f32 %v5607, %v5655
  %5657 = vmatmul.bf16.gmra.mxu0 %v4440
  %v5658 = vpop.f32.mrf.mxu0
  %v5659 = vadd.f32 %v5610, %v5658
  %v5660 = vpop.f32.mrf.mxu0
  %v5661 = vadd.f32 %v5612, %v5660
  %5662 = vmatmul.bf16.gmra.mxu0 %v4443
  %v5663 = vpop.f32.mrf.mxu0
  %v5664 = vadd.f32 %v5615, %v5663
  %v5665 = vpop.f32.mrf.mxu0
  %v5666 = vadd.f32 %v5617, %v5665
  %5667 = vdwg.mxu0
  %v5669 = vperm.slane %v3785, 0
  %v5670 = vperm.slane %v3785, 1
  %v5671 = vperm.slane %v3785, 2
  %v5675 = vadd.f32 %v5335, %v5669
  %v5676 = vadd.f32 %v5482, %v5670
  %v5677 = vadd.f32 %v5629, %v5671
  %v5678 = vadd.f32 %v5337, %v5669
  %v5679 = vadd.f32 %v5484, %v5670
  %v5680 = vadd.f32 %v5631, %v5671
  %v5681 = vadd.f32 %v5340, %v5669
  %v5682 = vadd.f32 %v5487, %v5670
  %v5683 = vadd.f32 %v5634, %v5671
  %v5684 = vadd.f32 %v5342, %v5669
  %v5685 = vadd.f32 %v5489, %v5670
  %v5686 = vadd.f32 %v5636, %v5671
  %v5687 = vadd.f32 %v5345, %v5669
  %v5688 = vadd.f32 %v5492, %v5670
  %v5689 = vadd.f32 %v5639, %v5671
  %v5690 = vadd.f32 %v5347, %v5669
  %v5691 = vadd.f32 %v5494, %v5670
  %v5692 = vadd.f32 %v5641, %v5671
  %v5693 = vadd.f32 %v5350, %v5669
  %v5694 = vadd.f32 %v5497, %v5670
  %v5695 = vadd.f32 %v5644, %v5671
  %v5696 = vadd.f32 %v5352, %v5669
  %v5697 = vadd.f32 %v5499, %v5670
  %v5698 = vadd.f32 %v5646, %v5671
  %v5699 = vadd.f32 %v5355, %v5669
  %v5700 = vadd.f32 %v5502, %v5670
  %v5701 = vadd.f32 %v5649, %v5671
  %v5702 = vadd.f32 %v5357, %v5669
  %v5703 = vadd.f32 %v5504, %v5670
  %v5704 = vadd.f32 %v5651, %v5671
  %v5705 = vadd.f32 %v5360, %v5669
  %v5706 = vadd.f32 %v5507, %v5670
  %v5707 = vadd.f32 %v5654, %v5671
  %v5708 = vadd.f32 %v5362, %v5669
  %v5709 = vadd.f32 %v5509, %v5670
  %v5710 = vadd.f32 %v5656, %v5671
  %v5711 = vadd.f32 %v5365, %v5669
  %v5712 = vadd.f32 %v5512, %v5670
  %v5713 = vadd.f32 %v5659, %v5671
  %v5714 = vadd.f32 %v5367, %v5669
  %v5715 = vadd.f32 %v5514, %v5670
  %v5716 = vadd.f32 %v5661, %v5671
  %v5717 = vadd.f32 %v5370, %v5669
  %v5718 = vadd.f32 %v5517, %v5670
  %v5719 = vadd.f32 %v5664, %v5671
  %v5720 = vadd.f32 %v5372, %v5669
  %v5721 = vadd.f32 %v5519, %v5670
  %v5722 = vadd.f32 %v5666, %v5671
  %v5723 = vmax.f32 %v5675, 0.0
  %v5724 = vmax.f32 %v5676, 0.0
  %v5725 = vmax.f32 %v5677, 0.0
  %v5726 = vmax.f32 %v5678, 0.0
  %v5727 = vmax.f32 %v5679, 0.0
  %v5728 = vmax.f32 %v5680, 0.0
  %v5729 = vmax.f32 %v5681, 0.0
  %v5730 = vmax.f32 %v5682, 0.0
  %v5731 = vmax.f32 %v5683, 0.0
  %v5732 = vmax.f32 %v5684, 0.0
  %v5733 = vmax.f32 %v5685, 0.0
  %v5734 = vmax.f32 %v5686, 0.0
  %v5735 = vmax.f32 %v5687, 0.0
  %v5736 = vmax.f32 %v5688, 0.0
  %v5737 = vmax.f32 %v5689, 0.0
  %v5738 = vmax.f32 %v5690, 0.0
  %v5739 = vmax.f32 %v5691, 0.0
  %v5740 = vmax.f32 %v5692, 0.0
  %v5741 = vmax.f32 %v5693, 0.0
  %v5742 = vmax.f32 %v5694, 0.0
  %v5743 = vmax.f32 %v5695, 0.0
  %v5744 = vmax.f32 %v5696, 0.0
  %v5745 = vmax.f32 %v5697, 0.0
  %v5746 = vmax.f32 %v5698, 0.0
  %v5747 = vmax.f32 %v5699, 0.0
  %v5748 = vmax.f32 %v5700, 0.0
  %v5749 = vmax.f32 %v5701, 0.0
  %v5750 = vmax.f32 %v5702, 0.0
  %v5751 = vmax.f32 %v5703, 0.0
  %v5752 = vmax.f32 %v5704, 0.0
  %v5753 = vmax.f32 %v5705, 0.0
  %v5754 = vmax.f32 %v5706, 0.0
  %v5755 = vmax.f32 %v5707, 0.0
  %v5756 = vmax.f32 %v5708, 0.0
  %v5757 = vmax.f32 %v5709, 0.0
  %v5758 = vmax.f32 %v5710, 0.0
  %v5759 = vmax.f32 %v5711, 0.0
  %v5760 = vmax.f32 %v5712, 0.0
  %v5761 = vmax.f32 %v5713, 0.0
  %v5762 = vmax.f32 %v5714, 0.0
  %v5763 = vmax.f32 %v5715, 0.0
  %v5764 = vmax.f32 %v5716, 0.0
  %v5765 = vmax.f32 %v5717, 0.0
  %v5766 = vmax.f32 %v5718, 0.0
  %v5767 = vmax.f32 %v5719, 0.0
  %v5768 = vmax.f32 %v5720, 0.0
  %v5769 = vmax.f32 %v5721, 0.0
  %v5770 = vmax.f32 %v5722, 0.0
  %v5771 = vpack.c.bf16 %v5724, %v5723
  %v5772 = vpack.c.bf16 %v5725, %v5725
  %v5773 = vpack.c.bf16 %v5727, %v5726
  %v5774 = vpack.c.bf16 %v5728, %v5728
  %v5775 = vpack.c.bf16 %v5730, %v5729
  %v5776 = vpack.c.bf16 %v5731, %v5731
  %v5777 = vpack.c.bf16 %v5733, %v5732
  %v5778 = vpack.c.bf16 %v5734, %v5734
  %v5779 = vpack.c.bf16 %v5736, %v5735
  %v5780 = vpack.c.bf16 %v5737, %v5737
  %v5781 = vpack.c.bf16 %v5739, %v5738
  %v5782 = vpack.c.bf16 %v5740, %v5740
  %v5783 = vpack.c.bf16 %v5742, %v5741
  %v5784 = vpack.c.bf16 %v5743, %v5743
  %v5785 = vpack.c.bf16 %v5745, %v5744
  %v5786 = vpack.c.bf16 %v5746, %v5746
  %v5787 = vpack.c.bf16 %v5748, %v5747
  %v5788 = vpack.c.bf16 %v5749, %v5749
  %v5789 = vpack.c.bf16 %v5751, %v5750
  %v5790 = vpack.c.bf16 %v5752, %v5752
  %v5791 = vpack.c.bf16 %v5754, %v5753
  %v5792 = vpack.c.bf16 %v5755, %v5755
  %v5793 = vpack.c.bf16 %v5757, %v5756
  %v5794 = vpack.c.bf16 %v5758, %v5758
  %v5795 = vpack.c.bf16 %v5760, %v5759
  %v5796 = vpack.c.bf16 %v5761, %v5761
  %v5797 = vpack.c.bf16 %v5763, %v5762
  %v5798 = vpack.c.bf16 %v5764, %v5764
  %v5799 = vpack.c.bf16 %v5766, %v5765
  %v5800 = vpack.c.bf16 %v5767, %v5767
  %v5801 = vpack.c.bf16 %v5769, %v5768
  %v5802 = vpack.c.bf16 %v5770, %v5770
  %5803 = vst [vmem:[#allocation4 + $0x18] sm:$0xff] %v5771
  %5804 = vst.msk [vmem:[#allocation4 + $0x20] sm:$0xf] %vm51, %v5772
  %5805 = vst [vmem:[#allocation4 + $0x24] sm:$0xff] %v5773
  %5806 = vst.msk [vmem:[#allocation4 + $0x2c] sm:$0xf] %vm51, %v5774
  %5807 = vst [vmem:[#allocation4 + $0x48] sm:$0xff] %v5775
  %5808 = vst.msk [vmem:[#allocation4 + $0x50] sm:$0xf] %vm51, %v5776
  %5809 = vst [vmem:[#allocation4 + $0x54] sm:$0xff] %v5777
  %5810 = vst.msk [vmem:[#allocation4 + $0x5c] sm:$0xf] %vm51, %v5778
  %5811 = vst [vmem:[#allocation4 + $0x78] sm:$0xff] %v5779
  %5812 = vst.msk [vmem:[#allocation4 + $0x80] sm:$0xf] %vm51, %v5780
  %5813 = vst [vmem:[#allocation4 + $0x84] sm:$0xff] %v5781
  %5814 = vst.msk [vmem:[#allocation4 + $0x8c] sm:$0xf] %vm51, %v5782
  %5815 = vst [vmem:[#allocation4 + $0xa8] sm:$0xff] %v5783
  %5816 = vst.msk [vmem:[#allocation4 + $0xb0] sm:$0xf] %vm51, %v5784
  %5817 = vst [vmem:[#allocation4 + $0xb4] sm:$0xff] %v5785
  %5818 = vst.msk [vmem:[#allocation4 + $0xbc] sm:$0xf] %vm51, %v5786
  %5819 = vst [vmem:[#allocation4 + $0xd8] sm:$0xff] %v5787
  %5820 = vst.msk [vmem:[#allocation4 + $0xe0] sm:$0xf] %vm51, %v5788
  %5821 = vst [vmem:[#allocation4 + $0xe4] sm:$0xff] %v5789
  %5822 = vst.msk [vmem:[#allocation4 + $0xec] sm:$0xf] %vm51, %v5790
  %5823 = vst [vmem:[#allocation4 + $0x108] sm:$0xff] %v5791
  %5824 = vst.msk [vmem:[#allocation4 + $0x110] sm:$0xf] %vm51, %v5792
  %5825 = vst [vmem:[#allocation4 + $0x114] sm:$0xff] %v5793
  %5826 = vst.msk [vmem:[#allocation4 + $0x11c] sm:$0xf] %vm51, %v5794
  %5827 = vst [vmem:[#allocation4 + $0x138] sm:$0xff] %v5795
  %5828 = vst.msk [vmem:[#allocation4 + $0x140] sm:$0xf] %vm51, %v5796
  %5829 = vst [vmem:[#allocation4 + $0x144] sm:$0xff] %v5797
  %5830 = vst.msk [vmem:[#allocation4 + $0x14c] sm:$0xf] %vm51, %v5798
  %5831 = vst [vmem:[#allocation4 + $0x168] sm:$0xff] %v5799
  %5832 = vst.msk [vmem:[#allocation4 + $0x170] sm:$0xf] %vm51, %v5800
  %5833 = vst [vmem:[#allocation4 + $0x174] sm:$0xff] %v5801
  %5834 = vst.msk [vmem:[#allocation4 + $0x17c] sm:$0xf] %vm51, %v5802
  %v5835 = vld [vmem:[#allocation3 + $0x18] sm:$0xff]
  %v5836 = vld [vmem:[#allocation3 + $0x20] sm:$0xf]
  %v5837 = vld [vmem:[#allocation3 + $0x24] sm:$0xff]
  %v5838 = vld [vmem:[#allocation3 + $0x2c] sm:$0xf]
  %v5839 = vld [vmem:[#allocation3 + $0x30] sm:$0xff]
  %v5840 = vld [vmem:[#allocation3 + $0x38] sm:$0xf]
  %v5841 = vld [vmem:[#allocation3 + $0x3c] sm:$0xff]
  %v5842 = vld [vmem:[#allocation3 + $0x44] sm:$0xf]
  %v5843 = vld [vmem:[#allocation3 + $0x48] sm:$0xff]
  %v5844 = vld [vmem:[#allocation3 + $0x50] sm:$0xf]
  %v5845 = vld [vmem:[#allocation3 + $0x54] sm:$0xff]
  %v5846 = vld [vmem:[#allocation3 + $0x5c] sm:$0xf]
  %v5847 = vld [vmem:[#allocation3 + $0x60] sm:$0xff]
  %v5848 = vld [vmem:[#allocation3 + $0x68] sm:$0xf]
  %v5849 = vld [vmem:[#allocation3 + $0x6c] sm:$0xff]
  %v5850 = vld [vmem:[#allocation3 + $0x74] sm:$0xf]
  %v5851 = vld [vmem:[#allocation3 + $0x78] sm:$0xff]
  %v5852 = vld [vmem:[#allocation3 + $0x80] sm:$0xf]
  %v5853 = vld [vmem:[#allocation3 + $0x84] sm:$0xff]
  %v5854 = vld [vmem:[#allocation3 + $0x8c] sm:$0xf]
  %v5855 = vld [vmem:[#allocation3 + $0x90] sm:$0xff]
  %v5856 = vld [vmem:[#allocation3 + $0x98] sm:$0xf]
  %v5857 = vld [vmem:[#allocation3 + $0x9c] sm:$0xff]
  %v5858 = vld [vmem:[#allocation3 + $0xa4] sm:$0xf]
  %v5859 = vld [vmem:[#allocation3 + $0xa8] sm:$0xff]
  %v5860 = vld [vmem:[#allocation3 + $0xb0] sm:$0xf]
  %v5861 = vld [vmem:[#allocation3 + $0xb4] sm:$0xff]
  %v5862 = vld [vmem:[#allocation3 + $0xbc] sm:$0xf]
  %v5863 = vld [vmem:[#allocation3 + $0xc0] sm:$0xff]
  %v5864 = vld [vmem:[#allocation3 + $0xc8] sm:$0xf]
  %v5865 = vld [vmem:[#allocation3 + $0xcc] sm:$0xff]
  %v5866 = vld [vmem:[#allocation3 + $0xd4] sm:$0xf]
  %v5867 = vld [vmem:[#allocation3 + $0xd8] sm:$0xff]
  %v5868 = vld [vmem:[#allocation3 + $0xe0] sm:$0xf]
  %v5869 = vld [vmem:[#allocation3 + $0xe4] sm:$0xff]
  %v5870 = vld [vmem:[#allocation3 + $0xec] sm:$0xf]
  %s5871 = scalar_lea.vmem %s5, 960
  %v5872 = vld [vmem:[%s5871] sm:$0xff]
  %v5873 = vld [vmem:[%s5871 + $0x8] sm:$0xf]
  %v5874 = vld [vmem:[%s5871 + $0xc] sm:$0xff]
  %v5875 = vld [vmem:[%s5871 + $0x14] sm:$0xf]
  %v5876 = vld [vmem:[%s5871 + $0x18] sm:$0xff]
  %v5877 = vld [vmem:[%s5871 + $0x20] sm:$0xf]
  %v5878 = vld [vmem:[%s5871 + $0x24] sm:$0xff]
  %v5879 = vld [vmem:[%s5871 + $0x2c] sm:$0xf]
  %v5880 = vld [vmem:[%s5871 + $0x30] sm:$0xff]
  %v5881 = vld [vmem:[%s5871 + $0x38] sm:$0xf]
  %v5882 = vld [vmem:[%s5871 + $0x3c] sm:$0xff]
  %v5883 = vld [vmem:[%s5871 + $0x44] sm:$0xf]
  %v5884 = vld [vmem:[%s5871 + $0x48] sm:$0xff]
  %v5885 = vld [vmem:[%s5871 + $0x50] sm:$0xf]
  %v5886 = vld [vmem:[%s5871 + $0x54] sm:$0xff]
  %v5887 = vld [vmem:[%s5871 + $0x5c] sm:$0xf]
  %v5888 = vld [vmem:[%s5871 + $0x60] sm:$0xff]
  %v5889 = vld [vmem:[%s5871 + $0x68] sm:$0xf]
  %v5890 = vld [vmem:[%s5871 + $0x6c] sm:$0xff]
  %v5891 = vld [vmem:[%s5871 + $0x74] sm:$0xf]
  %v5892 = vld [vmem:[%s5871 + $0x78] sm:$0xff]
  %v5893 = vld [vmem:[%s5871 + $0x80] sm:$0xf]
  %v5894 = vld [vmem:[%s5871 + $0x84] sm:$0xff]
  %v5895 = vld [vmem:[%s5871 + $0x8c] sm:$0xf]
  %v5896 = vld [vmem:[%s5871 + $0x90] sm:$0xff]
  %v5897 = vld [vmem:[%s5871 + $0x98] sm:$0xf]
  %v5898 = vld [vmem:[%s5871 + $0x9c] sm:$0xff]
  %v5899 = vld [vmem:[%s5871 + $0xa4] sm:$0xf]
  %v5900 = vld [vmem:[%s5871 + $0xa8] sm:$0xff]
  %v5901 = vld [vmem:[%s5871 + $0xb0] sm:$0xf]
  %v5902 = vld [vmem:[%s5871 + $0xb4] sm:$0xff]
  %v5903 = vld [vmem:[%s5871 + $0xbc] sm:$0xf]
  %v5904 = vld [vmem:[%s5871 + $0xc0] sm:$0xff]
  %v5905 = vld [vmem:[%s5871 + $0xc8] sm:$0xf]
  %v5906 = vld [vmem:[%s5871 + $0xcc] sm:$0xff]
  %v5907 = vld [vmem:[%s5871 + $0xd4] sm:$0xf]
  %v5908 = vld [vmem:[%s5871 + $0xd8] sm:$0xff]
  %v5909 = vld [vmem:[%s5871 + $0xe0] sm:$0xf]
  %v5910 = vld [vmem:[%s5871 + $0xe4] sm:$0xff]
  %v5911 = vld [vmem:[%s5871 + $0xec] sm:$0xf]
  %v5912 = vld [vmem:[%s5871 + $0xf0] sm:$0xff]
  %v5913 = vld [vmem:[%s5871 + $0xf8] sm:$0xf]
  %v5914 = vld [vmem:[%s5871 + $0xfc] sm:$0xff]
  %v5915 = vld [vmem:[%s5871 + $0x104] sm:$0xf]
  %v5916 = vld [vmem:[%s5871 + $0x108] sm:$0xff]
  %v5917 = vld [vmem:[%s5871 + $0x110] sm:$0xf]
  %v5918 = vld [vmem:[%s5871 + $0x114] sm:$0xff]
  %v5919 = vld [vmem:[%s5871 + $0x11c] sm:$0xf]
  %v5920 = vld [vmem:[%s5871 + $0x120] sm:$0xff]
  %v5921 = vld [vmem:[%s5871 + $0x128] sm:$0xf]
  %v5922 = vld [vmem:[%s5871 + $0x12c] sm:$0xff]
  %v5923 = vld [vmem:[%s5871 + $0x134] sm:$0xf]
  %v5924 = vld [vmem:[%s5871 + $0x138] sm:$0xff]
  %v5925 = vld [vmem:[%s5871 + $0x140] sm:$0xf]
  %v5926 = vld [vmem:[%s5871 + $0x144] sm:$0xff]
  %v5927 = vld [vmem:[%s5871 + $0x14c] sm:$0xf]
  %v5928 = vld [vmem:[%s5871 + $0x150] sm:$0xff]
  %v5929 = vld [vmem:[%s5871 + $0x158] sm:$0xf]
  %v5930 = vld [vmem:[%s5871 + $0x15c] sm:$0xff]
  %v5931 = vld [vmem:[%s5871 + $0x164] sm:$0xf]
  %v5932 = vld [vmem:[%s5871 + $0x168] sm:$0xff]
  %v5933 = vld [vmem:[%s5871 + $0x170] sm:$0xf]
  %v5934 = vld [vmem:[%s5871 + $0x174] sm:$0xff]
  %v5935 = vld [vmem:[%s5871 + $0x17c] sm:$0xf]
  %v5936 = vld [vmem:[%s5871 + $0x180] sm:$0xff]
  %v5937 = vld [vmem:[%s5871 + $0x188] sm:$0xf]
  %v5938 = vld [vmem:[%s5871 + $0x18c] sm:$0xff]
  %v5939 = vld [vmem:[%s5871 + $0x194] sm:$0xf]
  %v5940 = vld [vmem:[%s5871 + $0x198] sm:$0xff]
  %v5941 = vld [vmem:[%s5871 + $0x1a0] sm:$0xf]
  %v5942 = vld [vmem:[%s5871 + $0x1a4] sm:$0xff]
  %v5943 = vld [vmem:[%s5871 + $0x1ac] sm:$0xf]
  %v5944 = vld [vmem:[%s5871 + $0x1b0] sm:$0xff]
  %v5945 = vld [vmem:[%s5871 + $0x1b8] sm:$0xf]
  %v5946 = vld [vmem:[%s5871 + $0x1bc] sm:$0xff]
  %v5947 = vld [vmem:[%s5871 + $0x1c4] sm:$0xf]
  %v5948 = vld [vmem:[%s5871 + $0x1c8] sm:$0xff]
  %v5949 = vld [vmem:[%s5871 + $0x1d0] sm:$0xf]
  %v5950 = vld [vmem:[%s5871 + $0x1d4] sm:$0xff]
  %v5951 = vld [vmem:[%s5871 + $0x1dc] sm:$0xf]
  %s5952 = scalar_lea.vmem %s5, 1440
  %v5953 = vld [vmem:[%s5952] sm:$0xff]
  %v5954 = vld [vmem:[%s5952 + $0x8] sm:$0xf]
  %v5955 = vld [vmem:[%s5952 + $0xc] sm:$0xff]
  %v5956 = vld [vmem:[%s5952 + $0x14] sm:$0xf]
  %v5957 = vld [vmem:[%s5952 + $0x18] sm:$0xff]
  %v5958 = vld [vmem:[%s5952 + $0x20] sm:$0xf]
  %v5959 = vld [vmem:[%s5952 + $0x24] sm:$0xff]
  %v5960 = vld [vmem:[%s5952 + $0x2c] sm:$0xf]
  %v5961 = vld [vmem:[%s5952 + $0x30] sm:$0xff]
  %v5962 = vld [vmem:[%s5952 + $0x38] sm:$0xf]
  %v5963 = vld [vmem:[%s5952 + $0x3c] sm:$0xff]
  %v5964 = vld [vmem:[%s5952 + $0x44] sm:$0xf]
  %v5965 = vld [vmem:[%s5952 + $0x48] sm:$0xff]
  %v5966 = vld [vmem:[%s5952 + $0x50] sm:$0xf]
  %v5967 = vld [vmem:[%s5952 + $0x54] sm:$0xff]
  %v5968 = vld [vmem:[%s5952 + $0x5c] sm:$0xf]
  %v5969 = vld [vmem:[%s5952 + $0x60] sm:$0xff]
  %v5970 = vld [vmem:[%s5952 + $0x68] sm:$0xf]
  %v5971 = vld [vmem:[%s5952 + $0x6c] sm:$0xff]
  %v5972 = vld [vmem:[%s5952 + $0x74] sm:$0xf]
  %v5973 = vld [vmem:[%s5952 + $0x78] sm:$0xff]
  %v5974 = vld [vmem:[%s5952 + $0x80] sm:$0xf]
  %v5975 = vld [vmem:[%s5952 + $0x84] sm:$0xff]
  %v5976 = vld [vmem:[%s5952 + $0x8c] sm:$0xf]
  %v5977 = vld [vmem:[%s5952 + $0x90] sm:$0xff]
  %v5978 = vld [vmem:[%s5952 + $0x98] sm:$0xf]
  %v5979 = vld [vmem:[%s5952 + $0x9c] sm:$0xff]
  %v5980 = vld [vmem:[%s5952 + $0xa4] sm:$0xf]
  %v5981 = vld [vmem:[%s5952 + $0xa8] sm:$0xff]
  %v5982 = vld [vmem:[%s5952 + $0xb0] sm:$0xf]
  %v5983 = vld [vmem:[%s5952 + $0xb4] sm:$0xff]
  %v5984 = vld [vmem:[%s5952 + $0xbc] sm:$0xf]
  %v5985 = vld [vmem:[%s5952 + $0xc0] sm:$0xff]
  %v5986 = vld [vmem:[%s5952 + $0xc8] sm:$0xf]
  %v5987 = vld [vmem:[%s5952 + $0xcc] sm:$0xff]
  %v5988 = vld [vmem:[%s5952 + $0xd4] sm:$0xf]
  %v5989 = vld [vmem:[%s5952 + $0xd8] sm:$0xff]
  %v5990 = vld [vmem:[%s5952 + $0xe0] sm:$0xf]
  %v5991 = vld [vmem:[%s5952 + $0xe4] sm:$0xff]
  %v5992 = vld [vmem:[%s5952 + $0xec] sm:$0xf]
  %v5993 = vld [vmem:[%s5952 + $0xf0] sm:$0xff]
  %v5994 = vld [vmem:[%s5952 + $0xf8] sm:$0xf]
  %v5995 = vld [vmem:[%s5952 + $0xfc] sm:$0xff]
  %v5996 = vld [vmem:[%s5952 + $0x104] sm:$0xf]
  %v5997 = vld [vmem:[%s5952 + $0x108] sm:$0xff]
  %v5998 = vld [vmem:[%s5952 + $0x110] sm:$0xf]
  %v5999 = vld [vmem:[%s5952 + $0x114] sm:$0xff]
  %v6000 = vld [vmem:[%s5952 + $0x11c] sm:$0xf]
  %v6001 = vld [vmem:[%s5952 + $0x120] sm:$0xff]
  %v6002 = vld [vmem:[%s5952 + $0x128] sm:$0xf]
  %v6003 = vld [vmem:[%s5952 + $0x12c] sm:$0xff]
  %v6004 = vld [vmem:[%s5952 + $0x134] sm:$0xf]
  %v6005 = vld [vmem:[%s5952 + $0x138] sm:$0xff]
  %v6006 = vld [vmem:[%s5952 + $0x140] sm:$0xf]
  %v6007 = vld [vmem:[%s5952 + $0x144] sm:$0xff]
  %v6008 = vld [vmem:[%s5952 + $0x14c] sm:$0xf]
  %v6009 = vld [vmem:[%s5952 + $0x150] sm:$0xff]
  %v6010 = vld [vmem:[%s5952 + $0x158] sm:$0xf]
  %v6011 = vld [vmem:[%s5952 + $0x15c] sm:$0xff]
  %v6012 = vld [vmem:[%s5952 + $0x164] sm:$0xf]
  %v6013 = vld [vmem:[%s5952 + $0x168] sm:$0xff]
  %v6014 = vld [vmem:[%s5952 + $0x170] sm:$0xf]
  %v6015 = vld [vmem:[%s5952 + $0x174] sm:$0xff]
  %v6016 = vld [vmem:[%s5952 + $0x17c] sm:$0xf]
  %v6017 = vld [vmem:[%s5952 + $0x180] sm:$0xff]
  %v6018 = vld [vmem:[%s5952 + $0x188] sm:$0xf]
  %v6019 = vld [vmem:[%s5952 + $0x18c] sm:$0xff]
  %v6020 = vld [vmem:[%s5952 + $0x194] sm:$0xf]
  %v6021 = vld [vmem:[%s5952 + $0x198] sm:$0xff]
  %v6022 = vld [vmem:[%s5952 + $0x1a0] sm:$0xf]
  %v6023 = vld [vmem:[%s5952 + $0x1a4] sm:$0xff]
  %v6024 = vld [vmem:[%s5952 + $0x1ac] sm:$0xf]
  %v6025 = vld [vmem:[%s5952 + $0x1b0] sm:$0xff]
  %v6026 = vld [vmem:[%s5952 + $0x1b8] sm:$0xf]
  %v6027 = vld [vmem:[%s5952 + $0x1bc] sm:$0xff]
  %v6028 = vld [vmem:[%s5952 + $0x1c4] sm:$0xf]
  %v6029 = vld [vmem:[%s5952 + $0x1c8] sm:$0xff]
  %v6030 = vld [vmem:[%s5952 + $0x1d0] sm:$0xf]
  %v6031 = vld [vmem:[%s5952 + $0x1d4] sm:$0xff]
  %v6032 = vld [vmem:[%s5952 + $0x1dc] sm:$0xf]
  %v6065 = vunpack.c.l.b16 %v5839
  %v6066 = vunpack.c.h.b16 %v5839
  %v6067 = vunpack.c.l.b16 %v5840
  %v6068 = vunpack.c.l.b16 %v5841
  %v6069 = vunpack.c.h.b16 %v5841
  %v6070 = vunpack.c.l.b16 %v5842
  %v6071 = vunpack.c.l.b16 %v5843
  %v6072 = vunpack.c.h.b16 %v5843
  %v6073 = vunpack.c.l.b16 %v5844
  %v6074 = vunpack.c.l.b16 %v5845
  %v6075 = vunpack.c.h.b16 %v5845
  %v6076 = vunpack.c.l.b16 %v5846
  %v6077 = vunpack.c.l.b16 %v5847
  %v6078 = vunpack.c.h.b16 %v5847
  %v6079 = vunpack.c.l.b16 %v5848
  %v6080 = vunpack.c.l.b16 %v5849
  %v6081 = vunpack.c.h.b16 %v5849
  %v6082 = vunpack.c.l.b16 %v5850
  %v6083 = vunpack.c.l.b16 %v5851
  %v6084 = vunpack.c.h.b16 %v5851
  %v6085 = vunpack.c.l.b16 %v5852
  %v6086 = vunpack.c.l.b16 %v5853
  %v6087 = vunpack.c.h.b16 %v5853
  %v6088 = vunpack.c.l.b16 %v5854
  %v6089 = vunpack.c.l.b16 %v5855
  %v6090 = vunpack.c.h.b16 %v5855
  %v6091 = vunpack.c.l.b16 %v5856
  %v6092 = vunpack.c.l.b16 %v5857
  %v6093 = vunpack.c.h.b16 %v5857
  %v6094 = vunpack.c.l.b16 %v5858
  %v6095 = vunpack.c.l.b16 %v5859
  %v6096 = vunpack.c.h.b16 %v5859
  %v6097 = vunpack.c.l.b16 %v5860
  %v6098 = vunpack.c.l.b16 %v5861
  %v6099 = vunpack.c.h.b16 %v5861
  %v6100 = vunpack.c.l.b16 %v5862
  %v6101 = vunpack.c.l.b16 %v5863
  %v6102 = vunpack.c.h.b16 %v5863
  %v6103 = vunpack.c.l.b16 %v5864
  %v6104 = vunpack.c.l.b16 %v5865
  %v6105 = vunpack.c.h.b16 %v5865
  %v6106 = vunpack.c.l.b16 %v5866
  %v6107 = vunpack.c.l.b16 %v5867
  %v6108 = vunpack.c.h.b16 %v5867
  %v6109 = vunpack.c.l.b16 %v5868
  %v6110 = vunpack.c.l.b16 %v5869
  %v6111 = vunpack.c.h.b16 %v5869
  %v6112 = vunpack.c.l.b16 %v5870
  %v6113 = vpack.c.b16 %v6068, %v6065
  %v6114 = vpack.c.b16 %v6069, %v6066
  %v6115 = vpack.c.b16 %v6070, %v6067
  %v6116 = vpack.c.b16 %v6074, %v6071
  %v6117 = vpack.c.b16 %v6075, %v6072
  %v6118 = vpack.c.b16 %v6076, %v6073
  %v6119 = vpack.c.b16 %v6080, %v6077
  %v6120 = vpack.c.b16 %v6081, %v6078
  %v6121 = vpack.c.b16 %v6082, %v6079
  %v6122 = vpack.c.b16 %v6086, %v6083
  %v6123 = vpack.c.b16 %v6087, %v6084
  %v6124 = vpack.c.b16 %v6088, %v6085
  %v6125 = vpack.c.b16 %v6092, %v6089
  %v6126 = vpack.c.b16 %v6093, %v6090
  %v6127 = vpack.c.b16 %v6094, %v6091
  %v6128 = vpack.c.b16 %v6098, %v6095
  %v6129 = vpack.c.b16 %v6099, %v6096
  %v6130 = vpack.c.b16 %v6100, %v6097
  %v6131 = vpack.c.b16 %v6104, %v6101
  %v6132 = vpack.c.b16 %v6105, %v6102
  %v6133 = vpack.c.b16 %v6106, %v6103
  %v6134 = vpack.c.b16 %v6110, %v6107
  %v6135 = vpack.c.b16 %v6111, %v6108
  %v6136 = vpack.c.b16 %v6112, %v6109
  %v6233 = vunpack.c.l.b16 %v5953
  %v6234 = vunpack.c.h.b16 %v5953
  %v6235 = vunpack.c.l.b16 %v5954
  %v6236 = vunpack.c.l.b16 %v5955
  %v6237 = vunpack.c.h.b16 %v5955
  %v6238 = vunpack.c.l.b16 %v5956
  %v6239 = vunpack.c.l.b16 %v5957
  %v6240 = vunpack.c.h.b16 %v5957
  %v6241 = vunpack.c.l.b16 %v5958
  %v6242 = vunpack.c.l.b16 %v5959
  %v6243 = vunpack.c.h.b16 %v5959
  %v6244 = vunpack.c.l.b16 %v5960
  %v6245 = vunpack.c.l.b16 %v5961
  %v6246 = vunpack.c.h.b16 %v5961
  %v6247 = vunpack.c.l.b16 %v5962
  %v6248 = vunpack.c.l.b16 %v5963
  %v6249 = vunpack.c.h.b16 %v5963
  %v6250 = vunpack.c.l.b16 %v5964
  %v6251 = vunpack.c.l.b16 %v5965
  %v6252 = vunpack.c.h.b16 %v5965
  %v6253 = vunpack.c.l.b16 %v5966
  %v6254 = vunpack.c.l.b16 %v5967
  %v6255 = vunpack.c.h.b16 %v5967
  %v6256 = vunpack.c.l.b16 %v5968
  %v6257 = vunpack.c.l.b16 %v5969
  %v6258 = vunpack.c.h.b16 %v5969
  %v6259 = vunpack.c.l.b16 %v5970
  %v6260 = vunpack.c.l.b16 %v5971
  %v6261 = vunpack.c.h.b16 %v5971
  %v6262 = vunpack.c.l.b16 %v5972
  %v6263 = vunpack.c.l.b16 %v5973
  %v6264 = vunpack.c.h.b16 %v5973
  %v6265 = vunpack.c.l.b16 %v5974
  %v6266 = vunpack.c.l.b16 %v5975
  %v6267 = vunpack.c.h.b16 %v5975
  %v6268 = vunpack.c.l.b16 %v5976
  %v6269 = vunpack.c.l.b16 %v5977
  %v6270 = vunpack.c.h.b16 %v5977
  %v6271 = vunpack.c.l.b16 %v5978
  %v6272 = vunpack.c.l.b16 %v5979
  %v6273 = vunpack.c.h.b16 %v5979
  %v6274 = vunpack.c.l.b16 %v5980
  %v6275 = vunpack.c.l.b16 %v5981
  %v6276 = vunpack.c.h.b16 %v5981
  %v6277 = vunpack.c.l.b16 %v5982
  %v6278 = vunpack.c.l.b16 %v5983
  %v6279 = vunpack.c.h.b16 %v5983
  %v6280 = vunpack.c.l.b16 %v5984
  %v6281 = vunpack.c.l.b16 %v5985
  %v6282 = vunpack.c.h.b16 %v5985
  %v6283 = vunpack.c.l.b16 %v5986
  %v6284 = vunpack.c.l.b16 %v5987
  %v6285 = vunpack.c.h.b16 %v5987
  %v6286 = vunpack.c.l.b16 %v5988
  %v6287 = vunpack.c.l.b16 %v5989
  %v6288 = vunpack.c.h.b16 %v5989
  %v6289 = vunpack.c.l.b16 %v5990
  %v6290 = vunpack.c.l.b16 %v5991
  %v6291 = vunpack.c.h.b16 %v5991
  %v6292 = vunpack.c.l.b16 %v5992
  %v6293 = vunpack.c.l.b16 %v5993
  %v6294 = vunpack.c.h.b16 %v5993
  %v6295 = vunpack.c.l.b16 %v5994
  %v6296 = vunpack.c.l.b16 %v5995
  %v6297 = vunpack.c.h.b16 %v5995
  %v6298 = vunpack.c.l.b16 %v5996
  %v6299 = vunpack.c.l.b16 %v5997
  %v6300 = vunpack.c.h.b16 %v5997
  %v6301 = vunpack.c.l.b16 %v5998
  %v6302 = vunpack.c.l.b16 %v5999
  %v6303 = vunpack.c.h.b16 %v5999
  %v6304 = vunpack.c.l.b16 %v6000
  %v6305 = vunpack.c.l.b16 %v6001
  %v6306 = vunpack.c.h.b16 %v6001
  %v6307 = vunpack.c.l.b16 %v6002
  %v6308 = vunpack.c.l.b16 %v6003
  %v6309 = vunpack.c.h.b16 %v6003
  %v6310 = vunpack.c.l.b16 %v6004
  %v6311 = vunpack.c.l.b16 %v6005
  %v6312 = vunpack.c.h.b16 %v6005
  %v6313 = vunpack.c.l.b16 %v6006
  %v6314 = vunpack.c.l.b16 %v6007
  %v6315 = vunpack.c.h.b16 %v6007
  %v6316 = vunpack.c.l.b16 %v6008
  %v6317 = vunpack.c.l.b16 %v6009
  %v6318 = vunpack.c.h.b16 %v6009
  %v6319 = vunpack.c.l.b16 %v6010
  %v6320 = vunpack.c.l.b16 %v6011
  %v6321 = vunpack.c.h.b16 %v6011
  %v6322 = vunpack.c.l.b16 %v6012
  %v6323 = vunpack.c.l.b16 %v6013
  %v6324 = vunpack.c.h.b16 %v6013
  %v6325 = vunpack.c.l.b16 %v6014
  %v6326 = vunpack.c.l.b16 %v6015
  %v6327 = vunpack.c.h.b16 %v6015
  %v6328 = vunpack.c.l.b16 %v6016
  %v6329 = vunpack.c.l.b16 %v6017
  %v6330 = vunpack.c.h.b16 %v6017
  %v6331 = vunpack.c.l.b16 %v6018
  %v6332 = vunpack.c.l.b16 %v6019
  %v6333 = vunpack.c.h.b16 %v6019
  %v6334 = vunpack.c.l.b16 %v6020
  %v6335 = vunpack.c.l.b16 %v6021
  %v6336 = vunpack.c.h.b16 %v6021
  %v6337 = vunpack.c.l.b16 %v6022
  %v6338 = vunpack.c.l.b16 %v6023
  %v6339 = vunpack.c.h.b16 %v6023
  %v6340 = vunpack.c.l.b16 %v6024
  %v6341 = vunpack.c.l.b16 %v6025
  %v6342 = vunpack.c.h.b16 %v6025
  %v6343 = vunpack.c.l.b16 %v6026
  %v6344 = vunpack.c.l.b16 %v6027
  %v6345 = vunpack.c.h.b16 %v6027
  %v6346 = vunpack.c.l.b16 %v6028
  %v6347 = vunpack.c.l.b16 %v6029
  %v6348 = vunpack.c.h.b16 %v6029
  %v6349 = vunpack.c.l.b16 %v6030
  %v6350 = vunpack.c.l.b16 %v6031
  %v6351 = vunpack.c.h.b16 %v6031
  %v6352 = vunpack.c.l.b16 %v6032
  %v6353 = vpack.c.b16 %v6236, %v6233
  %v6354 = vpack.c.b16 %v6237, %v6234
  %v6355 = vpack.c.b16 %v6238, %v6235
  %v6356 = vpack.c.b16 %v6242, %v6239
  %v6357 = vpack.c.b16 %v6243, %v6240
  %v6358 = vpack.c.b16 %v6244, %v6241
  %v6359 = vpack.c.b16 %v6248, %v6245
  %v6360 = vpack.c.b16 %v6249, %v6246
  %v6361 = vpack.c.b16 %v6250, %v6247
  %v6362 = vpack.c.b16 %v6254, %v6251
  %v6363 = vpack.c.b16 %v6255, %v6252
  %v6364 = vpack.c.b16 %v6256, %v6253
  %v6365 = vpack.c.b16 %v6260, %v6257
  %v6366 = vpack.c.b16 %v6261, %v6258
  %v6367 = vpack.c.b16 %v6262, %v6259
  %v6368 = vpack.c.b16 %v6266, %v6263
  %v6369 = vpack.c.b16 %v6267, %v6264
  %v6370 = vpack.c.b16 %v6268, %v6265
  %v6371 = vpack.c.b16 %v6272, %v6269
  %v6372 = vpack.c.b16 %v6273, %v6270
  %v6373 = vpack.c.b16 %v6274, %v6271
  %v6374 = vpack.c.b16 %v6278, %v6275
  %v6375 = vpack.c.b16 %v6279, %v6276
  %v6376 = vpack.c.b16 %v6280, %v6277
  %v6377 = vpack.c.b16 %v6284, %v6281
  %v6378 = vpack.c.b16 %v6285, %v6282
  %v6379 = vpack.c.b16 %v6286, %v6283
  %v6380 = vpack.c.b16 %v6290, %v6287
  %v6381 = vpack.c.b16 %v6291, %v6288
  %v6382 = vpack.c.b16 %v6292, %v6289
  %v6383 = vpack.c.b16 %v6296, %v6293
  %v6384 = vpack.c.b16 %v6297, %v6294
  %v6385 = vpack.c.b16 %v6298, %v6295
  %v6386 = vpack.c.b16 %v6302, %v6299
  %v6387 = vpack.c.b16 %v6303, %v6300
  %v6388 = vpack.c.b16 %v6304, %v6301
  %v6389 = vpack.c.b16 %v6308, %v6305
  %v6390 = vpack.c.b16 %v6309, %v6306
  %v6391 = vpack.c.b16 %v6310, %v6307
  %v6392 = vpack.c.b16 %v6314, %v6311
  %v6393 = vpack.c.b16 %v6315, %v6312
  %v6394 = vpack.c.b16 %v6316, %v6313
  %v6395 = vpack.c.b16 %v6320, %v6317
  %v6396 = vpack.c.b16 %v6321, %v6318
  %v6397 = vpack.c.b16 %v6322, %v6319
  %v6398 = vpack.c.b16 %v6326, %v6323
  %v6399 = vpack.c.b16 %v6327, %v6324
  %v6400 = vpack.c.b16 %v6328, %v6325
  %v6401 = vpack.c.b16 %v6332, %v6329
  %v6402 = vpack.c.b16 %v6333, %v6330
  %v6403 = vpack.c.b16 %v6334, %v6331
  %v6404 = vpack.c.b16 %v6338, %v6335
  %v6405 = vpack.c.b16 %v6339, %v6336
  %v6406 = vpack.c.b16 %v6340, %v6337
  %v6407 = vpack.c.b16 %v6344, %v6341
  %v6408 = vpack.c.b16 %v6345, %v6342
  %v6409 = vpack.c.b16 %v6346, %v6343
  %v6410 = vpack.c.b16 %v6350, %v6347
  %v6411 = vpack.c.b16 %v6351, %v6348
  %v6412 = vpack.c.b16 %v6352, %v6349
  %v6474 = vsel %vm4423, %v6115, 0
  %v6477 = vsel %vm4423, %v6118, 0
  %v6480 = vsel %vm4423, %v6121, 0
  %v6483 = vsel %vm4423, %v6124, 0
  %v6486 = vsel %vm4423, %v6127, 0
  %v6489 = vsel %vm4423, %v6130, 0
  %v6492 = vsel %vm4423, %v6133, 0
  %v6495 = vsel %vm4423, %v6136, 0
  %6497 = vmatpush.bf16.msra.mxu0 %v6374
  %6498 = vmatpush.bf16.msra.mxu0 %v6371
  %6499 = vmatpush.bf16.msra.mxu0 %v6368
  %6500 = vmatpush.bf16.msra.mxu0 %v6365
  %6501 = vmatpush.bf16.msra.mxu0 %v6362
  %6502 = vmatpush.bf16.msra.mxu0 %v6359
  %6503 = vmatpush.bf16.msra.mxu0 %v6356
  %6504 = vmatpush.bf16.msra.mxu0 %v6353
  %6505 = vmatmul.bf16.gmra.mxu0 %v6113
  %v6506 = vpop.f32.mrf.mxu0
  %v6507 = vadd.f32 0.0, %v6506
  %v6508 = vpop.f32.mrf.mxu0
  %v6509 = vadd.f32 0.0, %v6508
  %6510 = vmatmul.bf16.gmra.mxu0 %v6116
  %v6511 = vpop.f32.mrf.mxu0
  %v6512 = vadd.f32 0.0, %v6511
  %v6513 = vpop.f32.mrf.mxu0
  %v6514 = vadd.f32 0.0, %v6513
  %6515 = vmatmul.bf16.gmra.mxu0 %v6119
  %v6516 = vpop.f32.mrf.mxu0
  %v6517 = vadd.f32 0.0, %v6516
  %v6518 = vpop.f32.mrf.mxu0
  %v6519 = vadd.f32 0.0, %v6518
  %6520 = vmatmul.bf16.gmra.mxu0 %v6122
  %v6521 = vpop.f32.mrf.mxu0
  %v6522 = vadd.f32 0.0, %v6521
  %v6523 = vpop.f32.mrf.mxu0
  %v6524 = vadd.f32 0.0, %v6523
  %6525 = vmatmul.bf16.gmra.mxu0 %v6125
  %v6526 = vpop.f32.mrf.mxu0
  %v6527 = vadd.f32 0.0, %v6526
  %v6528 = vpop.f32.mrf.mxu0
  %v6529 = vadd.f32 0.0, %v6528
  %6530 = vmatmul.bf16.gmra.mxu0 %v6128
  %v6531 = vpop.f32.mrf.mxu0
  %v6532 = vadd.f32 0.0, %v6531
  %v6533 = vpop.f32.mrf.mxu0
  %v6534 = vadd.f32 0.0, %v6533
  %6535 = vmatmul.bf16.gmra.mxu0 %v6131
  %v6536 = vpop.f32.mrf.mxu0
  %v6537 = vadd.f32 0.0, %v6536
  %v6538 = vpop.f32.mrf.mxu0
  %v6539 = vadd.f32 0.0, %v6538
  %6540 = vmatmul.bf16.gmra.mxu0 %v6134
  %v6541 = vpop.f32.mrf.mxu0
  %v6542 = vadd.f32 0.0, %v6541
  %v6543 = vpop.f32.mrf.mxu0
  %v6544 = vadd.f32 0.0, %v6543
  %6545 = vdwg.mxu0
  %6546 = vmatpush.bf16.msra.mxu0 %v6398
  %6547 = vmatpush.bf16.msra.mxu0 %v6395
  %6548 = vmatpush.bf16.msra.mxu0 %v6392
  %6549 = vmatpush.bf16.msra.mxu0 %v6389
  %6550 = vmatpush.bf16.msra.mxu0 %v6386
  %6551 = vmatpush.bf16.msra.mxu0 %v6383
  %6552 = vmatpush.bf16.msra.mxu0 %v6380
  %6553 = vmatpush.bf16.msra.mxu0 %v6377
  %6554 = vmatmul.bf16.gmra.mxu0 %v6114
  %v6555 = vpop.f32.mrf.mxu0
  %v6556 = vadd.f32 %v6507, %v6555
  %v6557 = vpop.f32.mrf.mxu0
  %v6558 = vadd.f32 %v6509, %v6557
  %6559 = vmatmul.bf16.gmra.mxu0 %v6117
  %v6560 = vpop.f32.mrf.mxu0
  %v6561 = vadd.f32 %v6512, %v6560
  %v6562 = vpop.f32.mrf.mxu0
  %v6563 = vadd.f32 %v6514, %v6562
  %6564 = vmatmul.bf16.gmra.mxu0 %v6120
  %v6565 = vpop.f32.mrf.mxu0
  %v6566 = vadd.f32 %v6517, %v6565
  %v6567 = vpop.f32.mrf.mxu0
  %v6568 = vadd.f32 %v6519, %v6567
  %6569 = vmatmul.bf16.gmra.mxu0 %v6123
  %v6570 = vpop.f32.mrf.mxu0
  %v6571 = vadd.f32 %v6522, %v6570
  %v6572 = vpop.f32.mrf.mxu0
  %v6573 = vadd.f32 %v6524, %v6572
  %6574 = vmatmul.bf16.gmra.mxu0 %v6126
  %v6575 = vpop.f32.mrf.mxu0
  %v6576 = vadd.f32 %v6527, %v6575
  %v6577 = vpop.f32.mrf.mxu0
  %v6578 = vadd.f32 %v6529, %v6577
  %6579 = vmatmul.bf16.gmra.mxu0 %v6129
  %v6580 = vpop.f32.mrf.mxu0
  %v6581 = vadd.f32 %v6532, %v6580
  %v6582 = vpop.f32.mrf.mxu0
  %v6583 = vadd.f32 %v6534, %v6582
  %6584 = vmatmul.bf16.gmra.mxu0 %v6132
  %v6585 = vpop.f32.mrf.mxu0
  %v6586 = vadd.f32 %v6537, %v6585
  %v6587 = vpop.f32.mrf.mxu0
  %v6588 = vadd.f32 %v6539, %v6587
  %6589 = vmatmul.bf16.gmra.mxu0 %v6135
  %v6590 = vpop.f32.mrf.mxu0
  %v6591 = vadd.f32 %v6542, %v6590
  %v6592 = vpop.f32.mrf.mxu0
  %v6593 = vadd.f32 %v6544, %v6592
  %6594 = vdwg.mxu0
  %6595 = vmatpush.bf16.msra.mxu0 0
  %6596 = vmatpush.bf16.msra.mxu0 0
  %6597 = vmatpush.bf16.msra.mxu0 0
  %6598 = vmatpush.bf16.msra.mxu0 0
  %6599 = vmatpush.bf16.msra.mxu0 %v6410
  %6600 = vmatpush.bf16.msra.mxu0 %v6407
  %6601 = vmatpush.bf16.msra.mxu0 %v6404
  %6602 = vmatpush.bf16.msra.mxu0 %v6401
  %6603 = vmatmul.bf16.gmra.mxu0 %v6474
  %v6604 = vpop.f32.mrf.mxu0
  %v6605 = vadd.f32 %v6556, %v6604
  %v6606 = vpop.f32.mrf.mxu0
  %v6607 = vadd.f32 %v6558, %v6606
  %6608 = vmatmul.bf16.gmra.mxu0 %v6477
  %v6609 = vpop.f32.mrf.mxu0
  %v6610 = vadd.f32 %v6561, %v6609
  %v6611 = vpop.f32.mrf.mxu0
  %v6612 = vadd.f32 %v6563, %v6611
  %6613 = vmatmul.bf16.gmra.mxu0 %v6480
  %v6614 = vpop.f32.mrf.mxu0
  %v6615 = vadd.f32 %v6566, %v6614
  %v6616 = vpop.f32.mrf.mxu0
  %v6617 = vadd.f32 %v6568, %v6616
  %6618 = vmatmul.bf16.gmra.mxu0 %v6483
  %v6619 = vpop.f32.mrf.mxu0
  %v6620 = vadd.f32 %v6571, %v6619
  %v6621 = vpop.f32.mrf.mxu0
  %v6622 = vadd.f32 %v6573, %v6621
  %6623 = vmatmul.bf16.gmra.mxu0 %v6486
  %v6624 = vpop.f32.mrf.mxu0
  %v6625 = vadd.f32 %v6576, %v6624
  %v6626 = vpop.f32.mrf.mxu0
  %v6627 = vadd.f32 %v6578, %v6626
  %6628 = vmatmul.bf16.gmra.mxu0 %v6489
  %v6629 = vpop.f32.mrf.mxu0
  %v6630 = vadd.f32 %v6581, %v6629
  %v6631 = vpop.f32.mrf.mxu0
  %v6632 = vadd.f32 %v6583, %v6631
  %6633 = vmatmul.bf16.gmra.mxu0 %v6492
  %v6634 = vpop.f32.mrf.mxu0
  %v6635 = vadd.f32 %v6586, %v6634
  %v6636 = vpop.f32.mrf.mxu0
  %v6637 = vadd.f32 %v6588, %v6636
  %6638 = vmatmul.bf16.gmra.mxu0 %v6495
  %v6639 = vpop.f32.mrf.mxu0
  %v6640 = vadd.f32 %v6591, %v6639
  %v6641 = vpop.f32.mrf.mxu0
  %v6642 = vadd.f32 %v6593, %v6641
  %6643 = vdwg.mxu0
  %6644 = vmatpush.bf16.msra.mxu0 %v6375
  %6645 = vmatpush.bf16.msra.mxu0 %v6372
  %6646 = vmatpush.bf16.msra.mxu0 %v6369
  %6647 = vmatpush.bf16.msra.mxu0 %v6366
  %6648 = vmatpush.bf16.msra.mxu0 %v6363
  %6649 = vmatpush.bf16.msra.mxu0 %v6360
  %6650 = vmatpush.bf16.msra.mxu0 %v6357
  %6651 = vmatpush.bf16.msra.mxu0 %v6354
  %6652 = vmatmul.bf16.gmra.mxu0 %v6113
  %v6653 = vpop.f32.mrf.mxu0
  %v6654 = vadd.f32 0.0, %v6653
  %v6655 = vpop.f32.mrf.mxu0
  %v6656 = vadd.f32 0.0, %v6655
  %6657 = vmatmul.bf16.gmra.mxu0 %v6116
  %v6658 = vpop.f32.mrf.mxu0
  %v6659 = vadd.f32 0.0, %v6658
  %v6660 = vpop.f32.mrf.mxu0
  %v6661 = vadd.f32 0.0, %v6660
  %6662 = vmatmul.bf16.gmra.mxu0 %v6119
  %v6663 = vpop.f32.mrf.mxu0
  %v6664 = vadd.f32 0.0, %v6663
  %v6665 = vpop.f32.mrf.mxu0
  %v6666 = vadd.f32 0.0, %v6665
  %6667 = vmatmul.bf16.gmra.mxu0 %v6122
  %v6668 = vpop.f32.mrf.mxu0
  %v6669 = vadd.f32 0.0, %v6668
  %v6670 = vpop.f32.mrf.mxu0
  %v6671 = vadd.f32 0.0, %v6670
  %6672 = vmatmul.bf16.gmra.mxu0 %v6125
  %v6673 = vpop.f32.mrf.mxu0
  %v6674 = vadd.f32 0.0, %v6673
  %v6675 = vpop.f32.mrf.mxu0
  %v6676 = vadd.f32 0.0, %v6675
  %6677 = vmatmul.bf16.gmra.mxu0 %v6128
  %v6678 = vpop.f32.mrf.mxu0
  %v6679 = vadd.f32 0.0, %v6678
  %v6680 = vpop.f32.mrf.mxu0
  %v6681 = vadd.f32 0.0, %v6680
  %6682 = vmatmul.bf16.gmra.mxu0 %v6131
  %v6683 = vpop.f32.mrf.mxu0
  %v6684 = vadd.f32 0.0, %v6683
  %v6685 = vpop.f32.mrf.mxu0
  %v6686 = vadd.f32 0.0, %v6685
  %6687 = vmatmul.bf16.gmra.mxu0 %v6134
  %v6688 = vpop.f32.mrf.mxu0
  %v6689 = vadd.f32 0.0, %v6688
  %v6690 = vpop.f32.mrf.mxu0
  %v6691 = vadd.f32 0.0, %v6690
  %6692 = vdwg.mxu0
  %6693 = vmatpush.bf16.msra.mxu0 %v6399
  %6694 = vmatpush.bf16.msra.mxu0 %v6396
  %6695 = vmatpush.bf16.msra.mxu0 %v6393
  %6696 = vmatpush.bf16.msra.mxu0 %v6390
  %6697 = vmatpush.bf16.msra.mxu0 %v6387
  %6698 = vmatpush.bf16.msra.mxu0 %v6384
  %6699 = vmatpush.bf16.msra.mxu0 %v6381
  %6700 = vmatpush.bf16.msra.mxu0 %v6378
  %6701 = vmatmul.bf16.gmra.mxu0 %v6114
  %v6702 = vpop.f32.mrf.mxu0
  %v6703 = vadd.f32 %v6654, %v6702
  %v6704 = vpop.f32.mrf.mxu0
  %v6705 = vadd.f32 %v6656, %v6704
  %6706 = vmatmul.bf16.gmra.mxu0 %v6117
  %v6707 = vpop.f32.mrf.mxu0
  %v6708 = vadd.f32 %v6659, %v6707
  %v6709 = vpop.f32.mrf.mxu0
  %v6710 = vadd.f32 %v6661, %v6709
  %6711 = vmatmul.bf16.gmra.mxu0 %v6120
  %v6712 = vpop.f32.mrf.mxu0
  %v6713 = vadd.f32 %v6664, %v6712
  %v6714 = vpop.f32.mrf.mxu0
  %v6715 = vadd.f32 %v6666, %v6714
  %6716 = vmatmul.bf16.gmra.mxu0 %v6123
  %v6717 = vpop.f32.mrf.mxu0
  %v6718 = vadd.f32 %v6669, %v6717
  %v6719 = vpop.f32.mrf.mxu0
  %v6720 = vadd.f32 %v6671, %v6719
  %6721 = vmatmul.bf16.gmra.mxu0 %v6126
  %v6722 = vpop.f32.mrf.mxu0
  %v6723 = vadd.f32 %v6674, %v6722
  %v6724 = vpop.f32.mrf.mxu0
  %v6725 = vadd.f32 %v6676, %v6724
  %6726 = vmatmul.bf16.gmra.mxu0 %v6129
  %v6727 = vpop.f32.mrf.mxu0
  %v6728 = vadd.f32 %v6679, %v6727
  %v6729 = vpop.f32.mrf.mxu0
  %v6730 = vadd.f32 %v6681, %v6729
  %6731 = vmatmul.bf16.gmra.mxu0 %v6132
  %v6732 = vpop.f32.mrf.mxu0
  %v6733 = vadd.f32 %v6684, %v6732
  %v6734 = vpop.f32.mrf.mxu0
  %v6735 = vadd.f32 %v6686, %v6734
  %6736 = vmatmul.bf16.gmra.mxu0 %v6135
  %v6737 = vpop.f32.mrf.mxu0
  %v6738 = vadd.f32 %v6689, %v6737
  %v6739 = vpop.f32.mrf.mxu0
  %v6740 = vadd.f32 %v6691, %v6739
  %6741 = vdwg.mxu0
  %6742 = vmatpush.bf16.msra.mxu0 0
  %6743 = vmatpush.bf16.msra.mxu0 0
  %6744 = vmatpush.bf16.msra.mxu0 0
  %6745 = vmatpush.bf16.msra.mxu0 0
  %6746 = vmatpush.bf16.msra.mxu0 %v6411
  %6747 = vmatpush.bf16.msra.mxu0 %v6408
  %6748 = vmatpush.bf16.msra.mxu0 %v6405
  %6749 = vmatpush.bf16.msra.mxu0 %v6402
  %6750 = vmatmul.bf16.gmra.mxu0 %v6474
  %v6751 = vpop.f32.mrf.mxu0
  %v6752 = vadd.f32 %v6703, %v6751
  %v6753 = vpop.f32.mrf.mxu0
  %v6754 = vadd.f32 %v6705, %v6753
  %6755 = vmatmul.bf16.gmra.mxu0 %v6477
  %v6756 = vpop.f32.mrf.mxu0
  %v6757 = vadd.f32 %v6708, %v6756
  %v6758 = vpop.f32.mrf.mxu0
  %v6759 = vadd.f32 %v6710, %v6758
  %6760 = vmatmul.bf16.gmra.mxu0 %v6480
  %v6761 = vpop.f32.mrf.mxu0
  %v6762 = vadd.f32 %v6713, %v6761
  %v6763 = vpop.f32.mrf.mxu0
  %v6764 = vadd.f32 %v6715, %v6763
  %6765 = vmatmul.bf16.gmra.mxu0 %v6483
  %v6766 = vpop.f32.mrf.mxu0
  %v6767 = vadd.f32 %v6718, %v6766
  %v6768 = vpop.f32.mrf.mxu0
  %v6769 = vadd.f32 %v6720, %v6768
  %6770 = vmatmul.bf16.gmra.mxu0 %v6486
  %v6771 = vpop.f32.mrf.mxu0
  %v6772 = vadd.f32 %v6723, %v6771
  %v6773 = vpop.f32.mrf.mxu0
  %v6774 = vadd.f32 %v6725, %v6773
  %6775 = vmatmul.bf16.gmra.mxu0 %v6489
  %v6776 = vpop.f32.mrf.mxu0
  %v6777 = vadd.f32 %v6728, %v6776
  %v6778 = vpop.f32.mrf.mxu0
  %v6779 = vadd.f32 %v6730, %v6778
  %6780 = vmatmul.bf16.gmra.mxu0 %v6492
  %v6781 = vpop.f32.mrf.mxu0
  %v6782 = vadd.f32 %v6733, %v6781
  %v6783 = vpop.f32.mrf.mxu0
  %v6784 = vadd.f32 %v6735, %v6783
  %6785 = vmatmul.bf16.gmra.mxu0 %v6495
  %v6786 = vpop.f32.mrf.mxu0
  %v6787 = vadd.f32 %v6738, %v6786
  %v6788 = vpop.f32.mrf.mxu0
  %v6789 = vadd.f32 %v6740, %v6788
  %6790 = vdwg.mxu0
  %6791 = vmatpush.bf16.msra.mxu0 %v6376
  %6792 = vmatpush.bf16.msra.mxu0 %v6373
  %6793 = vmatpush.bf16.msra.mxu0 %v6370
  %6794 = vmatpush.bf16.msra.mxu0 %v6367
  %6795 = vmatpush.bf16.msra.mxu0 %v6364
  %6796 = vmatpush.bf16.msra.mxu0 %v6361
  %6797 = vmatpush.bf16.msra.mxu0 %v6358
  %6798 = vmatpush.bf16.msra.mxu0 %v6355
  %6799 = vmatmul.bf16.gmra.mxu0 %v6113
  %v6800 = vpop.f32.mrf.mxu0
  %v6801 = vadd.f32 0.0, %v6800
  %v6802 = vpop.f32.mrf.mxu0
  %v6803 = vadd.f32 0.0, %v6802
  %6804 = vmatmul.bf16.gmra.mxu0 %v6116
  %v6805 = vpop.f32.mrf.mxu0
  %v6806 = vadd.f32 0.0, %v6805
  %v6807 = vpop.f32.mrf.mxu0
  %v6808 = vadd.f32 0.0, %v6807
  %6809 = vmatmul.bf16.gmra.mxu0 %v6119
  %v6810 = vpop.f32.mrf.mxu0
  %v6811 = vadd.f32 0.0, %v6810
  %v6812 = vpop.f32.mrf.mxu0
  %v6813 = vadd.f32 0.0, %v6812
  %6814 = vmatmul.bf16.gmra.mxu0 %v6122
  %v6815 = vpop.f32.mrf.mxu0
  %v6816 = vadd.f32 0.0, %v6815
  %v6817 = vpop.f32.mrf.mxu0
  %v6818 = vadd.f32 0.0, %v6817
  %6819 = vmatmul.bf16.gmra.mxu0 %v6125
  %v6820 = vpop.f32.mrf.mxu0
  %v6821 = vadd.f32 0.0, %v6820
  %v6822 = vpop.f32.mrf.mxu0
  %v6823 = vadd.f32 0.0, %v6822
  %6824 = vmatmul.bf16.gmra.mxu0 %v6128
  %v6825 = vpop.f32.mrf.mxu0
  %v6826 = vadd.f32 0.0, %v6825
  %v6827 = vpop.f32.mrf.mxu0
  %v6828 = vadd.f32 0.0, %v6827
  %6829 = vmatmul.bf16.gmra.mxu0 %v6131
  %v6830 = vpop.f32.mrf.mxu0
  %v6831 = vadd.f32 0.0, %v6830
  %v6832 = vpop.f32.mrf.mxu0
  %v6833 = vadd.f32 0.0, %v6832
  %6834 = vmatmul.bf16.gmra.mxu0 %v6134
  %v6835 = vpop.f32.mrf.mxu0
  %v6836 = vadd.f32 0.0, %v6835
  %v6837 = vpop.f32.mrf.mxu0
  %v6838 = vadd.f32 0.0, %v6837
  %6839 = vdwg.mxu0
  %6840 = vmatpush.bf16.msra.mxu0 %v6400
  %6841 = vmatpush.bf16.msra.mxu0 %v6397
  %6842 = vmatpush.bf16.msra.mxu0 %v6394
  %6843 = vmatpush.bf16.msra.mxu0 %v6391
  %6844 = vmatpush.bf16.msra.mxu0 %v6388
  %6845 = vmatpush.bf16.msra.mxu0 %v6385
  %6846 = vmatpush.bf16.msra.mxu0 %v6382
  %6847 = vmatpush.bf16.msra.mxu0 %v6379
  %6848 = vmatmul.bf16.gmra.mxu0 %v6114
  %v6849 = vpop.f32.mrf.mxu0
  %v6850 = vadd.f32 %v6801, %v6849
  %v6851 = vpop.f32.mrf.mxu0
  %v6852 = vadd.f32 %v6803, %v6851
  %6853 = vmatmul.bf16.gmra.mxu0 %v6117
  %v6854 = vpop.f32.mrf.mxu0
  %v6855 = vadd.f32 %v6806, %v6854
  %v6856 = vpop.f32.mrf.mxu0
  %v6857 = vadd.f32 %v6808, %v6856
  %6858 = vmatmul.bf16.gmra.mxu0 %v6120
  %v6859 = vpop.f32.mrf.mxu0
  %v6860 = vadd.f32 %v6811, %v6859
  %v6861 = vpop.f32.mrf.mxu0
  %v6862 = vadd.f32 %v6813, %v6861
  %6863 = vmatmul.bf16.gmra.mxu0 %v6123
  %v6864 = vpop.f32.mrf.mxu0
  %v6865 = vadd.f32 %v6816, %v6864
  %v6866 = vpop.f32.mrf.mxu0
  %v6867 = vadd.f32 %v6818, %v6866
  %6868 = vmatmul.bf16.gmra.mxu0 %v6126
  %v6869 = vpop.f32.mrf.mxu0
  %v6870 = vadd.f32 %v6821, %v6869
  %v6871 = vpop.f32.mrf.mxu0
  %v6872 = vadd.f32 %v6823, %v6871
  %6873 = vmatmul.bf16.gmra.mxu0 %v6129
  %v6874 = vpop.f32.mrf.mxu0
  %v6875 = vadd.f32 %v6826, %v6874
  %v6876 = vpop.f32.mrf.mxu0
  %v6877 = vadd.f32 %v6828, %v6876
  %6878 = vmatmul.bf16.gmra.mxu0 %v6132
  %v6879 = vpop.f32.mrf.mxu0
  %v6880 = vadd.f32 %v6831, %v6879
  %v6881 = vpop.f32.mrf.mxu0
  %v6882 = vadd.f32 %v6833, %v6881
  %6883 = vmatmul.bf16.gmra.mxu0 %v6135
  %v6884 = vpop.f32.mrf.mxu0
  %v6885 = vadd.f32 %v6836, %v6884
  %v6886 = vpop.f32.mrf.mxu0
  %v6887 = vadd.f32 %v6838, %v6886
  %6888 = vdwg.mxu0
  %6889 = vmatpush.bf16.msra.mxu0 0
  %6890 = vmatpush.bf16.msra.mxu0 0
  %6891 = vmatpush.bf16.msra.mxu0 0
  %6892 = vmatpush.bf16.msra.mxu0 0
  %6893 = vmatpush.bf16.msra.mxu0 %v6412
  %6894 = vmatpush.bf16.msra.mxu0 %v6409
  %6895 = vmatpush.bf16.msra.mxu0 %v6406
  %6896 = vmatpush.bf16.msra.mxu0 %v6403
  %6897 = vmatmul.bf16.gmra.mxu0 %v6474
  %v6898 = vpop.f32.mrf.mxu0
  %v6899 = vadd.f32 %v6850, %v6898
  %v6900 = vpop.f32.mrf.mxu0
  %v6901 = vadd.f32 %v6852, %v6900
  %6902 = vmatmul.bf16.gmra.mxu0 %v6477
  %v6903 = vpop.f32.mrf.mxu0
  %v6904 = vadd.f32 %v6855, %v6903
  %v6905 = vpop.f32.mrf.mxu0
  %v6906 = vadd.f32 %v6857, %v6905
  %6907 = vmatmul.bf16.gmra.mxu0 %v6480
  %v6908 = vpop.f32.mrf.mxu0
  %v6909 = vadd.f32 %v6860, %v6908
  %v6910 = vpop.f32.mrf.mxu0
  %v6911 = vadd.f32 %v6862, %v6910
  %6912 = vmatmul.bf16.gmra.mxu0 %v6483
  %v6913 = vpop.f32.mrf.mxu0
  %v6914 = vadd.f32 %v6865, %v6913
  %v6915 = vpop.f32.mrf.mxu0
  %v6916 = vadd.f32 %v6867, %v6915
  %6917 = vmatmul.bf16.gmra.mxu0 %v6486
  %v6918 = vpop.f32.mrf.mxu0
  %v6919 = vadd.f32 %v6870, %v6918
  %v6920 = vpop.f32.mrf.mxu0
  %v6921 = vadd.f32 %v6872, %v6920
  %6922 = vmatmul.bf16.gmra.mxu0 %v6489
  %v6923 = vpop.f32.mrf.mxu0
  %v6924 = vadd.f32 %v6875, %v6923
  %v6925 = vpop.f32.mrf.mxu0
  %v6926 = vadd.f32 %v6877, %v6925
  %6927 = vmatmul.bf16.gmra.mxu0 %v6492
  %v6928 = vpop.f32.mrf.mxu0
  %v6929 = vadd.f32 %v6880, %v6928
  %v6930 = vpop.f32.mrf.mxu0
  %v6931 = vadd.f32 %v6882, %v6930
  %6932 = vmatmul.bf16.gmra.mxu0 %v6495
  %v6933 = vpop.f32.mrf.mxu0
  %v6934 = vadd.f32 %v6885, %v6933
  %v6935 = vpop.f32.mrf.mxu0
  %v6936 = vadd.f32 %v6887, %v6935
  %6937 = vdwg.mxu0
  %v6942 = vunpack.c.l.b16 %v5835
  %v6943 = vunpack.c.h.b16 %v5835
  %v6944 = vunpack.c.l.b16 %v5836
  %v6945 = vunpack.c.l.b16 %v5837
  %v6946 = vunpack.c.h.b16 %v5837
  %v6947 = vunpack.c.l.b16 %v5838
  %v6948 = vpack.c.b16 %v6945, %v6942
  %v6949 = vpack.c.b16 %v6946, %v6943
  %v6950 = vpack.c.b16 %v6947, %v6944
  %v7033 = vunpack.c.l.b16 %v5872
  %v7034 = vunpack.c.h.b16 %v5872
  %v7035 = vunpack.c.l.b16 %v5873
  %v7036 = vunpack.c.l.b16 %v5874
  %v7037 = vunpack.c.h.b16 %v5874
  %v7038 = vunpack.c.l.b16 %v5875
  %v7039 = vunpack.c.l.b16 %v5876
  %v7040 = vunpack.c.h.b16 %v5876
  %v7041 = vunpack.c.l.b16 %v5877
  %v7042 = vunpack.c.l.b16 %v5878
  %v7043 = vunpack.c.h.b16 %v5878
  %v7044 = vunpack.c.l.b16 %v5879
  %v7045 = vunpack.c.l.b16 %v5880
  %v7046 = vunpack.c.h.b16 %v5880
  %v7047 = vunpack.c.l.b16 %v5881
  %v7048 = vunpack.c.l.b16 %v5882
  %v7049 = vunpack.c.h.b16 %v5882
  %v7050 = vunpack.c.l.b16 %v5883
  %v7051 = vunpack.c.l.b16 %v5884
  %v7052 = vunpack.c.h.b16 %v5884
  %v7053 = vunpack.c.l.b16 %v5885
  %v7054 = vunpack.c.l.b16 %v5886
  %v7055 = vunpack.c.h.b16 %v5886
  %v7056 = vunpack.c.l.b16 %v5887
  %v7057 = vunpack.c.l.b16 %v5888
  %v7058 = vunpack.c.h.b16 %v5888
  %v7059 = vunpack.c.l.b16 %v5889
  %v7060 = vunpack.c.l.b16 %v5890
  %v7061 = vunpack.c.h.b16 %v5890
  %v7062 = vunpack.c.l.b16 %v5891
  %v7063 = vunpack.c.l.b16 %v5892
  %v7064 = vunpack.c.h.b16 %v5892
  %v7065 = vunpack.c.l.b16 %v5893
  %v7066 = vunpack.c.l.b16 %v5894
  %v7067 = vunpack.c.h.b16 %v5894
  %v7068 = vunpack.c.l.b16 %v5895
  %v7069 = vunpack.c.l.b16 %v5896
  %v7070 = vunpack.c.h.b16 %v5896
  %v7071 = vunpack.c.l.b16 %v5897
  %v7072 = vunpack.c.l.b16 %v5898
  %v7073 = vunpack.c.h.b16 %v5898
  %v7074 = vunpack.c.l.b16 %v5899
  %v7075 = vunpack.c.l.b16 %v5900
  %v7076 = vunpack.c.h.b16 %v5900
  %v7077 = vunpack.c.l.b16 %v5901
  %v7078 = vunpack.c.l.b16 %v5902
  %v7079 = vunpack.c.h.b16 %v5902
  %v7080 = vunpack.c.l.b16 %v5903
  %v7081 = vunpack.c.l.b16 %v5904
  %v7082 = vunpack.c.h.b16 %v5904
  %v7083 = vunpack.c.l.b16 %v5905
  %v7084 = vunpack.c.l.b16 %v5906
  %v7085 = vunpack.c.h.b16 %v5906
  %v7086 = vunpack.c.l.b16 %v5907
  %v7087 = vunpack.c.l.b16 %v5908
  %v7088 = vunpack.c.h.b16 %v5908
  %v7089 = vunpack.c.l.b16 %v5909
  %v7090 = vunpack.c.l.b16 %v5910
  %v7091 = vunpack.c.h.b16 %v5910
  %v7092 = vunpack.c.l.b16 %v5911
  %v7093 = vunpack.c.l.b16 %v5912
  %v7094 = vunpack.c.h.b16 %v5912
  %v7095 = vunpack.c.l.b16 %v5913
  %v7096 = vunpack.c.l.b16 %v5914
  %v7097 = vunpack.c.h.b16 %v5914
  %v7098 = vunpack.c.l.b16 %v5915
  %v7099 = vunpack.c.l.b16 %v5916
  %v7100 = vunpack.c.h.b16 %v5916
  %v7101 = vunpack.c.l.b16 %v5917
  %v7102 = vunpack.c.l.b16 %v5918
  %v7103 = vunpack.c.h.b16 %v5918
  %v7104 = vunpack.c.l.b16 %v5919
  %v7105 = vunpack.c.l.b16 %v5920
  %v7106 = vunpack.c.h.b16 %v5920
  %v7107 = vunpack.c.l.b16 %v5921
  %v7108 = vunpack.c.l.b16 %v5922
  %v7109 = vunpack.c.h.b16 %v5922
  %v7110 = vunpack.c.l.b16 %v5923
  %v7111 = vunpack.c.l.b16 %v5924
  %v7112 = vunpack.c.h.b16 %v5924
  %v7113 = vunpack.c.l.b16 %v5925
  %v7114 = vunpack.c.l.b16 %v5926
  %v7115 = vunpack.c.h.b16 %v5926
  %v7116 = vunpack.c.l.b16 %v5927
  %v7117 = vunpack.c.l.b16 %v5928
  %v7118 = vunpack.c.h.b16 %v5928
  %v7119 = vunpack.c.l.b16 %v5929
  %v7120 = vunpack.c.l.b16 %v5930
  %v7121 = vunpack.c.h.b16 %v5930
  %v7122 = vunpack.c.l.b16 %v5931
  %v7123 = vunpack.c.l.b16 %v5932
  %v7124 = vunpack.c.h.b16 %v5932
  %v7125 = vunpack.c.l.b16 %v5933
  %v7126 = vunpack.c.l.b16 %v5934
  %v7127 = vunpack.c.h.b16 %v5934
  %v7128 = vunpack.c.l.b16 %v5935
  %v7129 = vunpack.c.l.b16 %v5936
  %v7130 = vunpack.c.h.b16 %v5936
  %v7131 = vunpack.c.l.b16 %v5937
  %v7132 = vunpack.c.l.b16 %v5938
  %v7133 = vunpack.c.h.b16 %v5938
  %v7134 = vunpack.c.l.b16 %v5939
  %v7135 = vunpack.c.l.b16 %v5940
  %v7136 = vunpack.c.h.b16 %v5940
  %v7137 = vunpack.c.l.b16 %v5941
  %v7138 = vunpack.c.l.b16 %v5942
  %v7139 = vunpack.c.h.b16 %v5942
  %v7140 = vunpack.c.l.b16 %v5943
  %v7141 = vunpack.c.l.b16 %v5944
  %v7142 = vunpack.c.h.b16 %v5944
  %v7143 = vunpack.c.l.b16 %v5945
  %v7144 = vunpack.c.l.b16 %v5946
  %v7145 = vunpack.c.h.b16 %v5946
  %v7146 = vunpack.c.l.b16 %v5947
  %v7147 = vunpack.c.l.b16 %v5948
  %v7148 = vunpack.c.h.b16 %v5948
  %v7149 = vunpack.c.l.b16 %v5949
  %v7150 = vunpack.c.l.b16 %v5950
  %v7151 = vunpack.c.h.b16 %v5950
  %v7152 = vunpack.c.l.b16 %v5951
  %v7153 = vpack.c.b16 %v7036, %v7033
  %v7154 = vpack.c.b16 %v7037, %v7034
  %v7155 = vpack.c.b16 %v7038, %v7035
  %v7156 = vpack.c.b16 %v7042, %v7039
  %v7157 = vpack.c.b16 %v7043, %v7040
  %v7158 = vpack.c.b16 %v7044, %v7041
  %v7159 = vpack.c.b16 %v7048, %v7045
  %v7160 = vpack.c.b16 %v7049, %v7046
  %v7161 = vpack.c.b16 %v7050, %v7047
  %v7162 = vpack.c.b16 %v7054, %v7051
  %v7163 = vpack.c.b16 %v7055, %v7052
  %v7164 = vpack.c.b16 %v7056, %v7053
  %v7165 = vpack.c.b16 %v7060, %v7057
  %v7166 = vpack.c.b16 %v7061, %v7058
  %v7167 = vpack.c.b16 %v7062, %v7059
  %v7168 = vpack.c.b16 %v7066, %v7063
  %v7169 = vpack.c.b16 %v7067, %v7064
  %v7170 = vpack.c.b16 %v7068, %v7065
  %v7171 = vpack.c.b16 %v7072, %v7069
  %v7172 = vpack.c.b16 %v7073, %v7070
  %v7173 = vpack.c.b16 %v7074, %v7071
  %v7174 = vpack.c.b16 %v7078, %v7075
  %v7175 = vpack.c.b16 %v7079, %v7076
  %v7176 = vpack.c.b16 %v7080, %v7077
  %v7177 = vpack.c.b16 %v7084, %v7081
  %v7178 = vpack.c.b16 %v7085, %v7082
  %v7179 = vpack.c.b16 %v7086, %v7083
  %v7180 = vpack.c.b16 %v7090, %v7087
  %v7181 = vpack.c.b16 %v7091, %v7088
  %v7182 = vpack.c.b16 %v7092, %v7089
  %v7183 = vpack.c.b16 %v7096, %v7093
  %v7184 = vpack.c.b16 %v7097, %v7094
  %v7185 = vpack.c.b16 %v7098, %v7095
  %v7186 = vpack.c.b16 %v7102, %v7099
  %v7187 = vpack.c.b16 %v7103, %v7100
  %v7188 = vpack.c.b16 %v7104, %v7101
  %v7189 = vpack.c.b16 %v7108, %v7105
  %v7190 = vpack.c.b16 %v7109, %v7106
  %v7191 = vpack.c.b16 %v7110, %v7107
  %v7192 = vpack.c.b16 %v7114, %v7111
  %v7193 = vpack.c.b16 %v7115, %v7112
  %v7194 = vpack.c.b16 %v7116, %v7113
  %v7195 = vpack.c.b16 %v7120, %v7117
  %v7196 = vpack.c.b16 %v7121, %v7118
  %v7197 = vpack.c.b16 %v7122, %v7119
  %v7198 = vpack.c.b16 %v7126, %v7123
  %v7199 = vpack.c.b16 %v7127, %v7124
  %v7200 = vpack.c.b16 %v7128, %v7125
  %v7201 = vpack.c.b16 %v7132, %v7129
  %v7202 = vpack.c.b16 %v7133, %v7130
  %v7203 = vpack.c.b16 %v7134, %v7131
  %v7204 = vpack.c.b16 %v7138, %v7135
  %v7205 = vpack.c.b16 %v7139, %v7136
  %v7206 = vpack.c.b16 %v7140, %v7137
  %v7207 = vpack.c.b16 %v7144, %v7141
  %v7208 = vpack.c.b16 %v7145, %v7142
  %v7209 = vpack.c.b16 %v7146, %v7143
  %v7210 = vpack.c.b16 %v7150, %v7147
  %v7211 = vpack.c.b16 %v7151, %v7148
  %v7212 = vpack.c.b16 %v7152, %v7149
  %v7274 = vsel %vm4423, %v6950, 0
  %7276 = vmatpush.bf16.msra.mxu0 %v7174
  %7277 = vmatpush.bf16.msra.mxu0 %v7171
  %7278 = vmatpush.bf16.msra.mxu0 %v7168
  %7279 = vmatpush.bf16.msra.mxu0 %v7165
  %7280 = vmatpush.bf16.msra.mxu0 %v7162
  %7281 = vmatpush.bf16.msra.mxu0 %v7159
  %7282 = vmatpush.bf16.msra.mxu0 %v7156
  %7283 = vmatpush.bf16.msra.mxu0 %v7153
  %7284 = vmatmul.bf16.gmra.mxu0 %v6948
  %v7285 = vpop.f32.mrf.mxu0
  %v7286 = vadd.f32 %v6605, %v7285
  %v7287 = vpop.f32.mrf.mxu0
  %v7288 = vadd.f32 %v6607, %v7287
  %7289 = vmatmul.bf16.gmra.mxu0 %v6113
  %v7290 = vpop.f32.mrf.mxu0
  %v7291 = vadd.f32 %v6610, %v7290
  %v7292 = vpop.f32.mrf.mxu0
  %v7293 = vadd.f32 %v6612, %v7292
  %7294 = vmatmul.bf16.gmra.mxu0 %v6116
  %v7295 = vpop.f32.mrf.mxu0
  %v7296 = vadd.f32 %v6615, %v7295
  %v7297 = vpop.f32.mrf.mxu0
  %v7298 = vadd.f32 %v6617, %v7297
  %7299 = vmatmul.bf16.gmra.mxu0 %v6119
  %v7300 = vpop.f32.mrf.mxu0
  %v7301 = vadd.f32 %v6620, %v7300
  %v7302 = vpop.f32.mrf.mxu0
  %v7303 = vadd.f32 %v6622, %v7302
  %7304 = vmatmul.bf16.gmra.mxu0 %v6122
  %v7305 = vpop.f32.mrf.mxu0
  %v7306 = vadd.f32 %v6625, %v7305
  %v7307 = vpop.f32.mrf.mxu0
  %v7308 = vadd.f32 %v6627, %v7307
  %7309 = vmatmul.bf16.gmra.mxu0 %v6125
  %v7310 = vpop.f32.mrf.mxu0
  %v7311 = vadd.f32 %v6630, %v7310
  %v7312 = vpop.f32.mrf.mxu0
  %v7313 = vadd.f32 %v6632, %v7312
  %7314 = vmatmul.bf16.gmra.mxu0 %v6128
  %v7315 = vpop.f32.mrf.mxu0
  %v7316 = vadd.f32 %v6635, %v7315
  %v7317 = vpop.f32.mrf.mxu0
  %v7318 = vadd.f32 %v6637, %v7317
  %7319 = vmatmul.bf16.gmra.mxu0 %v6131
  %v7320 = vpop.f32.mrf.mxu0
  %v7321 = vadd.f32 %v6640, %v7320
  %v7322 = vpop.f32.mrf.mxu0
  %v7323 = vadd.f32 %v6642, %v7322
  %7324 = vdwg.mxu0
  %7325 = vmatpush.bf16.msra.mxu0 %v7198
  %7326 = vmatpush.bf16.msra.mxu0 %v7195
  %7327 = vmatpush.bf16.msra.mxu0 %v7192
  %7328 = vmatpush.bf16.msra.mxu0 %v7189
  %7329 = vmatpush.bf16.msra.mxu0 %v7186
  %7330 = vmatpush.bf16.msra.mxu0 %v7183
  %7331 = vmatpush.bf16.msra.mxu0 %v7180
  %7332 = vmatpush.bf16.msra.mxu0 %v7177
  %7333 = vmatmul.bf16.gmra.mxu0 %v6949
  %v7334 = vpop.f32.mrf.mxu0
  %v7335 = vadd.f32 %v7286, %v7334
  %v7336 = vpop.f32.mrf.mxu0
  %v7337 = vadd.f32 %v7288, %v7336
  %7338 = vmatmul.bf16.gmra.mxu0 %v6114
  %v7339 = vpop.f32.mrf.mxu0
  %v7340 = vadd.f32 %v7291, %v7339
  %v7341 = vpop.f32.mrf.mxu0
  %v7342 = vadd.f32 %v7293, %v7341
  %7343 = vmatmul.bf16.gmra.mxu0 %v6117
  %v7344 = vpop.f32.mrf.mxu0
  %v7345 = vadd.f32 %v7296, %v7344
  %v7346 = vpop.f32.mrf.mxu0
  %v7347 = vadd.f32 %v7298, %v7346
  %7348 = vmatmul.bf16.gmra.mxu0 %v6120
  %v7349 = vpop.f32.mrf.mxu0
  %v7350 = vadd.f32 %v7301, %v7349
  %v7351 = vpop.f32.mrf.mxu0
  %v7352 = vadd.f32 %v7303, %v7351
  %7353 = vmatmul.bf16.gmra.mxu0 %v6123
  %v7354 = vpop.f32.mrf.mxu0
  %v7355 = vadd.f32 %v7306, %v7354
  %v7356 = vpop.f32.mrf.mxu0
  %v7357 = vadd.f32 %v7308, %v7356
  %7358 = vmatmul.bf16.gmra.mxu0 %v6126
  %v7359 = vpop.f32.mrf.mxu0
  %v7360 = vadd.f32 %v7311, %v7359
  %v7361 = vpop.f32.mrf.mxu0
  %v7362 = vadd.f32 %v7313, %v7361
  %7363 = vmatmul.bf16.gmra.mxu0 %v6129
  %v7364 = vpop.f32.mrf.mxu0
  %v7365 = vadd.f32 %v7316, %v7364
  %v7366 = vpop.f32.mrf.mxu0
  %v7367 = vadd.f32 %v7318, %v7366
  %7368 = vmatmul.bf16.gmra.mxu0 %v6132
  %v7369 = vpop.f32.mrf.mxu0
  %v7370 = vadd.f32 %v7321, %v7369
  %v7371 = vpop.f32.mrf.mxu0
  %v7372 = vadd.f32 %v7323, %v7371
  %7373 = vdwg.mxu0
  %7374 = vmatpush.bf16.msra.mxu0 0
  %7375 = vmatpush.bf16.msra.mxu0 0
  %7376 = vmatpush.bf16.msra.mxu0 0
  %7377 = vmatpush.bf16.msra.mxu0 0
  %7378 = vmatpush.bf16.msra.mxu0 %v7210
  %7379 = vmatpush.bf16.msra.mxu0 %v7207
  %7380 = vmatpush.bf16.msra.mxu0 %v7204
  %7381 = vmatpush.bf16.msra.mxu0 %v7201
  %7382 = vmatmul.bf16.gmra.mxu0 %v7274
  %v7383 = vpop.f32.mrf.mxu0
  %v7384 = vadd.f32 %v7335, %v7383
  %v7385 = vpop.f32.mrf.mxu0
  %v7386 = vadd.f32 %v7337, %v7385
  %7387 = vmatmul.bf16.gmra.mxu0 %v6474
  %v7388 = vpop.f32.mrf.mxu0
  %v7389 = vadd.f32 %v7340, %v7388
  %v7390 = vpop.f32.mrf.mxu0
  %v7391 = vadd.f32 %v7342, %v7390
  %7392 = vmatmul.bf16.gmra.mxu0 %v6477
  %v7393 = vpop.f32.mrf.mxu0
  %v7394 = vadd.f32 %v7345, %v7393
  %v7395 = vpop.f32.mrf.mxu0
  %v7396 = vadd.f32 %v7347, %v7395
  %7397 = vmatmul.bf16.gmra.mxu0 %v6480
  %v7398 = vpop.f32.mrf.mxu0
  %v7399 = vadd.f32 %v7350, %v7398
  %v7400 = vpop.f32.mrf.mxu0
  %v7401 = vadd.f32 %v7352, %v7400
  %7402 = vmatmul.bf16.gmra.mxu0 %v6483
  %v7403 = vpop.f32.mrf.mxu0
  %v7404 = vadd.f32 %v7355, %v7403
  %v7405 = vpop.f32.mrf.mxu0
  %v7406 = vadd.f32 %v7357, %v7405
  %7407 = vmatmul.bf16.gmra.mxu0 %v6486
  %v7408 = vpop.f32.mrf.mxu0
  %v7409 = vadd.f32 %v7360, %v7408
  %v7410 = vpop.f32.mrf.mxu0
  %v7411 = vadd.f32 %v7362, %v7410
  %7412 = vmatmul.bf16.gmra.mxu0 %v6489
  %v7413 = vpop.f32.mrf.mxu0
  %v7414 = vadd.f32 %v7365, %v7413
  %v7415 = vpop.f32.mrf.mxu0
  %v7416 = vadd.f32 %v7367, %v7415
  %7417 = vmatmul.bf16.gmra.mxu0 %v6492
  %v7418 = vpop.f32.mrf.mxu0
  %v7419 = vadd.f32 %v7370, %v7418
  %v7420 = vpop.f32.mrf.mxu0
  %v7421 = vadd.f32 %v7372, %v7420
  %7422 = vdwg.mxu0
  %7423 = vmatpush.bf16.msra.mxu0 %v7175
  %7424 = vmatpush.bf16.msra.mxu0 %v7172
  %7425 = vmatpush.bf16.msra.mxu0 %v7169
  %7426 = vmatpush.bf16.msra.mxu0 %v7166
  %7427 = vmatpush.bf16.msra.mxu0 %v7163
  %7428 = vmatpush.bf16.msra.mxu0 %v7160
  %7429 = vmatpush.bf16.msra.mxu0 %v7157
  %7430 = vmatpush.bf16.msra.mxu0 %v7154
  %7431 = vmatmul.bf16.gmra.mxu0 %v6948
  %v7432 = vpop.f32.mrf.mxu0
  %v7433 = vadd.f32 %v6752, %v7432
  %v7434 = vpop.f32.mrf.mxu0
  %v7435 = vadd.f32 %v6754, %v7434
  %7436 = vmatmul.bf16.gmra.mxu0 %v6113
  %v7437 = vpop.f32.mrf.mxu0
  %v7438 = vadd.f32 %v6757, %v7437
  %v7439 = vpop.f32.mrf.mxu0
  %v7440 = vadd.f32 %v6759, %v7439
  %7441 = vmatmul.bf16.gmra.mxu0 %v6116
  %v7442 = vpop.f32.mrf.mxu0
  %v7443 = vadd.f32 %v6762, %v7442
  %v7444 = vpop.f32.mrf.mxu0
  %v7445 = vadd.f32 %v6764, %v7444
  %7446 = vmatmul.bf16.gmra.mxu0 %v6119
  %v7447 = vpop.f32.mrf.mxu0
  %v7448 = vadd.f32 %v6767, %v7447
  %v7449 = vpop.f32.mrf.mxu0
  %v7450 = vadd.f32 %v6769, %v7449
  %7451 = vmatmul.bf16.gmra.mxu0 %v6122
  %v7452 = vpop.f32.mrf.mxu0
  %v7453 = vadd.f32 %v6772, %v7452
  %v7454 = vpop.f32.mrf.mxu0
  %v7455 = vadd.f32 %v6774, %v7454
  %7456 = vmatmul.bf16.gmra.mxu0 %v6125
  %v7457 = vpop.f32.mrf.mxu0
  %v7458 = vadd.f32 %v6777, %v7457
  %v7459 = vpop.f32.mrf.mxu0
  %v7460 = vadd.f32 %v6779, %v7459
  %7461 = vmatmul.bf16.gmra.mxu0 %v6128
  %v7462 = vpop.f32.mrf.mxu0
  %v7463 = vadd.f32 %v6782, %v7462
  %v7464 = vpop.f32.mrf.mxu0
  %v7465 = vadd.f32 %v6784, %v7464
  %7466 = vmatmul.bf16.gmra.mxu0 %v6131
  %v7467 = vpop.f32.mrf.mxu0
  %v7468 = vadd.f32 %v6787, %v7467
  %v7469 = vpop.f32.mrf.mxu0
  %v7470 = vadd.f32 %v6789, %v7469
  %7471 = vdwg.mxu0
  %7472 = vmatpush.bf16.msra.mxu0 %v7199
  %7473 = vmatpush.bf16.msra.mxu0 %v7196
  %7474 = vmatpush.bf16.msra.mxu0 %v7193
  %7475 = vmatpush.bf16.msra.mxu0 %v7190
  %7476 = vmatpush.bf16.msra.mxu0 %v7187
  %7477 = vmatpush.bf16.msra.mxu0 %v7184
  %7478 = vmatpush.bf16.msra.mxu0 %v7181
  %7479 = vmatpush.bf16.msra.mxu0 %v7178
  %7480 = vmatmul.bf16.gmra.mxu0 %v6949
  %v7481 = vpop.f32.mrf.mxu0
  %v7482 = vadd.f32 %v7433, %v7481
  %v7483 = vpop.f32.mrf.mxu0
  %v7484 = vadd.f32 %v7435, %v7483
  %7485 = vmatmul.bf16.gmra.mxu0 %v6114
  %v7486 = vpop.f32.mrf.mxu0
  %v7487 = vadd.f32 %v7438, %v7486
  %v7488 = vpop.f32.mrf.mxu0
  %v7489 = vadd.f32 %v7440, %v7488
  %7490 = vmatmul.bf16.gmra.mxu0 %v6117
  %v7491 = vpop.f32.mrf.mxu0
  %v7492 = vadd.f32 %v7443, %v7491
  %v7493 = vpop.f32.mrf.mxu0
  %v7494 = vadd.f32 %v7445, %v7493
  %7495 = vmatmul.bf16.gmra.mxu0 %v6120
  %v7496 = vpop.f32.mrf.mxu0
  %v7497 = vadd.f32 %v7448, %v7496
  %v7498 = vpop.f32.mrf.mxu0
  %v7499 = vadd.f32 %v7450, %v7498
  %7500 = vmatmul.bf16.gmra.mxu0 %v6123
  %v7501 = vpop.f32.mrf.mxu0
  %v7502 = vadd.f32 %v7453, %v7501
  %v7503 = vpop.f32.mrf.mxu0
  %v7504 = vadd.f32 %v7455, %v7503
  %7505 = vmatmul.bf16.gmra.mxu0 %v6126
  %v7506 = vpop.f32.mrf.mxu0
  %v7507 = vadd.f32 %v7458, %v7506
  %v7508 = vpop.f32.mrf.mxu0
  %v7509 = vadd.f32 %v7460, %v7508
  %7510 = vmatmul.bf16.gmra.mxu0 %v6129
  %v7511 = vpop.f32.mrf.mxu0
  %v7512 = vadd.f32 %v7463, %v7511
  %v7513 = vpop.f32.mrf.mxu0
  %v7514 = vadd.f32 %v7465, %v7513
  %7515 = vmatmul.bf16.gmra.mxu0 %v6132
  %v7516 = vpop.f32.mrf.mxu0
  %v7517 = vadd.f32 %v7468, %v7516
  %v7518 = vpop.f32.mrf.mxu0
  %v7519 = vadd.f32 %v7470, %v7518
  %7520 = vdwg.mxu0
  %7521 = vmatpush.bf16.msra.mxu0 0
  %7522 = vmatpush.bf16.msra.mxu0 0
  %7523 = vmatpush.bf16.msra.mxu0 0
  %7524 = vmatpush.bf16.msra.mxu0 0
  %7525 = vmatpush.bf16.msra.mxu0 %v7211
  %7526 = vmatpush.bf16.msra.mxu0 %v7208
  %7527 = vmatpush.bf16.msra.mxu0 %v7205
  %7528 = vmatpush.bf16.msra.mxu0 %v7202
  %7529 = vmatmul.bf16.gmra.mxu0 %v7274
  %v7530 = vpop.f32.mrf.mxu0
  %v7531 = vadd.f32 %v7482, %v7530
  %v7532 = vpop.f32.mrf.mxu0
  %v7533 = vadd.f32 %v7484, %v7532
  %7534 = vmatmul.bf16.gmra.mxu0 %v6474
  %v7535 = vpop.f32.mrf.mxu0
  %v7536 = vadd.f32 %v7487, %v7535
  %v7537 = vpop.f32.mrf.mxu0
  %v7538 = vadd.f32 %v7489, %v7537
  %7539 = vmatmul.bf16.gmra.mxu0 %v6477
  %v7540 = vpop.f32.mrf.mxu0
  %v7541 = vadd.f32 %v7492, %v7540
  %v7542 = vpop.f32.mrf.mxu0
  %v7543 = vadd.f32 %v7494, %v7542
  %7544 = vmatmul.bf16.gmra.mxu0 %v6480
  %v7545 = vpop.f32.mrf.mxu0
  %v7546 = vadd.f32 %v7497, %v7545
  %v7547 = vpop.f32.mrf.mxu0
  %v7548 = vadd.f32 %v7499, %v7547
  %7549 = vmatmul.bf16.gmra.mxu0 %v6483
  %v7550 = vpop.f32.mrf.mxu0
  %v7551 = vadd.f32 %v7502, %v7550
  %v7552 = vpop.f32.mrf.mxu0
  %v7553 = vadd.f32 %v7504, %v7552
  %7554 = vmatmul.bf16.gmra.mxu0 %v6486
  %v7555 = vpop.f32.mrf.mxu0
  %v7556 = vadd.f32 %v7507, %v7555
  %v7557 = vpop.f32.mrf.mxu0
  %v7558 = vadd.f32 %v7509, %v7557
  %7559 = vmatmul.bf16.gmra.mxu0 %v6489
  %v7560 = vpop.f32.mrf.mxu0
  %v7561 = vadd.f32 %v7512, %v7560
  %v7562 = vpop.f32.mrf.mxu0
  %v7563 = vadd.f32 %v7514, %v7562
  %7564 = vmatmul.bf16.gmra.mxu0 %v6492
  %v7565 = vpop.f32.mrf.mxu0
  %v7566 = vadd.f32 %v7517, %v7565
  %v7567 = vpop.f32.mrf.mxu0
  %v7568 = vadd.f32 %v7519, %v7567
  %7569 = vdwg.mxu0
  %7570 = vmatpush.bf16.msra.mxu0 %v7176
  %7571 = vmatpush.bf16.msra.mxu0 %v7173
  %7572 = vmatpush.bf16.msra.mxu0 %v7170
  %7573 = vmatpush.bf16.msra.mxu0 %v7167
  %7574 = vmatpush.bf16.msra.mxu0 %v7164
  %7575 = vmatpush.bf16.msra.mxu0 %v7161
  %7576 = vmatpush.bf16.msra.mxu0 %v7158
  %7577 = vmatpush.bf16.msra.mxu0 %v7155
  %7578 = vmatmul.bf16.gmra.mxu0 %v6948
  %v7579 = vpop.f32.mrf.mxu0
  %v7580 = vadd.f32 %v6899, %v7579
  %v7581 = vpop.f32.mrf.mxu0
  %v7582 = vadd.f32 %v6901, %v7581
  %7583 = vmatmul.bf16.gmra.mxu0 %v6113
  %v7584 = vpop.f32.mrf.mxu0
  %v7585 = vadd.f32 %v6904, %v7584
  %v7586 = vpop.f32.mrf.mxu0
  %v7587 = vadd.f32 %v6906, %v7586
  %7588 = vmatmul.bf16.gmra.mxu0 %v6116
  %v7589 = vpop.f32.mrf.mxu0
  %v7590 = vadd.f32 %v6909, %v7589
  %v7591 = vpop.f32.mrf.mxu0
  %v7592 = vadd.f32 %v6911, %v7591
  %7593 = vmatmul.bf16.gmra.mxu0 %v6119
  %v7594 = vpop.f32.mrf.mxu0
  %v7595 = vadd.f32 %v6914, %v7594
  %v7596 = vpop.f32.mrf.mxu0
  %v7597 = vadd.f32 %v6916, %v7596
  %7598 = vmatmul.bf16.gmra.mxu0 %v6122
  %v7599 = vpop.f32.mrf.mxu0
  %v7600 = vadd.f32 %v6919, %v7599
  %v7601 = vpop.f32.mrf.mxu0
  %v7602 = vadd.f32 %v6921, %v7601
  %7603 = vmatmul.bf16.gmra.mxu0 %v6125
  %v7604 = vpop.f32.mrf.mxu0
  %v7605 = vadd.f32 %v6924, %v7604
  %v7606 = vpop.f32.mrf.mxu0
  %v7607 = vadd.f32 %v6926, %v7606
  %7608 = vmatmul.bf16.gmra.mxu0 %v6128
  %v7609 = vpop.f32.mrf.mxu0
  %v7610 = vadd.f32 %v6929, %v7609
  %v7611 = vpop.f32.mrf.mxu0
  %v7612 = vadd.f32 %v6931, %v7611
  %7613 = vmatmul.bf16.gmra.mxu0 %v6131
  %v7614 = vpop.f32.mrf.mxu0
  %v7615 = vadd.f32 %v6934, %v7614
  %v7616 = vpop.f32.mrf.mxu0
  %v7617 = vadd.f32 %v6936, %v7616
  %7618 = vdwg.mxu0
  %7619 = vmatpush.bf16.msra.mxu0 %v7200
  %7620 = vmatpush.bf16.msra.mxu0 %v7197
  %7621 = vmatpush.bf16.msra.mxu0 %v7194
  %7622 = vmatpush.bf16.msra.mxu0 %v7191
  %7623 = vmatpush.bf16.msra.mxu0 %v7188
  %7624 = vmatpush.bf16.msra.mxu0 %v7185
  %7625 = vmatpush.bf16.msra.mxu0 %v7182
  %7626 = vmatpush.bf16.msra.mxu0 %v7179
  %7627 = vmatmul.bf16.gmra.mxu0 %v6949
  %v7628 = vpop.f32.mrf.mxu0
  %v7629 = vadd.f32 %v7580, %v7628
  %v7630 = vpop.f32.mrf.mxu0
  %v7631 = vadd.f32 %v7582, %v7630
  %7632 = vmatmul.bf16.gmra.mxu0 %v6114
  %v7633 = vpop.f32.mrf.mxu0
  %v7634 = vadd.f32 %v7585, %v7633
  %v7635 = vpop.f32.mrf.mxu0
  %v7636 = vadd.f32 %v7587, %v7635
  %7637 = vmatmul.bf16.gmra.mxu0 %v6117
  %v7638 = vpop.f32.mrf.mxu0
  %v7639 = vadd.f32 %v7590, %v7638
  %v7640 = vpop.f32.mrf.mxu0
  %v7641 = vadd.f32 %v7592, %v7640
  %7642 = vmatmul.bf16.gmra.mxu0 %v6120
  %v7643 = vpop.f32.mrf.mxu0
  %v7644 = vadd.f32 %v7595, %v7643
  %v7645 = vpop.f32.mrf.mxu0
  %v7646 = vadd.f32 %v7597, %v7645
  %7647 = vmatmul.bf16.gmra.mxu0 %v6123
  %v7648 = vpop.f32.mrf.mxu0
  %v7649 = vadd.f32 %v7600, %v7648
  %v7650 = vpop.f32.mrf.mxu0
  %v7651 = vadd.f32 %v7602, %v7650
  %7652 = vmatmul.bf16.gmra.mxu0 %v6126
  %v7653 = vpop.f32.mrf.mxu0
  %v7654 = vadd.f32 %v7605, %v7653
  %v7655 = vpop.f32.mrf.mxu0
  %v7656 = vadd.f32 %v7607, %v7655
  %7657 = vmatmul.bf16.gmra.mxu0 %v6129
  %v7658 = vpop.f32.mrf.mxu0
  %v7659 = vadd.f32 %v7610, %v7658
  %v7660 = vpop.f32.mrf.mxu0
  %v7661 = vadd.f32 %v7612, %v7660
  %7662 = vmatmul.bf16.gmra.mxu0 %v6132
  %v7663 = vpop.f32.mrf.mxu0
  %v7664 = vadd.f32 %v7615, %v7663
  %v7665 = vpop.f32.mrf.mxu0
  %v7666 = vadd.f32 %v7617, %v7665
  %7667 = vdwg.mxu0
  %7668 = vmatpush.bf16.msra.mxu0 0
  %7669 = vmatpush.bf16.msra.mxu0 0
  %7670 = vmatpush.bf16.msra.mxu0 0
  %7671 = vmatpush.bf16.msra.mxu0 0
  %7672 = vmatpush.bf16.msra.mxu0 %v7212
  %7673 = vmatpush.bf16.msra.mxu0 %v7209
  %7674 = vmatpush.bf16.msra.mxu0 %v7206
  %7675 = vmatpush.bf16.msra.mxu0 %v7203
  %7676 = vmatmul.bf16.gmra.mxu0 %v7274
  %v7677 = vpop.f32.mrf.mxu0
  %v7678 = vadd.f32 %v7629, %v7677
  %v7679 = vpop.f32.mrf.mxu0
  %v7680 = vadd.f32 %v7631, %v7679
  %7681 = vmatmul.bf16.gmra.mxu0 %v6474
  %v7682 = vpop.f32.mrf.mxu0
  %v7683 = vadd.f32 %v7634, %v7682
  %v7684 = vpop.f32.mrf.mxu0
  %v7685 = vadd.f32 %v7636, %v7684
  %7686 = vmatmul.bf16.gmra.mxu0 %v6477
  %v7687 = vpop.f32.mrf.mxu0
  %v7688 = vadd.f32 %v7639, %v7687
  %v7689 = vpop.f32.mrf.mxu0
  %v7690 = vadd.f32 %v7641, %v7689
  %7691 = vmatmul.bf16.gmra.mxu0 %v6480
  %v7692 = vpop.f32.mrf.mxu0
  %v7693 = vadd.f32 %v7644, %v7692
  %v7694 = vpop.f32.mrf.mxu0
  %v7695 = vadd.f32 %v7646, %v7694
  %7696 = vmatmul.bf16.gmra.mxu0 %v6483
  %v7697 = vpop.f32.mrf.mxu0
  %v7698 = vadd.f32 %v7649, %v7697
  %v7699 = vpop.f32.mrf.mxu0
  %v7700 = vadd.f32 %v7651, %v7699
  %7701 = vmatmul.bf16.gmra.mxu0 %v6486
  %v7702 = vpop.f32.mrf.mxu0
  %v7703 = vadd.f32 %v7654, %v7702
  %v7704 = vpop.f32.mrf.mxu0
  %v7705 = vadd.f32 %v7656, %v7704
  %7706 = vmatmul.bf16.gmra.mxu0 %v6489
  %v7707 = vpop.f32.mrf.mxu0
  %v7708 = vadd.f32 %v7659, %v7707
  %v7709 = vpop.f32.mrf.mxu0
  %v7710 = vadd.f32 %v7661, %v7709
  %7711 = vmatmul.bf16.gmra.mxu0 %v6492
  %v7712 = vpop.f32.mrf.mxu0
  %v7713 = vadd.f32 %v7664, %v7712
  %v7714 = vpop.f32.mrf.mxu0
  %v7715 = vadd.f32 %v7666, %v7714
  %7716 = vdwg.mxu0
  %v7717 = vadd.f32 %v7384, %v5669
  %v7718 = vadd.f32 %v7531, %v5670
  %v7719 = vadd.f32 %v7678, %v5671
  %v7720 = vadd.f32 %v7386, %v5669
  %v7721 = vadd.f32 %v7533, %v5670
  %v7722 = vadd.f32 %v7680, %v5671
  %v7723 = vadd.f32 %v7389, %v5669
  %v7724 = vadd.f32 %v7536, %v5670
  %v7725 = vadd.f32 %v7683, %v5671
  %v7726 = vadd.f32 %v7391, %v5669
  %v7727 = vadd.f32 %v7538, %v5670
  %v7728 = vadd.f32 %v7685, %v5671
  %v7729 = vadd.f32 %v7394, %v5669
  %v7730 = vadd.f32 %v7541, %v5670
  %v7731 = vadd.f32 %v7688, %v5671
  %v7732 = vadd.f32 %v7396, %v5669
  %v7733 = vadd.f32 %v7543, %v5670
  %v7734 = vadd.f32 %v7690, %v5671
  %v7735 = vadd.f32 %v7399, %v5669
  %v7736 = vadd.f32 %v7546, %v5670
  %v7737 = vadd.f32 %v7693, %v5671
  %v7738 = vadd.f32 %v7401, %v5669
  %v7739 = vadd.f32 %v7548, %v5670
  %v7740 = vadd.f32 %v7695, %v5671
  %v7741 = vadd.f32 %v7404, %v5669
  %v7742 = vadd.f32 %v7551, %v5670
  %v7743 = vadd.f32 %v7698, %v5671
  %v7744 = vadd.f32 %v7406, %v5669
  %v7745 = vadd.f32 %v7553, %v5670
  %v7746 = vadd.f32 %v7700, %v5671
  %v7747 = vadd.f32 %v7409, %v5669
  %v7748 = vadd.f32 %v7556, %v5670
  %v7749 = vadd.f32 %v7703, %v5671
  %v7750 = vadd.f32 %v7411, %v5669
  %v7751 = vadd.f32 %v7558, %v5670
  %v7752 = vadd.f32 %v7705, %v5671
  %v7753 = vadd.f32 %v7414, %v5669
  %v7754 = vadd.f32 %v7561, %v5670
  %v7755 = vadd.f32 %v7708, %v5671
  %v7756 = vadd.f32 %v7416, %v5669
  %v7757 = vadd.f32 %v7563, %v5670
  %v7758 = vadd.f32 %v7710, %v5671
  %v7759 = vadd.f32 %v7419, %v5669
  %v7760 = vadd.f32 %v7566, %v5670
  %v7761 = vadd.f32 %v7713, %v5671
  %v7762 = vadd.f32 %v7421, %v5669
  %v7763 = vadd.f32 %v7568, %v5670
  %v7764 = vadd.f32 %v7715, %v5671
  %v7765 = vmax.f32 %v7717, 0.0
  %v7766 = vmax.f32 %v7718, 0.0
  %v7767 = vmax.f32 %v7719, 0.0
  %v7768 = vmax.f32 %v7720, 0.0
  %v7769 = vmax.f32 %v7721, 0.0
  %v7770 = vmax.f32 %v7722, 0.0
  %v7771 = vmax.f32 %v7723, 0.0
  %v7772 = vmax.f32 %v7724, 0.0
  %v7773 = vmax.f32 %v7725, 0.0
  %v7774 = vmax.f32 %v7726, 0.0
  %v7775 = vmax.f32 %v7727, 0.0
  %v7776 = vmax.f32 %v7728, 0.0
  %v7777 = vmax.f32 %v7729, 0.0
  %v7778 = vmax.f32 %v7730, 0.0
  %v7779 = vmax.f32 %v7731, 0.0
  %v7780 = vmax.f32 %v7732, 0.0
  %v7781 = vmax.f32 %v7733, 0.0
  %v7782 = vmax.f32 %v7734, 0.0
  %v7783 = vmax.f32 %v7735, 0.0
  %v7784 = vmax.f32 %v7736, 0.0
  %v7785 = vmax.f32 %v7737, 0.0
  %v7786 = vmax.f32 %v7738, 0.0
  %v7787 = vmax.f32 %v7739, 0.0
  %v7788 = vmax.f32 %v7740, 0.0
  %v7789 = vmax.f32 %v7741, 0.0
  %v7790 = vmax.f32 %v7742, 0.0
  %v7791 = vmax.f32 %v7743, 0.0
  %v7792 = vmax.f32 %v7744, 0.0
  %v7793 = vmax.f32 %v7745, 0.0
  %v7794 = vmax.f32 %v7746, 0.0
  %v7795 = vmax.f32 %v7747, 0.0
  %v7796 = vmax.f32 %v7748, 0.0
  %v7797 = vmax.f32 %v7749, 0.0
  %v7798 = vmax.f32 %v7750, 0.0
  %v7799 = vmax.f32 %v7751, 0.0
  %v7800 = vmax.f32 %v7752, 0.0
  %v7801 = vmax.f32 %v7753, 0.0
  %v7802 = vmax.f32 %v7754, 0.0
  %v7803 = vmax.f32 %v7755, 0.0
  %v7804 = vmax.f32 %v7756, 0.0
  %v7805 = vmax.f32 %v7757, 0.0
  %v7806 = vmax.f32 %v7758, 0.0
  %v7807 = vmax.f32 %v7759, 0.0
  %v7808 = vmax.f32 %v7760, 0.0
  %v7809 = vmax.f32 %v7761, 0.0
  %v7810 = vmax.f32 %v7762, 0.0
  %v7811 = vmax.f32 %v7763, 0.0
  %v7812 = vmax.f32 %v7764, 0.0
  %v7813 = vpack.c.bf16 %v7766, %v7765
  %v7814 = vpack.c.bf16 %v7767, %v7767
  %v7815 = vpack.c.bf16 %v7769, %v7768
  %v7816 = vpack.c.bf16 %v7770, %v7770
  %v7817 = vpack.c.bf16 %v7772, %v7771
  %v7818 = vpack.c.bf16 %v7773, %v7773
  %v7819 = vpack.c.bf16 %v7775, %v7774
  %v7820 = vpack.c.bf16 %v7776, %v7776
  %v7821 = vpack.c.bf16 %v7778, %v7777
  %v7822 = vpack.c.bf16 %v7779, %v7779
  %v7823 = vpack.c.bf16 %v7781, %v7780
  %v7824 = vpack.c.bf16 %v7782, %v7782
  %v7825 = vpack.c.bf16 %v7784, %v7783
  %v7826 = vpack.c.bf16 %v7785, %v7785
  %v7827 = vpack.c.bf16 %v7787, %v7786
  %v7828 = vpack.c.bf16 %v7788, %v7788
  %v7829 = vpack.c.bf16 %v7790, %v7789
  %v7830 = vpack.c.bf16 %v7791, %v7791
  %v7831 = vpack.c.bf16 %v7793, %v7792
  %v7832 = vpack.c.bf16 %v7794, %v7794
  %v7833 = vpack.c.bf16 %v7796, %v7795
  %v7834 = vpack.c.bf16 %v7797, %v7797
  %v7835 = vpack.c.bf16 %v7799, %v7798
  %v7836 = vpack.c.bf16 %v7800, %v7800
  %v7837 = vpack.c.bf16 %v7802, %v7801
  %v7838 = vpack.c.bf16 %v7803, %v7803
  %v7839 = vpack.c.bf16 %v7805, %v7804
  %v7840 = vpack.c.bf16 %v7806, %v7806
  %v7841 = vpack.c.bf16 %v7808, %v7807
  %v7842 = vpack.c.bf16 %v7809, %v7809
  %v7843 = vpack.c.bf16 %v7811, %v7810
  %v7844 = vpack.c.bf16 %v7812, %v7812
  %7845 = vst [vmem:[#allocation4 + $0x30] sm:$0xff] %v7813
  %7846 = vst.msk [vmem:[#allocation4 + $0x38] sm:$0xf] %vm51, %v7814
  %7847 = vst [vmem:[#allocation4 + $0x3c] sm:$0xff] %v7815
  %7848 = vst.msk [vmem:[#allocation4 + $0x44] sm:$0xf] %vm51, %v7816
  %7849 = vst [vmem:[#allocation4 + $0x60] sm:$0xff] %v7817
  %7850 = vst.msk [vmem:[#allocation4 + $0x68] sm:$0xf] %vm51, %v7818
  %7851 = vst [vmem:[#allocation4 + $0x6c] sm:$0xff] %v7819
  %7852 = vst.msk [vmem:[#allocation4 + $0x74] sm:$0xf] %vm51, %v7820
  %7853 = vst [vmem:[#allocation4 + $0x90] sm:$0xff] %v7821
  %7854 = vst.msk [vmem:[#allocation4 + $0x98] sm:$0xf] %vm51, %v7822
  %7855 = vst [vmem:[#allocation4 + $0x9c] sm:$0xff] %v7823
  %7856 = vst.msk [vmem:[#allocation4 + $0xa4] sm:$0xf] %vm51, %v7824
  %7857 = vst [vmem:[#allocation4 + $0xc0] sm:$0xff] %v7825
  %7858 = vst.msk [vmem:[#allocation4 + $0xc8] sm:$0xf] %vm51, %v7826
  %7859 = vst [vmem:[#allocation4 + $0xcc] sm:$0xff] %v7827
  %7860 = vst.msk [vmem:[#allocation4 + $0xd4] sm:$0xf] %vm51, %v7828
  %7861 = vst [vmem:[#allocation4 + $0xf0] sm:$0xff] %v7829
  %7862 = vst.msk [vmem:[#allocation4 + $0xf8] sm:$0xf] %vm51, %v7830
  %7863 = vst [vmem:[#allocation4 + $0xfc] sm:$0xff] %v7831
  %7864 = vst.msk [vmem:[#allocation4 + $0x104] sm:$0xf] %vm51, %v7832
  %7865 = vst [vmem:[#allocation4 + $0x120] sm:$0xff] %v7833
  %7866 = vst.msk [vmem:[#allocation4 + $0x128] sm:$0xf] %vm51, %v7834
  %7867 = vst [vmem:[#allocation4 + $0x12c] sm:$0xff] %v7835
  %7868 = vst.msk [vmem:[#allocation4 + $0x134] sm:$0xf] %vm51, %v7836
  %7869 = vst [vmem:[#allocation4 + $0x150] sm:$0xff] %v7837
  %7870 = vst.msk [vmem:[#allocation4 + $0x158] sm:$0xf] %vm51, %v7838
  %7871 = vst [vmem:[#allocation4 + $0x15c] sm:$0xff] %v7839
  %7872 = vst.msk [vmem:[#allocation4 + $0x164] sm:$0xf] %vm51, %v7840
  %7873 = vst [vmem:[#allocation4 + $0x180] sm:$0xff] %v7841
  %7874 = vst.msk [vmem:[#allocation4 + $0x188] sm:$0xf] %vm51, %v7842
  %7875 = vst [vmem:[#allocation4 + $0x18c] sm:$0xff] %v7843
  %7876 = vst.msk [vmem:[#allocation4 + $0x194] sm:$0xf] %vm51, %v7844
  %v7877 = vld [vmem:[%s8] sm:$0x1]
  %v7878 = vld [vmem:[#allocation4] sm:$0xff]
  %v7879 = vld [vmem:[#allocation4 + $0x8] sm:$0xf]
  %v7880 = vld [vmem:[#allocation4 + $0xc] sm:$0xff]
  %v7881 = vld [vmem:[#allocation4 + $0x14] sm:$0xf]
  %v7882 = vld [vmem:[#allocation4 + $0x18] sm:$0xff]
  %v7883 = vld [vmem:[#allocation4 + $0x20] sm:$0xf]
  %v7884 = vld [vmem:[#allocation4 + $0x24] sm:$0xff]
  %v7885 = vld [vmem:[#allocation4 + $0x2c] sm:$0xf]
  %v7886 = vld [vmem:[#allocation4 + $0x30] sm:$0xff]
  %v7887 = vld [vmem:[#allocation4 + $0x38] sm:$0xf]
  %v7888 = vld [vmem:[#allocation4 + $0x3c] sm:$0xff]
  %v7889 = vld [vmem:[#allocation4 + $0x44] sm:$0xf]
  %v7890 = vld [vmem:[#allocation4 + $0x48] sm:$0xff]
  %v7891 = vld [vmem:[#allocation4 + $0x50] sm:$0xf]
  %v7892 = vld [vmem:[#allocation4 + $0x54] sm:$0xff]
  %v7893 = vld [vmem:[#allocation4 + $0x5c] sm:$0xf]
  %v7894 = vld [vmem:[#allocation4 + $0x60] sm:$0xff]
  %v7895 = vld [vmem:[#allocation4 + $0x68] sm:$0xf]
  %v7896 = vld [vmem:[#allocation4 + $0x6c] sm:$0xff]
  %v7897 = vld [vmem:[#allocation4 + $0x74] sm:$0xf]
  %v7898 = vld [vmem:[#allocation4 + $0x78] sm:$0xff]
  %v7899 = vld [vmem:[#allocation4 + $0x80] sm:$0xf]
  %v7900 = vld [vmem:[#allocation4 + $0x84] sm:$0xff]
  %v7901 = vld [vmem:[#allocation4 + $0x8c] sm:$0xf]
  %v7902 = vld [vmem:[#allocation4 + $0x90] sm:$0xff]
  %v7903 = vld [vmem:[#allocation4 + $0x98] sm:$0xf]
  %v7904 = vld [vmem:[#allocation4 + $0x9c] sm:$0xff]
  %v7905 = vld [vmem:[#allocation4 + $0xa4] sm:$0xf]
  %v7906 = vld [vmem:[#allocation4 + $0xa8] sm:$0xff]
  %v7907 = vld [vmem:[#allocation4 + $0xb0] sm:$0xf]
  %v7908 = vld [vmem:[#allocation4 + $0xb4] sm:$0xff]
  %v7909 = vld [vmem:[#allocation4 + $0xbc] sm:$0xf]
  %v7910 = vld [vmem:[#allocation4 + $0xc0] sm:$0xff]
  %v7911 = vld [vmem:[#allocation4 + $0xc8] sm:$0xf]
  %v7912 = vld [vmem:[#allocation4 + $0xcc] sm:$0xff]
  %v7913 = vld [vmem:[#allocation4 + $0xd4] sm:$0xf]
  %v7914 = vld [vmem:[#allocation4 + $0xd8] sm:$0xff]
  %v7915 = vld [vmem:[#allocation4 + $0xe0] sm:$0xf]
  %v7916 = vld [vmem:[#allocation4 + $0xe4] sm:$0xff]
  %v7917 = vld [vmem:[#allocation4 + $0xec] sm:$0xf]
  %v7918 = vld [vmem:[#allocation4 + $0xf0] sm:$0xff]
  %v7919 = vld [vmem:[#allocation4 + $0xf8] sm:$0xf]
  %v7920 = vld [vmem:[#allocation4 + $0xfc] sm:$0xff]
  %v7921 = vld [vmem:[#allocation4 + $0x104] sm:$0xf]
  %v7922 = vld [vmem:[#allocation4 + $0x108] sm:$0xff]
  %v7923 = vld [vmem:[#allocation4 + $0x110] sm:$0xf]
  %v7924 = vld [vmem:[#allocation4 + $0x114] sm:$0xff]
  %v7925 = vld [vmem:[#allocation4 + $0x11c] sm:$0xf]
  %v7926 = vld [vmem:[#allocation4 + $0x120] sm:$0xff]
  %v7927 = vld [vmem:[#allocation4 + $0x128] sm:$0xf]
  %v7928 = vld [vmem:[#allocation4 + $0x12c] sm:$0xff]
  %v7929 = vld [vmem:[#allocation4 + $0x134] sm:$0xf]
  %v7930 = vld [vmem:[#allocation4 + $0x138] sm:$0xff]
  %v7931 = vld [vmem:[#allocation4 + $0x140] sm:$0xf]
  %v7932 = vld [vmem:[#allocation4 + $0x144] sm:$0xff]
  %v7933 = vld [vmem:[#allocation4 + $0x14c] sm:$0xf]
  %v7934 = vld [vmem:[#allocation4 + $0x150] sm:$0xff]
  %v7935 = vld [vmem:[#allocation4 + $0x158] sm:$0xf]
  %v7936 = vld [vmem:[#allocation4 + $0x15c] sm:$0xff]
  %v7937 = vld [vmem:[#allocation4 + $0x164] sm:$0xf]
  %v7938 = vld [vmem:[#allocation4 + $0x168] sm:$0xff]
  %v7939 = vld [vmem:[#allocation4 + $0x170] sm:$0xf]
  %v7940 = vld [vmem:[#allocation4 + $0x174] sm:$0xff]
  %v7941 = vld [vmem:[#allocation4 + $0x17c] sm:$0xf]
  %v7942 = vld [vmem:[#allocation4 + $0x180] sm:$0xff]
  %v7943 = vld [vmem:[#allocation4 + $0x188] sm:$0xf]
  %v7944 = vld [vmem:[#allocation4 + $0x18c] sm:$0xff]
  %v7945 = vld [vmem:[#allocation4 + $0x194] sm:$0xf]
  %v7946 = vld [vmem:[%s7] sm:$0xf]
  %v7947 = vld [vmem:[%s7 + $0x4] sm:$0xf]
  %v7948 = vld [vmem:[%s7 + $0x8] sm:$0xf]
  %v7949 = vld [vmem:[%s7 + $0xc] sm:$0xf]
  %v7950 = vld [vmem:[%s7 + $0x10] sm:$0xf]
  %v7951 = vld [vmem:[%s7 + $0x14] sm:$0xf]
  %v7952 = vld [vmem:[%s7 + $0x18] sm:$0xf]
  %v7953 = vld [vmem:[%s7 + $0x1c] sm:$0xf]
  %v7954 = vld [vmem:[%s7 + $0x20] sm:$0xf]
  %v7955 = vld [vmem:[%s7 + $0x24] sm:$0xf]
  %v7956 = vld [vmem:[%s7 + $0x28] sm:$0xf]
  %v7957 = vld [vmem:[%s7 + $0x2c] sm:$0xf]
  %v7958 = vld [vmem:[%s7 + $0x30] sm:$0xf]
  %v7959 = vld [vmem:[%s7 + $0x34] sm:$0xf]
  %v7960 = vld [vmem:[%s7 + $0x38] sm:$0xf]
  %v7961 = vld [vmem:[%s7 + $0x3c] sm:$0xf]
  %v7962 = vld [vmem:[%s7 + $0x40] sm:$0xf]
  %v7963 = vld [vmem:[%s7 + $0x44] sm:$0xf]
  %v7964 = vld [vmem:[%s7 + $0x48] sm:$0xf]
  %v7965 = vld [vmem:[%s7 + $0x4c] sm:$0xf]
  %v7966 = vld [vmem:[%s7 + $0x50] sm:$0xf]
  %v7967 = vld [vmem:[%s7 + $0x54] sm:$0xf]
  %v7968 = vld [vmem:[%s7 + $0x58] sm:$0xf]
  %v7969 = vld [vmem:[%s7 + $0x5c] sm:$0xf]
  %v7970 = vld [vmem:[%s7 + $0x60] sm:$0xf]
  %v7971 = vld [vmem:[%s7 + $0x64] sm:$0xf]
  %v7972 = vld [vmem:[%s7 + $0x68] sm:$0xf]
  %v7973 = vld [vmem:[%s7 + $0x6c] sm:$0xf]
  %v7974 = vld [vmem:[%s7 + $0x70] sm:$0xf]
  %v7975 = vld [vmem:[%s7 + $0x74] sm:$0xf]
  %v7976 = vld [vmem:[%s7 + $0x78] sm:$0xf]
  %v7977 = vld [vmem:[%s7 + $0x7c] sm:$0xf]
  %v7978 = vld [vmem:[%s7 + $0x80] sm:$0xf]
  %v7979 = vld [vmem:[%s7 + $0x84] sm:$0xf]
  %v7980 = vld [vmem:[%s7 + $0x88] sm:$0xf]
  %v7981 = vld [vmem:[%s7 + $0x8c] sm:$0xf]
  %s7982 = scalar_lea.vmem %s7, 144
  %v7983 = vld [vmem:[%s7982] sm:$0xf]
  %v7984 = vld [vmem:[%s7982 + $0x4] sm:$0xf]
  %v7985 = vld [vmem:[%s7982 + $0x8] sm:$0xf]
  %v7986 = vld [vmem:[%s7982 + $0xc] sm:$0xf]
  %v7987 = vld [vmem:[%s7982 + $0x10] sm:$0xf]
  %v7988 = vld [vmem:[%s7982 + $0x14] sm:$0xf]
  %v7989 = vld [vmem:[%s7982 + $0x18] sm:$0xf]
  %v7990 = vld [vmem:[%s7982 + $0x1c] sm:$0xf]
  %v7991 = vld [vmem:[%s7982 + $0x20] sm:$0xf]
  %v7992 = vld [vmem:[%s7982 + $0x24] sm:$0xf]
  %v7993 = vld [vmem:[%s7982 + $0x28] sm:$0xf]
  %v7994 = vld [vmem:[%s7982 + $0x2c] sm:$0xf]
  %v7995 = vld [vmem:[%s7982 + $0x30] sm:$0xf]
  %v7996 = vld [vmem:[%s7982 + $0x34] sm:$0xf]
  %v7997 = vld [vmem:[%s7982 + $0x38] sm:$0xf]
  %v7998 = vld [vmem:[%s7982 + $0x3c] sm:$0xf]
  %v7999 = vld [vmem:[%s7982 + $0x40] sm:$0xf]
  %v8000 = vld [vmem:[%s7982 + $0x44] sm:$0xf]
  %v8001 = vld [vmem:[%s7982 + $0x48] sm:$0xf]
  %v8002 = vld [vmem:[%s7982 + $0x4c] sm:$0xf]
  %v8003 = vld [vmem:[%s7982 + $0x50] sm:$0xf]
  %v8004 = vld [vmem:[%s7982 + $0x54] sm:$0xf]
  %v8005 = vld [vmem:[%s7982 + $0x58] sm:$0xf]
  %v8006 = vld [vmem:[%s7982 + $0x5c] sm:$0xf]
  %v8007 = vld [vmem:[%s7982 + $0x60] sm:$0xf]
  %v8008 = vld [vmem:[%s7982 + $0x64] sm:$0xf]
  %v8009 = vld [vmem:[%s7982 + $0x68] sm:$0xf]
  %v8010 = vld [vmem:[%s7982 + $0x6c] sm:$0xf]
  %v8011 = vld [vmem:[%s7982 + $0x70] sm:$0xf]
  %v8012 = vld [vmem:[%s7982 + $0x74] sm:$0xf]
  %v8013 = vld [vmem:[%s7982 + $0x78] sm:$0xf]
  %v8014 = vld [vmem:[%s7982 + $0x7c] sm:$0xf]
  %v8015 = vld [vmem:[%s7982 + $0x80] sm:$0xf]
  %v8016 = vld [vmem:[%s7982 + $0x84] sm:$0xf]
  %v8017 = vld [vmem:[%s7982 + $0x88] sm:$0xf]
  %v8018 = vld [vmem:[%s7982 + $0x8c] sm:$0xf]
  %v8083 = vunpack.c.l.b16 %v7882
  %v8084 = vunpack.c.h.b16 %v7882
  %v8085 = vunpack.c.l.b16 %v7883
  %v8086 = vunpack.c.l.b16 %v7884
  %v8087 = vunpack.c.h.b16 %v7884
  %v8088 = vunpack.c.l.b16 %v7885
  %v8089 = vunpack.c.l.b16 %v7886
  %v8090 = vunpack.c.h.b16 %v7886
  %v8091 = vunpack.c.l.b16 %v7887
  %v8092 = vunpack.c.l.b16 %v7888
  %v8093 = vunpack.c.h.b16 %v7888
  %v8094 = vunpack.c.l.b16 %v7889
  %v8095 = vunpack.c.l.b16 %v7890
  %v8096 = vunpack.c.h.b16 %v7890
  %v8097 = vunpack.c.l.b16 %v7891
  %v8098 = vunpack.c.l.b16 %v7892
  %v8099 = vunpack.c.h.b16 %v7892
  %v8100 = vunpack.c.l.b16 %v7893
  %v8101 = vunpack.c.l.b16 %v7894
  %v8102 = vunpack.c.h.b16 %v7894
  %v8103 = vunpack.c.l.b16 %v7895
  %v8104 = vunpack.c.l.b16 %v7896
  %v8105 = vunpack.c.h.b16 %v7896
  %v8106 = vunpack.c.l.b16 %v7897
  %v8107 = vunpack.c.l.b16 %v7898
  %v8108 = vunpack.c.h.b16 %v7898
  %v8109 = vunpack.c.l.b16 %v7899
  %v8110 = vunpack.c.l.b16 %v7900
  %v8111 = vunpack.c.h.b16 %v7900
  %v8112 = vunpack.c.l.b16 %v7901
  %v8113 = vunpack.c.l.b16 %v7902
  %v8114 = vunpack.c.h.b16 %v7902
  %v8115 = vunpack.c.l.b16 %v7903
  %v8116 = vunpack.c.l.b16 %v7904
  %v8117 = vunpack.c.h.b16 %v7904
  %v8118 = vunpack.c.l.b16 %v7905
  %v8119 = vunpack.c.l.b16 %v7906
  %v8120 = vunpack.c.h.b16 %v7906
  %v8121 = vunpack.c.l.b16 %v7907
  %v8122 = vunpack.c.l.b16 %v7908
  %v8123 = vunpack.c.h.b16 %v7908
  %v8124 = vunpack.c.l.b16 %v7909
  %v8125 = vunpack.c.l.b16 %v7910
  %v8126 = vunpack.c.h.b16 %v7910
  %v8127 = vunpack.c.l.b16 %v7911
  %v8128 = vunpack.c.l.b16 %v7912
  %v8129 = vunpack.c.h.b16 %v7912
  %v8130 = vunpack.c.l.b16 %v7913
  %v8131 = vunpack.c.l.b16 %v7914
  %v8132 = vunpack.c.h.b16 %v7914
  %v8133 = vunpack.c.l.b16 %v7915
  %v8134 = vunpack.c.l.b16 %v7916
  %v8135 = vunpack.c.h.b16 %v7916
  %v8136 = vunpack.c.l.b16 %v7917
  %v8137 = vunpack.c.l.b16 %v7918
  %v8138 = vunpack.c.h.b16 %v7918
  %v8139 = vunpack.c.l.b16 %v7919
  %v8140 = vunpack.c.l.b16 %v7920
  %v8141 = vunpack.c.h.b16 %v7920
  %v8142 = vunpack.c.l.b16 %v7921
  %v8143 = vunpack.c.l.b16 %v7922
  %v8144 = vunpack.c.h.b16 %v7922
  %v8145 = vunpack.c.l.b16 %v7923
  %v8146 = vunpack.c.l.b16 %v7924
  %v8147 = vunpack.c.h.b16 %v7924
  %v8148 = vunpack.c.l.b16 %v7925
  %v8149 = vunpack.c.l.b16 %v7926
  %v8150 = vunpack.c.h.b16 %v7926
  %v8151 = vunpack.c.l.b16 %v7927
  %v8152 = vunpack.c.l.b16 %v7928
  %v8153 = vunpack.c.h.b16 %v7928
  %v8154 = vunpack.c.l.b16 %v7929
  %v8155 = vunpack.c.l.b16 %v7930
  %v8156 = vunpack.c.h.b16 %v7930
  %v8157 = vunpack.c.l.b16 %v7931
  %v8158 = vunpack.c.l.b16 %v7932
  %v8159 = vunpack.c.h.b16 %v7932
  %v8160 = vunpack.c.l.b16 %v7933
  %v8161 = vunpack.c.l.b16 %v7934
  %v8162 = vunpack.c.h.b16 %v7934
  %v8163 = vunpack.c.l.b16 %v7935
  %v8164 = vunpack.c.l.b16 %v7936
  %v8165 = vunpack.c.h.b16 %v7936
  %v8166 = vunpack.c.l.b16 %v7937
  %v8167 = vunpack.c.l.b16 %v7938
  %v8168 = vunpack.c.h.b16 %v7938
  %v8169 = vunpack.c.l.b16 %v7939
  %v8170 = vunpack.c.l.b16 %v7940
  %v8171 = vunpack.c.h.b16 %v7940
  %v8172 = vunpack.c.l.b16 %v7941
  %v8173 = vunpack.c.l.b16 %v7942
  %v8174 = vunpack.c.h.b16 %v7942
  %v8175 = vunpack.c.l.b16 %v7943
  %v8176 = vunpack.c.l.b16 %v7944
  %v8177 = vunpack.c.h.b16 %v7944
  %v8178 = vunpack.c.l.b16 %v7945
  %v8179 = vpack.c.b16 %v8086, %v8083
  %v8180 = vpack.c.b16 %v8087, %v8084
  %v8181 = vpack.c.b16 %v8088, %v8085
  %v8182 = vpack.c.b16 %v8092, %v8089
  %v8183 = vpack.c.b16 %v8093, %v8090
  %v8184 = vpack.c.b16 %v8094, %v8091
  %v8185 = vpack.c.b16 %v8098, %v8095
  %v8186 = vpack.c.b16 %v8099, %v8096
  %v8187 = vpack.c.b16 %v8100, %v8097
  %v8188 = vpack.c.b16 %v8104, %v8101
  %v8189 = vpack.c.b16 %v8105, %v8102
  %v8190 = vpack.c.b16 %v8106, %v8103
  %v8191 = vpack.c.b16 %v8110, %v8107
  %v8192 = vpack.c.b16 %v8111, %v8108
  %v8193 = vpack.c.b16 %v8112, %v8109
  %v8194 = vpack.c.b16 %v8116, %v8113
  %v8195 = vpack.c.b16 %v8117, %v8114
  %v8196 = vpack.c.b16 %v8118, %v8115
  %v8197 = vpack.c.b16 %v8122, %v8119
  %v8198 = vpack.c.b16 %v8123, %v8120
  %v8199 = vpack.c.b16 %v8124, %v8121
  %v8200 = vpack.c.b16 %v8128, %v8125
  %v8201 = vpack.c.b16 %v8129, %v8126
  %v8202 = vpack.c.b16 %v8130, %v8127
  %v8203 = vpack.c.b16 %v8134, %v8131
  %v8204 = vpack.c.b16 %v8135, %v8132
  %v8205 = vpack.c.b16 %v8136, %v8133
  %v8206 = vpack.c.b16 %v8140, %v8137
  %v8207 = vpack.c.b16 %v8141, %v8138
  %v8208 = vpack.c.b16 %v8142, %v8139
  %v8209 = vpack.c.b16 %v8146, %v8143
  %v8210 = vpack.c.b16 %v8147, %v8144
  %v8211 = vpack.c.b16 %v8148, %v8145
  %v8212 = vpack.c.b16 %v8152, %v8149
  %v8213 = vpack.c.b16 %v8153, %v8150
  %v8214 = vpack.c.b16 %v8154, %v8151
  %v8215 = vpack.c.b16 %v8158, %v8155
  %v8216 = vpack.c.b16 %v8159, %v8156
  %v8217 = vpack.c.b16 %v8160, %v8157
  %v8218 = vpack.c.b16 %v8164, %v8161
  %v8219 = vpack.c.b16 %v8165, %v8162
  %v8220 = vpack.c.b16 %v8166, %v8163
  %v8221 = vpack.c.b16 %v8170, %v8167
  %v8222 = vpack.c.b16 %v8171, %v8168
  %v8223 = vpack.c.b16 %v8172, %v8169
  %v8224 = vpack.c.b16 %v8176, %v8173
  %v8225 = vpack.c.b16 %v8177, %v8174
  %v8226 = vpack.c.b16 %v8178, %v8175
  %v8295 = vunpack.c.l.b16 %v7983
  %v8296 = vunpack.c.l.b16 %v7984
  %v8297 = vunpack.c.l.b16 %v7985
  %v8298 = vunpack.c.l.b16 %v7986
  %v8299 = vunpack.c.l.b16 %v7987
  %v8300 = vunpack.c.l.b16 %v7988
  %v8301 = vunpack.c.l.b16 %v7989
  %v8302 = vunpack.c.l.b16 %v7990
  %v8303 = vunpack.c.l.b16 %v7991
  %v8304 = vunpack.c.l.b16 %v7992
  %v8305 = vunpack.c.l.b16 %v7993
  %v8306 = vunpack.c.l.b16 %v7994
  %v8307 = vunpack.c.l.b16 %v7995
  %v8308 = vunpack.c.l.b16 %v7996
  %v8309 = vunpack.c.l.b16 %v7997
  %v8310 = vunpack.c.l.b16 %v7998
  %v8311 = vunpack.c.l.b16 %v7999
  %v8312 = vunpack.c.l.b16 %v8000
  %v8313 = vunpack.c.l.b16 %v8001
  %v8314 = vunpack.c.l.b16 %v8002
  %v8315 = vunpack.c.l.b16 %v8003
  %v8316 = vunpack.c.l.b16 %v8004
  %v8317 = vunpack.c.l.b16 %v8005
  %v8318 = vunpack.c.l.b16 %v8006
  %v8319 = vunpack.c.l.b16 %v8007
  %v8320 = vunpack.c.l.b16 %v8008
  %v8321 = vunpack.c.l.b16 %v8009
  %v8322 = vunpack.c.l.b16 %v8010
  %v8323 = vunpack.c.l.b16 %v8011
  %v8324 = vunpack.c.l.b16 %v8012
  %v8325 = vunpack.c.l.b16 %v8013
  %v8326 = vunpack.c.l.b16 %v8014
  %v8327 = vunpack.c.l.b16 %v8015
  %v8328 = vunpack.c.l.b16 %v8016
  %v8329 = vunpack.c.l.b16 %v8017
  %v8330 = vunpack.c.l.b16 %v8018
  %v8331 = vpack.c.b16 %v8296, %v8295
  %v8332 = vpack.c.b16 %v8298, %v8297
  %v8333 = vpack.c.b16 %v8300, %v8299
  %v8334 = vpack.c.b16 %v8302, %v8301
  %v8335 = vpack.c.b16 %v8304, %v8303
  %v8336 = vpack.c.b16 %v8306, %v8305
  %v8337 = vpack.c.b16 %v8308, %v8307
  %v8338 = vpack.c.b16 %v8310, %v8309
  %v8339 = vpack.c.b16 %v8312, %v8311
  %v8340 = vpack.c.b16 %v8314, %v8313
  %v8341 = vpack.c.b16 %v8316, %v8315
  %v8342 = vpack.c.b16 %v8318, %v8317
  %v8343 = vpack.c.b16 %v8320, %v8319
  %v8344 = vpack.c.b16 %v8322, %v8321
  %v8345 = vpack.c.b16 %v8324, %v8323
  %v8346 = vpack.c.b16 %v8326, %v8325
  %v8347 = vpack.c.b16 %v8328, %v8327
  %v8348 = vpack.c.b16 %v8330, %v8329
  %vm8367 = vcmask 261120
  %v8369 = vsel %vm8367, %v8181, 0
  %v8372 = vsel %vm8367, %v8184, 0
  %v8375 = vsel %vm8367, %v8187, 0
  %v8378 = vsel %vm8367, %v8190, 0
  %v8381 = vsel %vm8367, %v8193, 0
  %v8384 = vsel %vm8367, %v8196, 0
  %v8387 = vsel %vm8367, %v8199, 0
  %v8390 = vsel %vm8367, %v8202, 0
  %v8393 = vsel %vm8367, %v8205, 0
  %v8396 = vsel %vm8367, %v8208, 0
  %v8399 = vsel %vm8367, %v8211, 0
  %v8402 = vsel %vm8367, %v8214, 0
  %v8405 = vsel %vm8367, %v8217, 0
  %v8408 = vsel %vm8367, %v8220, 0
  %v8411 = vsel %vm8367, %v8223, 0
  %v8414 = vsel %vm8367, %v8226, 0
  %8416 = vmatpush.bf16.msra.mxu0 %v8338
  %8417 = vmatpush.bf16.msra.mxu0 %v8337
  %8418 = vmatpush.bf16.msra.mxu0 %v8336
  %8419 = vmatpush.bf16.msra.mxu0 %v8335
  %8420 = vmatpush.bf16.msra.mxu0 %v8334
  %8421 = vmatpush.bf16.msra.mxu0 %v8333
  %8422 = vmatpush.bf16.msra.mxu0 %v8332
  %8423 = vmatpush.bf16.msra.mxu0 %v8331
  %8424 = vmatmul.bf16.gmra.mxu0 %v8179
  %v8425 = vpop.f32.mrf.mxu0
  %v8426 = vadd.f32 0.0, %v8425
  %v8427 = vpop.f32.mrf.mxu0
  %v8428 = vadd.f32 0.0, %v8427
  %8429 = vmatmul.bf16.gmra.mxu0 %v8182
  %v8430 = vpop.f32.mrf.mxu0
  %v8431 = vadd.f32 0.0, %v8430
  %v8432 = vpop.f32.mrf.mxu0
  %v8433 = vadd.f32 0.0, %v8432
  %8434 = vmatmul.bf16.gmra.mxu0 %v8185
  %v8435 = vpop.f32.mrf.mxu0
  %v8436 = vadd.f32 0.0, %v8435
  %v8437 = vpop.f32.mrf.mxu0
  %v8438 = vadd.f32 0.0, %v8437
  %8439 = vmatmul.bf16.gmra.mxu0 %v8188
  %v8440 = vpop.f32.mrf.mxu0
  %v8441 = vadd.f32 0.0, %v8440
  %v8442 = vpop.f32.mrf.mxu0
  %v8443 = vadd.f32 0.0, %v8442
  %8444 = vmatmul.bf16.gmra.mxu0 %v8191
  %v8445 = vpop.f32.mrf.mxu0
  %v8446 = vadd.f32 0.0, %v8445
  %v8447 = vpop.f32.mrf.mxu0
  %v8448 = vadd.f32 0.0, %v8447
  %8449 = vmatmul.bf16.gmra.mxu0 %v8194
  %v8450 = vpop.f32.mrf.mxu0
  %v8451 = vadd.f32 0.0, %v8450
  %v8452 = vpop.f32.mrf.mxu0
  %v8453 = vadd.f32 0.0, %v8452
  %8454 = vmatmul.bf16.gmra.mxu0 %v8197
  %v8455 = vpop.f32.mrf.mxu0
  %v8456 = vadd.f32 0.0, %v8455
  %v8457 = vpop.f32.mrf.mxu0
  %v8458 = vadd.f32 0.0, %v8457
  %8459 = vmatmul.bf16.gmra.mxu0 %v8200
  %v8460 = vpop.f32.mrf.mxu0
  %v8461 = vadd.f32 0.0, %v8460
  %v8462 = vpop.f32.mrf.mxu0
  %v8463 = vadd.f32 0.0, %v8462
  %8464 = vmatmul.bf16.gmra.mxu0 %v8203
  %v8465 = vpop.f32.mrf.mxu0
  %v8466 = vadd.f32 0.0, %v8465
  %v8467 = vpop.f32.mrf.mxu0
  %v8468 = vadd.f32 0.0, %v8467
  %8469 = vmatmul.bf16.gmra.mxu0 %v8206
  %v8470 = vpop.f32.mrf.mxu0
  %v8471 = vadd.f32 0.0, %v8470
  %v8472 = vpop.f32.mrf.mxu0
  %v8473 = vadd.f32 0.0, %v8472
  %8474 = vmatmul.bf16.gmra.mxu0 %v8209
  %v8475 = vpop.f32.mrf.mxu0
  %v8476 = vadd.f32 0.0, %v8475
  %v8477 = vpop.f32.mrf.mxu0
  %v8478 = vadd.f32 0.0, %v8477
  %8479 = vmatmul.bf16.gmra.mxu0 %v8212
  %v8480 = vpop.f32.mrf.mxu0
  %v8481 = vadd.f32 0.0, %v8480
  %v8482 = vpop.f32.mrf.mxu0
  %v8483 = vadd.f32 0.0, %v8482
  %8484 = vmatmul.bf16.gmra.mxu0 %v8215
  %v8485 = vpop.f32.mrf.mxu0
  %v8486 = vadd.f32 0.0, %v8485
  %v8487 = vpop.f32.mrf.mxu0
  %v8488 = vadd.f32 0.0, %v8487
  %8489 = vmatmul.bf16.gmra.mxu0 %v8218
  %v8490 = vpop.f32.mrf.mxu0
  %v8491 = vadd.f32 0.0, %v8490
  %v8492 = vpop.f32.mrf.mxu0
  %v8493 = vadd.f32 0.0, %v8492
  %8494 = vmatmul.bf16.gmra.mxu0 %v8221
  %v8495 = vpop.f32.mrf.mxu0
  %v8496 = vadd.f32 0.0, %v8495
  %v8497 = vpop.f32.mrf.mxu0
  %v8498 = vadd.f32 0.0, %v8497
  %8499 = vmatmul.bf16.gmra.mxu0 %v8224
  %v8500 = vpop.f32.mrf.mxu0
  %v8501 = vadd.f32 0.0, %v8500
  %v8502 = vpop.f32.mrf.mxu0
  %v8503 = vadd.f32 0.0, %v8502
  %8504 = vdwg.mxu0
  %8505 = vmatpush.bf16.msra.mxu0 %v8346
  %8506 = vmatpush.bf16.msra.mxu0 %v8345
  %8507 = vmatpush.bf16.msra.mxu0 %v8344
  %8508 = vmatpush.bf16.msra.mxu0 %v8343
  %8509 = vmatpush.bf16.msra.mxu0 %v8342
  %8510 = vmatpush.bf16.msra.mxu0 %v8341
  %8511 = vmatpush.bf16.msra.mxu0 %v8340
  %8512 = vmatpush.bf16.msra.mxu0 %v8339
  %8513 = vmatmul.bf16.gmra.mxu0 %v8180
  %v8514 = vpop.f32.mrf.mxu0
  %v8515 = vadd.f32 %v8426, %v8514
  %v8516 = vpop.f32.mrf.mxu0
  %v8517 = vadd.f32 %v8428, %v8516
  %8518 = vmatmul.bf16.gmra.mxu0 %v8183
  %v8519 = vpop.f32.mrf.mxu0
  %v8520 = vadd.f32 %v8431, %v8519
  %v8521 = vpop.f32.mrf.mxu0
  %v8522 = vadd.f32 %v8433, %v8521
  %8523 = vmatmul.bf16.gmra.mxu0 %v8186
  %v8524 = vpop.f32.mrf.mxu0
  %v8525 = vadd.f32 %v8436, %v8524
  %v8526 = vpop.f32.mrf.mxu0
  %v8527 = vadd.f32 %v8438, %v8526
  %8528 = vmatmul.bf16.gmra.mxu0 %v8189
  %v8529 = vpop.f32.mrf.mxu0
  %v8530 = vadd.f32 %v8441, %v8529
  %v8531 = vpop.f32.mrf.mxu0
  %v8532 = vadd.f32 %v8443, %v8531
  %8533 = vmatmul.bf16.gmra.mxu0 %v8192
  %v8534 = vpop.f32.mrf.mxu0
  %v8535 = vadd.f32 %v8446, %v8534
  %v8536 = vpop.f32.mrf.mxu0
  %v8537 = vadd.f32 %v8448, %v8536
  %8538 = vmatmul.bf16.gmra.mxu0 %v8195
  %v8539 = vpop.f32.mrf.mxu0
  %v8540 = vadd.f32 %v8451, %v8539
  %v8541 = vpop.f32.mrf.mxu0
  %v8542 = vadd.f32 %v8453, %v8541
  %8543 = vmatmul.bf16.gmra.mxu0 %v8198
  %v8544 = vpop.f32.mrf.mxu0
  %v8545 = vadd.f32 %v8456, %v8544
  %v8546 = vpop.f32.mrf.mxu0
  %v8547 = vadd.f32 %v8458, %v8546
  %8548 = vmatmul.bf16.gmra.mxu0 %v8201
  %v8549 = vpop.f32.mrf.mxu0
  %v8550 = vadd.f32 %v8461, %v8549
  %v8551 = vpop.f32.mrf.mxu0
  %v8552 = vadd.f32 %v8463, %v8551
  %8553 = vmatmul.bf16.gmra.mxu0 %v8204
  %v8554 = vpop.f32.mrf.mxu0
  %v8555 = vadd.f32 %v8466, %v8554
  %v8556 = vpop.f32.mrf.mxu0
  %v8557 = vadd.f32 %v8468, %v8556
  %8558 = vmatmul.bf16.gmra.mxu0 %v8207
  %v8559 = vpop.f32.mrf.mxu0
  %v8560 = vadd.f32 %v8471, %v8559
  %v8561 = vpop.f32.mrf.mxu0
  %v8562 = vadd.f32 %v8473, %v8561
  %8563 = vmatmul.bf16.gmra.mxu0 %v8210
  %v8564 = vpop.f32.mrf.mxu0
  %v8565 = vadd.f32 %v8476, %v8564
  %v8566 = vpop.f32.mrf.mxu0
  %v8567 = vadd.f32 %v8478, %v8566
  %8568 = vmatmul.bf16.gmra.mxu0 %v8213
  %v8569 = vpop.f32.mrf.mxu0
  %v8570 = vadd.f32 %v8481, %v8569
  %v8571 = vpop.f32.mrf.mxu0
  %v8572 = vadd.f32 %v8483, %v8571
  %8573 = vmatmul.bf16.gmra.mxu0 %v8216
  %v8574 = vpop.f32.mrf.mxu0
  %v8575 = vadd.f32 %v8486, %v8574
  %v8576 = vpop.f32.mrf.mxu0
  %v8577 = vadd.f32 %v8488, %v8576
  %8578 = vmatmul.bf16.gmra.mxu0 %v8219
  %v8579 = vpop.f32.mrf.mxu0
  %v8580 = vadd.f32 %v8491, %v8579
  %v8581 = vpop.f32.mrf.mxu0
  %v8582 = vadd.f32 %v8493, %v8581
  %8583 = vmatmul.bf16.gmra.mxu0 %v8222
  %v8584 = vpop.f32.mrf.mxu0
  %v8585 = vadd.f32 %v8496, %v8584
  %v8586 = vpop.f32.mrf.mxu0
  %v8587 = vadd.f32 %v8498, %v8586
  %8588 = vmatmul.bf16.gmra.mxu0 %v8225
  %v8589 = vpop.f32.mrf.mxu0
  %v8590 = vadd.f32 %v8501, %v8589
  %v8591 = vpop.f32.mrf.mxu0
  %v8592 = vadd.f32 %v8503, %v8591
  %8593 = vdwg.mxu0
  %8594 = vmatpush.bf16.msra.mxu0 0
  %8595 = vmatpush.bf16.msra.mxu0 0
  %8596 = vmatpush.bf16.msra.mxu0 0
  %8597 = vmatpush.bf16.msra.mxu0 0
  %8598 = vmatpush.bf16.msra.mxu0 0
  %8599 = vmatpush.bf16.msra.mxu0 0
  %8600 = vmatpush.bf16.msra.mxu0 %v8348
  %8601 = vmatpush.bf16.msra.mxu0 %v8347
  %8602 = vmatmul.bf16.gmra.mxu0 %v8369
  %v8603 = vpop.f32.mrf.mxu0
  %v8604 = vadd.f32 %v8515, %v8603
  %v8605 = vpop.f32.mrf.mxu0
  %v8606 = vadd.f32 %v8517, %v8605
  %8607 = vmatmul.bf16.gmra.mxu0 %v8372
  %v8608 = vpop.f32.mrf.mxu0
  %v8609 = vadd.f32 %v8520, %v8608
  %v8610 = vpop.f32.mrf.mxu0
  %v8611 = vadd.f32 %v8522, %v8610
  %8612 = vmatmul.bf16.gmra.mxu0 %v8375
  %v8613 = vpop.f32.mrf.mxu0
  %v8614 = vadd.f32 %v8525, %v8613
  %v8615 = vpop.f32.mrf.mxu0
  %v8616 = vadd.f32 %v8527, %v8615
  %8617 = vmatmul.bf16.gmra.mxu0 %v8378
  %v8618 = vpop.f32.mrf.mxu0
  %v8619 = vadd.f32 %v8530, %v8618
  %v8620 = vpop.f32.mrf.mxu0
  %v8621 = vadd.f32 %v8532, %v8620
  %8622 = vmatmul.bf16.gmra.mxu0 %v8381
  %v8623 = vpop.f32.mrf.mxu0
  %v8624 = vadd.f32 %v8535, %v8623
  %v8625 = vpop.f32.mrf.mxu0
  %v8626 = vadd.f32 %v8537, %v8625
  %8627 = vmatmul.bf16.gmra.mxu0 %v8384
  %v8628 = vpop.f32.mrf.mxu0
  %v8629 = vadd.f32 %v8540, %v8628
  %v8630 = vpop.f32.mrf.mxu0
  %v8631 = vadd.f32 %v8542, %v8630
  %8632 = vmatmul.bf16.gmra.mxu0 %v8387
  %v8633 = vpop.f32.mrf.mxu0
  %v8634 = vadd.f32 %v8545, %v8633
  %v8635 = vpop.f32.mrf.mxu0
  %v8636 = vadd.f32 %v8547, %v8635
  %8637 = vmatmul.bf16.gmra.mxu0 %v8390
  %v8638 = vpop.f32.mrf.mxu0
  %v8639 = vadd.f32 %v8550, %v8638
  %v8640 = vpop.f32.mrf.mxu0
  %v8641 = vadd.f32 %v8552, %v8640
  %8642 = vmatmul.bf16.gmra.mxu0 %v8393
  %v8643 = vpop.f32.mrf.mxu0
  %v8644 = vadd.f32 %v8555, %v8643
  %v8645 = vpop.f32.mrf.mxu0
  %v8646 = vadd.f32 %v8557, %v8645
  %8647 = vmatmul.bf16.gmra.mxu0 %v8396
  %v8648 = vpop.f32.mrf.mxu0
  %v8649 = vadd.f32 %v8560, %v8648
  %v8650 = vpop.f32.mrf.mxu0
  %v8651 = vadd.f32 %v8562, %v8650
  %8652 = vmatmul.bf16.gmra.mxu0 %v8399
  %v8653 = vpop.f32.mrf.mxu0
  %v8654 = vadd.f32 %v8565, %v8653
  %v8655 = vpop.f32.mrf.mxu0
  %v8656 = vadd.f32 %v8567, %v8655
  %8657 = vmatmul.bf16.gmra.mxu0 %v8402
  %v8658 = vpop.f32.mrf.mxu0
  %v8659 = vadd.f32 %v8570, %v8658
  %v8660 = vpop.f32.mrf.mxu0
  %v8661 = vadd.f32 %v8572, %v8660
  %8662 = vmatmul.bf16.gmra.mxu0 %v8405
  %v8663 = vpop.f32.mrf.mxu0
  %v8664 = vadd.f32 %v8575, %v8663
  %v8665 = vpop.f32.mrf.mxu0
  %v8666 = vadd.f32 %v8577, %v8665
  %8667 = vmatmul.bf16.gmra.mxu0 %v8408
  %v8668 = vpop.f32.mrf.mxu0
  %v8669 = vadd.f32 %v8580, %v8668
  %v8670 = vpop.f32.mrf.mxu0
  %v8671 = vadd.f32 %v8582, %v8670
  %8672 = vmatmul.bf16.gmra.mxu0 %v8411
  %v8673 = vpop.f32.mrf.mxu0
  %v8674 = vadd.f32 %v8585, %v8673
  %v8675 = vpop.f32.mrf.mxu0
  %v8676 = vadd.f32 %v8587, %v8675
  %8677 = vmatmul.bf16.gmra.mxu0 %v8414
  %v8678 = vpop.f32.mrf.mxu0
  %v8679 = vadd.f32 %v8590, %v8678
  %v8680 = vpop.f32.mrf.mxu0
  %v8681 = vadd.f32 %v8592, %v8680
  %8682 = vdwg.mxu0
  %v8687 = vunpack.c.l.b16 %v7878
  %v8688 = vunpack.c.h.b16 %v7878
  %v8689 = vunpack.c.l.b16 %v7879
  %v8690 = vunpack.c.l.b16 %v7880
  %v8691 = vunpack.c.h.b16 %v7880
  %v8692 = vunpack.c.l.b16 %v7881
  %v8693 = vpack.c.b16 %v8690, %v8687
  %v8694 = vpack.c.b16 %v8691, %v8688
  %v8695 = vpack.c.b16 %v8692, %v8689
  %v8734 = vunpack.c.l.b16 %v7946
  %v8735 = vunpack.c.l.b16 %v7947
  %v8736 = vunpack.c.l.b16 %v7948
  %v8737 = vunpack.c.l.b16 %v7949
  %v8738 = vunpack.c.l.b16 %v7950
  %v8739 = vunpack.c.l.b16 %v7951
  %v8740 = vunpack.c.l.b16 %v7952
  %v8741 = vunpack.c.l.b16 %v7953
  %v8742 = vunpack.c.l.b16 %v7954
  %v8743 = vunpack.c.l.b16 %v7955
  %v8744 = vunpack.c.l.b16 %v7956
  %v8745 = vunpack.c.l.b16 %v7957
  %v8746 = vunpack.c.l.b16 %v7958
  %v8747 = vunpack.c.l.b16 %v7959
  %v8748 = vunpack.c.l.b16 %v7960
  %v8749 = vunpack.c.l.b16 %v7961
  %v8750 = vunpack.c.l.b16 %v7962
  %v8751 = vunpack.c.l.b16 %v7963
  %v8752 = vunpack.c.l.b16 %v7964
  %v8753 = vunpack.c.l.b16 %v7965
  %v8754 = vunpack.c.l.b16 %v7966
  %v8755 = vunpack.c.l.b16 %v7967
  %v8756 = vunpack.c.l.b16 %v7968
  %v8757 = vunpack.c.l.b16 %v7969
  %v8758 = vunpack.c.l.b16 %v7970
  %v8759 = vunpack.c.l.b16 %v7971
  %v8760 = vunpack.c.l.b16 %v7972
  %v8761 = vunpack.c.l.b16 %v7973
  %v8762 = vunpack.c.l.b16 %v7974
  %v8763 = vunpack.c.l.b16 %v7975
  %v8764 = vunpack.c.l.b16 %v7976
  %v8765 = vunpack.c.l.b16 %v7977
  %v8766 = vunpack.c.l.b16 %v7978
  %v8767 = vunpack.c.l.b16 %v7979
  %v8768 = vunpack.c.l.b16 %v7980
  %v8769 = vunpack.c.l.b16 %v7981
  %v8770 = vpack.c.b16 %v8735, %v8734
  %v8771 = vpack.c.b16 %v8737, %v8736
  %v8772 = vpack.c.b16 %v8739, %v8738
  %v8773 = vpack.c.b16 %v8741, %v8740
  %v8774 = vpack.c.b16 %v8743, %v8742
  %v8775 = vpack.c.b16 %v8745, %v8744
  %v8776 = vpack.c.b16 %v8747, %v8746
  %v8777 = vpack.c.b16 %v8749, %v8748
  %v8778 = vpack.c.b16 %v8751, %v8750
  %v8779 = vpack.c.b16 %v8753, %v8752
  %v8780 = vpack.c.b16 %v8755, %v8754
  %v8781 = vpack.c.b16 %v8757, %v8756
  %v8782 = vpack.c.b16 %v8759, %v8758
  %v8783 = vpack.c.b16 %v8761, %v8760
  %v8784 = vpack.c.b16 %v8763, %v8762
  %v8785 = vpack.c.b16 %v8765, %v8764
  %v8786 = vpack.c.b16 %v8767, %v8766
  %v8787 = vpack.c.b16 %v8769, %v8768
  %v8807 = vsel %vm8367, %v8695, 0
  %8809 = vmatpush.bf16.msra.mxu0 %v8777
  %8810 = vmatpush.bf16.msra.mxu0 %v8776
  %8811 = vmatpush.bf16.msra.mxu0 %v8775
  %8812 = vmatpush.bf16.msra.mxu0 %v8774
  %8813 = vmatpush.bf16.msra.mxu0 %v8773
  %8814 = vmatpush.bf16.msra.mxu0 %v8772
  %8815 = vmatpush.bf16.msra.mxu0 %v8771
  %8816 = vmatpush.bf16.msra.mxu0 %v8770
  %8817 = vmatmul.bf16.gmra.mxu0 %v8693
  %v8818 = vpop.f32.mrf.mxu0
  %v8819 = vadd.f32 %v8604, %v8818
  %v8820 = vpop.f32.mrf.mxu0
  %v8821 = vadd.f32 %v8606, %v8820
  %8822 = vmatmul.bf16.gmra.mxu0 %v8179
  %v8823 = vpop.f32.mrf.mxu0
  %v8824 = vadd.f32 %v8609, %v8823
  %v8825 = vpop.f32.mrf.mxu0
  %v8826 = vadd.f32 %v8611, %v8825
  %8827 = vmatmul.bf16.gmra.mxu0 %v8182
  %v8828 = vpop.f32.mrf.mxu0
  %v8829 = vadd.f32 %v8614, %v8828
  %v8830 = vpop.f32.mrf.mxu0
  %v8831 = vadd.f32 %v8616, %v8830
  %8832 = vmatmul.bf16.gmra.mxu0 %v8185
  %v8833 = vpop.f32.mrf.mxu0
  %v8834 = vadd.f32 %v8619, %v8833
  %v8835 = vpop.f32.mrf.mxu0
  %v8836 = vadd.f32 %v8621, %v8835
  %8837 = vmatmul.bf16.gmra.mxu0 %v8188
  %v8838 = vpop.f32.mrf.mxu0
  %v8839 = vadd.f32 %v8624, %v8838
  %v8840 = vpop.f32.mrf.mxu0
  %v8841 = vadd.f32 %v8626, %v8840
  %8842 = vmatmul.bf16.gmra.mxu0 %v8191
  %v8843 = vpop.f32.mrf.mxu0
  %v8844 = vadd.f32 %v8629, %v8843
  %v8845 = vpop.f32.mrf.mxu0
  %v8846 = vadd.f32 %v8631, %v8845
  %8847 = vmatmul.bf16.gmra.mxu0 %v8194
  %v8848 = vpop.f32.mrf.mxu0
  %v8849 = vadd.f32 %v8634, %v8848
  %v8850 = vpop.f32.mrf.mxu0
  %v8851 = vadd.f32 %v8636, %v8850
  %8852 = vmatmul.bf16.gmra.mxu0 %v8197
  %v8853 = vpop.f32.mrf.mxu0
  %v8854 = vadd.f32 %v8639, %v8853
  %v8855 = vpop.f32.mrf.mxu0
  %v8856 = vadd.f32 %v8641, %v8855
  %8857 = vmatmul.bf16.gmra.mxu0 %v8200
  %v8858 = vpop.f32.mrf.mxu0
  %v8859 = vadd.f32 %v8644, %v8858
  %v8860 = vpop.f32.mrf.mxu0
  %v8861 = vadd.f32 %v8646, %v8860
  %8862 = vmatmul.bf16.gmra.mxu0 %v8203
  %v8863 = vpop.f32.mrf.mxu0
  %v8864 = vadd.f32 %v8649, %v8863
  %v8865 = vpop.f32.mrf.mxu0
  %v8866 = vadd.f32 %v8651, %v8865
  %8867 = vmatmul.bf16.gmra.mxu0 %v8206
  %v8868 = vpop.f32.mrf.mxu0
  %v8869 = vadd.f32 %v8654, %v8868
  %v8870 = vpop.f32.mrf.mxu0
  %v8871 = vadd.f32 %v8656, %v8870
  %8872 = vmatmul.bf16.gmra.mxu0 %v8209
  %v8873 = vpop.f32.mrf.mxu0
  %v8874 = vadd.f32 %v8659, %v8873
  %v8875 = vpop.f32.mrf.mxu0
  %v8876 = vadd.f32 %v8661, %v8875
  %8877 = vmatmul.bf16.gmra.mxu0 %v8212
  %v8878 = vpop.f32.mrf.mxu0
  %v8879 = vadd.f32 %v8664, %v8878
  %v8880 = vpop.f32.mrf.mxu0
  %v8881 = vadd.f32 %v8666, %v8880
  %8882 = vmatmul.bf16.gmra.mxu0 %v8215
  %v8883 = vpop.f32.mrf.mxu0
  %v8884 = vadd.f32 %v8669, %v8883
  %v8885 = vpop.f32.mrf.mxu0
  %v8886 = vadd.f32 %v8671, %v8885
  %8887 = vmatmul.bf16.gmra.mxu0 %v8218
  %v8888 = vpop.f32.mrf.mxu0
  %v8889 = vadd.f32 %v8674, %v8888
  %v8890 = vpop.f32.mrf.mxu0
  %v8891 = vadd.f32 %v8676, %v8890
  %8892 = vmatmul.bf16.gmra.mxu0 %v8221
  %v8893 = vpop.f32.mrf.mxu0
  %v8894 = vadd.f32 %v8679, %v8893
  %v8895 = vpop.f32.mrf.mxu0
  %v8896 = vadd.f32 %v8681, %v8895
  %8897 = vdwg.mxu0
  %8898 = vmatpush.bf16.msra.mxu0 %v8785
  %8899 = vmatpush.bf16.msra.mxu0 %v8784
  %8900 = vmatpush.bf16.msra.mxu0 %v8783
  %8901 = vmatpush.bf16.msra.mxu0 %v8782
  %8902 = vmatpush.bf16.msra.mxu0 %v8781
  %8903 = vmatpush.bf16.msra.mxu0 %v8780
  %8904 = vmatpush.bf16.msra.mxu0 %v8779
  %8905 = vmatpush.bf16.msra.mxu0 %v8778
  %8906 = vmatmul.bf16.gmra.mxu0 %v8694
  %v8907 = vpop.f32.mrf.mxu0
  %v8908 = vadd.f32 %v8819, %v8907
  %v8909 = vpop.f32.mrf.mxu0
  %v8910 = vadd.f32 %v8821, %v8909
  %8911 = vmatmul.bf16.gmra.mxu0 %v8180
  %v8912 = vpop.f32.mrf.mxu0
  %v8913 = vadd.f32 %v8824, %v8912
  %v8914 = vpop.f32.mrf.mxu0
  %v8915 = vadd.f32 %v8826, %v8914
  %8916 = vmatmul.bf16.gmra.mxu0 %v8183
  %v8917 = vpop.f32.mrf.mxu0
  %v8918 = vadd.f32 %v8829, %v8917
  %v8919 = vpop.f32.mrf.mxu0
  %v8920 = vadd.f32 %v8831, %v8919
  %8921 = vmatmul.bf16.gmra.mxu0 %v8186
  %v8922 = vpop.f32.mrf.mxu0
  %v8923 = vadd.f32 %v8834, %v8922
  %v8924 = vpop.f32.mrf.mxu0
  %v8925 = vadd.f32 %v8836, %v8924
  %8926 = vmatmul.bf16.gmra.mxu0 %v8189
  %v8927 = vpop.f32.mrf.mxu0
  %v8928 = vadd.f32 %v8839, %v8927
  %v8929 = vpop.f32.mrf.mxu0
  %v8930 = vadd.f32 %v8841, %v8929
  %8931 = vmatmul.bf16.gmra.mxu0 %v8192
  %v8932 = vpop.f32.mrf.mxu0
  %v8933 = vadd.f32 %v8844, %v8932
  %v8934 = vpop.f32.mrf.mxu0
  %v8935 = vadd.f32 %v8846, %v8934
  %8936 = vmatmul.bf16.gmra.mxu0 %v8195
  %v8937 = vpop.f32.mrf.mxu0
  %v8938 = vadd.f32 %v8849, %v8937
  %v8939 = vpop.f32.mrf.mxu0
  %v8940 = vadd.f32 %v8851, %v8939
  %8941 = vmatmul.bf16.gmra.mxu0 %v8198
  %v8942 = vpop.f32.mrf.mxu0
  %v8943 = vadd.f32 %v8854, %v8942
  %v8944 = vpop.f32.mrf.mxu0
  %v8945 = vadd.f32 %v8856, %v8944
  %8946 = vmatmul.bf16.gmra.mxu0 %v8201
  %v8947 = vpop.f32.mrf.mxu0
  %v8948 = vadd.f32 %v8859, %v8947
  %v8949 = vpop.f32.mrf.mxu0
  %v8950 = vadd.f32 %v8861, %v8949
  %8951 = vmatmul.bf16.gmra.mxu0 %v8204
  %v8952 = vpop.f32.mrf.mxu0
  %v8953 = vadd.f32 %v8864, %v8952
  %v8954 = vpop.f32.mrf.mxu0
  %v8955 = vadd.f32 %v8866, %v8954
  %8956 = vmatmul.bf16.gmra.mxu0 %v8207
  %v8957 = vpop.f32.mrf.mxu0
  %v8958 = vadd.f32 %v8869, %v8957
  %v8959 = vpop.f32.mrf.mxu0
  %v8960 = vadd.f32 %v8871, %v8959
  %8961 = vmatmul.bf16.gmra.mxu0 %v8210
  %v8962 = vpop.f32.mrf.mxu0
  %v8963 = vadd.f32 %v8874, %v8962
  %v8964 = vpop.f32.mrf.mxu0
  %v8965 = vadd.f32 %v8876, %v8964
  %8966 = vmatmul.bf16.gmra.mxu0 %v8213
  %v8967 = vpop.f32.mrf.mxu0
  %v8968 = vadd.f32 %v8879, %v8967
  %v8969 = vpop.f32.mrf.mxu0
  %v8970 = vadd.f32 %v8881, %v8969
  %8971 = vmatmul.bf16.gmra.mxu0 %v8216
  %v8972 = vpop.f32.mrf.mxu0
  %v8973 = vadd.f32 %v8884, %v8972
  %v8974 = vpop.f32.mrf.mxu0
  %v8975 = vadd.f32 %v8886, %v8974
  %8976 = vmatmul.bf16.gmra.mxu0 %v8219
  %v8977 = vpop.f32.mrf.mxu0
  %v8978 = vadd.f32 %v8889, %v8977
  %v8979 = vpop.f32.mrf.mxu0
  %v8980 = vadd.f32 %v8891, %v8979
  %8981 = vmatmul.bf16.gmra.mxu0 %v8222
  %v8982 = vpop.f32.mrf.mxu0
  %v8983 = vadd.f32 %v8894, %v8982
  %v8984 = vpop.f32.mrf.mxu0
  %v8985 = vadd.f32 %v8896, %v8984
  %8986 = vdwg.mxu0
  %8987 = vmatpush.bf16.msra.mxu0 0
  %8988 = vmatpush.bf16.msra.mxu0 0
  %8989 = vmatpush.bf16.msra.mxu0 0
  %8990 = vmatpush.bf16.msra.mxu0 0
  %8991 = vmatpush.bf16.msra.mxu0 0
  %8992 = vmatpush.bf16.msra.mxu0 0
  %8993 = vmatpush.bf16.msra.mxu0 %v8787
  %8994 = vmatpush.bf16.msra.mxu0 %v8786
  %8995 = vmatmul.bf16.gmra.mxu0 %v8807
  %v8996 = vpop.f32.mrf.mxu0
  %v8997 = vadd.f32 %v8908, %v8996
  %v8998 = vpop.f32.mrf.mxu0
  %v8999 = vadd.f32 %v8910, %v8998
  %9000 = vmatmul.bf16.gmra.mxu0 %v8369
  %v9001 = vpop.f32.mrf.mxu0
  %v9002 = vadd.f32 %v8913, %v9001
  %v9003 = vpop.f32.mrf.mxu0
  %v9004 = vadd.f32 %v8915, %v9003
  %9005 = vmatmul.bf16.gmra.mxu0 %v8372
  %v9006 = vpop.f32.mrf.mxu0
  %v9007 = vadd.f32 %v8918, %v9006
  %v9008 = vpop.f32.mrf.mxu0
  %v9009 = vadd.f32 %v8920, %v9008
  %9010 = vmatmul.bf16.gmra.mxu0 %v8375
  %v9011 = vpop.f32.mrf.mxu0
  %v9012 = vadd.f32 %v8923, %v9011
  %v9013 = vpop.f32.mrf.mxu0
  %v9014 = vadd.f32 %v8925, %v9013
  %9015 = vmatmul.bf16.gmra.mxu0 %v8378
  %v9016 = vpop.f32.mrf.mxu0
  %v9017 = vadd.f32 %v8928, %v9016
  %v9018 = vpop.f32.mrf.mxu0
  %v9019 = vadd.f32 %v8930, %v9018
  %9020 = vmatmul.bf16.gmra.mxu0 %v8381
  %v9021 = vpop.f32.mrf.mxu0
  %v9022 = vadd.f32 %v8933, %v9021
  %v9023 = vpop.f32.mrf.mxu0
  %v9024 = vadd.f32 %v8935, %v9023
  %9025 = vmatmul.bf16.gmra.mxu0 %v8384
  %v9026 = vpop.f32.mrf.mxu0
  %v9027 = vadd.f32 %v8938, %v9026
  %v9028 = vpop.f32.mrf.mxu0
  %v9029 = vadd.f32 %v8940, %v9028
  %9030 = vmatmul.bf16.gmra.mxu0 %v8387
  %v9031 = vpop.f32.mrf.mxu0
  %v9032 = vadd.f32 %v8943, %v9031
  %v9033 = vpop.f32.mrf.mxu0
  %v9034 = vadd.f32 %v8945, %v9033
  %9035 = vmatmul.bf16.gmra.mxu0 %v8390
  %v9036 = vpop.f32.mrf.mxu0
  %v9037 = vadd.f32 %v8948, %v9036
  %v9038 = vpop.f32.mrf.mxu0
  %v9039 = vadd.f32 %v8950, %v9038
  %9040 = vmatmul.bf16.gmra.mxu0 %v8393
  %v9041 = vpop.f32.mrf.mxu0
  %v9042 = vadd.f32 %v8953, %v9041
  %v9043 = vpop.f32.mrf.mxu0
  %v9044 = vadd.f32 %v8955, %v9043
  %9045 = vmatmul.bf16.gmra.mxu0 %v8396
  %v9046 = vpop.f32.mrf.mxu0
  %v9047 = vadd.f32 %v8958, %v9046
  %v9048 = vpop.f32.mrf.mxu0
  %v9049 = vadd.f32 %v8960, %v9048
  %9050 = vmatmul.bf16.gmra.mxu0 %v8399
  %v9051 = vpop.f32.mrf.mxu0
  %v9052 = vadd.f32 %v8963, %v9051
  %v9053 = vpop.f32.mrf.mxu0
  %v9054 = vadd.f32 %v8965, %v9053
  %9055 = vmatmul.bf16.gmra.mxu0 %v8402
  %v9056 = vpop.f32.mrf.mxu0
  %v9057 = vadd.f32 %v8968, %v9056
  %v9058 = vpop.f32.mrf.mxu0
  %v9059 = vadd.f32 %v8970, %v9058
  %9060 = vmatmul.bf16.gmra.mxu0 %v8405
  %v9061 = vpop.f32.mrf.mxu0
  %v9062 = vadd.f32 %v8973, %v9061
  %v9063 = vpop.f32.mrf.mxu0
  %v9064 = vadd.f32 %v8975, %v9063
  %9065 = vmatmul.bf16.gmra.mxu0 %v8408
  %v9066 = vpop.f32.mrf.mxu0
  %v9067 = vadd.f32 %v8978, %v9066
  %v9068 = vpop.f32.mrf.mxu0
  %v9069 = vadd.f32 %v8980, %v9068
  %9070 = vmatmul.bf16.gmra.mxu0 %v8411
  %v9071 = vpop.f32.mrf.mxu0
  %v9072 = vadd.f32 %v8983, %v9071
  %v9073 = vpop.f32.mrf.mxu0
  %v9074 = vadd.f32 %v8985, %v9073
  %9075 = vdwg.mxu0
  %v9077 = vperm.slane %v7877, 0
  %v9079 = vadd.f32 %v8997, %v9077
  %v9080 = vadd.f32 %v8999, %v9077
  %v9081 = vadd.f32 %v9002, %v9077
  %v9082 = vadd.f32 %v9004, %v9077
  %v9083 = vadd.f32 %v9007, %v9077
  %v9084 = vadd.f32 %v9009, %v9077
  %v9085 = vadd.f32 %v9012, %v9077
  %v9086 = vadd.f32 %v9014, %v9077
  %v9087 = vadd.f32 %v9017, %v9077
  %v9088 = vadd.f32 %v9019, %v9077
  %v9089 = vadd.f32 %v9022, %v9077
  %v9090 = vadd.f32 %v9024, %v9077
  %v9091 = vadd.f32 %v9027, %v9077
  %v9092 = vadd.f32 %v9029, %v9077
  %v9093 = vadd.f32 %v9032, %v9077
  %v9094 = vadd.f32 %v9034, %v9077
  %v9095 = vadd.f32 %v9037, %v9077
  %v9096 = vadd.f32 %v9039, %v9077
  %v9097 = vadd.f32 %v9042, %v9077
  %v9098 = vadd.f32 %v9044, %v9077
  %v9099 = vadd.f32 %v9047, %v9077
  %v9100 = vadd.f32 %v9049, %v9077
  %v9101 = vadd.f32 %v9052, %v9077
  %v9102 = vadd.f32 %v9054, %v9077
  %v9103 = vadd.f32 %v9057, %v9077
  %v9104 = vadd.f32 %v9059, %v9077
  %v9105 = vadd.f32 %v9062, %v9077
  %v9106 = vadd.f32 %v9064, %v9077
  %v9107 = vadd.f32 %v9067, %v9077
  %v9108 = vadd.f32 %v9069, %v9077
  %v9109 = vadd.f32 %v9072, %v9077
  %v9110 = vadd.f32 %v9074, %v9077
  %v9111 = vsub.f32 0.0, %v9079
  %v9112 = vsub.f32 0.0, %v9080
  %v9113 = vsub.f32 0.0, %v9081
  %v9114 = vsub.f32 0.0, %v9082
  %v9115 = vsub.f32 0.0, %v9083
  %v9116 = vsub.f32 0.0, %v9084
  %v9117 = vsub.f32 0.0, %v9085
  %v9118 = vsub.f32 0.0, %v9086
  %v9119 = vsub.f32 0.0, %v9087
  %v9120 = vsub.f32 0.0, %v9088
  %v9121 = vsub.f32 0.0, %v9089
  %v9122 = vsub.f32 0.0, %v9090
  %v9123 = vsub.f32 0.0, %v9091
  %v9124 = vsub.f32 0.0, %v9092
  %v9125 = vsub.f32 0.0, %v9093
  %v9126 = vsub.f32 0.0, %v9094
  %v9127 = vsub.f32 0.0, %v9095
  %v9128 = vsub.f32 0.0, %v9096
  %v9129 = vsub.f32 0.0, %v9097
  %v9130 = vsub.f32 0.0, %v9098
  %v9131 = vsub.f32 0.0, %v9099
  %v9132 = vsub.f32 0.0, %v9100
  %v9133 = vsub.f32 0.0, %v9101
  %v9134 = vsub.f32 0.0, %v9102
  %v9135 = vsub.f32 0.0, %v9103
  %v9136 = vsub.f32 0.0, %v9104
  %v9137 = vsub.f32 0.0, %v9105
  %v9138 = vsub.f32 0.0, %v9106
  %v9139 = vsub.f32 0.0, %v9107
  %v9140 = vsub.f32 0.0, %v9108
  %v9141 = vsub.f32 0.0, %v9109
  %v9142 = vsub.f32 0.0, %v9110
  %v9143 = vmul.f32 %v9111, 1.442695
  %v9144 = vpow.pop %v9143
  %v9145 = vmul.f32 %v9112, 1.442695
  %v9146 = vpow.pop %v9145
  %v9147 = vmul.f32 %v9113, 1.442695
  %v9148 = vpow.pop %v9147
  %v9149 = vmul.f32 %v9114, 1.442695
  %v9150 = vpow.pop %v9149
  %v9151 = vmul.f32 %v9115, 1.442695
  %v9152 = vpow.pop %v9151
  %v9153 = vmul.f32 %v9116, 1.442695
  %v9154 = vpow.pop %v9153
  %v9155 = vmul.f32 %v9117, 1.442695
  %v9156 = vpow.pop %v9155
  %v9157 = vmul.f32 %v9118, 1.442695
  %v9158 = vpow.pop %v9157
  %v9159 = vmul.f32 %v9119, 1.442695
  %v9160 = vpow.pop %v9159
  %v9161 = vmul.f32 %v9120, 1.442695
  %v9162 = vpow.pop %v9161
  %v9163 = vmul.f32 %v9121, 1.442695
  %v9164 = vpow.pop %v9163
  %v9165 = vmul.f32 %v9122, 1.442695
  %v9166 = vpow.pop %v9165
  %v9167 = vmul.f32 %v9123, 1.442695
  %v9168 = vpow.pop %v9167
  %v9169 = vmul.f32 %v9124, 1.442695
  %v9170 = vpow.pop %v9169
  %v9171 = vmul.f32 %v9125, 1.442695
  %v9172 = vpow.pop %v9171
  %v9173 = vmul.f32 %v9126, 1.442695
  %v9174 = vpow.pop %v9173
  %v9175 = vmul.f32 %v9127, 1.442695
  %v9176 = vpow.pop %v9175
  %v9177 = vmul.f32 %v9128, 1.442695
  %v9178 = vpow.pop %v9177
  %v9179 = vmul.f32 %v9129, 1.442695
  %v9180 = vpow.pop %v9179
  %v9181 = vmul.f32 %v9130, 1.442695
  %v9182 = vpow.pop %v9181
  %v9183 = vmul.f32 %v9131, 1.442695
  %v9184 = vpow.pop %v9183
  %v9185 = vmul.f32 %v9132, 1.442695
  %v9186 = vpow.pop %v9185
  %v9187 = vmul.f32 %v9133, 1.442695
  %v9188 = vpow.pop %v9187
  %v9189 = vmul.f32 %v9134, 1.442695
  %v9190 = vpow.pop %v9189
  %v9191 = vmul.f32 %v9135, 1.442695
  %v9192 = vpow.pop %v9191
  %v9193 = vmul.f32 %v9136, 1.442695
  %v9194 = vpow.pop %v9193
  %v9195 = vmul.f32 %v9137, 1.442695
  %v9196 = vpow.pop %v9195
  %v9197 = vmul.f32 %v9138, 1.442695
  %v9198 = vpow.pop %v9197
  %v9199 = vmul.f32 %v9139, 1.442695
  %v9200 = vpow.pop %v9199
  %v9201 = vmul.f32 %v9140, 1.442695
  %v9202 = vpow.pop %v9201
  %v9203 = vmul.f32 %v9141, 1.442695
  %v9204 = vpow.pop %v9203
  %v9205 = vmul.f32 %v9142, 1.442695
  %v9206 = vpow.pop %v9205
  %v9207 = vadd.f32 %v9144, 1.0
  %v9208 = vadd.f32 %v9146, 1.0
  %v9209 = vadd.f32 %v9148, 1.0
  %v9210 = vadd.f32 %v9150, 1.0
  %v9211 = vadd.f32 %v9152, 1.0
  %v9212 = vadd.f32 %v9154, 1.0
  %v9213 = vadd.f32 %v9156, 1.0
  %v9214 = vadd.f32 %v9158, 1.0
  %v9215 = vadd.f32 %v9160, 1.0
  %v9216 = vadd.f32 %v9162, 1.0
  %v9217 = vadd.f32 %v9164, 1.0
  %v9218 = vadd.f32 %v9166, 1.0
  %v9219 = vadd.f32 %v9168, 1.0
  %v9220 = vadd.f32 %v9170, 1.0
  %v9221 = vadd.f32 %v9172, 1.0
  %v9222 = vadd.f32 %v9174, 1.0
  %v9223 = vadd.f32 %v9176, 1.0
  %v9224 = vadd.f32 %v9178, 1.0
  %v9225 = vadd.f32 %v9180, 1.0
  %v9226 = vadd.f32 %v9182, 1.0
  %v9227 = vadd.f32 %v9184, 1.0
  %v9228 = vadd.f32 %v9186, 1.0
  %v9229 = vadd.f32 %v9188, 1.0
  %v9230 = vadd.f32 %v9190, 1.0
  %v9231 = vadd.f32 %v9192, 1.0
  %v9232 = vadd.f32 %v9194, 1.0
  %v9233 = vadd.f32 %v9196, 1.0
  %v9234 = vadd.f32 %v9198, 1.0
  %v9235 = vadd.f32 %v9200, 1.0
  %v9236 = vadd.f32 %v9202, 1.0
  %v9237 = vadd.f32 %v9204, 1.0
  %v9238 = vadd.f32 %v9206, 1.0
  %v9239 = vrcp.pop %v9207
  %v9240 = vrcp.pop %v9208
  %v9241 = vrcp.pop %v9209
  %v9242 = vrcp.pop %v9210
  %v9243 = vrcp.pop %v9211
  %v9244 = vrcp.pop %v9212
  %v9245 = vrcp.pop %v9213
  %v9246 = vrcp.pop %v9214
  %v9247 = vrcp.pop %v9215
  %v9248 = vrcp.pop %v9216
  %v9249 = vrcp.pop %v9217
  %v9250 = vrcp.pop %v9218
  %v9251 = vrcp.pop %v9219
  %v9252 = vrcp.pop %v9220
  %v9253 = vrcp.pop %v9221
  %v9254 = vrcp.pop %v9222
  %v9255 = vrcp.pop %v9223
  %v9256 = vrcp.pop %v9224
  %v9257 = vrcp.pop %v9225
  %v9258 = vrcp.pop %v9226
  %v9259 = vrcp.pop %v9227
  %v9260 = vrcp.pop %v9228
  %v9261 = vrcp.pop %v9229
  %v9262 = vrcp.pop %v9230
  %v9263 = vrcp.pop %v9231
  %v9264 = vrcp.pop %v9232
  %v9265 = vrcp.pop %v9233
  %v9266 = vrcp.pop %v9234
  %v9267 = vrcp.pop %v9235
  %v9268 = vrcp.pop %v9236
  %v9269 = vrcp.pop %v9237
  %v9270 = vrcp.pop %v9238
  %9271 = vst [vmem:[%s9] sm:$0xff] %v9239
  %9272 = vst [vmem:[%s9 + $0x100] sm:$0xff] %v9240
  %9273 = vst [vmem:[%s9 + $0x10] sm:$0xff] %v9241
  %9274 = vst [vmem:[%s9 + $0x110] sm:$0xff] %v9242
  %9275 = vst [vmem:[%s9 + $0x20] sm:$0xff] %v9243
  %9276 = vst [vmem:[%s9 + $0x120] sm:$0xff] %v9244
  %9277 = vst [vmem:[%s9 + $0x30] sm:$0xff] %v9245
  %9278 = vst [vmem:[%s9 + $0x130] sm:$0xff] %v9246
  %9279 = vst [vmem:[%s9 + $0x40] sm:$0xff] %v9247
  %9280 = vst [vmem:[%s9 + $0x140] sm:$0xff] %v9248
  %9281 = vst [vmem:[%s9 + $0x50] sm:$0xff] %v9249
  %9282 = vst [vmem:[%s9 + $0x150] sm:$0xff] %v9250
  %9283 = vst [vmem:[%s9 + $0x60] sm:$0xff] %v9251
  %9284 = vst [vmem:[%s9 + $0x160] sm:$0xff] %v9252
  %9285 = vst [vmem:[%s9 + $0x70] sm:$0xff] %v9253
  %9286 = vst [vmem:[%s9 + $0x170] sm:$0xff] %v9254
  %9287 = vst [vmem:[%s9 + $0x80] sm:$0xff] %v9255
  %9288 = vst [vmem:[%s9 + $0x180] sm:$0xff] %v9256
  %9289 = vst [vmem:[%s9 + $0x90] sm:$0xff] %v9257
  %9290 = vst [vmem:[%s9 + $0x190] sm:$0xff] %v9258
  %9291 = vst [vmem:[%s9 + $0xa0] sm:$0xff] %v9259
  %9292 = vst [vmem:[%s9 + $0x1a0] sm:$0xff] %v9260
  %9293 = vst [vmem:[%s9 + $0xb0] sm:$0xff] %v9261
  %9294 = vst [vmem:[%s9 + $0x1b0] sm:$0xff] %v9262
  %9295 = vst [vmem:[%s9 + $0xc0] sm:$0xff] %v9263
  %9296 = vst [vmem:[%s9 + $0x1c0] sm:$0xff] %v9264
  %9297 = vst [vmem:[%s9 + $0xd0] sm:$0xff] %v9265
  %9298 = vst [vmem:[%s9 + $0x1d0] sm:$0xff] %v9266
  %9299 = vst [vmem:[%s9 + $0xe0] sm:$0xff] %v9267
  %9300 = vst [vmem:[%s9 + $0x1e0] sm:$0xff] %v9268
  %9301 = vst [vmem:[%s9 + $0xf0] sm:$0xff] %v9269
  %9302 = vst [vmem:[%s9 + $0x1f0] sm:$0xff] %v9270
  %v9303 = vld [vmem:[#allocation4 + $0x18] sm:$0xff]
  %v9304 = vld [vmem:[#allocation4 + $0x20] sm:$0xf]
  %v9305 = vld [vmem:[#allocation4 + $0x24] sm:$0xff]
  %v9306 = vld [vmem:[#allocation4 + $0x2c] sm:$0xf]
  %v9307 = vld [vmem:[#allocation4 + $0x30] sm:$0xff]
  %v9308 = vld [vmem:[#allocation4 + $0x38] sm:$0xf]
  %v9309 = vld [vmem:[#allocation4 + $0x3c] sm:$0xff]
  %v9310 = vld [vmem:[#allocation4 + $0x44] sm:$0xf]
  %v9311 = vld [vmem:[#allocation4 + $0x48] sm:$0xff]
  %v9312 = vld [vmem:[#allocation4 + $0x50] sm:$0xf]
  %v9313 = vld [vmem:[#allocation4 + $0x54] sm:$0xff]
  %v9314 = vld [vmem:[#allocation4 + $0x5c] sm:$0xf]
  %v9315 = vld [vmem:[#allocation4 + $0x60] sm:$0xff]
  %v9316 = vld [vmem:[#allocation4 + $0x68] sm:$0xf]
  %v9317 = vld [vmem:[#allocation4 + $0x6c] sm:$0xff]
  %v9318 = vld [vmem:[#allocation4 + $0x74] sm:$0xf]
  %v9319 = vld [vmem:[#allocation4 + $0x78] sm:$0xff]
  %v9320 = vld [vmem:[#allocation4 + $0x80] sm:$0xf]
  %v9321 = vld [vmem:[#allocation4 + $0x84] sm:$0xff]
  %v9322 = vld [vmem:[#allocation4 + $0x8c] sm:$0xf]
  %v9323 = vld [vmem:[#allocation4 + $0x90] sm:$0xff]
  %v9324 = vld [vmem:[#allocation4 + $0x98] sm:$0xf]
  %v9325 = vld [vmem:[#allocation4 + $0x9c] sm:$0xff]
  %v9326 = vld [vmem:[#allocation4 + $0xa4] sm:$0xf]
  %v9327 = vld [vmem:[#allocation4 + $0xa8] sm:$0xff]
  %v9328 = vld [vmem:[#allocation4 + $0xb0] sm:$0xf]
  %v9329 = vld [vmem:[#allocation4 + $0xb4] sm:$0xff]
  %v9330 = vld [vmem:[#allocation4 + $0xbc] sm:$0xf]
  %v9331 = vld [vmem:[#allocation4 + $0xc0] sm:$0xff]
  %v9332 = vld [vmem:[#allocation4 + $0xc8] sm:$0xf]
  %v9333 = vld [vmem:[#allocation4 + $0xcc] sm:$0xff]
  %v9334 = vld [vmem:[#allocation4 + $0xd4] sm:$0xf]
  %v9335 = vld [vmem:[#allocation4 + $0xd8] sm:$0xff]
  %v9336 = vld [vmem:[#allocation4 + $0xe0] sm:$0xf]
  %v9337 = vld [vmem:[#allocation4 + $0xe4] sm:$0xff]
  %v9338 = vld [vmem:[#allocation4 + $0xec] sm:$0xf]
  %v9339 = vld [vmem:[#allocation4 + $0xf0] sm:$0xff]
  %v9340 = vld [vmem:[#allocation4 + $0xf8] sm:$0xf]
  %v9341 = vld [vmem:[#allocation4 + $0xfc] sm:$0xff]
  %v9342 = vld [vmem:[#allocation4 + $0x104] sm:$0xf]
  %v9343 = vld [vmem:[#allocation4 + $0x108] sm:$0xff]
  %v9344 = vld [vmem:[#allocation4 + $0x110] sm:$0xf]
  %v9345 = vld [vmem:[#allocation4 + $0x114] sm:$0xff]
  %v9346 = vld [vmem:[#allocation4 + $0x11c] sm:$0xf]
  %v9347 = vld [vmem:[#allocation4 + $0x120] sm:$0xff]
  %v9348 = vld [vmem:[#allocation4 + $0x128] sm:$0xf]
  %v9349 = vld [vmem:[#allocation4 + $0x12c] sm:$0xff]
  %v9350 = vld [vmem:[#allocation4 + $0x134] sm:$0xf]
  %v9351 = vld [vmem:[#allocation4 + $0x138] sm:$0xff]
  %v9352 = vld [vmem:[#allocation4 + $0x140] sm:$0xf]
  %v9353 = vld [vmem:[#allocation4 + $0x144] sm:$0xff]
  %v9354 = vld [vmem:[#allocation4 + $0x14c] sm:$0xf]
  %v9355 = vld [vmem:[#allocation4 + $0x150] sm:$0xff]
  %v9356 = vld [vmem:[#allocation4 + $0x158] sm:$0xf]
  %v9357 = vld [vmem:[#allocation4 + $0x15c] sm:$0xff]
  %v9358 = vld [vmem:[#allocation4 + $0x164] sm:$0xf]
  %v9359 = vld [vmem:[#allocation4 + $0x168] sm:$0xff]
  %v9360 = vld [vmem:[#allocation4 + $0x170] sm:$0xf]
  %v9361 = vld [vmem:[#allocation4 + $0x174] sm:$0xff]
  %v9362 = vld [vmem:[#allocation4 + $0x17c] sm:$0xf]
  %v9363 = vld [vmem:[#allocation4 + $0x180] sm:$0xff]
  %v9364 = vld [vmem:[#allocation4 + $0x188] sm:$0xf]
  %v9365 = vld [vmem:[#allocation4 + $0x18c] sm:$0xff]
  %v9366 = vld [vmem:[#allocation4 + $0x194] sm:$0xf]
  %v9367 = vld [vmem:[#allocation4 + $0x198] sm:$0xff]
  %v9368 = vld [vmem:[#allocation4 + $0x1a0] sm:$0xf]
  %v9369 = vld [vmem:[#allocation4 + $0x1a4] sm:$0xff]
  %v9370 = vld [vmem:[#allocation4 + $0x1ac] sm:$0xf]
  %s9371 = scalar_lea.vmem %s7, 288
  %v9372 = vld [vmem:[%s9371] sm:$0xf]
  %v9373 = vld [vmem:[%s9371 + $0x4] sm:$0xf]
  %v9374 = vld [vmem:[%s9371 + $0x8] sm:$0xf]
  %v9375 = vld [vmem:[%s9371 + $0xc] sm:$0xf]
  %v9376 = vld [vmem:[%s9371 + $0x10] sm:$0xf]
  %v9377 = vld [vmem:[%s9371 + $0x14] sm:$0xf]
  %v9378 = vld [vmem:[%s9371 + $0x18] sm:$0xf]
  %v9379 = vld [vmem:[%s9371 + $0x1c] sm:$0xf]
  %v9380 = vld [vmem:[%s9371 + $0x20] sm:$0xf]
  %v9381 = vld [vmem:[%s9371 + $0x24] sm:$0xf]
  %v9382 = vld [vmem:[%s9371 + $0x28] sm:$0xf]
  %v9383 = vld [vmem:[%s9371 + $0x2c] sm:$0xf]
  %v9384 = vld [vmem:[%s9371 + $0x30] sm:$0xf]
  %v9385 = vld [vmem:[%s9371 + $0x34] sm:$0xf]
  %v9386 = vld [vmem:[%s9371 + $0x38] sm:$0xf]
  %v9387 = vld [vmem:[%s9371 + $0x3c] sm:$0xf]
  %v9388 = vld [vmem:[%s9371 + $0x40] sm:$0xf]
  %v9389 = vld [vmem:[%s9371 + $0x44] sm:$0xf]
  %v9390 = vld [vmem:[%s9371 + $0x48] sm:$0xf]
  %v9391 = vld [vmem:[%s9371 + $0x4c] sm:$0xf]
  %v9392 = vld [vmem:[%s9371 + $0x50] sm:$0xf]
  %v9393 = vld [vmem:[%s9371 + $0x54] sm:$0xf]
  %v9394 = vld [vmem:[%s9371 + $0x58] sm:$0xf]
  %v9395 = vld [vmem:[%s9371 + $0x5c] sm:$0xf]
  %v9396 = vld [vmem:[%s9371 + $0x60] sm:$0xf]
  %v9397 = vld [vmem:[%s9371 + $0x64] sm:$0xf]
  %v9398 = vld [vmem:[%s9371 + $0x68] sm:$0xf]
  %v9399 = vld [vmem:[%s9371 + $0x6c] sm:$0xf]
  %v9400 = vld [vmem:[%s9371 + $0x70] sm:$0xf]
  %v9401 = vld [vmem:[%s9371 + $0x74] sm:$0xf]
  %v9402 = vld [vmem:[%s9371 + $0x78] sm:$0xf]
  %v9403 = vld [vmem:[%s9371 + $0x7c] sm:$0xf]
  %v9404 = vld [vmem:[%s9371 + $0x80] sm:$0xf]
  %v9405 = vld [vmem:[%s9371 + $0x84] sm:$0xf]
  %v9406 = vld [vmem:[%s9371 + $0x88] sm:$0xf]
  %v9407 = vld [vmem:[%s9371 + $0x8c] sm:$0xf]
  %s9408 = scalar_lea.vmem %s7, 432
  %v9409 = vld [vmem:[%s9408] sm:$0xf]
  %v9410 = vld [vmem:[%s9408 + $0x4] sm:$0xf]
  %v9411 = vld [vmem:[%s9408 + $0x8] sm:$0xf]
  %v9412 = vld [vmem:[%s9408 + $0xc] sm:$0xf]
  %v9413 = vld [vmem:[%s9408 + $0x10] sm:$0xf]
  %v9414 = vld [vmem:[%s9408 + $0x14] sm:$0xf]
  %v9415 = vld [vmem:[%s9408 + $0x18] sm:$0xf]
  %v9416 = vld [vmem:[%s9408 + $0x1c] sm:$0xf]
  %v9417 = vld [vmem:[%s9408 + $0x20] sm:$0xf]
  %v9418 = vld [vmem:[%s9408 + $0x24] sm:$0xf]
  %v9419 = vld [vmem:[%s9408 + $0x28] sm:$0xf]
  %v9420 = vld [vmem:[%s9408 + $0x2c] sm:$0xf]
  %v9421 = vld [vmem:[%s9408 + $0x30] sm:$0xf]
  %v9422 = vld [vmem:[%s9408 + $0x34] sm:$0xf]
  %v9423 = vld [vmem:[%s9408 + $0x38] sm:$0xf]
  %v9424 = vld [vmem:[%s9408 + $0x3c] sm:$0xf]
  %v9425 = vld [vmem:[%s9408 + $0x40] sm:$0xf]
  %v9426 = vld [vmem:[%s9408 + $0x44] sm:$0xf]
  %v9427 = vld [vmem:[%s9408 + $0x48] sm:$0xf]
  %v9428 = vld [vmem:[%s9408 + $0x4c] sm:$0xf]
  %v9429 = vld [vmem:[%s9408 + $0x50] sm:$0xf]
  %v9430 = vld [vmem:[%s9408 + $0x54] sm:$0xf]
  %v9431 = vld [vmem:[%s9408 + $0x58] sm:$0xf]
  %v9432 = vld [vmem:[%s9408 + $0x5c] sm:$0xf]
  %v9433 = vld [vmem:[%s9408 + $0x60] sm:$0xf]
  %v9434 = vld [vmem:[%s9408 + $0x64] sm:$0xf]
  %v9435 = vld [vmem:[%s9408 + $0x68] sm:$0xf]
  %v9436 = vld [vmem:[%s9408 + $0x6c] sm:$0xf]
  %v9437 = vld [vmem:[%s9408 + $0x70] sm:$0xf]
  %v9438 = vld [vmem:[%s9408 + $0x74] sm:$0xf]
  %v9439 = vld [vmem:[%s9408 + $0x78] sm:$0xf]
  %v9440 = vld [vmem:[%s9408 + $0x7c] sm:$0xf]
  %v9441 = vld [vmem:[%s9408 + $0x80] sm:$0xf]
  %v9442 = vld [vmem:[%s9408 + $0x84] sm:$0xf]
  %v9443 = vld [vmem:[%s9408 + $0x88] sm:$0xf]
  %v9444 = vld [vmem:[%s9408 + $0x8c] sm:$0xf]
  %v9509 = vunpack.c.l.b16 %v9307
  %v9510 = vunpack.c.h.b16 %v9307
  %v9511 = vunpack.c.l.b16 %v9308
  %v9512 = vunpack.c.l.b16 %v9309
  %v9513 = vunpack.c.h.b16 %v9309
  %v9514 = vunpack.c.l.b16 %v9310
  %v9515 = vunpack.c.l.b16 %v9311
  %v9516 = vunpack.c.h.b16 %v9311
  %v9517 = vunpack.c.l.b16 %v9312
  %v9518 = vunpack.c.l.b16 %v9313
  %v9519 = vunpack.c.h.b16 %v9313
  %v9520 = vunpack.c.l.b16 %v9314
  %v9521 = vunpack.c.l.b16 %v9315
  %v9522 = vunpack.c.h.b16 %v9315
  %v9523 = vunpack.c.l.b16 %v9316
  %v9524 = vunpack.c.l.b16 %v9317
  %v9525 = vunpack.c.h.b16 %v9317
  %v9526 = vunpack.c.l.b16 %v9318
  %v9527 = vunpack.c.l.b16 %v9319
  %v9528 = vunpack.c.h.b16 %v9319
  %v9529 = vunpack.c.l.b16 %v9320
  %v9530 = vunpack.c.l.b16 %v9321
  %v9531 = vunpack.c.h.b16 %v9321
  %v9532 = vunpack.c.l.b16 %v9322
  %v9533 = vunpack.c.l.b16 %v9323
  %v9534 = vunpack.c.h.b16 %v9323
  %v9535 = vunpack.c.l.b16 %v9324
  %v9536 = vunpack.c.l.b16 %v9325
  %v9537 = vunpack.c.h.b16 %v9325
  %v9538 = vunpack.c.l.b16 %v9326
  %v9539 = vunpack.c.l.b16 %v9327
  %v9540 = vunpack.c.h.b16 %v9327
  %v9541 = vunpack.c.l.b16 %v9328
  %v9542 = vunpack.c.l.b16 %v9329
  %v9543 = vunpack.c.h.b16 %v9329
  %v9544 = vunpack.c.l.b16 %v9330
  %v9545 = vunpack.c.l.b16 %v9331
  %v9546 = vunpack.c.h.b16 %v9331
  %v9547 = vunpack.c.l.b16 %v9332
  %v9548 = vunpack.c.l.b16 %v9333
  %v9549 = vunpack.c.h.b16 %v9333
  %v9550 = vunpack.c.l.b16 %v9334
  %v9551 = vunpack.c.l.b16 %v9335
  %v9552 = vunpack.c.h.b16 %v9335
  %v9553 = vunpack.c.l.b16 %v9336
  %v9554 = vunpack.c.l.b16 %v9337
  %v9555 = vunpack.c.h.b16 %v9337
  %v9556 = vunpack.c.l.b16 %v9338
  %v9557 = vunpack.c.l.b16 %v9339
  %v9558 = vunpack.c.h.b16 %v9339
  %v9559 = vunpack.c.l.b16 %v9340
  %v9560 = vunpack.c.l.b16 %v9341
  %v9561 = vunpack.c.h.b16 %v9341
  %v9562 = vunpack.c.l.b16 %v9342
  %v9563 = vunpack.c.l.b16 %v9343
  %v9564 = vunpack.c.h.b16 %v9343
  %v9565 = vunpack.c.l.b16 %v9344
  %v9566 = vunpack.c.l.b16 %v9345
  %v9567 = vunpack.c.h.b16 %v9345
  %v9568 = vunpack.c.l.b16 %v9346
  %v9569 = vunpack.c.l.b16 %v9347
  %v9570 = vunpack.c.h.b16 %v9347
  %v9571 = vunpack.c.l.b16 %v9348
  %v9572 = vunpack.c.l.b16 %v9349
  %v9573 = vunpack.c.h.b16 %v9349
  %v9574 = vunpack.c.l.b16 %v9350
  %v9575 = vunpack.c.l.b16 %v9351
  %v9576 = vunpack.c.h.b16 %v9351
  %v9577 = vunpack.c.l.b16 %v9352
  %v9578 = vunpack.c.l.b16 %v9353
  %v9579 = vunpack.c.h.b16 %v9353
  %v9580 = vunpack.c.l.b16 %v9354
  %v9581 = vunpack.c.l.b16 %v9355
  %v9582 = vunpack.c.h.b16 %v9355
  %v9583 = vunpack.c.l.b16 %v9356
  %v9584 = vunpack.c.l.b16 %v9357
  %v9585 = vunpack.c.h.b16 %v9357
  %v9586 = vunpack.c.l.b16 %v9358
  %v9587 = vunpack.c.l.b16 %v9359
  %v9588 = vunpack.c.h.b16 %v9359
  %v9589 = vunpack.c.l.b16 %v9360
  %v9590 = vunpack.c.l.b16 %v9361
  %v9591 = vunpack.c.h.b16 %v9361
  %v9592 = vunpack.c.l.b16 %v9362
  %v9593 = vunpack.c.l.b16 %v9363
  %v9594 = vunpack.c.h.b16 %v9363
  %v9595 = vunpack.c.l.b16 %v9364
  %v9596 = vunpack.c.l.b16 %v9365
  %v9597 = vunpack.c.h.b16 %v9365
  %v9598 = vunpack.c.l.b16 %v9366
  %v9599 = vunpack.c.l.b16 %v9367
  %v9600 = vunpack.c.h.b16 %v9367
  %v9601 = vunpack.c.l.b16 %v9368
  %v9602 = vunpack.c.l.b16 %v9369
  %v9603 = vunpack.c.h.b16 %v9369
  %v9604 = vunpack.c.l.b16 %v9370
  %v9605 = vpack.c.b16 %v9512, %v9509
  %v9606 = vpack.c.b16 %v9513, %v9510
  %v9607 = vpack.c.b16 %v9514, %v9511
  %v9608 = vpack.c.b16 %v9518, %v9515
  %v9609 = vpack.c.b16 %v9519, %v9516
  %v9610 = vpack.c.b16 %v9520, %v9517
  %v9611 = vpack.c.b16 %v9524, %v9521
  %v9612 = vpack.c.b16 %v9525, %v9522
  %v9613 = vpack.c.b16 %v9526, %v9523
  %v9614 = vpack.c.b16 %v9530, %v9527
  %v9615 = vpack.c.b16 %v9531, %v9528
  %v9616 = vpack.c.b16 %v9532, %v9529
  %v9617 = vpack.c.b16 %v9536, %v9533
  %v9618 = vpack.c.b16 %v9537, %v9534
  %v9619 = vpack.c.b16 %v9538, %v9535
  %v9620 = vpack.c.b16 %v9542, %v9539
  %v9621 = vpack.c.b16 %v9543, %v9540
  %v9622 = vpack.c.b16 %v9544, %v9541
  %v9623 = vpack.c.b16 %v9548, %v9545
  %v9624 = vpack.c.b16 %v9549, %v9546
  %v9625 = vpack.c.b16 %v9550, %v9547
  %v9626 = vpack.c.b16 %v9554, %v9551
  %v9627 = vpack.c.b16 %v9555, %v9552
  %v9628 = vpack.c.b16 %v9556, %v9553
  %v9629 = vpack.c.b16 %v9560, %v9557
  %v9630 = vpack.c.b16 %v9561, %v9558
  %v9631 = vpack.c.b16 %v9562, %v9559
  %v9632 = vpack.c.b16 %v9566, %v9563
  %v9633 = vpack.c.b16 %v9567, %v9564
  %v9634 = vpack.c.b16 %v9568, %v9565
  %v9635 = vpack.c.b16 %v9572, %v9569
  %v9636 = vpack.c.b16 %v9573, %v9570
  %v9637 = vpack.c.b16 %v9574, %v9571
  %v9638 = vpack.c.b16 %v9578, %v9575
  %v9639 = vpack.c.b16 %v9579, %v9576
  %v9640 = vpack.c.b16 %v9580, %v9577
  %v9641 = vpack.c.b16 %v9584, %v9581
  %v9642 = vpack.c.b16 %v9585, %v9582
  %v9643 = vpack.c.b16 %v9586, %v9583
  %v9644 = vpack.c.b16 %v9590, %v9587
  %v9645 = vpack.c.b16 %v9591, %v9588
  %v9646 = vpack.c.b16 %v9592, %v9589
  %v9647 = vpack.c.b16 %v9596, %v9593
  %v9648 = vpack.c.b16 %v9597, %v9594
  %v9649 = vpack.c.b16 %v9598, %v9595
  %v9650 = vpack.c.b16 %v9602, %v9599
  %v9651 = vpack.c.b16 %v9603, %v9600
  %v9652 = vpack.c.b16 %v9604, %v9601
  %v9721 = vunpack.c.l.b16 %v9409
  %v9722 = vunpack.c.l.b16 %v9410
  %v9723 = vunpack.c.l.b16 %v9411
  %v9724 = vunpack.c.l.b16 %v9412
  %v9725 = vunpack.c.l.b16 %v9413
  %v9726 = vunpack.c.l.b16 %v9414
  %v9727 = vunpack.c.l.b16 %v9415
  %v9728 = vunpack.c.l.b16 %v9416
  %v9729 = vunpack.c.l.b16 %v9417
  %v9730 = vunpack.c.l.b16 %v9418
  %v9731 = vunpack.c.l.b16 %v9419
  %v9732 = vunpack.c.l.b16 %v9420
  %v9733 = vunpack.c.l.b16 %v9421
  %v9734 = vunpack.c.l.b16 %v9422
  %v9735 = vunpack.c.l.b16 %v9423
  %v9736 = vunpack.c.l.b16 %v9424
  %v9737 = vunpack.c.l.b16 %v9425
  %v9738 = vunpack.c.l.b16 %v9426
  %v9739 = vunpack.c.l.b16 %v9427
  %v9740 = vunpack.c.l.b16 %v9428
  %v9741 = vunpack.c.l.b16 %v9429
  %v9742 = vunpack.c.l.b16 %v9430
  %v9743 = vunpack.c.l.b16 %v9431
  %v9744 = vunpack.c.l.b16 %v9432
  %v9745 = vunpack.c.l.b16 %v9433
  %v9746 = vunpack.c.l.b16 %v9434
  %v9747 = vunpack.c.l.b16 %v9435
  %v9748 = vunpack.c.l.b16 %v9436
  %v9749 = vunpack.c.l.b16 %v9437
  %v9750 = vunpack.c.l.b16 %v9438
  %v9751 = vunpack.c.l.b16 %v9439
  %v9752 = vunpack.c.l.b16 %v9440
  %v9753 = vunpack.c.l.b16 %v9441
  %v9754 = vunpack.c.l.b16 %v9442
  %v9755 = vunpack.c.l.b16 %v9443
  %v9756 = vunpack.c.l.b16 %v9444
  %v9757 = vpack.c.b16 %v9722, %v9721
  %v9758 = vpack.c.b16 %v9724, %v9723
  %v9759 = vpack.c.b16 %v9726, %v9725
  %v9760 = vpack.c.b16 %v9728, %v9727
  %v9761 = vpack.c.b16 %v9730, %v9729
  %v9762 = vpack.c.b16 %v9732, %v9731
  %v9763 = vpack.c.b16 %v9734, %v9733
  %v9764 = vpack.c.b16 %v9736, %v9735
  %v9765 = vpack.c.b16 %v9738, %v9737
  %v9766 = vpack.c.b16 %v9740, %v9739
  %v9767 = vpack.c.b16 %v9742, %v9741
  %v9768 = vpack.c.b16 %v9744, %v9743
  %v9769 = vpack.c.b16 %v9746, %v9745
  %v9770 = vpack.c.b16 %v9748, %v9747
  %v9771 = vpack.c.b16 %v9750, %v9749
  %v9772 = vpack.c.b16 %v9752, %v9751
  %v9773 = vpack.c.b16 %v9754, %v9753
  %v9774 = vpack.c.b16 %v9756, %v9755
  %v9794 = vsel %vm8367, %v9607, 0
  %v9797 = vsel %vm8367, %v9610, 0
  %v9800 = vsel %vm8367, %v9613, 0
  %v9803 = vsel %vm8367, %v9616, 0
  %v9806 = vsel %vm8367, %v9619, 0
  %v9809 = vsel %vm8367, %v9622, 0
  %v9812 = vsel %vm8367, %v9625, 0
  %v9815 = vsel %vm8367, %v9628, 0
  %v9818 = vsel %vm8367, %v9631, 0
  %v9821 = vsel %vm8367, %v9634, 0
  %v9824 = vsel %vm8367, %v9637, 0
  %v9827 = vsel %vm8367, %v9640, 0
  %v9830 = vsel %vm8367, %v9643, 0
  %v9833 = vsel %vm8367, %v9646, 0
  %v9836 = vsel %vm8367, %v9649, 0
  %v9839 = vsel %vm8367, %v9652, 0
  %9841 = vmatpush.bf16.msra.mxu0 %v9764
  %9842 = vmatpush.bf16.msra.mxu0 %v9763
  %9843 = vmatpush.bf16.msra.mxu0 %v9762
  %9844 = vmatpush.bf16.msra.mxu0 %v9761
  %9845 = vmatpush.bf16.msra.mxu0 %v9760
  %9846 = vmatpush.bf16.msra.mxu0 %v9759
  %9847 = vmatpush.bf16.msra.mxu0 %v9758
  %9848 = vmatpush.bf16.msra.mxu0 %v9757
  %9849 = vmatmul.bf16.gmra.mxu0 %v9605
  %v9850 = vpop.f32.mrf.mxu0
  %v9851 = vadd.f32 0.0, %v9850
  %v9852 = vpop.f32.mrf.mxu0
  %v9853 = vadd.f32 0.0, %v9852
  %9854 = vmatmul.bf16.gmra.mxu0 %v9608
  %v9855 = vpop.f32.mrf.mxu0
  %v9856 = vadd.f32 0.0, %v9855
  %v9857 = vpop.f32.mrf.mxu0
  %v9858 = vadd.f32 0.0, %v9857
  %9859 = vmatmul.bf16.gmra.mxu0 %v9611
  %v9860 = vpop.f32.mrf.mxu0
  %v9861 = vadd.f32 0.0, %v9860
  %v9862 = vpop.f32.mrf.mxu0
  %v9863 = vadd.f32 0.0, %v9862
  %9864 = vmatmul.bf16.gmra.mxu0 %v9614
  %v9865 = vpop.f32.mrf.mxu0
  %v9866 = vadd.f32 0.0, %v9865
  %v9867 = vpop.f32.mrf.mxu0
  %v9868 = vadd.f32 0.0, %v9867
  %9869 = vmatmul.bf16.gmra.mxu0 %v9617
  %v9870 = vpop.f32.mrf.mxu0
  %v9871 = vadd.f32 0.0, %v9870
  %v9872 = vpop.f32.mrf.mxu0
  %v9873 = vadd.f32 0.0, %v9872
  %9874 = vmatmul.bf16.gmra.mxu0 %v9620
  %v9875 = vpop.f32.mrf.mxu0
  %v9876 = vadd.f32 0.0, %v9875
  %v9877 = vpop.f32.mrf.mxu0
  %v9878 = vadd.f32 0.0, %v9877
  %9879 = vmatmul.bf16.gmra.mxu0 %v9623
  %v9880 = vpop.f32.mrf.mxu0
  %v9881 = vadd.f32 0.0, %v9880
  %v9882 = vpop.f32.mrf.mxu0
  %v9883 = vadd.f32 0.0, %v9882
  %9884 = vmatmul.bf16.gmra.mxu0 %v9626
  %v9885 = vpop.f32.mrf.mxu0
  %v9886 = vadd.f32 0.0, %v9885
  %v9887 = vpop.f32.mrf.mxu0
  %v9888 = vadd.f32 0.0, %v9887
  %9889 = vmatmul.bf16.gmra.mxu0 %v9629
  %v9890 = vpop.f32.mrf.mxu0
  %v9891 = vadd.f32 0.0, %v9890
  %v9892 = vpop.f32.mrf.mxu0
  %v9893 = vadd.f32 0.0, %v9892
  %9894 = vmatmul.bf16.gmra.mxu0 %v9632
  %v9895 = vpop.f32.mrf.mxu0
  %v9896 = vadd.f32 0.0, %v9895
  %v9897 = vpop.f32.mrf.mxu0
  %v9898 = vadd.f32 0.0, %v9897
  %9899 = vmatmul.bf16.gmra.mxu0 %v9635
  %v9900 = vpop.f32.mrf.mxu0
  %v9901 = vadd.f32 0.0, %v9900
  %v9902 = vpop.f32.mrf.mxu0
  %v9903 = vadd.f32 0.0, %v9902
  %9904 = vmatmul.bf16.gmra.mxu0 %v9638
  %v9905 = vpop.f32.mrf.mxu0
  %v9906 = vadd.f32 0.0, %v9905
  %v9907 = vpop.f32.mrf.mxu0
  %v9908 = vadd.f32 0.0, %v9907
  %9909 = vmatmul.bf16.gmra.mxu0 %v9641
  %v9910 = vpop.f32.mrf.mxu0
  %v9911 = vadd.f32 0.0, %v9910
  %v9912 = vpop.f32.mrf.mxu0
  %v9913 = vadd.f32 0.0, %v9912
  %9914 = vmatmul.bf16.gmra.mxu0 %v9644
  %v9915 = vpop.f32.mrf.mxu0
  %v9916 = vadd.f32 0.0, %v9915
  %v9917 = vpop.f32.mrf.mxu0
  %v9918 = vadd.f32 0.0, %v9917
  %9919 = vmatmul.bf16.gmra.mxu0 %v9647
  %v9920 = vpop.f32.mrf.mxu0
  %v9921 = vadd.f32 0.0, %v9920
  %v9922 = vpop.f32.mrf.mxu0
  %v9923 = vadd.f32 0.0, %v9922
  %9924 = vmatmul.bf16.gmra.mxu0 %v9650
  %v9925 = vpop.f32.mrf.mxu0
  %v9926 = vadd.f32 0.0, %v9925
  %v9927 = vpop.f32.mrf.mxu0
  %v9928 = vadd.f32 0.0, %v9927
  %9929 = vdwg.mxu0
  %9930 = vmatpush.bf16.msra.mxu0 %v9772
  %9931 = vmatpush.bf16.msra.mxu0 %v9771
  %9932 = vmatpush.bf16.msra.mxu0 %v9770
  %9933 = vmatpush.bf16.msra.mxu0 %v9769
  %9934 = vmatpush.bf16.msra.mxu0 %v9768
  %9935 = vmatpush.bf16.msra.mxu0 %v9767
  %9936 = vmatpush.bf16.msra.mxu0 %v9766
  %9937 = vmatpush.bf16.msra.mxu0 %v9765
  %9938 = vmatmul.bf16.gmra.mxu0 %v9606
  %v9939 = vpop.f32.mrf.mxu0
  %v9940 = vadd.f32 %v9851, %v9939
  %v9941 = vpop.f32.mrf.mxu0
  %v9942 = vadd.f32 %v9853, %v9941
  %9943 = vmatmul.bf16.gmra.mxu0 %v9609
  %v9944 = vpop.f32.mrf.mxu0
  %v9945 = vadd.f32 %v9856, %v9944
  %v9946 = vpop.f32.mrf.mxu0
  %v9947 = vadd.f32 %v9858, %v9946
  %9948 = vmatmul.bf16.gmra.mxu0 %v9612
  %v9949 = vpop.f32.mrf.mxu0
  %v9950 = vadd.f32 %v9861, %v9949
  %v9951 = vpop.f32.mrf.mxu0
  %v9952 = vadd.f32 %v9863, %v9951
  %9953 = vmatmul.bf16.gmra.mxu0 %v9615
  %v9954 = vpop.f32.mrf.mxu0
  %v9955 = vadd.f32 %v9866, %v9954
  %v9956 = vpop.f32.mrf.mxu0
  %v9957 = vadd.f32 %v9868, %v9956
  %9958 = vmatmul.bf16.gmra.mxu0 %v9618
  %v9959 = vpop.f32.mrf.mxu0
  %v9960 = vadd.f32 %v9871, %v9959
  %v9961 = vpop.f32.mrf.mxu0
  %v9962 = vadd.f32 %v9873, %v9961
  %9963 = vmatmul.bf16.gmra.mxu0 %v9621
  %v9964 = vpop.f32.mrf.mxu0
  %v9965 = vadd.f32 %v9876, %v9964
  %v9966 = vpop.f32.mrf.mxu0
  %v9967 = vadd.f32 %v9878, %v9966
  %9968 = vmatmul.bf16.gmra.mxu0 %v9624
  %v9969 = vpop.f32.mrf.mxu0
  %v9970 = vadd.f32 %v9881, %v9969
  %v9971 = vpop.f32.mrf.mxu0
  %v9972 = vadd.f32 %v9883, %v9971
  %9973 = vmatmul.bf16.gmra.mxu0 %v9627
  %v9974 = vpop.f32.mrf.mxu0
  %v9975 = vadd.f32 %v9886, %v9974
  %v9976 = vpop.f32.mrf.mxu0
  %v9977 = vadd.f32 %v9888, %v9976
  %9978 = vmatmul.bf16.gmra.mxu0 %v9630
  %v9979 = vpop.f32.mrf.mxu0
  %v9980 = vadd.f32 %v9891, %v9979
  %v9981 = vpop.f32.mrf.mxu0
  %v9982 = vadd.f32 %v9893, %v9981
  %9983 = vmatmul.bf16.gmra.mxu0 %v9633
  %v9984 = vpop.f32.mrf.mxu0
  %v9985 = vadd.f32 %v9896, %v9984
  %v9986 = vpop.f32.mrf.mxu0
  %v9987 = vadd.f32 %v9898, %v9986
  %9988 = vmatmul.bf16.gmra.mxu0 %v9636
  %v9989 = vpop.f32.mrf.mxu0
  %v9990 = vadd.f32 %v9901, %v9989
  %v9991 = vpop.f32.mrf.mxu0
  %v9992 = vadd.f32 %v9903, %v9991
  %9993 = vmatmul.bf16.gmra.mxu0 %v9639
  %v9994 = vpop.f32.mrf.mxu0
  %v9995 = vadd.f32 %v9906, %v9994
  %v9996 = vpop.f32.mrf.mxu0
  %v9997 = vadd.f32 %v9908, %v9996
  %9998 = vmatmul.bf16.gmra.mxu0 %v9642
  %v9999 = vpop.f32.mrf.mxu0
  %v10000 = vadd.f32 %v9911, %v9999
  %v10001 = vpop.f32.mrf.mxu0
  %v10002 = vadd.f32 %v9913, %v10001
  %10003 = vmatmul.bf16.gmra.mxu0 %v9645
  %v10004 = vpop.f32.mrf.mxu0
  %v10005 = vadd.f32 %v9916, %v10004
  %v10006 = vpop.f32.mrf.mxu0
  %v10007 = vadd.f32 %v9918, %v10006
  %10008 = vmatmul.bf16.gmra.mxu0 %v9648
  %v10009 = vpop.f32.mrf.mxu0
  %v10010 = vadd.f32 %v9921, %v10009
  %v10011 = vpop.f32.mrf.mxu0
  %v10012 = vadd.f32 %v9923, %v10011
  %10013 = vmatmul.bf16.gmra.mxu0 %v9651
  %v10014 = vpop.f32.mrf.mxu0
  %v10015 = vadd.f32 %v9926, %v10014
  %v10016 = vpop.f32.mrf.mxu0
  %v10017 = vadd.f32 %v9928, %v10016
  %10018 = vdwg.mxu0
  %10019 = vmatpush.bf16.msra.mxu0 0
  %10020 = vmatpush.bf16.msra.mxu0 0
  %10021 = vmatpush.bf16.msra.mxu0 0
  %10022 = vmatpush.bf16.msra.mxu0 0
  %10023 = vmatpush.bf16.msra.mxu0 0
  %10024 = vmatpush.bf16.msra.mxu0 0
  %10025 = vmatpush.bf16.msra.mxu0 %v9774
  %10026 = vmatpush.bf16.msra.mxu0 %v9773
  %10027 = vmatmul.bf16.gmra.mxu0 %v9794
  %v10028 = vpop.f32.mrf.mxu0
  %v10029 = vadd.f32 %v9940, %v10028
  %v10030 = vpop.f32.mrf.mxu0
  %v10031 = vadd.f32 %v9942, %v10030
  %10032 = vmatmul.bf16.gmra.mxu0 %v9797
  %v10033 = vpop.f32.mrf.mxu0
  %v10034 = vadd.f32 %v9945, %v10033
  %v10035 = vpop.f32.mrf.mxu0
  %v10036 = vadd.f32 %v9947, %v10035
  %10037 = vmatmul.bf16.gmra.mxu0 %v9800
  %v10038 = vpop.f32.mrf.mxu0
  %v10039 = vadd.f32 %v9950, %v10038
  %v10040 = vpop.f32.mrf.mxu0
  %v10041 = vadd.f32 %v9952, %v10040
  %10042 = vmatmul.bf16.gmra.mxu0 %v9803
  %v10043 = vpop.f32.mrf.mxu0
  %v10044 = vadd.f32 %v9955, %v10043
  %v10045 = vpop.f32.mrf.mxu0
  %v10046 = vadd.f32 %v9957, %v10045
  %10047 = vmatmul.bf16.gmra.mxu0 %v9806
  %v10048 = vpop.f32.mrf.mxu0
  %v10049 = vadd.f32 %v9960, %v10048
  %v10050 = vpop.f32.mrf.mxu0
  %v10051 = vadd.f32 %v9962, %v10050
  %10052 = vmatmul.bf16.gmra.mxu0 %v9809
  %v10053 = vpop.f32.mrf.mxu0
  %v10054 = vadd.f32 %v9965, %v10053
  %v10055 = vpop.f32.mrf.mxu0
  %v10056 = vadd.f32 %v9967, %v10055
  %10057 = vmatmul.bf16.gmra.mxu0 %v9812
  %v10058 = vpop.f32.mrf.mxu0
  %v10059 = vadd.f32 %v9970, %v10058
  %v10060 = vpop.f32.mrf.mxu0
  %v10061 = vadd.f32 %v9972, %v10060
  %10062 = vmatmul.bf16.gmra.mxu0 %v9815
  %v10063 = vpop.f32.mrf.mxu0
  %v10064 = vadd.f32 %v9975, %v10063
  %v10065 = vpop.f32.mrf.mxu0
  %v10066 = vadd.f32 %v9977, %v10065
  %10067 = vmatmul.bf16.gmra.mxu0 %v9818
  %v10068 = vpop.f32.mrf.mxu0
  %v10069 = vadd.f32 %v9980, %v10068
  %v10070 = vpop.f32.mrf.mxu0
  %v10071 = vadd.f32 %v9982, %v10070
  %10072 = vmatmul.bf16.gmra.mxu0 %v9821
  %v10073 = vpop.f32.mrf.mxu0
  %v10074 = vadd.f32 %v9985, %v10073
  %v10075 = vpop.f32.mrf.mxu0
  %v10076 = vadd.f32 %v9987, %v10075
  %10077 = vmatmul.bf16.gmra.mxu0 %v9824
  %v10078 = vpop.f32.mrf.mxu0
  %v10079 = vadd.f32 %v9990, %v10078
  %v10080 = vpop.f32.mrf.mxu0
  %v10081 = vadd.f32 %v9992, %v10080
  %10082 = vmatmul.bf16.gmra.mxu0 %v9827
  %v10083 = vpop.f32.mrf.mxu0
  %v10084 = vadd.f32 %v9995, %v10083
  %v10085 = vpop.f32.mrf.mxu0
  %v10086 = vadd.f32 %v9997, %v10085
  %10087 = vmatmul.bf16.gmra.mxu0 %v9830
  %v10088 = vpop.f32.mrf.mxu0
  %v10089 = vadd.f32 %v10000, %v10088
  %v10090 = vpop.f32.mrf.mxu0
  %v10091 = vadd.f32 %v10002, %v10090
  %10092 = vmatmul.bf16.gmra.mxu0 %v9833
  %v10093 = vpop.f32.mrf.mxu0
  %v10094 = vadd.f32 %v10005, %v10093
  %v10095 = vpop.f32.mrf.mxu0
  %v10096 = vadd.f32 %v10007, %v10095
  %10097 = vmatmul.bf16.gmra.mxu0 %v9836
  %v10098 = vpop.f32.mrf.mxu0
  %v10099 = vadd.f32 %v10010, %v10098
  %v10100 = vpop.f32.mrf.mxu0
  %v10101 = vadd.f32 %v10012, %v10100
  %10102 = vmatmul.bf16.gmra.mxu0 %v9839
  %v10103 = vpop.f32.mrf.mxu0
  %v10104 = vadd.f32 %v10015, %v10103
  %v10105 = vpop.f32.mrf.mxu0
  %v10106 = vadd.f32 %v10017, %v10105
  %10107 = vdwg.mxu0
  %v10112 = vunpack.c.l.b16 %v9303
  %v10113 = vunpack.c.h.b16 %v9303
  %v10114 = vunpack.c.l.b16 %v9304
  %v10115 = vunpack.c.l.b16 %v9305
  %v10116 = vunpack.c.h.b16 %v9305
  %v10117 = vunpack.c.l.b16 %v9306
  %v10118 = vpack.c.b16 %v10115, %v10112
  %v10119 = vpack.c.b16 %v10116, %v10113
  %v10120 = vpack.c.b16 %v10117, %v10114
  %v10159 = vunpack.c.l.b16 %v9372
  %v10160 = vunpack.c.l.b16 %v9373
  %v10161 = vunpack.c.l.b16 %v9374
  %v10162 = vunpack.c.l.b16 %v9375
  %v10163 = vunpack.c.l.b16 %v9376
  %v10164 = vunpack.c.l.b16 %v9377
  %v10165 = vunpack.c.l.b16 %v9378
  %v10166 = vunpack.c.l.b16 %v9379
  %v10167 = vunpack.c.l.b16 %v9380
  %v10168 = vunpack.c.l.b16 %v9381
  %v10169 = vunpack.c.l.b16 %v9382
  %v10170 = vunpack.c.l.b16 %v9383
  %v10171 = vunpack.c.l.b16 %v9384
  %v10172 = vunpack.c.l.b16 %v9385
  %v10173 = vunpack.c.l.b16 %v9386
  %v10174 = vunpack.c.l.b16 %v9387
  %v10175 = vunpack.c.l.b16 %v9388
  %v10176 = vunpack.c.l.b16 %v9389
  %v10177 = vunpack.c.l.b16 %v9390
  %v10178 = vunpack.c.l.b16 %v9391
  %v10179 = vunpack.c.l.b16 %v9392
  %v10180 = vunpack.c.l.b16 %v9393
  %v10181 = vunpack.c.l.b16 %v9394
  %v10182 = vunpack.c.l.b16 %v9395
  %v10183 = vunpack.c.l.b16 %v9396
  %v10184 = vunpack.c.l.b16 %v9397
  %v10185 = vunpack.c.l.b16 %v9398
  %v10186 = vunpack.c.l.b16 %v9399
  %v10187 = vunpack.c.l.b16 %v9400
  %v10188 = vunpack.c.l.b16 %v9401
  %v10189 = vunpack.c.l.b16 %v9402
  %v10190 = vunpack.c.l.b16 %v9403
  %v10191 = vunpack.c.l.b16 %v9404
  %v10192 = vunpack.c.l.b16 %v9405
  %v10193 = vunpack.c.l.b16 %v9406
  %v10194 = vunpack.c.l.b16 %v9407
  %v10195 = vpack.c.b16 %v10160, %v10159
  %v10196 = vpack.c.b16 %v10162, %v10161
  %v10197 = vpack.c.b16 %v10164, %v10163
  %v10198 = vpack.c.b16 %v10166, %v10165
  %v10199 = vpack.c.b16 %v10168, %v10167
  %v10200 = vpack.c.b16 %v10170, %v10169
  %v10201 = vpack.c.b16 %v10172, %v10171
  %v10202 = vpack.c.b16 %v10174, %v10173
  %v10203 = vpack.c.b16 %v10176, %v10175
  %v10204 = vpack.c.b16 %v10178, %v10177
  %v10205 = vpack.c.b16 %v10180, %v10179
  %v10206 = vpack.c.b16 %v10182, %v10181
  %v10207 = vpack.c.b16 %v10184, %v10183
  %v10208 = vpack.c.b16 %v10186, %v10185
  %v10209 = vpack.c.b16 %v10188, %v10187
  %v10210 = vpack.c.b16 %v10190, %v10189
  %v10211 = vpack.c.b16 %v10192, %v10191
  %v10212 = vpack.c.b16 %v10194, %v10193
  %v10232 = vsel %vm8367, %v10120, 0
  %10234 = vmatpush.bf16.msra.mxu0 %v10202
  %10235 = vmatpush.bf16.msra.mxu0 %v10201
  %10236 = vmatpush.bf16.msra.mxu0 %v10200
  %10237 = vmatpush.bf16.msra.mxu0 %v10199
  %10238 = vmatpush.bf16.msra.mxu0 %v10198
  %10239 = vmatpush.bf16.msra.mxu0 %v10197
  %10240 = vmatpush.bf16.msra.mxu0 %v10196
  %10241 = vmatpush.bf16.msra.mxu0 %v10195
  %10242 = vmatmul.bf16.gmra.mxu0 %v10118
  %v10243 = vpop.f32.mrf.mxu0
  %v10244 = vadd.f32 %v10029, %v10243
  %v10245 = vpop.f32.mrf.mxu0
  %v10246 = vadd.f32 %v10031, %v10245
  %10247 = vmatmul.bf16.gmra.mxu0 %v9605
  %v10248 = vpop.f32.mrf.mxu0
  %v10249 = vadd.f32 %v10034, %v10248
  %v10250 = vpop.f32.mrf.mxu0
  %v10251 = vadd.f32 %v10036, %v10250
  %10252 = vmatmul.bf16.gmra.mxu0 %v9608
  %v10253 = vpop.f32.mrf.mxu0
  %v10254 = vadd.f32 %v10039, %v10253
  %v10255 = vpop.f32.mrf.mxu0
  %v10256 = vadd.f32 %v10041, %v10255
  %10257 = vmatmul.bf16.gmra.mxu0 %v9611
  %v10258 = vpop.f32.mrf.mxu0
  %v10259 = vadd.f32 %v10044, %v10258
  %v10260 = vpop.f32.mrf.mxu0
  %v10261 = vadd.f32 %v10046, %v10260
  %10262 = vmatmul.bf16.gmra.mxu0 %v9614
  %v10263 = vpop.f32.mrf.mxu0
  %v10264 = vadd.f32 %v10049, %v10263
  %v10265 = vpop.f32.mrf.mxu0
  %v10266 = vadd.f32 %v10051, %v10265
  %10267 = vmatmul.bf16.gmra.mxu0 %v9617
  %v10268 = vpop.f32.mrf.mxu0
  %v10269 = vadd.f32 %v10054, %v10268
  %v10270 = vpop.f32.mrf.mxu0
  %v10271 = vadd.f32 %v10056, %v10270
  %10272 = vmatmul.bf16.gmra.mxu0 %v9620
  %v10273 = vpop.f32.mrf.mxu0
  %v10274 = vadd.f32 %v10059, %v10273
  %v10275 = vpop.f32.mrf.mxu0
  %v10276 = vadd.f32 %v10061, %v10275
  %10277 = vmatmul.bf16.gmra.mxu0 %v9623
  %v10278 = vpop.f32.mrf.mxu0
  %v10279 = vadd.f32 %v10064, %v10278
  %v10280 = vpop.f32.mrf.mxu0
  %v10281 = vadd.f32 %v10066, %v10280
  %10282 = vmatmul.bf16.gmra.mxu0 %v9626
  %v10283 = vpop.f32.mrf.mxu0
  %v10284 = vadd.f32 %v10069, %v10283
  %v10285 = vpop.f32.mrf.mxu0
  %v10286 = vadd.f32 %v10071, %v10285
  %10287 = vmatmul.bf16.gmra.mxu0 %v9629
  %v10288 = vpop.f32.mrf.mxu0
  %v10289 = vadd.f32 %v10074, %v10288
  %v10290 = vpop.f32.mrf.mxu0
  %v10291 = vadd.f32 %v10076, %v10290
  %10292 = vmatmul.bf16.gmra.mxu0 %v9632
  %v10293 = vpop.f32.mrf.mxu0
  %v10294 = vadd.f32 %v10079, %v10293
  %v10295 = vpop.f32.mrf.mxu0
  %v10296 = vadd.f32 %v10081, %v10295
  %10297 = vmatmul.bf16.gmra.mxu0 %v9635
  %v10298 = vpop.f32.mrf.mxu0
  %v10299 = vadd.f32 %v10084, %v10298
  %v10300 = vpop.f32.mrf.mxu0
  %v10301 = vadd.f32 %v10086, %v10300
  %10302 = vmatmul.bf16.gmra.mxu0 %v9638
  %v10303 = vpop.f32.mrf.mxu0
  %v10304 = vadd.f32 %v10089, %v10303
  %v10305 = vpop.f32.mrf.mxu0
  %v10306 = vadd.f32 %v10091, %v10305
  %10307 = vmatmul.bf16.gmra.mxu0 %v9641
  %v10308 = vpop.f32.mrf.mxu0
  %v10309 = vadd.f32 %v10094, %v10308
  %v10310 = vpop.f32.mrf.mxu0
  %v10311 = vadd.f32 %v10096, %v10310
  %10312 = vmatmul.bf16.gmra.mxu0 %v9644
  %v10313 = vpop.f32.mrf.mxu0
  %v10314 = vadd.f32 %v10099, %v10313
  %v10315 = vpop.f32.mrf.mxu0
  %v10316 = vadd.f32 %v10101, %v10315
  %10317 = vmatmul.bf16.gmra.mxu0 %v9647
  %v10318 = vpop.f32.mrf.mxu0
  %v10319 = vadd.f32 %v10104, %v10318
  %v10320 = vpop.f32.mrf.mxu0
  %v10321 = vadd.f32 %v10106, %v10320
  %10322 = vdwg.mxu0
  %10323 = vmatpush.bf16.msra.mxu0 %v10210
  %10324 = vmatpush.bf16.msra.mxu0 %v10209
  %10325 = vmatpush.bf16.msra.mxu0 %v10208
  %10326 = vmatpush.bf16.msra.mxu0 %v10207
  %10327 = vmatpush.bf16.msra.mxu0 %v10206
  %10328 = vmatpush.bf16.msra.mxu0 %v10205
  %10329 = vmatpush.bf16.msra.mxu0 %v10204
  %10330 = vmatpush.bf16.msra.mxu0 %v10203
  %10331 = vmatmul.bf16.gmra.mxu0 %v10119
  %v10332 = vpop.f32.mrf.mxu0
  %v10333 = vadd.f32 %v10244, %v10332
  %v10334 = vpop.f32.mrf.mxu0
  %v10335 = vadd.f32 %v10246, %v10334
  %10336 = vmatmul.bf16.gmra.mxu0 %v9606
  %v10337 = vpop.f32.mrf.mxu0
  %v10338 = vadd.f32 %v10249, %v10337
  %v10339 = vpop.f32.mrf.mxu0
  %v10340 = vadd.f32 %v10251, %v10339
  %10341 = vmatmul.bf16.gmra.mxu0 %v9609
  %v10342 = vpop.f32.mrf.mxu0
  %v10343 = vadd.f32 %v10254, %v10342
  %v10344 = vpop.f32.mrf.mxu0
  %v10345 = vadd.f32 %v10256, %v10344
  %10346 = vmatmul.bf16.gmra.mxu0 %v9612
  %v10347 = vpop.f32.mrf.mxu0
  %v10348 = vadd.f32 %v10259, %v10347
  %v10349 = vpop.f32.mrf.mxu0
  %v10350 = vadd.f32 %v10261, %v10349
  %10351 = vmatmul.bf16.gmra.mxu0 %v9615
  %v10352 = vpop.f32.mrf.mxu0
  %v10353 = vadd.f32 %v10264, %v10352
  %v10354 = vpop.f32.mrf.mxu0
  %v10355 = vadd.f32 %v10266, %v10354
  %10356 = vmatmul.bf16.gmra.mxu0 %v9618
  %v10357 = vpop.f32.mrf.mxu0
  %v10358 = vadd.f32 %v10269, %v10357
  %v10359 = vpop.f32.mrf.mxu0
  %v10360 = vadd.f32 %v10271, %v10359
  %10361 = vmatmul.bf16.gmra.mxu0 %v9621
  %v10362 = vpop.f32.mrf.mxu0
  %v10363 = vadd.f32 %v10274, %v10362
  %v10364 = vpop.f32.mrf.mxu0
  %v10365 = vadd.f32 %v10276, %v10364
  %10366 = vmatmul.bf16.gmra.mxu0 %v9624
  %v10367 = vpop.f32.mrf.mxu0
  %v10368 = vadd.f32 %v10279, %v10367
  %v10369 = vpop.f32.mrf.mxu0
  %v10370 = vadd.f32 %v10281, %v10369
  %10371 = vmatmul.bf16.gmra.mxu0 %v9627
  %v10372 = vpop.f32.mrf.mxu0
  %v10373 = vadd.f32 %v10284, %v10372
  %v10374 = vpop.f32.mrf.mxu0
  %v10375 = vadd.f32 %v10286, %v10374
  %10376 = vmatmul.bf16.gmra.mxu0 %v9630
  %v10377 = vpop.f32.mrf.mxu0
  %v10378 = vadd.f32 %v10289, %v10377
  %v10379 = vpop.f32.mrf.mxu0
  %v10380 = vadd.f32 %v10291, %v10379
  %10381 = vmatmul.bf16.gmra.mxu0 %v9633
  %v10382 = vpop.f32.mrf.mxu0
  %v10383 = vadd.f32 %v10294, %v10382
  %v10384 = vpop.f32.mrf.mxu0
  %v10385 = vadd.f32 %v10296, %v10384
  %10386 = vmatmul.bf16.gmra.mxu0 %v9636
  %v10387 = vpop.f32.mrf.mxu0
  %v10388 = vadd.f32 %v10299, %v10387
  %v10389 = vpop.f32.mrf.mxu0
  %v10390 = vadd.f32 %v10301, %v10389
  %10391 = vmatmul.bf16.gmra.mxu0 %v9639
  %v10392 = vpop.f32.mrf.mxu0
  %v10393 = vadd.f32 %v10304, %v10392
  %v10394 = vpop.f32.mrf.mxu0
  %v10395 = vadd.f32 %v10306, %v10394
  %10396 = vmatmul.bf16.gmra.mxu0 %v9642
  %v10397 = vpop.f32.mrf.mxu0
  %v10398 = vadd.f32 %v10309, %v10397
  %v10399 = vpop.f32.mrf.mxu0
  %v10400 = vadd.f32 %v10311, %v10399
  %10401 = vmatmul.bf16.gmra.mxu0 %v9645
  %v10402 = vpop.f32.mrf.mxu0
  %v10403 = vadd.f32 %v10314, %v10402
  %v10404 = vpop.f32.mrf.mxu0
  %v10405 = vadd.f32 %v10316, %v10404
  %10406 = vmatmul.bf16.gmra.mxu0 %v9648
  %v10407 = vpop.f32.mrf.mxu0
  %v10408 = vadd.f32 %v10319, %v10407
  %v10409 = vpop.f32.mrf.mxu0
  %v10410 = vadd.f32 %v10321, %v10409
  %10411 = vdwg.mxu0
  %10412 = vmatpush.bf16.msra.mxu0 0
  %10413 = vmatpush.bf16.msra.mxu0 0
  %10414 = vmatpush.bf16.msra.mxu0 0
  %10415 = vmatpush.bf16.msra.mxu0 0
  %10416 = vmatpush.bf16.msra.mxu0 0
  %10417 = vmatpush.bf16.msra.mxu0 0
  %10418 = vmatpush.bf16.msra.mxu0 %v10212
  %10419 = vmatpush.bf16.msra.mxu0 %v10211
  %10420 = vmatmul.bf16.gmra.mxu0 %v10232
  %v10421 = vpop.f32.mrf.mxu0
  %v10422 = vadd.f32 %v10333, %v10421
  %v10423 = vpop.f32.mrf.mxu0
  %v10424 = vadd.f32 %v10335, %v10423
  %10425 = vmatmul.bf16.gmra.mxu0 %v9794
  %v10426 = vpop.f32.mrf.mxu0
  %v10427 = vadd.f32 %v10338, %v10426
  %v10428 = vpop.f32.mrf.mxu0
  %v10429 = vadd.f32 %v10340, %v10428
  %10430 = vmatmul.bf16.gmra.mxu0 %v9797
  %v10431 = vpop.f32.mrf.mxu0
  %v10432 = vadd.f32 %v10343, %v10431
  %v10433 = vpop.f32.mrf.mxu0
  %v10434 = vadd.f32 %v10345, %v10433
  %10435 = vmatmul.bf16.gmra.mxu0 %v9800
  %v10436 = vpop.f32.mrf.mxu0
  %v10437 = vadd.f32 %v10348, %v10436
  %v10438 = vpop.f32.mrf.mxu0
  %v10439 = vadd.f32 %v10350, %v10438
  %10440 = vmatmul.bf16.gmra.mxu0 %v9803
  %v10441 = vpop.f32.mrf.mxu0
  %v10442 = vadd.f32 %v10353, %v10441
  %v10443 = vpop.f32.mrf.mxu0
  %v10444 = vadd.f32 %v10355, %v10443
  %10445 = vmatmul.bf16.gmra.mxu0 %v9806
  %v10446 = vpop.f32.mrf.mxu0
  %v10447 = vadd.f32 %v10358, %v10446
  %v10448 = vpop.f32.mrf.mxu0
  %v10449 = vadd.f32 %v10360, %v10448
  %10450 = vmatmul.bf16.gmra.mxu0 %v9809
  %v10451 = vpop.f32.mrf.mxu0
  %v10452 = vadd.f32 %v10363, %v10451
  %v10453 = vpop.f32.mrf.mxu0
  %v10454 = vadd.f32 %v10365, %v10453
  %10455 = vmatmul.bf16.gmra.mxu0 %v9812
  %v10456 = vpop.f32.mrf.mxu0
  %v10457 = vadd.f32 %v10368, %v10456
  %v10458 = vpop.f32.mrf.mxu0
  %v10459 = vadd.f32 %v10370, %v10458
  %10460 = vmatmul.bf16.gmra.mxu0 %v9815
  %v10461 = vpop.f32.mrf.mxu0
  %v10462 = vadd.f32 %v10373, %v10461
  %v10463 = vpop.f32.mrf.mxu0
  %v10464 = vadd.f32 %v10375, %v10463
  %10465 = vmatmul.bf16.gmra.mxu0 %v9818
  %v10466 = vpop.f32.mrf.mxu0
  %v10467 = vadd.f32 %v10378, %v10466
  %v10468 = vpop.f32.mrf.mxu0
  %v10469 = vadd.f32 %v10380, %v10468
  %10470 = vmatmul.bf16.gmra.mxu0 %v9821
  %v10471 = vpop.f32.mrf.mxu0
  %v10472 = vadd.f32 %v10383, %v10471
  %v10473 = vpop.f32.mrf.mxu0
  %v10474 = vadd.f32 %v10385, %v10473
  %10475 = vmatmul.bf16.gmra.mxu0 %v9824
  %v10476 = vpop.f32.mrf.mxu0
  %v10477 = vadd.f32 %v10388, %v10476
  %v10478 = vpop.f32.mrf.mxu0
  %v10479 = vadd.f32 %v10390, %v10478
  %10480 = vmatmul.bf16.gmra.mxu0 %v9827
  %v10481 = vpop.f32.mrf.mxu0
  %v10482 = vadd.f32 %v10393, %v10481
  %v10483 = vpop.f32.mrf.mxu0
  %v10484 = vadd.f32 %v10395, %v10483
  %10485 = vmatmul.bf16.gmra.mxu0 %v9830
  %v10486 = vpop.f32.mrf.mxu0
  %v10487 = vadd.f32 %v10398, %v10486
  %v10488 = vpop.f32.mrf.mxu0
  %v10489 = vadd.f32 %v10400, %v10488
  %10490 = vmatmul.bf16.gmra.mxu0 %v9833
  %v10491 = vpop.f32.mrf.mxu0
  %v10492 = vadd.f32 %v10403, %v10491
  %v10493 = vpop.f32.mrf.mxu0
  %v10494 = vadd.f32 %v10405, %v10493
  %10495 = vmatmul.bf16.gmra.mxu0 %v9836
  %v10496 = vpop.f32.mrf.mxu0
  %v10497 = vadd.f32 %v10408, %v10496
  %v10498 = vpop.f32.mrf.mxu0
  %v10499 = vadd.f32 %v10410, %v10498
  %10500 = vdwg.mxu0
  %v10501 = vadd.f32 %v10422, %v9077
  %v10502 = vadd.f32 %v10424, %v9077
  %v10503 = vadd.f32 %v10427, %v9077
  %v10504 = vadd.f32 %v10429, %v9077
  %v10505 = vadd.f32 %v10432, %v9077
  %v10506 = vadd.f32 %v10434, %v9077
  %v10507 = vadd.f32 %v10437, %v9077
  %v10508 = vadd.f32 %v10439, %v9077
  %v10509 = vadd.f32 %v10442, %v9077
  %v10510 = vadd.f32 %v10444, %v9077
  %v10511 = vadd.f32 %v10447, %v9077
  %v10512 = vadd.f32 %v10449, %v9077
  %v10513 = vadd.f32 %v10452, %v9077
  %v10514 = vadd.f32 %v10454, %v9077
  %v10515 = vadd.f32 %v10457, %v9077
  %v10516 = vadd.f32 %v10459, %v9077
  %v10517 = vadd.f32 %v10462, %v9077
  %v10518 = vadd.f32 %v10464, %v9077
  %v10519 = vadd.f32 %v10467, %v9077
  %v10520 = vadd.f32 %v10469, %v9077
  %v10521 = vadd.f32 %v10472, %v9077
  %v10522 = vadd.f32 %v10474, %v9077
  %v10523 = vadd.f32 %v10477, %v9077
  %v10524 = vadd.f32 %v10479, %v9077
  %v10525 = vadd.f32 %v10482, %v9077
  %v10526 = vadd.f32 %v10484, %v9077
  %v10527 = vadd.f32 %v10487, %v9077
  %v10528 = vadd.f32 %v10489, %v9077
  %v10529 = vadd.f32 %v10492, %v9077
  %v10530 = vadd.f32 %v10494, %v9077
  %v10531 = vadd.f32 %v10497, %v9077
  %v10532 = vadd.f32 %v10499, %v9077
  %v10533 = vsub.f32 0.0, %v10501
  %v10534 = vsub.f32 0.0, %v10502
  %v10535 = vsub.f32 0.0, %v10503
  %v10536 = vsub.f32 0.0, %v10504
  %v10537 = vsub.f32 0.0, %v10505
  %v10538 = vsub.f32 0.0, %v10506
  %v10539 = vsub.f32 0.0, %v10507
  %v10540 = vsub.f32 0.0, %v10508
  %v10541 = vsub.f32 0.0, %v10509
  %v10542 = vsub.f32 0.0, %v10510
  %v10543 = vsub.f32 0.0, %v10511
  %v10544 = vsub.f32 0.0, %v10512
  %v10545 = vsub.f32 0.0, %v10513
  %v10546 = vsub.f32 0.0, %v10514
  %v10547 = vsub.f32 0.0, %v10515
  %v10548 = vsub.f32 0.0, %v10516
  %v10549 = vsub.f32 0.0, %v10517
  %v10550 = vsub.f32 0.0, %v10518
  %v10551 = vsub.f32 0.0, %v10519
  %v10552 = vsub.f32 0.0, %v10520
  %v10553 = vsub.f32 0.0, %v10521
  %v10554 = vsub.f32 0.0, %v10522
  %v10555 = vsub.f32 0.0, %v10523
  %v10556 = vsub.f32 0.0, %v10524
  %v10557 = vsub.f32 0.0, %v10525
  %v10558 = vsub.f32 0.0, %v10526
  %v10559 = vsub.f32 0.0, %v10527
  %v10560 = vsub.f32 0.0, %v10528
  %v10561 = vsub.f32 0.0, %v10529
  %v10562 = vsub.f32 0.0, %v10530
  %v10563 = vsub.f32 0.0, %v10531
  %v10564 = vsub.f32 0.0, %v10532
  %v10565 = vmul.f32 %v10533, 1.442695
  %v10566 = vpow.pop %v10565
  %v10567 = vmul.f32 %v10534, 1.442695
  %v10568 = vpow.pop %v10567
  %v10569 = vmul.f32 %v10535, 1.442695
  %v10570 = vpow.pop %v10569
  %v10571 = vmul.f32 %v10536, 1.442695
  %v10572 = vpow.pop %v10571
  %v10573 = vmul.f32 %v10537, 1.442695
  %v10574 = vpow.pop %v10573
  %v10575 = vmul.f32 %v10538, 1.442695
  %v10576 = vpow.pop %v10575
  %v10577 = vmul.f32 %v10539, 1.442695
  %v10578 = vpow.pop %v10577
  %v10579 = vmul.f32 %v10540, 1.442695
  %v10580 = vpow.pop %v10579
  %v10581 = vmul.f32 %v10541, 1.442695
  %v10582 = vpow.pop %v10581
  %v10583 = vmul.f32 %v10542, 1.442695
  %v10584 = vpow.pop %v10583
  %v10585 = vmul.f32 %v10543, 1.442695
  %v10586 = vpow.pop %v10585
  %v10587 = vmul.f32 %v10544, 1.442695
  %v10588 = vpow.pop %v10587
  %v10589 = vmul.f32 %v10545, 1.442695
  %v10590 = vpow.pop %v10589
  %v10591 = vmul.f32 %v10546, 1.442695
  %v10592 = vpow.pop %v10591
  %v10593 = vmul.f32 %v10547, 1.442695
  %v10594 = vpow.pop %v10593
  %v10595 = vmul.f32 %v10548, 1.442695
  %v10596 = vpow.pop %v10595
  %v10597 = vmul.f32 %v10549, 1.442695
  %v10598 = vpow.pop %v10597
  %v10599 = vmul.f32 %v10550, 1.442695
  %v10600 = vpow.pop %v10599
  %v10601 = vmul.f32 %v10551, 1.442695
  %v10602 = vpow.pop %v10601
  %v10603 = vmul.f32 %v10552, 1.442695
  %v10604 = vpow.pop %v10603
  %v10605 = vmul.f32 %v10553, 1.442695
  %v10606 = vpow.pop %v10605
  %v10607 = vmul.f32 %v10554, 1.442695
  %v10608 = vpow.pop %v10607
  %v10609 = vmul.f32 %v10555, 1.442695
  %v10610 = vpow.pop %v10609
  %v10611 = vmul.f32 %v10556, 1.442695
  %v10612 = vpow.pop %v10611
  %v10613 = vmul.f32 %v10557, 1.442695
  %v10614 = vpow.pop %v10613
  %v10615 = vmul.f32 %v10558, 1.442695
  %v10616 = vpow.pop %v10615
  %v10617 = vmul.f32 %v10559, 1.442695
  %v10618 = vpow.pop %v10617
  %v10619 = vmul.f32 %v10560, 1.442695
  %v10620 = vpow.pop %v10619
  %v10621 = vmul.f32 %v10561, 1.442695
  %v10622 = vpow.pop %v10621
  %v10623 = vmul.f32 %v10562, 1.442695
  %v10624 = vpow.pop %v10623
  %v10625 = vmul.f32 %v10563, 1.442695
  %v10626 = vpow.pop %v10625
  %v10627 = vmul.f32 %v10564, 1.442695
  %v10628 = vpow.pop %v10627
  %v10629 = vadd.f32 %v10566, 1.0
  %v10630 = vadd.f32 %v10568, 1.0
  %v10631 = vadd.f32 %v10570, 1.0
  %v10632 = vadd.f32 %v10572, 1.0
  %v10633 = vadd.f32 %v10574, 1.0
  %v10634 = vadd.f32 %v10576, 1.0
  %v10635 = vadd.f32 %v10578, 1.0
  %v10636 = vadd.f32 %v10580, 1.0
  %v10637 = vadd.f32 %v10582, 1.0
  %v10638 = vadd.f32 %v10584, 1.0
  %v10639 = vadd.f32 %v10586, 1.0
  %v10640 = vadd.f32 %v10588, 1.0
  %v10641 = vadd.f32 %v10590, 1.0
  %v10642 = vadd.f32 %v10592, 1.0
  %v10643 = vadd.f32 %v10594, 1.0
  %v10644 = vadd.f32 %v10596, 1.0
  %v10645 = vadd.f32 %v10598, 1.0
  %v10646 = vadd.f32 %v10600, 1.0
  %v10647 = vadd.f32 %v10602, 1.0
  %v10648 = vadd.f32 %v10604, 1.0
  %v10649 = vadd.f32 %v10606, 1.0
  %v10650 = vadd.f32 %v10608, 1.0
  %v10651 = vadd.f32 %v10610, 1.0
  %v10652 = vadd.f32 %v10612, 1.0
  %v10653 = vadd.f32 %v10614, 1.0
  %v10654 = vadd.f32 %v10616, 1.0
  %v10655 = vadd.f32 %v10618, 1.0
  %v10656 = vadd.f32 %v10620, 1.0
  %v10657 = vadd.f32 %v10622, 1.0
  %v10658 = vadd.f32 %v10624, 1.0
  %v10659 = vadd.f32 %v10626, 1.0
  %v10660 = vadd.f32 %v10628, 1.0
  %v10661 = vrcp.pop %v10629
  %v10662 = vrcp.pop %v10630
  %v10663 = vrcp.pop %v10631
  %v10664 = vrcp.pop %v10632
  %v10665 = vrcp.pop %v10633
  %v10666 = vrcp.pop %v10634
  %v10667 = vrcp.pop %v10635
  %v10668 = vrcp.pop %v10636
  %v10669 = vrcp.pop %v10637
  %v10670 = vrcp.pop %v10638
  %v10671 = vrcp.pop %v10639
  %v10672 = vrcp.pop %v10640
  %v10673 = vrcp.pop %v10641
  %v10674 = vrcp.pop %v10642
  %v10675 = vrcp.pop %v10643
  %v10676 = vrcp.pop %v10644
  %v10677 = vrcp.pop %v10645
  %v10678 = vrcp.pop %v10646
  %v10679 = vrcp.pop %v10647
  %v10680 = vrcp.pop %v10648
  %v10681 = vrcp.pop %v10649
  %v10682 = vrcp.pop %v10650
  %v10683 = vrcp.pop %v10651
  %v10684 = vrcp.pop %v10652
  %v10685 = vrcp.pop %v10653
  %v10686 = vrcp.pop %v10654
  %v10687 = vrcp.pop %v10655
  %v10688 = vrcp.pop %v10656
  %v10689 = vrcp.pop %v10657
  %v10690 = vrcp.pop %v10658
  %v10691 = vrcp.pop %v10659
  %v10692 = vrcp.pop %v10660
  %10693 = vst [vmem:[%s9 + $0x8] sm:$0xff] %v10661
  %10694 = vst [vmem:[%s9 + $0x108] sm:$0xff] %v10662
  %10695 = vst [vmem:[%s9 + $0x18] sm:$0xff] %v10663
  %10696 = vst [vmem:[%s9 + $0x118] sm:$0xff] %v10664
  %10697 = vst [vmem:[%s9 + $0x28] sm:$0xff] %v10665
  %10698 = vst [vmem:[%s9 + $0x128] sm:$0xff] %v10666
  %10699 = vst [vmem:[%s9 + $0x38] sm:$0xff] %v10667
  %10700 = vst [vmem:[%s9 + $0x138] sm:$0xff] %v10668
  %10701 = vst [vmem:[%s9 + $0x48] sm:$0xff] %v10669
  %10702 = vst [vmem:[%s9 + $0x148] sm:$0xff] %v10670
  %10703 = vst [vmem:[%s9 + $0x58] sm:$0xff] %v10671
  %10704 = vst [vmem:[%s9 + $0x158] sm:$0xff] %v10672
  %10705 = vst [vmem:[%s9 + $0x68] sm:$0xff] %v10673
  %10706 = vst [vmem:[%s9 + $0x168] sm:$0xff] %v10674
  %10707 = vst [vmem:[%s9 + $0x78] sm:$0xff] %v10675
  %10708 = vst [vmem:[%s9 + $0x178] sm:$0xff] %v10676
  %10709 = vst [vmem:[%s9 + $0x88] sm:$0xff] %v10677
  %10710 = vst [vmem:[%s9 + $0x188] sm:$0xff] %v10678
  %10711 = vst [vmem:[%s9 + $0x98] sm:$0xff] %v10679
  %10712 = vst [vmem:[%s9 + $0x198] sm:$0xff] %v10680
  %10713 = vst [vmem:[%s9 + $0xa8] sm:$0xff] %v10681
  %10714 = vst [vmem:[%s9 + $0x1a8] sm:$0xff] %v10682
  %10715 = vst [vmem:[%s9 + $0xb8] sm:$0xff] %v10683
  %10716 = vst [vmem:[%s9 + $0x1b8] sm:$0xff] %v10684
  %10717 = vst [vmem:[%s9 + $0xc8] sm:$0xff] %v10685
  %10718 = vst [vmem:[%s9 + $0x1c8] sm:$0xff] %v10686
  %10719 = vst [vmem:[%s9 + $0xd8] sm:$0xff] %v10687
  %10720 = vst [vmem:[%s9 + $0x1d8] sm:$0xff] %v10688
  %10721 = vst [vmem:[%s9 + $0xe8] sm:$0xff] %v10689
  %10722 = vst [vmem:[%s9 + $0x1e8] sm:$0xff] %v10690
  %10723 = vst [vmem:[%s9 + $0xf8] sm:$0xff] %v10691
  %10724 = vst [vmem:[%s9 + $0x1f8] sm:$0xff] %v10692
  // Predicated region
  $region38: #{dec_cnn_oscn_forward.1} parent=0 // pred_check
    _
  $region39: #{dec_cnn_oscn_forward.1} parent=0 // pred_check_branch
    %10726 = sbr.rel (0) target = $region41
  $region40: #{dec_cnn_oscn_forward.1} parent=0 // pred_region
    _
  $region41: #{dec_cnn_oscn_forward.1} parent=0 // pred_fallthru
    _
  // Predicated region
  $region42: #{dec_cnn_oscn_forward.1} parent=0 // pred_check
    _
  $region43: #{dec_cnn_oscn_forward.1} parent=0 // pred_check_branch
    %10728 = sbr.rel (0) target = $region45
  $region44: #{dec_cnn_oscn_forward.1} parent=0 // pred_region
    _
  $region45: #{dec_cnn_oscn_forward.1} parent=0 // pred_fallthru
    _

</llo_original>
